<compile_context>
chip_gen: v5e
topology: v5e:2x2
jax: 0.10.0
libtpu: 0.0.40
codegen_flags: <defaults>
</compile_context>

<pallas_src>
import jax
import jax.numpy as jnp
from jax.experimental import pallas as pl
from jax.experimental.pallas import tpu as pltpu


# ----------------------------------------------------------------------------
# Pallas kernel (built per static variant of present/absent neighbours)
# ----------------------------------------------------------------------------
def _make_kernel(hidden_size, bias_splits, names):
    H = hidden_size
    n_in = len(names)

    def kernel(*refs):
        r = dict(zip(names, refs[:n_in]))
        h_out, c_out = refs[n_in], refs[n_in + 1]

        def brow(i):
            s, n = bias_splits[i]               # static, 128-aligned offsets
            return r["rows"][:, s:s + n]        # (1, n) f32 bias row

        def mm(a, w_ref):
            w = w_ref[...]
            # MXU matmul in the weights' dtype (bf16) with f32 accumulation;
            # all element-wise math elsewhere stays f32 (v5e-safe).
            return jnp.dot(a.astype(w.dtype), w,
                           preferred_element_type=jnp.float32)

        # h-seed MLP.  First layer = sum of K=128 partial dots (concat-free);
        # absent neighbours were dropped statically.  Its output layer
        # (fc_w3 / fc_b3) is folded into the hidden->gates matmul (w3hh).
        a = mm(r["hp"][...], r["hw0_p"])
        if "hl0" in r:
            a = a + mm(r["hl0"][...], r["hw0_l"])
        if "hu0" in r:
            a = a + mm(r["hu0"][...], r["hw0_u"])
        a = jnp.maximum(a + brow(0), 0.0)
        a = jnp.maximum(mm(a, r["hw1"]) + brow(1), 0.0)
        a = jnp.maximum(mm(a, r["hw2"]) + brow(2), 0.0)
        gates_h = mm(a, r["w3hh"])                              # (bm, 4H)

        # c-seed MLP (full 4 layers), same concat-free first layer.
        b = mm(r["hp1"][...], r["cw0_p"])
        if "hl1" in r:
            b = b + mm(r["hl1"][...], r["cw0_l"])
        if "hu1" in r:
            b = b + mm(r["hu1"][...], r["cw0_u"])
        b = jnp.maximum(b + brow(3), 0.0)
        b = jnp.maximum(mm(b, r["cw1"]) + brow(4), 0.0)
        b = jnp.maximum(mm(b, r["cw2"]) + brow(5), 0.0)
        c0 = mm(b, r["cw3"]) + brow(6)                          # (bm, H)

        # LSTM input contribution. input_size == 1 degenerates the matmul
        # into a VPU broadcast multiply (no MXU pass wasted).
        x = r["x"][...]                                         # (bm, I) f32
        if x.shape[-1] == 1:
            gates_x = x * r["wih"][...]                         # (bm,1)*(1,4H)
        else:
            gates_x = mm(x, r["wih"])

        # brow(7) = b_ih + b_hh + fc_b3 @ w_hh (pre-summed in prepare_params).
        gates = gates_x + gates_h + brow(7)                     # (bm, 4H)

        i = jax.nn.sigmoid(gates[:, 0:H])
        f = jax.nn.sigmoid(gates[:, H:2 * H])
        g = jnp.tanh(gates[:, 2 * H:3 * H])
        o = jax.nn.sigmoid(gates[:, 3 * H:4 * H])

        c_new = f * c0 + i * g
        h_new = o * jnp.tanh(c_new)

        h_out[...] = h_new
        c_out[...] = c_new

    return kernel


# ----------------------------------------------------------------------------
# Parameter preparation (fusion, bf16 cast, first-layer split, bias packing)
# ----------------------------------------------------------------------------
def prepare_params(params, hidden_size, weight_dtype=jnp.bfloat16):
    f32 = jnp.float32
    H = hidden_size
    p = {k: v.astype(f32) for k, v in params.items()}

    # Fold the h-seed MLP output layer into the LSTM hidden->gates matmul.
    w3hh = p["fc_w3"] @ p["w_hh"]                               # (L2, 4H)
    b_all = p["b_ih"] + p["b_hh"] + p["fc_b3"] @ p["w_hh"]      # (1, 4H)

    bias_rows = [p["fc_b0"], p["fc_b1"], p["fc_b2"],
                 p["fc1_b0"], p["fc1_b1"], p["fc1_b2"], p["fc1_b3"],
                 b_all]
    splits, off = [], 0
    for r in bias_rows:
        splits.append((off, r.shape[1]))
        off += r.shape[1]
    rows = jnp.concatenate(bias_rows, axis=1)                   # (1, sum)

    wd = weight_dtype
    prep = {
        # First layers split into the three K=128 row blocks that multiply
        # hidden_left / hidden_up / hidden_pre; the wrapper only passes the
        # blocks whose inputs are actually present (static None-ness).
        "hw0_l": p["fc_w0"][0:H].astype(wd),
        "hw0_u": p["fc_w0"][H:2 * H].astype(wd),
        "hw0_p": p["fc_w0"][2 * H:3 * H].astype(wd),
        "hw1": p["fc_w1"].astype(wd),
        "hw2": p["fc_w2"].astype(wd),
        "w3hh": w3hh.astype(wd),
        "cw0_l": p["fc1_w0"][0:H].astype(wd),
        "cw0_u": p["fc1_w0"][H:2 * H].astype(wd),
        "cw0_p": p["fc1_w0"][2 * H:3 * H].astype(wd),
        "cw1": p["fc1_w1"].astype(wd),
        "cw2": p["fc1_w2"].astype(wd),
        "cw3": p["fc1_w3"].astype(wd),
        "w_ih": p["w_ih"],      # (I, 4H) f32 — tiny; used on the VPU when I==1
        "rows": rows,           # (1, sum) f32 packed bias rows (128-aligned)
    }
    return prep, tuple(splits)


# ----------------------------------------------------------------------------
# Wrapper (glue: None handling, batch tiling/padding, pallas_call)
# ----------------------------------------------------------------------------
def lattice_rnn_cell(prep, bias_splits, x, hidden_left, hidden_up,
                     hidden_pre, hidden_pre1, *, batch_size, hidden_size,
                     act_dtype=jnp.bfloat16):
    B, H = batch_size, hidden_size

    has_hl0 = hidden_left[0] is not None
    has_hu0 = hidden_up[0] is not None
    has_hl1 = hidden_left[1] is not None
    has_hu1 = hidden_up[1] is not None

    x2 = jnp.squeeze(x, axis=1).astype(jnp.float32)             # (B, I)
    I = x2.shape[1]

    # Batch tiling: bm=128 rows per grid step ("parallel" -> v7x's two TCs
    # split the batch); pad odd batches up to a multiple of bm.
    if B > 128:
        bm = 128
        Bp = -(-B // bm) * bm
    else:
        bm, Bp = B, B
    nm = Bp // bm

    def pad_b(a):
        return a if Bp == B else jnp.pad(a, ((0, Bp - B), (0, 0)))

    names, arrays, specs = [], [], []

    def add_act(name, arr):            # batch-tiled activation input
        names.append(name)
        arrays.append(pad_b(arr))
        specs.append(pl.BlockSpec((bm, arr.shape[1]), lambda m: (m, 0)))

    def add_const(name, arr):          # weight / bias: constant index_map ->
        names.append(name)             # DMA'd once, VMEM-resident across steps
        arrays.append(arr)
        specs.append(pl.BlockSpec(arr.shape, lambda m: (0, 0)))

    # Activations stream as bf16 (the kernel casts to the weight dtype before
    # every dot anyway -> bit-identical math, half the activation DMA).
    add_act("hp", hidden_pre.astype(act_dtype))
    if has_hl0:
        add_act("hl0", hidden_left[0].astype(act_dtype))
    if has_hu0:
        add_act("hu0", hidden_up[0].astype(act_dtype))
    add_act("hp1", hidden_pre1.astype(act_dtype))
    if has_hl1:
        add_act("hl1", hidden_left[1].astype(act_dtype))
    if has_hu1:
        add_act("hu1", hidden_up[1].astype(act_dtype))
    add_act("x", x2)

    add_const("hw0_p", prep["hw0_p"])
    if has_hl0:
        add_const("hw0_l", prep["hw0_l"])
    if has_hu0:
        add_const("hw0_u", prep["hw0_u"])
    add_const("hw1", prep["hw1"])
    add_const("hw2", prep["hw2"])
    add_const("w3hh", prep["w3hh"])
    add_const("cw0_p", prep["cw0_p"])
    if has_hl1:
        add_const("cw0_l", prep["cw0_l"])
    if has_hu1:
        add_const("cw0_u", prep["cw0_u"])
    add_const("cw1", prep["cw1"])
    add_const("cw2", prep["cw2"])
    add_const("cw3", prep["cw3"])
    add_const("wih", prep["w_ih"])
    add_const("rows", prep["rows"])

    # Advisory cost estimate so XLA schedules neighbouring glue ops around
    # this small custom call instead of serializing on it.
    L0, L1 = prep["hw1"].shape
    L2 = prep["hw2"].shape[1]
    G = prep["w3hh"].shape[1]
    nb_h = 1 + int(has_hl0) + int(has_hu0)
    nb_c = 1 + int(has_hl1) + int(has_hu1)
    mm_flops = 2 * Bp * ((nb_h + nb_c) * H * L0
                         + 2 * (L0 * L1 + L1 * L2) + L2 * G + L2 * H)
    mm_flops += Bp * G if I == 1 else 2 * Bp * I * G
    cost = pl.CostEstimate(
        flops=int(mm_flops + Bp * (3 * G + 6 * H)),
        transcendentals=int(Bp * (G + H)),
        bytes_accessed=int(sum(a.size * a.dtype.itemsize for a in arrays)
                           + 2 * Bp * H * 4))

    kernel = _make_kernel(H, bias_splits, tuple(names))

    h_new, c_new = pl.pallas_call(
        kernel,
        out_shape=(jax.ShapeDtypeStruct((Bp, H), jnp.float32),
                   jax.ShapeDtypeStruct((Bp, H), jnp.float32)),
        grid_spec=pltpu.PrefetchScalarGridSpec(
            num_scalar_prefetch=0,
            grid=(nm,),
            in_specs=specs,
            out_specs=(pl.BlockSpec((bm, H), lambda m: (m, 0)),
                       pl.BlockSpec((bm, H), lambda m: (m, 0)))),
        compiler_params=pltpu.CompilerParams(
            dimension_semantics=("parallel",)),
        cost_estimate=cost,
    )(*arrays)

    if Bp != B:
        h_new, c_new = h_new[:B], c_new[:B]
    return h_new, c_new


# ----------------------------------------------------------------------------
# Deterministic parameter init (PyTorch-style U(-1/sqrt(fan_in), 1/sqrt(fan_in)))
# ----------------------------------------------------------------------------
def init_params(key, input_size, hidden_size, layers_sizes):
    def linear_init(k, fan_in, fan_out):
        bound = 1.0 / float(fan_in) ** 0.5
        kw, kb = jax.random.split(k)
        w = jax.random.uniform(kw, (fan_in, fan_out), jnp.float32, -bound, bound)
        b = jax.random.uniform(kb, (1, fan_out), jnp.float32, -bound, bound)
        return w, b

    H = hidden_size
    dims = [3 * H] + list(layers_sizes) + [H]   # [384, 384, 256, 128, 128]
    keys = jax.random.split(key, 12)
    params = {}

    for li in range(4):  # multi_layer_fc (h seed)
        w, b = linear_init(keys[li], dims[li], dims[li + 1])
        params[f"fc_w{li}"] = w
        params[f"fc_b{li}"] = b
    for li in range(4):  # multi_layer_fc1 (c seed)
        w, b = linear_init(keys[4 + li], dims[li], dims[li + 1])
        params[f"fc1_w{li}"] = w
        params[f"fc1_b{li}"] = b

    # nn.LSTMCell(input_size, hidden_size); stored transposed: (in, 4H)
    bound = 1.0 / float(H) ** 0.5
    k0, k1, k2, k3 = jax.random.split(keys[8], 4)
    params["w_ih"] = jax.random.uniform(k0, (input_size, 4 * H), jnp.float32, -bound, bound)
    params["w_hh"] = jax.random.uniform(k1, (H, 4 * H), jnp.float32, -bound, bound)
    params["b_ih"] = jax.random.uniform(k2, (1, 4 * H), jnp.float32, -bound, bound)
    params["b_hh"] = jax.random.uniform(k3, (1, 4 * H), jnp.float32, -bound, bound)

    # TODO(synk): self.fc_input (Linear(input_size, input_size)) is defined in
    # the PyTorch module but never used in forward, so it is omitted here.
    return params


# ----------------------------------------------------------------------------
# Pure-JAX references
# ----------------------------------------------------------------------------
def reference_forward(params, ch, ch1, x2, hidden_size):
    """Original, unfused, full-f32 module math (the spec)."""
    H = hidden_size

    def mlp(v, prefix):
        v = jnp.maximum(v @ params[f"{prefix}_w0"] + params[f"{prefix}_b0"], 0.0)
        v = jnp.maximum(v @ params[f"{prefix}_w1"] + params[f"{prefix}_b1"], 0.0)
        v = jnp.maximum(v @ params[f"{prefix}_w2"] + params[f"{prefix}_b2"], 0.0)
        return v @ params[f"{prefix}_w3"] + params[f"{prefix}_b3"]

    h0 = mlp(ch, "fc")
    c0 = mlp(ch1, "fc1")
    gates = x2 @ params["w_ih"] + params["b_ih"] + h0 @ params["w_hh"] + params["b_hh"]
    i = jax.nn.sigmoid(gates[:, 0:H])
    f = jax.nn.sigmoid(gates[:, H:2 * H])
    g = jnp.tanh(gates[:, 2 * H:3 * H])
    o = jax.nn.sigmoid(gates[:, 3 * H:4 * H])
    c_new = f * c0 + i * g
    h_new = o * jnp.tanh(c_new)
    return h_new, c_new


def reference_prepared(prep, bias_splits, hl0, hu0, hp, hl1, hu1, hp1, x2,
                       hidden_size, act_dtype=jnp.bfloat16):
    """Exact plain-JAX mirror of the kernel math (bf16 partial dots, f32 accum)."""
    H = hidden_size

    def brow(i):
        s, n = bias_splits[i]
        return prep["rows"][:, s:s + n]

    def mm(a, w):
        return jnp.dot(a.astype(w.dtype), w, preferred_element_type=jnp.float32)

    a = mm(hp.astype(act_dtype), prep["hw0_p"])
    if hl0 is not None:
        a = a + mm(hl0.astype(act_dtype), prep["hw0_l"])
    if hu0 is not None:
        a = a + mm(hu0.astype(act_dtype), prep["hw0_u"])
    a = jnp.maximum(a + brow(0), 0.0)
    a = jnp.maximum(mm(a, prep["hw1"]) + brow(1), 0.0)
    a = jnp.maximum(mm(a, prep["hw2"]) + brow(2), 0.0)
    gates_h = mm(a, prep["w3hh"])

    b = mm(hp1.astype(act_dtype), prep["cw0_p"])
    if hl1 is not None:
        b = b + mm(hl1.astype(act_dtype), prep["cw0_l"])
    if hu1 is not None:
        b = b + mm(hu1.astype(act_dtype), prep["cw0_u"])
    b = jnp.maximum(b + brow(3), 0.0)
    b = jnp.maximum(mm(b, prep["cw1"]) + brow(4), 0.0)
    b = jnp.maximum(mm(b, prep["cw2"]) + brow(5), 0.0)
    c0 = mm(b, prep["cw3"]) + brow(6)

    if x2.shape[1] == 1:
        gates_x = x2 * prep["w_ih"]
    else:
        gates_x = mm(x2, prep["w_ih"])
    gates = gates_x + gates_h + brow(7)

    i = jax.nn.sigmoid(gates[:, 0:H])
    f = jax.nn.sigmoid(gates[:, H:2 * H])
    g = jnp.tanh(gates[:, 2 * H:3 * H])
    o = jax.nn.sigmoid(gates[:, 3 * H:4 * H])
    c_new = f * c0 + i * g
    h_new = o * jnp.tanh(c_new)
    return h_new, c_new


# ----------------------------------------------------------------------------
if __name__ == "__main__":
    input_size = 1
    hidden_size = 128
    layers_sizes = [hidden_size * 3, hidden_size * 2, hidden_size]
    batch_size = 256   # module default; gives a 2-step "parallel" batch grid

    key = jax.random.PRNGKey(0)
    kp, kx, k1, k2, k3, k4, k5, k6 = jax.random.split(key, 8)

    params = init_params(kp, input_size, hidden_size, layers_sizes)
    prep, bias_splits = prepare_params(params, hidden_size)   # bf16, fused, packed

    x = jax.random.normal(kx, (batch_size, 1, input_size), jnp.float32)
    hidden_left = (jax.random.normal(k1, (batch_size, hidden_size), jnp.float32),
                   jax.random.normal(k2, (batch_size, hidden_size), jnp.float32))
    hidden_up = (jax.random.normal(k3, (batch_size, hidden_size), jnp.float32),
                 jax.random.normal(k4, (batch_size, hidden_size), jnp.float32))
    hidden_pre = jax.random.normal(k5, (batch_size, hidden_size), jnp.float32)
    hidden_pre1 = jax.random.normal(k6, (batch_size, hidden_size), jnp.float32)

    x2 = jnp.squeeze(x, axis=1)
    zeros = jnp.zeros((batch_size, hidden_size), jnp.float32)

    # ---- Case 1: interior lattice cell (all neighbours present) ----
    h_new, c_new = lattice_rnn_cell(
        prep, bias_splits, x, hidden_left, hidden_up, hidden_pre, hidden_pre1,
        batch_size=batch_size, hidden_size=hidden_size)
    jax.block_until_ready((h_new, c_new))

    h_ref, c_ref = reference_prepared(
        prep, bias_splits, hidden_left[0], hidden_up[0], hidden_pre,
        hidden_left[1], hidden_up[1], hidden_pre1, x2, hidden_size)
    assert jnp.allclose(h_new, h_ref, rtol=2e-3, atol=2e-3)
    assert jnp.allclose(c_new, c_ref, rtol=2e-3, atol=2e-3)

    ch = jnp.concatenate([hidden_left[0], hidden_up[0], hidden_pre], axis=1)
    ch1 = jnp.concatenate([hidden_left[1], hidden_up[1], hidden_pre1], axis=1)
    h_f32, c_f32 = reference_forward(params, ch, ch1, x2, hidden_size)
    assert jnp.allclose(h_new, h_f32, rtol=0.0, atol=0.1)
    assert jnp.allclose(c_new, c_f32, rtol=0.0, atol=0.2)

    # ---- Case 2: boundary cell (hidden_left is None -> that K-slice is
    #      statically skipped in the kernel instead of multiplying zeros) ----
    h_b, c_b = lattice_rnn_cell(
        prep, bias_splits, x, (None, None), hidden_up, hidden_pre, hidden_pre1,
        batch_size=batch_size, hidden_size=hidden_size)
    jax.block_until_ready((h_b, c_b))

    h_bref, c_bref = reference_prepared(
        prep, bias_splits, None, hidden_up[0], hidden_pre,
        None, hidden_up[1], hidden_pre1, x2, hidden_size)
    assert jnp.allclose(h_b, h_bref, rtol=2e-3, atol=2e-3)
    assert jnp.allclose(c_b, c_bref, rtol=2e-3, atol=2e-3)

    ch_b = jnp.concatenate([zeros, hidden_up[0], hidden_pre], axis=1)
    ch1_b = jnp.concatenate([zeros, hidden_up[1], hidden_pre1], axis=1)
    h_bf32, c_bf32 = reference_forward(params, ch_b, ch1_b, x2, hidden_size)
    assert jnp.allclose(h_b, h_bf32, rtol=0.0, atol=0.1)
    assert jnp.allclose(c_b, c_bf32, rtol=0.0, atol=0.2)

    print("KERNEL_OK")
</pallas_src>

<mosaic_0001>
module attributes {stable_mosaic.version = 11 : i64} {
  func.func @kernel(%arg0: i32, %arg1: memref<128x128xbf16, #tpu.memory_space<vmem>>, %arg2: memref<128x128xbf16, #tpu.memory_space<vmem>>, %arg3: memref<128x128xbf16, #tpu.memory_space<vmem>>, %arg4: memref<128x128xbf16, #tpu.memory_space<vmem>>, %arg5: memref<128x128xbf16, #tpu.memory_space<vmem>>, %arg6: memref<128x128xbf16, #tpu.memory_space<vmem>>, %arg7: memref<128x1xf32, #tpu.memory_space<vmem>>, %arg8: memref<128x384xbf16, #tpu.memory_space<vmem>>, %arg9: memref<128x384xbf16, #tpu.memory_space<vmem>>, %arg10: memref<128x384xbf16, #tpu.memory_space<vmem>>, %arg11: memref<384x256xbf16, #tpu.memory_space<vmem>>, %arg12: memref<256x128xbf16, #tpu.memory_space<vmem>>, %arg13: memref<128x512xbf16, #tpu.memory_space<vmem>>, %arg14: memref<128x384xbf16, #tpu.memory_space<vmem>>, %arg15: memref<128x384xbf16, #tpu.memory_space<vmem>>, %arg16: memref<128x384xbf16, #tpu.memory_space<vmem>>, %arg17: memref<384x256xbf16, #tpu.memory_space<vmem>>, %arg18: memref<256x128xbf16, #tpu.memory_space<vmem>>, %arg19: memref<128x128xbf16, #tpu.memory_space<vmem>>, %arg20: memref<1x512xf32, #tpu.memory_space<vmem>>, %arg21: memref<1x2176xf32, #tpu.memory_space<vmem>>, %arg22: memref<128x128xf32, #tpu.memory_space<vmem>>, %arg23: memref<128x128xf32, #tpu.memory_space<vmem>>) attributes {dimension_semantics = [#tpu.dimension_semantics<parallel>], iteration_bounds = array<i64: 2>, scalar_prefetch = 0 : i64, scratch_operands = 0 : i64, tpu.core_type = #tpu.core_type<tc>, window_params = [{transform_indices = @transform_0, window_bounds = array<i64: 128, 128>}, {transform_indices = @transform_1, window_bounds = array<i64: 128, 128>}, {transform_indices = @transform_2, window_bounds = array<i64: 128, 128>}, {transform_indices = @transform_3, window_bounds = array<i64: 128, 128>}, {transform_indices = @transform_4, window_bounds = array<i64: 128, 128>}, {transform_indices = @transform_5, window_bounds = array<i64: 128, 128>}, {transform_indices = @transform_6, window_bounds = array<i64: 128, 1>}, {pipeline_mode = #tpu.pipeline_mode<synchronous>, transform_indices = @transform_7, window_bounds = array<i64: 128, 384>}, {pipeline_mode = #tpu.pipeline_mode<synchronous>, transform_indices = @transform_8, window_bounds = array<i64: 128, 384>}, {pipeline_mode = #tpu.pipeline_mode<synchronous>, transform_indices = @transform_9, window_bounds = array<i64: 128, 384>}, {pipeline_mode = #tpu.pipeline_mode<synchronous>, transform_indices = @transform_10, window_bounds = array<i64: 384, 256>}, {pipeline_mode = #tpu.pipeline_mode<synchronous>, transform_indices = @transform_11, window_bounds = array<i64: 256, 128>}, {pipeline_mode = #tpu.pipeline_mode<synchronous>, transform_indices = @transform_12, window_bounds = array<i64: 128, 512>}, {pipeline_mode = #tpu.pipeline_mode<synchronous>, transform_indices = @transform_13, window_bounds = array<i64: 128, 384>}, {pipeline_mode = #tpu.pipeline_mode<synchronous>, transform_indices = @transform_14, window_bounds = array<i64: 128, 384>}, {pipeline_mode = #tpu.pipeline_mode<synchronous>, transform_indices = @transform_15, window_bounds = array<i64: 128, 384>}, {pipeline_mode = #tpu.pipeline_mode<synchronous>, transform_indices = @transform_16, window_bounds = array<i64: 384, 256>}, {pipeline_mode = #tpu.pipeline_mode<synchronous>, transform_indices = @transform_17, window_bounds = array<i64: 256, 128>}, {pipeline_mode = #tpu.pipeline_mode<synchronous>, transform_indices = @transform_18, window_bounds = array<i64: 128, 128>}, {pipeline_mode = #tpu.pipeline_mode<synchronous>, transform_indices = @transform_19, window_bounds = array<i64: 1, 512>}, {pipeline_mode = #tpu.pipeline_mode<synchronous>, transform_indices = @transform_20, window_bounds = array<i64: 1, 2176>}, {transform_indices = @transform_21, window_bounds = array<i64: 128, 128>}, {transform_indices = @transform_22, window_bounds = array<i64: 128, 128>}]} {
    %c0 = arith.constant 0 : index
    %c0_0 = arith.constant 0 : index
    %0 = vector.load %arg1[%c0, %c0_0] : memref<128x128xbf16, #tpu.memory_space<vmem>>, vector<128x128xbf16>
    %c0_1 = arith.constant 0 : index
    %c0_2 = arith.constant 0 : index
    %1 = vector.load %arg8[%c0_1, %c0_2] : memref<128x384xbf16, #tpu.memory_space<vmem>>, vector<128x384xbf16>
    %cst = arith.constant dense<0.000000e+00> : vector<128x384xf32>
    %2 = tpu.matmul %0, %1, %cst {dimension_numbers = #tpu.dot_dimension_numbers<[1], [0], [0], [1], [0, 0, 1, 1], [], []>} : vector<128x128xbf16>, vector<128x384xbf16>, vector<128x384xf32> -> vector<128x384xf32>
    %c0_3 = arith.constant 0 : index
    %c0_4 = arith.constant 0 : index
    %3 = vector.load %arg2[%c0_3, %c0_4] : memref<128x128xbf16, #tpu.memory_space<vmem>>, vector<128x128xbf16>
    %c0_5 = arith.constant 0 : index
    %c0_6 = arith.constant 0 : index
    %4 = vector.load %arg9[%c0_5, %c0_6] : memref<128x384xbf16, #tpu.memory_space<vmem>>, vector<128x384xbf16>
    %cst_7 = arith.constant dense<0.000000e+00> : vector<128x384xf32>
    %5 = tpu.matmul %3, %4, %cst_7 {dimension_numbers = #tpu.dot_dimension_numbers<[1], [0], [0], [1], [0, 0, 1, 1], [], []>} : vector<128x128xbf16>, vector<128x384xbf16>, vector<128x384xf32> -> vector<128x384xf32>
    %6 = arith.addf %2, %5 : vector<128x384xf32>
    %c0_8 = arith.constant 0 : index
    %c0_9 = arith.constant 0 : index
    %7 = vector.load %arg3[%c0_8, %c0_9] : memref<128x128xbf16, #tpu.memory_space<vmem>>, vector<128x128xbf16>
    %c0_10 = arith.constant 0 : index
    %c0_11 = arith.constant 0 : index
    %8 = vector.load %arg10[%c0_10, %c0_11] : memref<128x384xbf16, #tpu.memory_space<vmem>>, vector<128x384xbf16>
    %cst_12 = arith.constant dense<0.000000e+00> : vector<128x384xf32>
    %9 = tpu.matmul %7, %8, %cst_12 {dimension_numbers = #tpu.dot_dimension_numbers<[1], [0], [0], [1], [0, 0, 1, 1], [], []>} : vector<128x128xbf16>, vector<128x384xbf16>, vector<128x384xf32> -> vector<128x384xf32>
    %10 = arith.addf %6, %9 : vector<128x384xf32>
    %c0_13 = arith.constant 0 : index
    %c0_14 = arith.constant 0 : index
    %11 = vector.load %arg21[%c0_13, %c0_14] : memref<1x2176xf32, #tpu.memory_space<vmem>>, vector<1x384xf32>
    %12 = vector.broadcast %11 : vector<1x384xf32> to vector<128x384xf32>
    %13 = arith.addf %10, %12 : vector<128x384xf32>
    %cst_15 = arith.constant 0.000000e+00 : f32
    %14 = vector.broadcast %cst_15 : f32 to vector<128x384xf32>
    %15 = arith.maximumf %13, %14 : vector<128x384xf32>
    %c0_16 = arith.constant 0 : index
    %c0_17 = arith.constant 0 : index
    %16 = vector.load %arg11[%c0_16, %c0_17] : memref<384x256xbf16, #tpu.memory_space<vmem>>, vector<384x256xbf16>
    %17 = arith.truncf %15 : vector<128x384xf32> to vector<128x384xbf16>
    %cst_18 = arith.constant dense<0.000000e+00> : vector<128x256xf32>
    %18 = tpu.matmul %17, %16, %cst_18 {dimension_numbers = #tpu.dot_dimension_numbers<[1], [0], [0], [1], [0, 0, 1, 1], [], []>} : vector<128x384xbf16>, vector<384x256xbf16>, vector<128x256xf32> -> vector<128x256xf32>
    %c0_19 = arith.constant 0 : index
    %c384 = arith.constant 384 : index
    %19 = vector.load %arg21[%c0_19, %c384] : memref<1x2176xf32, #tpu.memory_space<vmem>>, vector<1x256xf32>
    %20 = vector.broadcast %19 : vector<1x256xf32> to vector<128x256xf32>
    %21 = arith.addf %18, %20 : vector<128x256xf32>
    %cst_20 = arith.constant 0.000000e+00 : f32
    %22 = vector.broadcast %cst_20 : f32 to vector<128x256xf32>
    %23 = arith.maximumf %21, %22 : vector<128x256xf32>
    %c0_21 = arith.constant 0 : index
    %c0_22 = arith.constant 0 : index
    %24 = vector.load %arg12[%c0_21, %c0_22] : memref<256x128xbf16, #tpu.memory_space<vmem>>, vector<256x128xbf16>
    %25 = arith.truncf %23 : vector<128x256xf32> to vector<128x256xbf16>
    %cst_23 = arith.constant dense<0.000000e+00> : vector<128x128xf32>
    %26 = tpu.matmul %25, %24, %cst_23 {dimension_numbers = #tpu.dot_dimension_numbers<[1], [0], [0], [1], [0, 0, 1, 1], [], []>} : vector<128x256xbf16>, vector<256x128xbf16>, vector<128x128xf32> -> vector<128x128xf32>
    %c0_24 = arith.constant 0 : index
    %c640 = arith.constant 640 : index
    %27 = vector.load %arg21[%c0_24, %c640] : memref<1x2176xf32, #tpu.memory_space<vmem>>, vector<1x128xf32>
    %28 = vector.broadcast %27 : vector<1x128xf32> to vector<128x128xf32>
    %29 = arith.addf %26, %28 : vector<128x128xf32>
    %cst_25 = arith.constant 0.000000e+00 : f32
    %30 = vector.broadcast %cst_25 : f32 to vector<128x128xf32>
    %31 = arith.maximumf %29, %30 : vector<128x128xf32>
    %c0_26 = arith.constant 0 : index
    %c0_27 = arith.constant 0 : index
    %32 = vector.load %arg13[%c0_26, %c0_27] : memref<128x512xbf16, #tpu.memory_space<vmem>>, vector<128x512xbf16>
    %33 = arith.truncf %31 : vector<128x128xf32> to vector<128x128xbf16>
    %cst_28 = arith.constant dense<0.000000e+00> : vector<128x512xf32>
    %34 = tpu.matmul %33, %32, %cst_28 {dimension_numbers = #tpu.dot_dimension_numbers<[1], [0], [0], [1], [0, 0, 1, 1], [], []>} : vector<128x128xbf16>, vector<128x512xbf16>, vector<128x512xf32> -> vector<128x512xf32>
    %c0_29 = arith.constant 0 : index
    %c0_30 = arith.constant 0 : index
    %35 = vector.load %arg4[%c0_29, %c0_30] : memref<128x128xbf16, #tpu.memory_space<vmem>>, vector<128x128xbf16>
    %c0_31 = arith.constant 0 : index
    %c0_32 = arith.constant 0 : index
    %36 = vector.load %arg14[%c0_31, %c0_32] : memref<128x384xbf16, #tpu.memory_space<vmem>>, vector<128x384xbf16>
    %cst_33 = arith.constant dense<0.000000e+00> : vector<128x384xf32>
    %37 = tpu.matmul %35, %36, %cst_33 {dimension_numbers = #tpu.dot_dimension_numbers<[1], [0], [0], [1], [0, 0, 1, 1], [], []>} : vector<128x128xbf16>, vector<128x384xbf16>, vector<128x384xf32> -> vector<128x384xf32>
    %c0_34 = arith.constant 0 : index
    %c0_35 = arith.constant 0 : index
    %38 = vector.load %arg5[%c0_34, %c0_35] : memref<128x128xbf16, #tpu.memory_space<vmem>>, vector<128x128xbf16>
    %c0_36 = arith.constant 0 : index
    %c0_37 = arith.constant 0 : index
    %39 = vector.load %arg15[%c0_36, %c0_37] : memref<128x384xbf16, #tpu.memory_space<vmem>>, vector<128x384xbf16>
    %cst_38 = arith.constant dense<0.000000e+00> : vector<128x384xf32>
    %40 = tpu.matmul %38, %39, %cst_38 {dimension_numbers = #tpu.dot_dimension_numbers<[1], [0], [0], [1], [0, 0, 1, 1], [], []>} : vector<128x128xbf16>, vector<128x384xbf16>, vector<128x384xf32> -> vector<128x384xf32>
    %41 = arith.addf %37, %40 : vector<128x384xf32>
    %c0_39 = arith.constant 0 : index
    %c0_40 = arith.constant 0 : index
    %42 = vector.load %arg6[%c0_39, %c0_40] : memref<128x128xbf16, #tpu.memory_space<vmem>>, vector<128x128xbf16>
    %c0_41 = arith.constant 0 : index
    %c0_42 = arith.constant 0 : index
    %43 = vector.load %arg16[%c0_41, %c0_42] : memref<128x384xbf16, #tpu.memory_space<vmem>>, vector<128x384xbf16>
    %cst_43 = arith.constant dense<0.000000e+00> : vector<128x384xf32>
    %44 = tpu.matmul %42, %43, %cst_43 {dimension_numbers = #tpu.dot_dimension_numbers<[1], [0], [0], [1], [0, 0, 1, 1], [], []>} : vector<128x128xbf16>, vector<128x384xbf16>, vector<128x384xf32> -> vector<128x384xf32>
    %45 = arith.addf %41, %44 : vector<128x384xf32>
    %c0_44 = arith.constant 0 : index
    %c768 = arith.constant 768 : index
    %46 = vector.load %arg21[%c0_44, %c768] : memref<1x2176xf32, #tpu.memory_space<vmem>>, vector<1x384xf32>
    %47 = vector.broadcast %46 : vector<1x384xf32> to vector<128x384xf32>
    %48 = arith.addf %45, %47 : vector<128x384xf32>
    %cst_45 = arith.constant 0.000000e+00 : f32
    %49 = vector.broadcast %cst_45 : f32 to vector<128x384xf32>
    %50 = arith.maximumf %48, %49 : vector<128x384xf32>
    %c0_46 = arith.constant 0 : index
    %c0_47 = arith.constant 0 : index
    %51 = vector.load %arg17[%c0_46, %c0_47] : memref<384x256xbf16, #tpu.memory_space<vmem>>, vector<384x256xbf16>
    %52 = arith.truncf %50 : vector<128x384xf32> to vector<128x384xbf16>
    %cst_48 = arith.constant dense<0.000000e+00> : vector<128x256xf32>
    %53 = tpu.matmul %52, %51, %cst_48 {dimension_numbers = #tpu.dot_dimension_numbers<[1], [0], [0], [1], [0, 0, 1, 1], [], []>} : vector<128x384xbf16>, vector<384x256xbf16>, vector<128x256xf32> -> vector<128x256xf32>
    %c0_49 = arith.constant 0 : index
    %c1152 = arith.constant 1152 : index
    %54 = vector.load %arg21[%c0_49, %c1152] : memref<1x2176xf32, #tpu.memory_space<vmem>>, vector<1x256xf32>
    %55 = vector.broadcast %54 : vector<1x256xf32> to vector<128x256xf32>
    %56 = arith.addf %53, %55 : vector<128x256xf32>
    %cst_50 = arith.constant 0.000000e+00 : f32
    %57 = vector.broadcast %cst_50 : f32 to vector<128x256xf32>
    %58 = arith.maximumf %56, %57 : vector<128x256xf32>
    %c0_51 = arith.constant 0 : index
    %c0_52 = arith.constant 0 : index
    %59 = vector.load %arg18[%c0_51, %c0_52] : memref<256x128xbf16, #tpu.memory_space<vmem>>, vector<256x128xbf16>
    %60 = arith.truncf %58 : vector<128x256xf32> to vector<128x256xbf16>
    %cst_53 = arith.constant dense<0.000000e+00> : vector<128x128xf32>
    %61 = tpu.matmul %60, %59, %cst_53 {dimension_numbers = #tpu.dot_dimension_numbers<[1], [0], [0], [1], [0, 0, 1, 1], [], []>} : vector<128x256xbf16>, vector<256x128xbf16>, vector<128x128xf32> -> vector<128x128xf32>
    %c0_54 = arith.constant 0 : index
    %c1408 = arith.constant 1408 : index
    %62 = vector.load %arg21[%c0_54, %c1408] : memref<1x2176xf32, #tpu.memory_space<vmem>>, vector<1x128xf32>
    %63 = vector.broadcast %62 : vector<1x128xf32> to vector<128x128xf32>
    %64 = arith.addf %61, %63 : vector<128x128xf32>
    %cst_55 = arith.constant 0.000000e+00 : f32
    %65 = vector.broadcast %cst_55 : f32 to vector<128x128xf32>
    %66 = arith.maximumf %64, %65 : vector<128x128xf32>
    %c0_56 = arith.constant 0 : index
    %c0_57 = arith.constant 0 : index
    %67 = vector.load %arg19[%c0_56, %c0_57] : memref<128x128xbf16, #tpu.memory_space<vmem>>, vector<128x128xbf16>
    %68 = arith.truncf %66 : vector<128x128xf32> to vector<128x128xbf16>
    %cst_58 = arith.constant dense<0.000000e+00> : vector<128x128xf32>
    %69 = tpu.matmul %68, %67, %cst_58 {dimension_numbers = #tpu.dot_dimension_numbers<[1], [0], [0], [1], [0, 0, 1, 1], [], []>} : vector<128x128xbf16>, vector<128x128xbf16>, vector<128x128xf32> -> vector<128x128xf32>
    %c0_59 = arith.constant 0 : index
    %c1536 = arith.constant 1536 : index
    %70 = vector.load %arg21[%c0_59, %c1536] : memref<1x2176xf32, #tpu.memory_space<vmem>>, vector<1x128xf32>
    %71 = vector.broadcast %70 : vector<1x128xf32> to vector<128x128xf32>
    %72 = arith.addf %69, %71 : vector<128x128xf32>
    %c0_60 = arith.constant 0 : index
    %c0_61 = arith.constant 0 : index
    %73 = vector.load %arg7[%c0_60, %c0_61] : memref<128x1xf32, #tpu.memory_space<vmem>>, vector<128x1xf32>
    %c0_62 = arith.constant 0 : index
    %c0_63 = arith.constant 0 : index
    %74 = vector.load %arg20[%c0_62, %c0_63] : memref<1x512xf32, #tpu.memory_space<vmem>>, vector<1x512xf32>
    %75 = vector.broadcast %73 : vector<128x1xf32> to vector<128x512xf32>
    %76 = vector.broadcast %74 : vector<1x512xf32> to vector<128x512xf32>
    %77 = arith.mulf %75, %76 : vector<128x512xf32>
    %78 = arith.addf %77, %34 : vector<128x512xf32>
    %c0_64 = arith.constant 0 : index
    %c1664 = arith.constant 1664 : index
    %79 = vector.load %arg21[%c0_64, %c1664] : memref<1x2176xf32, #tpu.memory_space<vmem>>, vector<1x512xf32>
    %80 = vector.broadcast %79 : vector<1x512xf32> to vector<128x512xf32>
    %81 = arith.addf %78, %80 : vector<128x512xf32>
    %82 = vector.extract_strided_slice %81 {offsets = [0, 0], sizes = [128, 128], strides = [1, 1]} : vector<128x512xf32> to vector<128x128xf32>
    %83 = arith.negf %82 : vector<128x128xf32>
    %84 = math.exp %83 : vector<128x128xf32>
    %cst_65 = arith.constant 1.000000e+00 : f32
    %85 = vector.broadcast %cst_65 : f32 to vector<128x128xf32>
    %86 = arith.addf %85, %84 : vector<128x128xf32>
    %87 = arith.divf %85, %86 : vector<128x128xf32>
    %88 = vector.extract_strided_slice %81 {offsets = [0, 128], sizes = [128, 128], strides = [1, 1]} : vector<128x512xf32> to vector<128x128xf32>
    %89 = arith.negf %88 : vector<128x128xf32>
    %90 = math.exp %89 : vector<128x128xf32>
    %cst_66 = arith.constant 1.000000e+00 : f32
    %91 = vector.broadcast %cst_66 : f32 to vector<128x128xf32>
    %92 = arith.addf %91, %90 : vector<128x128xf32>
    %93 = arith.divf %91, %92 : vector<128x128xf32>
    %94 = vector.extract_strided_slice %81 {offsets = [0, 256], sizes = [128, 128], strides = [1, 1]} : vector<128x512xf32> to vector<128x128xf32>
    %95 = math.tanh %94 : vector<128x128xf32>
    %96 = vector.extract_strided_slice %81 {offsets = [0, 384], sizes = [128, 128], strides = [1, 1]} : vector<128x512xf32> to vector<128x128xf32>
    %97 = arith.negf %96 : vector<128x128xf32>
    %98 = math.exp %97 : vector<128x128xf32>
    %cst_67 = arith.constant 1.000000e+00 : f32
    %99 = vector.broadcast %cst_67 : f32 to vector<128x128xf32>
    %100 = arith.addf %99, %98 : vector<128x128xf32>
    %101 = arith.divf %99, %100 : vector<128x128xf32>
    %102 = arith.mulf %93, %72 : vector<128x128xf32>
    %103 = arith.mulf %87, %95 : vector<128x128xf32>
    %104 = arith.addf %102, %103 : vector<128x128xf32>
    %105 = math.tanh %104 : vector<128x128xf32>
    %106 = arith.mulf %101, %105 : vector<128x128xf32>
    %c0_68 = arith.constant 0 : index
    %c0_69 = arith.constant 0 : index
    %107 = vector.load %arg22[%c0_68, %c0_69] : memref<128x128xf32, #tpu.memory_space<vmem>>, vector<128x128xf32>
    tpu.vector_store %arg22[%c0_68, %c0_69], %106 {strides = array<i32>} : memref<128x128xf32, #tpu.memory_space<vmem>>, vector<128x128xf32>,
    %c0_70 = arith.constant 0 : index
    %c0_71 = arith.constant 0 : index
    %108 = vector.load %arg23[%c0_70, %c0_71] : memref<128x128xf32, #tpu.memory_space<vmem>>, vector<128x128xf32>
    tpu.vector_store %arg23[%c0_70, %c0_71], %104 {strides = array<i32>} : memref<128x128xf32, #tpu.memory_space<vmem>>, vector<128x128xf32>,
    return
  }
  func.func @transform_0(%arg0: i32) -> (i32, i32) {
    %c0_i32 = arith.constant 0 : i32
    %c0_i32_0 = arith.constant 0 : i32
    return %arg0, %c0_i32 : i32, i32
  }
  func.func @transform_1(%arg0: i32) -> (i32, i32) {
    %c0_i32 = arith.constant 0 : i32
    %c0_i32_0 = arith.constant 0 : i32
    return %arg0, %c0_i32 : i32, i32
  }
  func.func @transform_2(%arg0: i32) -> (i32, i32) {
    %c0_i32 = arith.constant 0 : i32
    %c0_i32_0 = arith.constant 0 : i32
    return %arg0, %c0_i32 : i32, i32
  }
  func.func @transform_3(%arg0: i32) -> (i32, i32) {
    %c0_i32 = arith.constant 0 : i32
    %c0_i32_0 = arith.constant 0 : i32
    return %arg0, %c0_i32 : i32, i32
  }
  func.func @transform_4(%arg0: i32) -> (i32, i32) {
    %c0_i32 = arith.constant 0 : i32
    %c0_i32_0 = arith.constant 0 : i32
    return %arg0, %c0_i32 : i32, i32
  }
  func.func @transform_5(%arg0: i32) -> (i32, i32) {
    %c0_i32 = arith.constant 0 : i32
    %c0_i32_0 = arith.constant 0 : i32
    return %arg0, %c0_i32 : i32, i32
  }
  func.func @transform_6(%arg0: i32) -> (i32, i32) {
    %c0_i32 = arith.constant 0 : i32
    %c0_i32_0 = arith.constant 0 : i32
    return %arg0, %c0_i32 : i32, i32
  }
  func.func @transform_7(%arg0: i32) -> (i32, i32) {
    %c0_i32 = arith.constant 0 : i32
    %c0_i32_0 = arith.constant 0 : i32
    %c0_i32_1 = arith.constant 0 : i32
    return %c0_i32, %c0_i32_0 : i32, i32
  }
  func.func @transform_8(%arg0: i32) -> (i32, i32) {
    %c0_i32 = arith.constant 0 : i32
    %c0_i32_0 = arith.constant 0 : i32
    %c0_i32_1 = arith.constant 0 : i32
    return %c0_i32, %c0_i32_0 : i32, i32
  }
  func.func @transform_9(%arg0: i32) -> (i32, i32) {
    %c0_i32 = arith.constant 0 : i32
    %c0_i32_0 = arith.constant 0 : i32
    %c0_i32_1 = arith.constant 0 : i32
    return %c0_i32, %c0_i32_0 : i32, i32
  }
  func.func @transform_10(%arg0: i32) -> (i32, i32) {
    %c0_i32 = arith.constant 0 : i32
    %c0_i32_0 = arith.constant 0 : i32
    %c0_i32_1 = arith.constant 0 : i32
    return %c0_i32, %c0_i32_0 : i32, i32
  }
  func.func @transform_11(%arg0: i32) -> (i32, i32) {
    %c0_i32 = arith.constant 0 : i32
    %c0_i32_0 = arith.constant 0 : i32
    %c0_i32_1 = arith.constant 0 : i32
    return %c0_i32, %c0_i32_0 : i32, i32
  }
  func.func @transform_12(%arg0: i32) -> (i32, i32) {
    %c0_i32 = arith.constant 0 : i32
    %c0_i32_0 = arith.constant 0 : i32
    %c0_i32_1 = arith.constant 0 : i32
    return %c0_i32, %c0_i32_0 : i32, i32
  }
  func.func @transform_13(%arg0: i32) -> (i32, i32) {
    %c0_i32 = arith.constant 0 : i32
    %c0_i32_0 = arith.constant 0 : i32
    %c0_i32_1 = arith.constant 0 : i32
    return %c0_i32, %c0_i32_0 : i32, i32
  }
  func.func @transform_14(%arg0: i32) -> (i32, i32) {
    %c0_i32 = arith.constant 0 : i32
    %c0_i32_0 = arith.constant 0 : i32
    %c0_i32_1 = arith.constant 0 : i32
    return %c0_i32, %c0_i32_0 : i32, i32
  }
  func.func @transform_15(%arg0: i32) -> (i32, i32) {
    %c0_i32 = arith.constant 0 : i32
    %c0_i32_0 = arith.constant 0 : i32
    %c0_i32_1 = arith.constant 0 : i32
    return %c0_i32, %c0_i32_0 : i32, i32
  }
  func.func @transform_16(%arg0: i32) -> (i32, i32) {
    %c0_i32 = arith.constant 0 : i32
    %c0_i32_0 = arith.constant 0 : i32
    %c0_i32_1 = arith.constant 0 : i32
    return %c0_i32, %c0_i32_0 : i32, i32
  }
  func.func @transform_17(%arg0: i32) -> (i32, i32) {
    %c0_i32 = arith.constant 0 : i32
    %c0_i32_0 = arith.constant 0 : i32
    %c0_i32_1 = arith.constant 0 : i32
    return %c0_i32, %c0_i32_0 : i32, i32
  }
  func.func @transform_18(%arg0: i32) -> (i32, i32) {
    %c0_i32 = arith.constant 0 : i32
    %c0_i32_0 = arith.constant 0 : i32
    %c0_i32_1 = arith.constant 0 : i32
    return %c0_i32, %c0_i32_0 : i32, i32
  }
  func.func @transform_19(%arg0: i32) -> (i32, i32) {
    %c0_i32 = arith.constant 0 : i32
    %c0_i32_0 = arith.constant 0 : i32
    %c0_i32_1 = arith.constant 0 : i32
    return %c0_i32, %c0_i32_0 : i32, i32
  }
  func.func @transform_20(%arg0: i32) -> (i32, i32) {
    %c0_i32 = arith.constant 0 : i32
    %c0_i32_0 = arith.constant 0 : i32
    %c0_i32_1 = arith.constant 0 : i32
    return %c0_i32, %c0_i32_0 : i32, i32
  }
  func.func @transform_21(%arg0: i32) -> (i32, i32) {
    %c0_i32 = arith.constant 0 : i32
    %c0_i32_0 = arith.constant 0 : i32
    return %arg0, %c0_i32 : i32, i32
  }
  func.func @transform_22(%arg0: i32) -> (i32, i32) {
    %c0_i32 = arith.constant 0 : i32
    %c0_i32_0 = arith.constant 0 : i32
    return %arg0, %c0_i32 : i32, i32
  }
}

</mosaic_0001>

<llo_original>
// kernel: tpu_custom_call.1
$region0: #{tpu_custom_call.1}
  #allocation0 [shape = 'u32[]', space=smem, size = 0x4, offset = 0x4, fixed_abs, tag = 'smem constant byte address 0x4 - core index']
  #allocation1 [shape = 'u32[72,128]{1,0:T(1,128)}', space=vmem, size = 0x9000, scoped, tag = 'internal scratch']
  %s0 = inlined_call_operand.hbm [shape: bf16[256,128], index: 0, kind: input, shape index: {}]
  %s1 = inlined_call_operand.hbm [shape: bf16[256,128], index: 1, kind: input, shape index: {}]
  %s2 = inlined_call_operand.hbm [shape: bf16[256,128], index: 2, kind: input, shape index: {}]
  %s3 = inlined_call_operand.hbm [shape: bf16[256,128], index: 3, kind: input, shape index: {}]
  %s4 = inlined_call_operand.hbm [shape: bf16[256,128], index: 4, kind: input, shape index: {}]
  %s5 = inlined_call_operand.hbm [shape: bf16[256,128], index: 5, kind: input, shape index: {}]
  %s6 = inlined_call_operand.vmem [shape: f32[256,1], index: 6, kind: input, shape index: {}]
  %s7 = inlined_call_operand.hbm [shape: bf16[128,384], index: 7, kind: input, shape index: {}]
  %s8 = inlined_call_operand.hbm [shape: bf16[128,384], index: 8, kind: input, shape index: {}]
  %s9 = inlined_call_operand.hbm [shape: bf16[128,384], index: 9, kind: input, shape index: {}]
  %s10 = inlined_call_operand.hbm [shape: bf16[384,256], index: 10, kind: input, shape index: {}]
  %s11 = inlined_call_operand.hbm [shape: bf16[256,128], index: 11, kind: input, shape index: {}]
  %s12 = inlined_call_operand.vmem [shape: bf16[128,512], index: 12, kind: input, shape index: {}]
  %s13 = inlined_call_operand.hbm [shape: bf16[128,384], index: 13, kind: input, shape index: {}]
  %s14 = inlined_call_operand.hbm [shape: bf16[128,384], index: 14, kind: input, shape index: {}]
  %s15 = inlined_call_operand.hbm [shape: bf16[128,384], index: 15, kind: input, shape index: {}]
  %s16 = inlined_call_operand.hbm [shape: bf16[384,256], index: 16, kind: input, shape index: {}]
  %s17 = inlined_call_operand.hbm [shape: bf16[256,128], index: 17, kind: input, shape index: {}]
  %s18 = inlined_call_operand.hbm [shape: bf16[128,128], index: 18, kind: input, shape index: {}]
  %s19 = inlined_call_operand.hbm [shape: f32[1,512], index: 19, kind: input, shape index: {}]
  %s20 = inlined_call_operand.vmem [shape: f32[1,2176], index: 20, kind: input, shape index: {}]
  %s21 = inlined_call_operand.hbm [shape: f32[256,128], index: 21, kind: output, shape index: {0}]
  %s22 = inlined_call_operand.hbm [shape: f32[256,128], index: 22, kind: output, shape index: {1}]
  %23 = xla_tuple %s21, %s22
  %s24 = sld [smem:[#allocation0]]
  $region197: #{tpu_custom_call.1} parent=0
    _
  %s26 = ssub.s32 1, %s24
  %s27 = scalar_select 0, %s26, %s24
  $region1: #{tpu_custom_call.1} parent=0
    #allocation2 [shape = 'u8[65536]{0}', space=vmem, size = 0x10000, scoped, tag = 'input window, operand 0']
    #allocation3 [shape = 's32[2]{0}', space=sflag, size = 0x8, scoped, tag = 'scoped memory for tpu_custom_call.1']
    #allocation4 [shape = 's32[2]{0}', space=sflag, size = 0x8, scoped, tag = 'scoped memory for tpu_custom_call.1']
    #allocation5 [shape = 'u8[65536]{0}', space=vmem, size = 0x10000, scoped, tag = 'input window, operand 1']
    #allocation6 [shape = 's32[2]{0}', space=sflag, size = 0x8, scoped, tag = 'scoped memory for tpu_custom_call.1']
    #allocation7 [shape = 'u8[65536]{0}', space=vmem, size = 0x10000, scoped, tag = 'input window, operand 2']
    #allocation8 [shape = 'u8[65536]{0}', space=vmem, size = 0x10000, scoped, tag = 'input window, operand 3']
    #allocation9 [shape = 's32[2]{0}', space=sflag, size = 0x8, scoped, tag = 'scoped memory for tpu_custom_call.1']
    #allocation10 [shape = 'u8[65536]{0}', space=vmem, size = 0x10000, scoped, tag = 'input window, operand 4']
    #allocation11 [shape = 'u8[65536]{0}', space=vmem, size = 0x10000, scoped, tag = 'input window, operand 5']
    #allocation12 [shape = 's32[2]{0}', space=sflag, size = 0x8, scoped, tag = 'scoped memory for tpu_custom_call.1']
    #allocation13 [shape = 'u8[98304]{0}', space=vmem, size = 0x18000, scoped, tag = 'input window, operand 7, single buffered']
    #allocation14 [shape = 'u8[98304]{0}', space=vmem, size = 0x18000, scoped, tag = 'input window, operand 8, single buffered']
    #allocation15 [shape = 's32[1]{0}', space=sflag, size = 0x4, scoped, tag = 'scoped memory for tpu_custom_call.1']
    #allocation16 [shape = 'u8[98304]{0}', space=vmem, size = 0x18000, scoped, tag = 'input window, operand 9, single buffered']
    #allocation17 [shape = 'u8[196608]{0}', space=vmem, size = 0x30000, scoped, tag = 'input window, operand 10, single buffered']
    #allocation18 [shape = 's32[1]{0}', space=sflag, size = 0x4, scoped, tag = 'scoped memory for tpu_custom_call.1']
    #allocation19 [shape = 'u8[65536]{0}', space=vmem, size = 0x10000, scoped, tag = 'input window, operand 11, single buffered']
    #allocation20 [shape = 'u8[98304]{0}', space=vmem, size = 0x18000, scoped, tag = 'input window, operand 13, single buffered']
    #allocation21 [shape = 's32[1]{0}', space=sflag, size = 0x4, scoped, tag = 'scoped memory for tpu_custom_call.1']
    #allocation22 [shape = 'u8[98304]{0}', space=vmem, size = 0x18000, scoped, tag = 'input window, operand 14, single buffered']
    #allocation23 [shape = 'u8[98304]{0}', space=vmem, size = 0x18000, scoped, tag = 'input window, operand 15, single buffered']
    #allocation24 [shape = 's32[1]{0}', space=sflag, size = 0x4, scoped, tag = 'scoped memory for tpu_custom_call.1']
    #allocation25 [shape = 'u8[196608]{0}', space=vmem, size = 0x30000, scoped, tag = 'input window, operand 16, single buffered']
    #allocation26 [shape = 'u8[65536]{0}', space=vmem, size = 0x10000, scoped, tag = 'input window, operand 17, single buffered']
    #allocation27 [shape = 's32[1]{0}', space=sflag, size = 0x4, scoped, tag = 'scoped memory for tpu_custom_call.1']
    #allocation28 [shape = 'u8[32768]{0}', space=vmem, size = 0x8000, scoped, tag = 'input window, operand 18, single buffered']
    #allocation29 [shape = 'u8[2048]{0}', space=vmem, size = 0x800, scoped, tag = 'input window, operand 19, single buffered']
    #allocation30 [shape = 's32[1]{0}', space=sflag, size = 0x4, scoped, tag = 'scoped memory for tpu_custom_call.1']
    #allocation31 [shape = 'u8[131072]{0}', space=vmem, size = 0x20000, scoped, tag = 'output window, operand 0']
    #allocation32 [shape = 'u8[131072]{0}', space=vmem, size = 0x20000, scoped, tag = 'output window, operand 1']
    #allocation33 [shape = 's32[2]{0}', space=sflag, size = 0x8, scoped, tag = 'scoped memory for tpu_custom_call.1']
    %28 = vsyncpa [#allocation3], 0
    %s29 = scalar_lea.sflag [#allocation3], 1
    %30 = vsyncpa %s29, 0
    %31 = vsyncpa [#allocation6], 0
    %s32 = scalar_lea.sflag [#allocation6], 1
    %33 = vsyncpa %s32, 0
    %34 = vsyncpa [#allocation9], 0
    %s35 = scalar_lea.sflag [#allocation9], 1
    %36 = vsyncpa %s35, 0
    %37 = vsyncpa [#allocation12], 0
    %s38 = scalar_lea.sflag [#allocation12], 1
    %39 = vsyncpa %s38, 0
    %40 = vsyncpa [#allocation15], 0
    %41 = vsyncpa [#allocation18], 0
    %42 = vsyncpa [#allocation21], 0
    %43 = vsyncpa [#allocation24], 0
    %44 = vsyncpa [#allocation27], 0
    %45 = vsyncpa [#allocation30], 0
    %46 = vsyncpa [#allocation4], 0
    %s47 = scalar_lea.sflag [#allocation4], 1
    %48 = vsyncpa %s47, 0
    %49 = vsyncpa [#allocation33], 0
    %s50 = scalar_lea.sflag [#allocation33], 1
    %51 = vsyncpa %s50, 0
    loop: start=0, step=1, limit=4
    $region2: #{tpu_custom_call.1} parent=1 // loop_pre_header
      _
    $region3: #{tpu_custom_call.1} parent=1 // loop_header
      %s53 = sphi 0, %s57
      %p54 = scmp.ge.s32.totalorder %s53, 4
      %s63 = sphi 0, %s65
      %s66 = sphi 0, %s63
      %s67 = sphi 0, %s66
      %s83 = sphi 0, %s67
      %s89 = sphi 0, %s91
      %s92 = sphi 0, %s89
      %s93 = sphi 0, %s92
      %s109 = sphi 0, %s93
      %s115 = sphi 0, %s117
      %s118 = sphi 0, %s115
      %s119 = sphi 0, %s118
      %s135 = sphi 0, %s119
      %s141 = sphi 0, %s143
      %s144 = sphi 0, %s141
      %s145 = sphi 0, %s144
      %s161 = sphi 0, %s145
      %s167 = sphi 0, %s169
      %s170 = sphi 0, %s167
      %s171 = sphi 0, %s170
      %s187 = sphi 0, %s171
      %s193 = sphi 0, %s195
      %s196 = sphi 0, %s193
      %s197 = sphi 0, %s196
      %s213 = sphi 0, %s197
      %s219 = sphi 0, %s221
      %s222 = sphi 0, %s219
      %s223 = sphi 0, %s222
      %s239 = sphi 0, %s223
      %s243 = sphi 0, %s243
      %s245 = sphi 0, %s243
      %s246 = sphi 0, %s245
      %s260 = sphi 0, %s246
      %s264 = sphi 0, %s264
      %s266 = sphi 0, %s264
      %s267 = sphi 0, %s266
      %s281 = sphi 0, %s267
      %s285 = sphi 0, %s285
      %s287 = sphi 0, %s285
      %s288 = sphi 0, %s287
      %s302 = sphi 0, %s288
      %s306 = sphi 0, %s306
      %s308 = sphi 0, %s306
      %s309 = sphi 0, %s308
      %s323 = sphi 0, %s309
      %s327 = sphi 0, %s327
      %s329 = sphi 0, %s327
      %s330 = sphi 0, %s329
      %s344 = sphi 0, %s330
      %s348 = sphi 0, %s348
      %s350 = sphi 0, %s348
      %s351 = sphi 0, %s350
      %s365 = sphi 0, %s351
      %s369 = sphi 0, %s369
      %s371 = sphi 0, %s369
      %s372 = sphi 0, %s371
      %s386 = sphi 0, %s372
      %s390 = sphi 0, %s390
      %s392 = sphi 0, %s390
      %s393 = sphi 0, %s392
      %s407 = sphi 0, %s393
      %s411 = sphi 0, %s411
      %s413 = sphi 0, %s411
      %s414 = sphi 0, %s413
      %s428 = sphi 0, %s414
      %s432 = sphi 0, %s432
      %s434 = sphi 0, %s432
      %s435 = sphi 0, %s434
      %s449 = sphi 0, %s435
      %s453 = sphi 0, %s453
      %s455 = sphi 0, %s453
      %s456 = sphi 0, %s455
      %s470 = sphi 0, %s456
      %s474 = sphi 0, %s474
      %s476 = sphi 0, %s474
      %s477 = sphi 0, %s476
      %s491 = sphi 0, %s477
      %s495 = sphi 0, %s495
      %s497 = sphi 0, %s495
      %s498 = sphi 0, %s497
      %s512 = sphi 0, %s498
      %s516 = sphi 0, %s516
      %s518 = sphi 0, %s516
      %s519 = sphi 0, %s518
      %s533 = sphi 0, %s519
      %s539 = sphi 0, %s541
      %s542 = sphi 0, %s539
      %s543 = sphi 0, %s542
      %s559 = sphi 0, %s543
      %s565 = sphi 0, %s567
      %s568 = sphi 0, %s565
      %s569 = sphi 0, %s568
      %s585 = sphi 0, %s569
    $region4: #{tpu_custom_call.1} parent=1 // loop_header_branch
      %56 = sbr.rel (%p54) target = $region8
    $region5: #{tpu_custom_call.1} parent=1 // loop_body
      %s58 = ssub.s32 %s53, 1
      %s59 = ssub.s32 %s53, 2
      %s60 = sadd.s32 %s53, 1
      %s61 = ssub.s32 %s53, %s60
      %p62 = scmp.eq.s32.totalorder %s61, 0
      %s64 = sadd.s32 %s63, 1
      %s65 = scalar_select %p62, %s63, %s64
      %p68 = pneg %p62
      %p69 = scmp.eq.s32.totalorder %s53, 1
      %p70 = por %p68, %p69
      %p71 = scmp.ne.s32.totalorder %s63, %s66
      %p72 = scmp.eq.s32.totalorder %s53, 0
      %p73 = por %p71, %p72
      %p74 = scmp.ne.s32.totalorder %s63, %s66
      %p75 = scmp.eq.s32.totalorder %s58, 1
      %p76 = por %p74, %p75
      %p77 = scmp.ne.s32.totalorder %s66, %s67
      %p78 = scmp.eq.s32.totalorder %s58, 0
      %p79 = por %p77, %p78
      %p80 = scmp.ne.s32.totalorder %s66, %s67
      %p81 = scmp.eq.s32.totalorder %s59, 1
      %p82 = por %p80, %p81
      %p84 = scmp.ne.s32.totalorder %s67, %s83
      %p85 = scmp.eq.s32.totalorder %s59, 0
      %p86 = por %p84, %p85
      %s87 = ssub.s32 %s53, %s60
      %p88 = scmp.eq.s32.totalorder %s87, 0
      %s90 = sadd.s32 %s89, 1
      %s91 = scalar_select %p88, %s89, %s90
      %p94 = pneg %p88
      %p95 = scmp.eq.s32.totalorder %s53, 1
      %p96 = por %p94, %p95
      %p97 = scmp.ne.s32.totalorder %s89, %s92
      %p98 = scmp.eq.s32.totalorder %s53, 0
      %p99 = por %p97, %p98
      %p100 = scmp.ne.s32.totalorder %s89, %s92
      %p101 = scmp.eq.s32.totalorder %s58, 1
      %p102 = por %p100, %p101
      %p103 = scmp.ne.s32.totalorder %s92, %s93
      %p104 = scmp.eq.s32.totalorder %s58, 0
      %p105 = por %p103, %p104
      %p106 = scmp.ne.s32.totalorder %s92, %s93
      %p107 = scmp.eq.s32.totalorder %s59, 1
      %p108 = por %p106, %p107
      %p110 = scmp.ne.s32.totalorder %s93, %s109
      %p111 = scmp.eq.s32.totalorder %s59, 0
      %p112 = por %p110, %p111
      %s113 = ssub.s32 %s53, %s60
      %p114 = scmp.eq.s32.totalorder %s113, 0
      %s116 = sadd.s32 %s115, 1
      %s117 = scalar_select %p114, %s115, %s116
      %p120 = pneg %p114
      %p121 = scmp.eq.s32.totalorder %s53, 1
      %p122 = por %p120, %p121
      %p123 = scmp.ne.s32.totalorder %s115, %s118
      %p124 = scmp.eq.s32.totalorder %s53, 0
      %p125 = por %p123, %p124
      %p126 = scmp.ne.s32.totalorder %s115, %s118
      %p127 = scmp.eq.s32.totalorder %s58, 1
      %p128 = por %p126, %p127
      %p129 = scmp.ne.s32.totalorder %s118, %s119
      %p130 = scmp.eq.s32.totalorder %s58, 0
      %p131 = por %p129, %p130
      %p132 = scmp.ne.s32.totalorder %s118, %s119
      %p133 = scmp.eq.s32.totalorder %s59, 1
      %p134 = por %p132, %p133
      %p136 = scmp.ne.s32.totalorder %s119, %s135
      %p137 = scmp.eq.s32.totalorder %s59, 0
      %p138 = por %p136, %p137
      %s139 = ssub.s32 %s53, %s60
      %p140 = scmp.eq.s32.totalorder %s139, 0
      %s142 = sadd.s32 %s141, 1
      %s143 = scalar_select %p140, %s141, %s142
      %p146 = pneg %p140
      %p147 = scmp.eq.s32.totalorder %s53, 1
      %p148 = por %p146, %p147
      %p149 = scmp.ne.s32.totalorder %s141, %s144
      %p150 = scmp.eq.s32.totalorder %s53, 0
      %p151 = por %p149, %p150
      %p152 = scmp.ne.s32.totalorder %s141, %s144
      %p153 = scmp.eq.s32.totalorder %s58, 1
      %p154 = por %p152, %p153
      %p155 = scmp.ne.s32.totalorder %s144, %s145
      %p156 = scmp.eq.s32.totalorder %s58, 0
      %p157 = por %p155, %p156
      %p158 = scmp.ne.s32.totalorder %s144, %s145
      %p159 = scmp.eq.s32.totalorder %s59, 1
      %p160 = por %p158, %p159
      %p162 = scmp.ne.s32.totalorder %s145, %s161
      %p163 = scmp.eq.s32.totalorder %s59, 0
      %p164 = por %p162, %p163
      %s165 = ssub.s32 %s53, %s60
      %p166 = scmp.eq.s32.totalorder %s165, 0
      %s168 = sadd.s32 %s167, 1
      %s169 = scalar_select %p166, %s167, %s168
      %p172 = pneg %p166
      %p173 = scmp.eq.s32.totalorder %s53, 1
      %p174 = por %p172, %p173
      %p175 = scmp.ne.s32.totalorder %s167, %s170
      %p176 = scmp.eq.s32.totalorder %s53, 0
      %p177 = por %p175, %p176
      %p178 = scmp.ne.s32.totalorder %s167, %s170
      %p179 = scmp.eq.s32.totalorder %s58, 1
      %p180 = por %p178, %p179
      %p181 = scmp.ne.s32.totalorder %s170, %s171
      %p182 = scmp.eq.s32.totalorder %s58, 0
      %p183 = por %p181, %p182
      %p184 = scmp.ne.s32.totalorder %s170, %s171
      %p185 = scmp.eq.s32.totalorder %s59, 1
      %p186 = por %p184, %p185
      %p188 = scmp.ne.s32.totalorder %s171, %s187
      %p189 = scmp.eq.s32.totalorder %s59, 0
      %p190 = por %p188, %p189
      %s191 = ssub.s32 %s53, %s60
      %p192 = scmp.eq.s32.totalorder %s191, 0
      %s194 = sadd.s32 %s193, 1
      %s195 = scalar_select %p192, %s193, %s194
      %p198 = pneg %p192
      %p199 = scmp.eq.s32.totalorder %s53, 1
      %p200 = por %p198, %p199
      %p201 = scmp.ne.s32.totalorder %s193, %s196
      %p202 = scmp.eq.s32.totalorder %s53, 0
      %p203 = por %p201, %p202
      %p204 = scmp.ne.s32.totalorder %s193, %s196
      %p205 = scmp.eq.s32.totalorder %s58, 1
      %p206 = por %p204, %p205
      %p207 = scmp.ne.s32.totalorder %s196, %s197
      %p208 = scmp.eq.s32.totalorder %s58, 0
      %p209 = por %p207, %p208
      %p210 = scmp.ne.s32.totalorder %s196, %s197
      %p211 = scmp.eq.s32.totalorder %s59, 1
      %p212 = por %p210, %p211
      %p214 = scmp.ne.s32.totalorder %s197, %s213
      %p215 = scmp.eq.s32.totalorder %s59, 0
      %p216 = por %p214, %p215
      %s217 = ssub.s32 %s53, %s60
      %p218 = scmp.eq.s32.totalorder %s217, 0
      %s220 = sadd.s32 %s219, 1
      %s221 = scalar_select %p218, %s219, %s220
      %p224 = pneg %p218
      %p225 = scmp.eq.s32.totalorder %s53, 1
      %p226 = por %p224, %p225
      %p227 = scmp.ne.s32.totalorder %s219, %s222
      %p228 = scmp.eq.s32.totalorder %s53, 0
      %p229 = por %p227, %p228
      %p230 = scmp.ne.s32.totalorder %s219, %s222
      %p231 = scmp.eq.s32.totalorder %s58, 1
      %p232 = por %p230, %p231
      %p233 = scmp.ne.s32.totalorder %s222, %s223
      %p234 = scmp.eq.s32.totalorder %s58, 0
      %p235 = por %p233, %p234
      %p236 = scmp.ne.s32.totalorder %s222, %s223
      %p237 = scmp.eq.s32.totalorder %s59, 1
      %p238 = por %p236, %p237
      %p240 = scmp.ne.s32.totalorder %s223, %s239
      %p241 = scmp.eq.s32.totalorder %s59, 0
      %p242 = por %p240, %p241
      %s244 = sadd.s32 %s243, 1
      %p247 = scmp.eq.s32.totalorder %s53, 1
      %p248 = scmp.ne.s32.totalorder %s243, %s245
      %p249 = scmp.eq.s32.totalorder %s53, 0
      %p250 = por %p248, %p249
      %p251 = scmp.ne.s32.totalorder %s243, %s245
      %p252 = scmp.eq.s32.totalorder %s58, 1
      %p253 = por %p251, %p252
      %p254 = scmp.ne.s32.totalorder %s245, %s246
      %p255 = scmp.eq.s32.totalorder %s58, 0
      %p256 = por %p254, %p255
      %p257 = scmp.ne.s32.totalorder %s245, %s246
      %p258 = scmp.eq.s32.totalorder %s59, 1
      %p259 = por %p257, %p258
      %p261 = scmp.ne.s32.totalorder %s246, %s260
      %p262 = scmp.eq.s32.totalorder %s59, 0
      %p263 = por %p261, %p262
      %s265 = sadd.s32 %s264, 1
      %p268 = scmp.eq.s32.totalorder %s53, 1
      %p269 = scmp.ne.s32.totalorder %s264, %s266
      %p270 = scmp.eq.s32.totalorder %s53, 0
      %p271 = por %p269, %p270
      %p272 = scmp.ne.s32.totalorder %s264, %s266
      %p273 = scmp.eq.s32.totalorder %s58, 1
      %p274 = por %p272, %p273
      %p275 = scmp.ne.s32.totalorder %s266, %s267
      %p276 = scmp.eq.s32.totalorder %s58, 0
      %p277 = por %p275, %p276
      %p278 = scmp.ne.s32.totalorder %s266, %s267
      %p279 = scmp.eq.s32.totalorder %s59, 1
      %p280 = por %p278, %p279
      %p282 = scmp.ne.s32.totalorder %s267, %s281
      %p283 = scmp.eq.s32.totalorder %s59, 0
      %p284 = por %p282, %p283
      %s286 = sadd.s32 %s285, 1
      %p289 = scmp.eq.s32.totalorder %s53, 1
      %p290 = scmp.ne.s32.totalorder %s285, %s287
      %p291 = scmp.eq.s32.totalorder %s53, 0
      %p292 = por %p290, %p291
      %p293 = scmp.ne.s32.totalorder %s285, %s287
      %p294 = scmp.eq.s32.totalorder %s58, 1
      %p295 = por %p293, %p294
      %p296 = scmp.ne.s32.totalorder %s287, %s288
      %p297 = scmp.eq.s32.totalorder %s58, 0
      %p298 = por %p296, %p297
      %p299 = scmp.ne.s32.totalorder %s287, %s288
      %p300 = scmp.eq.s32.totalorder %s59, 1
      %p301 = por %p299, %p300
      %p303 = scmp.ne.s32.totalorder %s288, %s302
      %p304 = scmp.eq.s32.totalorder %s59, 0
      %p305 = por %p303, %p304
      %s307 = sadd.s32 %s306, 1
      %p310 = scmp.eq.s32.totalorder %s53, 1
      %p311 = scmp.ne.s32.totalorder %s306, %s308
      %p312 = scmp.eq.s32.totalorder %s53, 0
      %p313 = por %p311, %p312
      %p314 = scmp.ne.s32.totalorder %s306, %s308
      %p315 = scmp.eq.s32.totalorder %s58, 1
      %p316 = por %p314, %p315
      %p317 = scmp.ne.s32.totalorder %s308, %s309
      %p318 = scmp.eq.s32.totalorder %s58, 0
      %p319 = por %p317, %p318
      %p320 = scmp.ne.s32.totalorder %s308, %s309
      %p321 = scmp.eq.s32.totalorder %s59, 1
      %p322 = por %p320, %p321
      %p324 = scmp.ne.s32.totalorder %s309, %s323
      %p325 = scmp.eq.s32.totalorder %s59, 0
      %p326 = por %p324, %p325
      %s328 = sadd.s32 %s327, 1
      %p331 = scmp.eq.s32.totalorder %s53, 1
      %p332 = scmp.ne.s32.totalorder %s327, %s329
      %p333 = scmp.eq.s32.totalorder %s53, 0
      %p334 = por %p332, %p333
      %p335 = scmp.ne.s32.totalorder %s327, %s329
      %p336 = scmp.eq.s32.totalorder %s58, 1
      %p337 = por %p335, %p336
      %p338 = scmp.ne.s32.totalorder %s329, %s330
      %p339 = scmp.eq.s32.totalorder %s58, 0
      %p340 = por %p338, %p339
      %p341 = scmp.ne.s32.totalorder %s329, %s330
      %p342 = scmp.eq.s32.totalorder %s59, 1
      %p343 = por %p341, %p342
      %p345 = scmp.ne.s32.totalorder %s330, %s344
      %p346 = scmp.eq.s32.totalorder %s59, 0
      %p347 = por %p345, %p346
      %s349 = sadd.s32 %s348, 1
      %p352 = scmp.eq.s32.totalorder %s53, 1
      %p353 = scmp.ne.s32.totalorder %s348, %s350
      %p354 = scmp.eq.s32.totalorder %s53, 0
      %p355 = por %p353, %p354
      %p356 = scmp.ne.s32.totalorder %s348, %s350
      %p357 = scmp.eq.s32.totalorder %s58, 1
      %p358 = por %p356, %p357
      %p359 = scmp.ne.s32.totalorder %s350, %s351
      %p360 = scmp.eq.s32.totalorder %s58, 0
      %p361 = por %p359, %p360
      %p362 = scmp.ne.s32.totalorder %s350, %s351
      %p363 = scmp.eq.s32.totalorder %s59, 1
      %p364 = por %p362, %p363
      %p366 = scmp.ne.s32.totalorder %s351, %s365
      %p367 = scmp.eq.s32.totalorder %s59, 0
      %p368 = por %p366, %p367
      %s370 = sadd.s32 %s369, 1
      %p373 = scmp.eq.s32.totalorder %s53, 1
      %p374 = scmp.ne.s32.totalorder %s369, %s371
      %p375 = scmp.eq.s32.totalorder %s53, 0
      %p376 = por %p374, %p375
      %p377 = scmp.ne.s32.totalorder %s369, %s371
      %p378 = scmp.eq.s32.totalorder %s58, 1
      %p379 = por %p377, %p378
      %p380 = scmp.ne.s32.totalorder %s371, %s372
      %p381 = scmp.eq.s32.totalorder %s58, 0
      %p382 = por %p380, %p381
      %p383 = scmp.ne.s32.totalorder %s371, %s372
      %p384 = scmp.eq.s32.totalorder %s59, 1
      %p385 = por %p383, %p384
      %p387 = scmp.ne.s32.totalorder %s372, %s386
      %p388 = scmp.eq.s32.totalorder %s59, 0
      %p389 = por %p387, %p388
      %s391 = sadd.s32 %s390, 1
      %p394 = scmp.eq.s32.totalorder %s53, 1
      %p395 = scmp.ne.s32.totalorder %s390, %s392
      %p396 = scmp.eq.s32.totalorder %s53, 0
      %p397 = por %p395, %p396
      %p398 = scmp.ne.s32.totalorder %s390, %s392
      %p399 = scmp.eq.s32.totalorder %s58, 1
      %p400 = por %p398, %p399
      %p401 = scmp.ne.s32.totalorder %s392, %s393
      %p402 = scmp.eq.s32.totalorder %s58, 0
      %p403 = por %p401, %p402
      %p404 = scmp.ne.s32.totalorder %s392, %s393
      %p405 = scmp.eq.s32.totalorder %s59, 1
      %p406 = por %p404, %p405
      %p408 = scmp.ne.s32.totalorder %s393, %s407
      %p409 = scmp.eq.s32.totalorder %s59, 0
      %p410 = por %p408, %p409
      %s412 = sadd.s32 %s411, 1
      %p415 = scmp.eq.s32.totalorder %s53, 1
      %p416 = scmp.ne.s32.totalorder %s411, %s413
      %p417 = scmp.eq.s32.totalorder %s53, 0
      %p418 = por %p416, %p417
      %p419 = scmp.ne.s32.totalorder %s411, %s413
      %p420 = scmp.eq.s32.totalorder %s58, 1
      %p421 = por %p419, %p420
      %p422 = scmp.ne.s32.totalorder %s413, %s414
      %p423 = scmp.eq.s32.totalorder %s58, 0
      %p424 = por %p422, %p423
      %p425 = scmp.ne.s32.totalorder %s413, %s414
      %p426 = scmp.eq.s32.totalorder %s59, 1
      %p427 = por %p425, %p426
      %p429 = scmp.ne.s32.totalorder %s414, %s428
      %p430 = scmp.eq.s32.totalorder %s59, 0
      %p431 = por %p429, %p430
      %s433 = sadd.s32 %s432, 1
      %p436 = scmp.eq.s32.totalorder %s53, 1
      %p437 = scmp.ne.s32.totalorder %s432, %s434
      %p438 = scmp.eq.s32.totalorder %s53, 0
      %p439 = por %p437, %p438
      %p440 = scmp.ne.s32.totalorder %s432, %s434
      %p441 = scmp.eq.s32.totalorder %s58, 1
      %p442 = por %p440, %p441
      %p443 = scmp.ne.s32.totalorder %s434, %s435
      %p444 = scmp.eq.s32.totalorder %s58, 0
      %p445 = por %p443, %p444
      %p446 = scmp.ne.s32.totalorder %s434, %s435
      %p447 = scmp.eq.s32.totalorder %s59, 1
      %p448 = por %p446, %p447
      %p450 = scmp.ne.s32.totalorder %s435, %s449
      %p451 = scmp.eq.s32.totalorder %s59, 0
      %p452 = por %p450, %p451
      %s454 = sadd.s32 %s453, 1
      %p457 = scmp.eq.s32.totalorder %s53, 1
      %p458 = scmp.ne.s32.totalorder %s453, %s455
      %p459 = scmp.eq.s32.totalorder %s53, 0
      %p460 = por %p458, %p459
      %p461 = scmp.ne.s32.totalorder %s453, %s455
      %p462 = scmp.eq.s32.totalorder %s58, 1
      %p463 = por %p461, %p462
      %p464 = scmp.ne.s32.totalorder %s455, %s456
      %p465 = scmp.eq.s32.totalorder %s58, 0
      %p466 = por %p464, %p465
      %p467 = scmp.ne.s32.totalorder %s455, %s456
      %p468 = scmp.eq.s32.totalorder %s59, 1
      %p469 = por %p467, %p468
      %p471 = scmp.ne.s32.totalorder %s456, %s470
      %p472 = scmp.eq.s32.totalorder %s59, 0
      %p473 = por %p471, %p472
      %s475 = sadd.s32 %s474, 1
      %p478 = scmp.eq.s32.totalorder %s53, 1
      %p479 = scmp.ne.s32.totalorder %s474, %s476
      %p480 = scmp.eq.s32.totalorder %s53, 0
      %p481 = por %p479, %p480
      %p482 = scmp.ne.s32.totalorder %s474, %s476
      %p483 = scmp.eq.s32.totalorder %s58, 1
      %p484 = por %p482, %p483
      %p485 = scmp.ne.s32.totalorder %s476, %s477
      %p486 = scmp.eq.s32.totalorder %s58, 0
      %p487 = por %p485, %p486
      %p488 = scmp.ne.s32.totalorder %s476, %s477
      %p489 = scmp.eq.s32.totalorder %s59, 1
      %p490 = por %p488, %p489
      %p492 = scmp.ne.s32.totalorder %s477, %s491
      %p493 = scmp.eq.s32.totalorder %s59, 0
      %p494 = por %p492, %p493
      %s496 = sadd.s32 %s495, 1
      %p499 = scmp.eq.s32.totalorder %s53, 1
      %p500 = scmp.ne.s32.totalorder %s495, %s497
      %p501 = scmp.eq.s32.totalorder %s53, 0
      %p502 = por %p500, %p501
      %p503 = scmp.ne.s32.totalorder %s495, %s497
      %p504 = scmp.eq.s32.totalorder %s58, 1
      %p505 = por %p503, %p504
      %p506 = scmp.ne.s32.totalorder %s497, %s498
      %p507 = scmp.eq.s32.totalorder %s58, 0
      %p508 = por %p506, %p507
      %p509 = scmp.ne.s32.totalorder %s497, %s498
      %p510 = scmp.eq.s32.totalorder %s59, 1
      %p511 = por %p509, %p510
      %p513 = scmp.ne.s32.totalorder %s498, %s512
      %p514 = scmp.eq.s32.totalorder %s59, 0
      %p515 = por %p513, %p514
      %s517 = sadd.s32 %s516, 1
      %p520 = scmp.eq.s32.totalorder %s53, 1
      %p521 = scmp.ne.s32.totalorder %s516, %s518
      %p522 = scmp.eq.s32.totalorder %s53, 0
      %p523 = por %p521, %p522
      %p524 = scmp.ne.s32.totalorder %s516, %s518
      %p525 = scmp.eq.s32.totalorder %s58, 1
      %p526 = por %p524, %p525
      %p527 = scmp.ne.s32.totalorder %s518, %s519
      %p528 = scmp.eq.s32.totalorder %s58, 0
      %p529 = por %p527, %p528
      %p530 = scmp.ne.s32.totalorder %s518, %s519
      %p531 = scmp.eq.s32.totalorder %s59, 1
      %p532 = por %p530, %p531
      %p534 = scmp.ne.s32.totalorder %s519, %s533
      %p535 = scmp.eq.s32.totalorder %s59, 0
      %p536 = por %p534, %p535
      %s537 = ssub.s32 %s53, %s60
      %p538 = scmp.eq.s32.totalorder %s537, 0
      %s540 = sadd.s32 %s539, 1
      %s541 = scalar_select %p538, %s539, %s540
      %p544 = pneg %p538
      %p545 = scmp.eq.s32.totalorder %s53, 1
      %p546 = por %p544, %p545
      %p547 = scmp.ne.s32.totalorder %s539, %s542
      %p548 = scmp.eq.s32.totalorder %s53, 0
      %p549 = por %p547, %p548
      %p550 = scmp.ne.s32.totalorder %s539, %s542
      %p551 = scmp.eq.s32.totalorder %s58, 1
      %p552 = por %p550, %p551
      %p553 = scmp.ne.s32.totalorder %s542, %s543
      %p554 = scmp.eq.s32.totalorder %s58, 0
      %p555 = por %p553, %p554
      %p556 = scmp.ne.s32.totalorder %s542, %s543
      %p557 = scmp.eq.s32.totalorder %s59, 1
      %p558 = por %p556, %p557
      %p560 = scmp.ne.s32.totalorder %s543, %s559
      %p561 = scmp.eq.s32.totalorder %s59, 0
      %p562 = por %p560, %p561
      %s563 = ssub.s32 %s53, %s60
      %p564 = scmp.eq.s32.totalorder %s563, 0
      %s566 = sadd.s32 %s565, 1
      %s567 = scalar_select %p564, %s565, %s566
      %p570 = pneg %p564
      %p571 = scmp.eq.s32.totalorder %s53, 1
      %p572 = por %p570, %p571
      %p573 = scmp.ne.s32.totalorder %s565, %s568
      %p574 = scmp.eq.s32.totalorder %s53, 0
      %p575 = por %p573, %p574
      %p576 = scmp.ne.s32.totalorder %s565, %s568
      %p577 = scmp.eq.s32.totalorder %s58, 1
      %p578 = por %p576, %p577
      %p579 = scmp.ne.s32.totalorder %s568, %s569
      %p580 = scmp.eq.s32.totalorder %s58, 0
      %p581 = por %p579, %p580
      %p582 = scmp.ne.s32.totalorder %s568, %s569
      %p583 = scmp.eq.s32.totalorder %s59, 1
      %p584 = por %p582, %p583
      %p586 = scmp.ne.s32.totalorder %s569, %s585
      %p587 = scmp.eq.s32.totalorder %s59, 0
      %p588 = por %p586, %p587
      %p589 = scmp.le.s32.totalorder 1, %s53
      %p590 = scmp.lt.s32.totalorder %s53, 3
      %p591 = pnand %p589, %p590
      %p592 = pneg %p591
      // Predicated region
      $region9: #{tpu_custom_call.1} parent=5 // pred_check
        _
      $region10: #{tpu_custom_call.1} parent=5 // pred_check_branch
        %594 = sbr.rel (%p591) target = $region12
      $region11: #{tpu_custom_call.1} parent=5 // pred_region
        %s595 = ssub.s32 %s53, 1
        // Predicated region
        $region13: #{tpu_custom_call.1} parent=11 // pred_check
          %p596 = pneg %p256
        $region14: #{tpu_custom_call.1} parent=11 // pred_check_branch
          %598 = sbr.rel (%p596) target = $region16
        $region15: #{tpu_custom_call.1} parent=11 // pred_region
          %600 = vsyncadd [#allocation12], 0
          %s601 = sshll.u32 %s7, 4
          %s602 = int_to_ptr.hbm [resolvable:$true] %s601
          %s603 = sshll.u32 [#allocation13], 4
          %s604 = int_to_ptr.vmem [resolvable:$true] %s603
          %609 = dma.hbm_to_vmem [thread:$0]  %s602, 3072, %s604, [#allocation12], 192, 192, 12
        $region16: #{tpu_custom_call.1} parent=11 // pred_fallthru
          _
        // Predicated region
        $region17: #{tpu_custom_call.1} parent=11 // pred_check
          %p610 = pneg %p277
        $region18: #{tpu_custom_call.1} parent=11 // pred_check_branch
          %612 = sbr.rel (%p610) target = $region20
        $region19: #{tpu_custom_call.1} parent=11 // pred_region
          %614 = vsyncadd [#allocation15], 0
          %s615 = sshll.u32 %s8, 4
          %s616 = int_to_ptr.hbm [resolvable:$true] %s615
          %s617 = sshll.u32 [#allocation14], 4
          %s618 = int_to_ptr.vmem [resolvable:$true] %s617
          %623 = dma.hbm_to_vmem [thread:$0]  %s616, 3072, %s618, [#allocation15], 192, 192, 12
        $region20: #{tpu_custom_call.1} parent=11 // pred_fallthru
          _
        // Predicated region
        $region21: #{tpu_custom_call.1} parent=11 // pred_check
          %p624 = pneg %p298
        $region22: #{tpu_custom_call.1} parent=11 // pred_check_branch
          %626 = sbr.rel (%p624) target = $region24
        $region23: #{tpu_custom_call.1} parent=11 // pred_region
          %628 = vsyncadd [#allocation15], 0
          %s629 = sshll.u32 %s9, 4
          %s630 = int_to_ptr.hbm [resolvable:$true] %s629
          %s631 = sshll.u32 [#allocation16], 4
          %s632 = int_to_ptr.vmem [resolvable:$true] %s631
          %637 = dma.hbm_to_vmem [thread:$0]  %s630, 3072, %s632, [#allocation15], 192, 192, 12
        $region24: #{tpu_custom_call.1} parent=11 // pred_fallthru
          _
        // Predicated region
        $region25: #{tpu_custom_call.1} parent=11 // pred_check
          %p638 = pneg %p319
        $region26: #{tpu_custom_call.1} parent=11 // pred_check_branch
          %640 = sbr.rel (%p638) target = $region28
        $region27: #{tpu_custom_call.1} parent=11 // pred_region
          %642 = vsyncadd [#allocation18], 0
          %s643 = sshll.u32 %s10, 4
          %s644 = int_to_ptr.hbm [resolvable:$true] %s643
          %s645 = sshll.u32 [#allocation17], 4
          %s646 = int_to_ptr.vmem [resolvable:$true] %s645
          %651 = dma.hbm_to_vmem [thread:$0]  %s644, 6144, %s646, [#allocation18], 128, 128, 8
        $region28: #{tpu_custom_call.1} parent=11 // pred_fallthru
          _
        // Predicated region
        $region29: #{tpu_custom_call.1} parent=11 // pred_check
          %p652 = pneg %p340
        $region30: #{tpu_custom_call.1} parent=11 // pred_check_branch
          %654 = sbr.rel (%p652) target = $region32
        $region31: #{tpu_custom_call.1} parent=11 // pred_region
          %656 = vsyncadd [#allocation18], 0
          %s657 = sshll.u32 %s11, 4
          %s658 = int_to_ptr.hbm [resolvable:$true] %s657
          %s659 = sshll.u32 [#allocation19], 4
          %s660 = int_to_ptr.vmem [resolvable:$true] %s659
          %665 = dma.hbm_to_vmem [thread:$0]  %s658, 2048, %s660, [#allocation18], 64, 64, 4
        $region32: #{tpu_custom_call.1} parent=11 // pred_fallthru
          _
        // Predicated region
        $region33: #{tpu_custom_call.1} parent=11 // pred_check
          %p666 = pneg %p361
        $region34: #{tpu_custom_call.1} parent=11 // pred_check_branch
          %668 = sbr.rel (%p666) target = $region36
        $region35: #{tpu_custom_call.1} parent=11 // pred_region
          _
        $region36: #{tpu_custom_call.1} parent=11 // pred_fallthru
          _
        // Predicated region
        $region37: #{tpu_custom_call.1} parent=11 // pred_check
          %p669 = pneg %p382
        $region38: #{tpu_custom_call.1} parent=11 // pred_check_branch
          %671 = sbr.rel (%p669) target = $region40
        $region39: #{tpu_custom_call.1} parent=11 // pred_region
          %673 = vsyncadd [#allocation21], 0
          %s674 = sshll.u32 %s13, 4
          %s675 = int_to_ptr.hbm [resolvable:$true] %s674
          %s676 = sshll.u32 [#allocation20], 4
          %s677 = int_to_ptr.vmem [resolvable:$true] %s676
          %682 = dma.hbm_to_vmem [thread:$0]  %s675, 3072, %s677, [#allocation21], 192, 192, 12
        $region40: #{tpu_custom_call.1} parent=11 // pred_fallthru
          _
        // Predicated region
        $region41: #{tpu_custom_call.1} parent=11 // pred_check
          %p683 = pneg %p403
        $region42: #{tpu_custom_call.1} parent=11 // pred_check_branch
          %685 = sbr.rel (%p683) target = $region44
        $region43: #{tpu_custom_call.1} parent=11 // pred_region
          %687 = vsyncadd [#allocation21], 0
          %s688 = sshll.u32 %s14, 4
          %s689 = int_to_ptr.hbm [resolvable:$true] %s688
          %s690 = sshll.u32 [#allocation22], 4
          %s691 = int_to_ptr.vmem [resolvable:$true] %s690
          %696 = dma.hbm_to_vmem [thread:$0]  %s689, 3072, %s691, [#allocation21], 192, 192, 12
        $region44: #{tpu_custom_call.1} parent=11 // pred_fallthru
          _
        // Predicated region
        $region45: #{tpu_custom_call.1} parent=11 // pred_check
          %p697 = pneg %p424
        $region46: #{tpu_custom_call.1} parent=11 // pred_check_branch
          %699 = sbr.rel (%p697) target = $region48
        $region47: #{tpu_custom_call.1} parent=11 // pred_region
          %701 = vsyncadd [#allocation24], 0
          %s702 = sshll.u32 %s15, 4
          %s703 = int_to_ptr.hbm [resolvable:$true] %s702
          %s704 = sshll.u32 [#allocation23], 4
          %s705 = int_to_ptr.vmem [resolvable:$true] %s704
          %710 = dma.hbm_to_vmem [thread:$0]  %s703, 3072, %s705, [#allocation24], 192, 192, 12
        $region48: #{tpu_custom_call.1} parent=11 // pred_fallthru
          _
        // Predicated region
        $region49: #{tpu_custom_call.1} parent=11 // pred_check
          %p711 = pneg %p445
        $region50: #{tpu_custom_call.1} parent=11 // pred_check_branch
          %713 = sbr.rel (%p711) target = $region52
        $region51: #{tpu_custom_call.1} parent=11 // pred_region
          %715 = vsyncadd [#allocation24], 0
          %s716 = sshll.u32 %s16, 4
          %s717 = int_to_ptr.hbm [resolvable:$true] %s716
          %s718 = sshll.u32 [#allocation25], 4
          %s719 = int_to_ptr.vmem [resolvable:$true] %s718
          %724 = dma.hbm_to_vmem [thread:$0]  %s717, 6144, %s719, [#allocation24], 128, 128, 8
        $region52: #{tpu_custom_call.1} parent=11 // pred_fallthru
          _
        // Predicated region
        $region53: #{tpu_custom_call.1} parent=11 // pred_check
          %p725 = pneg %p466
        $region54: #{tpu_custom_call.1} parent=11 // pred_check_branch
          %727 = sbr.rel (%p725) target = $region56
        $region55: #{tpu_custom_call.1} parent=11 // pred_region
          %729 = vsyncadd [#allocation27], 0
          %s730 = sshll.u32 %s17, 4
          %s731 = int_to_ptr.hbm [resolvable:$true] %s730
          %s732 = sshll.u32 [#allocation26], 4
          %s733 = int_to_ptr.vmem [resolvable:$true] %s732
          %738 = dma.hbm_to_vmem [thread:$0]  %s731, 2048, %s733, [#allocation27], 64, 64, 4
        $region56: #{tpu_custom_call.1} parent=11 // pred_fallthru
          _
        // Predicated region
        $region57: #{tpu_custom_call.1} parent=11 // pred_check
          %p739 = pneg %p487
        $region58: #{tpu_custom_call.1} parent=11 // pred_check_branch
          %741 = sbr.rel (%p739) target = $region60
        $region59: #{tpu_custom_call.1} parent=11 // pred_region
          %743 = vsyncadd [#allocation27], 0
          %s744 = sshll.u32 %s18, 4
          %s745 = int_to_ptr.hbm [resolvable:$true] %s744
          %s746 = sshll.u32 [#allocation28], 4
          %s747 = int_to_ptr.vmem [resolvable:$true] %s746
          %752 = dma.hbm_to_vmem [thread:$0]  %s745, 1024, %s747, [#allocation27], 64, 64, 4
        $region60: #{tpu_custom_call.1} parent=11 // pred_fallthru
          _
        // Predicated region
        $region61: #{tpu_custom_call.1} parent=11 // pred_check
          %p753 = pneg %p508
        $region62: #{tpu_custom_call.1} parent=11 // pred_check_branch
          %755 = sbr.rel (%p753) target = $region64
        $region63: #{tpu_custom_call.1} parent=11 // pred_region
          %757 = vsyncadd [#allocation30], 0
          %s759 = sshll.u32 %s19, 4
          %s760 = int_to_ptr.hbm [resolvable:$true] %s759
          %s761 = sshll.u32 [#allocation29], 4
          %s762 = int_to_ptr.vmem [resolvable:$true] %s761
          %764 = dma.hbm_to_vmem [thread:$0]  %s760, 64, %s762, [#allocation30]
        $region64: #{tpu_custom_call.1} parent=11 // pred_fallthru
          _
        // Predicated region
        $region65: #{tpu_custom_call.1} parent=11 // pred_check
          %p765 = pneg %p529
        $region66: #{tpu_custom_call.1} parent=11 // pred_check_branch
          %767 = sbr.rel (%p765) target = $region68
        $region67: #{tpu_custom_call.1} parent=11 // pred_region
          _
        $region68: #{tpu_custom_call.1} parent=11 // pred_fallthru
          _
      $region12: #{tpu_custom_call.1} parent=5 // pred_fallthru
        _
      %p768 = scmp.lt.s32.totalorder %s53, 2
      // Predicated region
      $region69: #{tpu_custom_call.1} parent=5 // pred_check
        %p769 = pneg %p768
      $region70: #{tpu_custom_call.1} parent=5 // pred_check_branch
        %771 = sbr.rel (%p769) target = $region72
      $region71: #{tpu_custom_call.1} parent=5 // pred_region
        // Predicated region
        $region73: #{tpu_custom_call.1} parent=71 // pred_check
          %p772 = pneg %p73
        $region74: #{tpu_custom_call.1} parent=71 // pred_check_branch
          %774 = sbr.rel (%p772) target = $region76
        $region75: #{tpu_custom_call.1} parent=71 // pred_region
          %s775 = sand.u32 %s63, 1
          %s776 = scalar_lea.sflag [#allocation3], %s775
          %s777 = sand.u32 %s63, 1
          %s778 = smul.addr %s777, 64
          %s779 = scalar_lea.vmem [#allocation2], %s778
          %s780 = smul.u32 16, %s53
          %782 = vsyncadd %s776, 0
          %s783 = smul.addr %s780, 4
          %s784 = scalar_lea.hbm %s0, %s783
          %s785 = sshll.u32 %s784, 4
          %s786 = int_to_ptr.hbm [resolvable:$true] %s785
          %s787 = sshll.u32 %s779, 4
          %s788 = int_to_ptr.vmem [resolvable:$true] %s787
          %793 = dma.hbm_to_vmem [thread:$0]  %s786, 1024, %s788, %s776, 64, 64, 4
        $region76: #{tpu_custom_call.1} parent=71 // pred_fallthru
          _
        // Predicated region
        $region77: #{tpu_custom_call.1} parent=71 // pred_check
          %p794 = pneg %p99
        $region78: #{tpu_custom_call.1} parent=71 // pred_check_branch
          %796 = sbr.rel (%p794) target = $region80
        $region79: #{tpu_custom_call.1} parent=71 // pred_region
          %s797 = sand.u32 %s53, 1
          %s798 = scalar_lea.sflag [#allocation6], %s797
          %s799 = sand.u32 %s89, 1
          %s800 = smul.addr %s799, 64
          %s801 = scalar_lea.vmem [#allocation5], %s800
          %s802 = smul.u32 16, %s53
          %804 = vsyncadd %s798, 0
          %s805 = smul.addr %s802, 4
          %s806 = scalar_lea.hbm %s1, %s805
          %s807 = sshll.u32 %s806, 4
          %s808 = int_to_ptr.hbm [resolvable:$true] %s807
          %s809 = sshll.u32 %s801, 4
          %s810 = int_to_ptr.vmem [resolvable:$true] %s809
          %815 = dma.hbm_to_vmem [thread:$0]  %s808, 1024, %s810, %s798, 64, 64, 4
        $region80: #{tpu_custom_call.1} parent=71 // pred_fallthru
          _
        // Predicated region
        $region81: #{tpu_custom_call.1} parent=71 // pred_check
          %p816 = pneg %p125
        $region82: #{tpu_custom_call.1} parent=71 // pred_check_branch
          %818 = sbr.rel (%p816) target = $region84
        $region83: #{tpu_custom_call.1} parent=71 // pred_region
          %s819 = sand.u32 %s53, 1
          %s820 = scalar_lea.sflag [#allocation6], %s819
          %s821 = sand.u32 %s115, 1
          %s822 = smul.addr %s821, 64
          %s823 = scalar_lea.vmem [#allocation7], %s822
          %s824 = smul.u32 16, %s53
          %826 = vsyncadd %s820, 0
          %s827 = smul.addr %s824, 4
          %s828 = scalar_lea.hbm %s2, %s827
          %s829 = sshll.u32 %s828, 4
          %s830 = int_to_ptr.hbm [resolvable:$true] %s829
          %s831 = sshll.u32 %s823, 4
          %s832 = int_to_ptr.vmem [resolvable:$true] %s831
          %837 = dma.hbm_to_vmem [thread:$0]  %s830, 1024, %s832, %s820, 64, 64, 4
        $region84: #{tpu_custom_call.1} parent=71 // pred_fallthru
          _
        // Predicated region
        $region85: #{tpu_custom_call.1} parent=71 // pred_check
          %p838 = pneg %p151
        $region86: #{tpu_custom_call.1} parent=71 // pred_check_branch
          %840 = sbr.rel (%p838) target = $region88
        $region87: #{tpu_custom_call.1} parent=71 // pred_region
          %s841 = sand.u32 %s53, 1
          %s842 = scalar_lea.sflag [#allocation9], %s841
          %s843 = sand.u32 %s141, 1
          %s844 = smul.addr %s843, 64
          %s845 = scalar_lea.vmem [#allocation8], %s844
          %s846 = smul.u32 16, %s53
          %848 = vsyncadd %s842, 0
          %s849 = smul.addr %s846, 4
          %s850 = scalar_lea.hbm %s3, %s849
          %s851 = sshll.u32 %s850, 4
          %s852 = int_to_ptr.hbm [resolvable:$true] %s851
          %s853 = sshll.u32 %s845, 4
          %s854 = int_to_ptr.vmem [resolvable:$true] %s853
          %859 = dma.hbm_to_vmem [thread:$0]  %s852, 1024, %s854, %s842, 64, 64, 4
        $region88: #{tpu_custom_call.1} parent=71 // pred_fallthru
          _
        // Predicated region
        $region89: #{tpu_custom_call.1} parent=71 // pred_check
          %p860 = pneg %p177
        $region90: #{tpu_custom_call.1} parent=71 // pred_check_branch
          %862 = sbr.rel (%p860) target = $region92
        $region91: #{tpu_custom_call.1} parent=71 // pred_region
          %s863 = sand.u32 %s53, 1
          %s864 = scalar_lea.sflag [#allocation9], %s863
          %s865 = sand.u32 %s167, 1
          %s866 = smul.addr %s865, 64
          %s867 = scalar_lea.vmem [#allocation10], %s866
          %s868 = smul.u32 16, %s53
          %870 = vsyncadd %s864, 0
          %s871 = smul.addr %s868, 4
          %s872 = scalar_lea.hbm %s4, %s871
          %s873 = sshll.u32 %s872, 4
          %s874 = int_to_ptr.hbm [resolvable:$true] %s873
          %s875 = sshll.u32 %s867, 4
          %s876 = int_to_ptr.vmem [resolvable:$true] %s875
          %881 = dma.hbm_to_vmem [thread:$0]  %s874, 1024, %s876, %s864, 64, 64, 4
        $region92: #{tpu_custom_call.1} parent=71 // pred_fallthru
          _
        // Predicated region
        $region93: #{tpu_custom_call.1} parent=71 // pred_check
          %p882 = pneg %p203
        $region94: #{tpu_custom_call.1} parent=71 // pred_check_branch
          %884 = sbr.rel (%p882) target = $region96
        $region95: #{tpu_custom_call.1} parent=71 // pred_region
          %s885 = sand.u32 %s53, 1
          %s886 = scalar_lea.sflag [#allocation12], %s885
          %s887 = sand.u32 %s193, 1
          %s888 = smul.addr %s887, 64
          %s889 = scalar_lea.vmem [#allocation11], %s888
          %s890 = smul.u32 16, %s53
          %892 = vsyncadd %s886, 0
          %s893 = smul.addr %s890, 4
          %s894 = scalar_lea.hbm %s5, %s893
          %s895 = sshll.u32 %s894, 4
          %s896 = int_to_ptr.hbm [resolvable:$true] %s895
          %s897 = sshll.u32 %s889, 4
          %s898 = int_to_ptr.vmem [resolvable:$true] %s897
          %903 = dma.hbm_to_vmem [thread:$0]  %s896, 1024, %s898, %s886, 64, 64, 4
        $region96: #{tpu_custom_call.1} parent=71 // pred_fallthru
          _
        // Predicated region
        $region97: #{tpu_custom_call.1} parent=71 // pred_check
          %p904 = pneg %p229
        $region98: #{tpu_custom_call.1} parent=71 // pred_check_branch
          %906 = sbr.rel (%p904) target = $region100
        $region99: #{tpu_custom_call.1} parent=71 // pred_region
          %s907 = smul.u32 16, %s53
          %p908 = scmp.lt.s32.totalorder %s907, 31
          %s909 = scalar_select %p908, %s907, 31
          %s910 = smul.addr %s909, 8
          %s911 = scalar_lea.vmem %s6, %s910
          %s912 = smul.u32 16, %s53
        $region100: #{tpu_custom_call.1} parent=71 // pred_fallthru
          _
      $region72: #{tpu_custom_call.1} parent=5 // pred_fallthru
        _
      %p913 = scmp.le.s32.totalorder 1, %s53
      %p914 = scmp.lt.s32.totalorder %s53, 3
      %p915 = pnand %p913, %p914
      %p916 = pneg %p915
      // Predicated region
      $region101: #{tpu_custom_call.1} parent=5 // pred_check
        _
      $region102: #{tpu_custom_call.1} parent=5 // pred_check_branch
        %918 = sbr.rel (%p915) target = $region104
      $region103: #{tpu_custom_call.1} parent=5 // pred_region
        %s919 = ssub.s32 %s53, 1
        %s920 = sand.u32 %s66, 1
        %s921 = scalar_lea.sflag [#allocation3], %s920
        %s922 = sand.u32 %s66, 1
        %s923 = smul.addr %s922, 64
        %s924 = scalar_lea.vmem [#allocation2], %s923
        // Predicated region
        $region105: #{tpu_custom_call.1} parent=103 // pred_check
          %p925 = pneg %p79
        $region106: #{tpu_custom_call.1} parent=103 // pred_check_branch
          %927 = sbr.rel (%p925) target = $region108
        $region107: #{tpu_custom_call.1} parent=103 // pred_region
          %929 = dma.done %s921, 1024
        $region108: #{tpu_custom_call.1} parent=103 // pred_fallthru
          _
        %s930 = sand.u32 %s58, 1
        %s931 = scalar_lea.sflag [#allocation6], %s930
        %s932 = sand.u32 %s92, 1
        %s933 = smul.addr %s932, 64
        %s934 = scalar_lea.vmem [#allocation5], %s933
        // Predicated region
        $region109: #{tpu_custom_call.1} parent=103 // pred_check
          %p935 = pneg %p105
        $region110: #{tpu_custom_call.1} parent=103 // pred_check_branch
          %937 = sbr.rel (%p935) target = $region112
        $region111: #{tpu_custom_call.1} parent=103 // pred_region
          %939 = dma.done %s931, 1024
        $region112: #{tpu_custom_call.1} parent=103 // pred_fallthru
          _
        %s940 = sand.u32 %s58, 1
        %s941 = scalar_lea.sflag [#allocation6], %s940
        %s942 = sand.u32 %s118, 1
        %s943 = smul.addr %s942, 64
        %s944 = scalar_lea.vmem [#allocation7], %s943
        // Predicated region
        $region113: #{tpu_custom_call.1} parent=103 // pred_check
          %p945 = pneg %p131
        $region114: #{tpu_custom_call.1} parent=103 // pred_check_branch
          %947 = sbr.rel (%p945) target = $region116
        $region115: #{tpu_custom_call.1} parent=103 // pred_region
          %949 = dma.done %s941, 1024
        $region116: #{tpu_custom_call.1} parent=103 // pred_fallthru
          _
        %s950 = sand.u32 %s58, 1
        %s951 = scalar_lea.sflag [#allocation9], %s950
        %s952 = sand.u32 %s144, 1
        %s953 = smul.addr %s952, 64
        %s954 = scalar_lea.vmem [#allocation8], %s953
        // Predicated region
        $region117: #{tpu_custom_call.1} parent=103 // pred_check
          %p955 = pneg %p157
        $region118: #{tpu_custom_call.1} parent=103 // pred_check_branch
          %957 = sbr.rel (%p955) target = $region120
        $region119: #{tpu_custom_call.1} parent=103 // pred_region
          %959 = dma.done %s951, 1024
        $region120: #{tpu_custom_call.1} parent=103 // pred_fallthru
          _
        %s960 = sand.u32 %s58, 1
        %s961 = scalar_lea.sflag [#allocation9], %s960
        %s962 = sand.u32 %s170, 1
        %s963 = smul.addr %s962, 64
        %s964 = scalar_lea.vmem [#allocation10], %s963
        // Predicated region
        $region121: #{tpu_custom_call.1} parent=103 // pred_check
          %p965 = pneg %p183
        $region122: #{tpu_custom_call.1} parent=103 // pred_check_branch
          %967 = sbr.rel (%p965) target = $region124
        $region123: #{tpu_custom_call.1} parent=103 // pred_region
          %969 = dma.done %s961, 1024
        $region124: #{tpu_custom_call.1} parent=103 // pred_fallthru
          _
        %s970 = sand.u32 %s58, 1
        %s971 = scalar_lea.sflag [#allocation12], %s970
        %s972 = sand.u32 %s196, 1
        %s973 = smul.addr %s972, 64
        %s974 = scalar_lea.vmem [#allocation11], %s973
        // Predicated region
        $region125: #{tpu_custom_call.1} parent=103 // pred_check
          %p975 = pneg %p209
        $region126: #{tpu_custom_call.1} parent=103 // pred_check_branch
          %977 = sbr.rel (%p975) target = $region128
        $region127: #{tpu_custom_call.1} parent=103 // pred_region
          %979 = dma.done %s971, 1024
        $region128: #{tpu_custom_call.1} parent=103 // pred_fallthru
          _
        // Predicated region
        $region129: #{tpu_custom_call.1} parent=103 // pred_check
          %p980 = pneg %p256
        $region130: #{tpu_custom_call.1} parent=103 // pred_check_branch
          %982 = sbr.rel (%p980) target = $region132
        $region131: #{tpu_custom_call.1} parent=103 // pred_region
          %984 = dma.done [#allocation12], 3072
        $region132: #{tpu_custom_call.1} parent=103 // pred_fallthru
          _
        // Predicated region
        $region133: #{tpu_custom_call.1} parent=103 // pred_check
          %p985 = pneg %p277
        $region134: #{tpu_custom_call.1} parent=103 // pred_check_branch
          %987 = sbr.rel (%p985) target = $region136
        $region135: #{tpu_custom_call.1} parent=103 // pred_region
          %989 = dma.done [#allocation15], 3072
        $region136: #{tpu_custom_call.1} parent=103 // pred_fallthru
          _
        // Predicated region
        $region137: #{tpu_custom_call.1} parent=103 // pred_check
          %p990 = pneg %p298
        $region138: #{tpu_custom_call.1} parent=103 // pred_check_branch
          %992 = sbr.rel (%p990) target = $region140
        $region139: #{tpu_custom_call.1} parent=103 // pred_region
          %994 = dma.done [#allocation15], 3072
        $region140: #{tpu_custom_call.1} parent=103 // pred_fallthru
          _
        // Predicated region
        $region141: #{tpu_custom_call.1} parent=103 // pred_check
          %p995 = pneg %p319
        $region142: #{tpu_custom_call.1} parent=103 // pred_check_branch
          %997 = sbr.rel (%p995) target = $region144
        $region143: #{tpu_custom_call.1} parent=103 // pred_region
          %999 = dma.done [#allocation18], 6144
        $region144: #{tpu_custom_call.1} parent=103 // pred_fallthru
          _
        // Predicated region
        $region145: #{tpu_custom_call.1} parent=103 // pred_check
          %p1000 = pneg %p340
        $region146: #{tpu_custom_call.1} parent=103 // pred_check_branch
          %1002 = sbr.rel (%p1000) target = $region148
        $region147: #{tpu_custom_call.1} parent=103 // pred_region
          %1004 = dma.done [#allocation18], 2048
        $region148: #{tpu_custom_call.1} parent=103 // pred_fallthru
          _
        // Predicated region
        $region149: #{tpu_custom_call.1} parent=103 // pred_check
          %p1005 = pneg %p382
        $region150: #{tpu_custom_call.1} parent=103 // pred_check_branch
          %1007 = sbr.rel (%p1005) target = $region152
        $region151: #{tpu_custom_call.1} parent=103 // pred_region
          %1009 = dma.done [#allocation21], 3072
        $region152: #{tpu_custom_call.1} parent=103 // pred_fallthru
          _
        // Predicated region
        $region153: #{tpu_custom_call.1} parent=103 // pred_check
          %p1010 = pneg %p403
        $region154: #{tpu_custom_call.1} parent=103 // pred_check_branch
          %1012 = sbr.rel (%p1010) target = $region156
        $region155: #{tpu_custom_call.1} parent=103 // pred_region
          %1014 = dma.done [#allocation21], 3072
        $region156: #{tpu_custom_call.1} parent=103 // pred_fallthru
          _
        // Predicated region
        $region157: #{tpu_custom_call.1} parent=103 // pred_check
          %p1015 = pneg %p424
        $region158: #{tpu_custom_call.1} parent=103 // pred_check_branch
          %1017 = sbr.rel (%p1015) target = $region160
        $region159: #{tpu_custom_call.1} parent=103 // pred_region
          %1019 = dma.done [#allocation24], 3072
        $region160: #{tpu_custom_call.1} parent=103 // pred_fallthru
          _
        // Predicated region
        $region161: #{tpu_custom_call.1} parent=103 // pred_check
          %p1020 = pneg %p445
        $region162: #{tpu_custom_call.1} parent=103 // pred_check_branch
          %1022 = sbr.rel (%p1020) target = $region164
        $region163: #{tpu_custom_call.1} parent=103 // pred_region
          %1024 = dma.done [#allocation24], 6144
        $region164: #{tpu_custom_call.1} parent=103 // pred_fallthru
          _
        // Predicated region
        $region165: #{tpu_custom_call.1} parent=103 // pred_check
          %p1025 = pneg %p466
        $region166: #{tpu_custom_call.1} parent=103 // pred_check_branch
          %1027 = sbr.rel (%p1025) target = $region168
        $region167: #{tpu_custom_call.1} parent=103 // pred_region
          %1029 = dma.done [#allocation27], 2048
        $region168: #{tpu_custom_call.1} parent=103 // pred_fallthru
          _
        // Predicated region
        $region169: #{tpu_custom_call.1} parent=103 // pred_check
          %p1030 = pneg %p487
        $region170: #{tpu_custom_call.1} parent=103 // pred_check_branch
          %1032 = sbr.rel (%p1030) target = $region172
        $region171: #{tpu_custom_call.1} parent=103 // pred_region
          %1034 = dma.done [#allocation27], 1024
        $region172: #{tpu_custom_call.1} parent=103 // pred_fallthru
          _
        // Predicated region
        $region173: #{tpu_custom_call.1} parent=103 // pred_check
          %p1035 = pneg %p508
        $region174: #{tpu_custom_call.1} parent=103 // pred_check_branch
          %1037 = sbr.rel (%p1035) target = $region176
        $region175: #{tpu_custom_call.1} parent=103 // pred_region
          %1039 = dma.done [#allocation30], 64
        $region176: #{tpu_custom_call.1} parent=103 // pred_fallthru
          _
        %s1040 = sand.u32 %s66, 1
        %s1041 = scalar_lea.sflag [#allocation3], %s1040
        %s1042 = sand.u32 %s66, 1
        %s1043 = smul.addr %s1042, 64
        %s1044 = scalar_lea.vmem [#allocation2], %s1043
        %p1045 = pneg %p79
        %p1046 = pneg %p76
        %s1047 = sand.u32 %s58, 1
        %s1048 = scalar_lea.sflag [#allocation6], %s1047
        %s1049 = sand.u32 %s92, 1
        %s1050 = smul.addr %s1049, 64
        %s1051 = scalar_lea.vmem [#allocation5], %s1050
        %p1052 = pneg %p105
        %p1053 = pneg %p102
        %s1054 = sand.u32 %s58, 1
        %s1055 = scalar_lea.sflag [#allocation6], %s1054
        %s1056 = sand.u32 %s118, 1
        %s1057 = smul.addr %s1056, 64
        %s1058 = scalar_lea.vmem [#allocation7], %s1057
        %p1059 = pneg %p131
        %p1060 = pneg %p128
        %s1061 = sand.u32 %s58, 1
        %s1062 = scalar_lea.sflag [#allocation9], %s1061
        %s1063 = sand.u32 %s144, 1
        %s1064 = smul.addr %s1063, 64
        %s1065 = scalar_lea.vmem [#allocation8], %s1064
        %p1066 = pneg %p157
        %p1067 = pneg %p154
        %s1068 = sand.u32 %s58, 1
        %s1069 = scalar_lea.sflag [#allocation9], %s1068
        %s1070 = sand.u32 %s170, 1
        %s1071 = smul.addr %s1070, 64
        %s1072 = scalar_lea.vmem [#allocation10], %s1071
        %p1073 = pneg %p183
        %p1074 = pneg %p180
        %s1075 = sand.u32 %s58, 1
        %s1076 = scalar_lea.sflag [#allocation12], %s1075
        %s1077 = sand.u32 %s196, 1
        %s1078 = smul.addr %s1077, 64
        %s1079 = scalar_lea.vmem [#allocation11], %s1078
        %p1080 = pneg %p209
        %p1081 = pneg %p206
        %s1082 = smul.u32 16, %s58
        %p1083 = scmp.lt.s32.totalorder %s1082, 31
        %s1084 = scalar_select %p1083, %s1082, 31
        %s1085 = smul.addr %s1084, 8
        %s1086 = scalar_lea.vmem %s6, %s1085
        %p1087 = pneg %p235
        %p1088 = pneg %p232
        %p1089 = pneg %p256
        %p1090 = pneg %p253
        %p1091 = pneg %p277
        %p1092 = pneg %p274
        %p1093 = pneg %p298
        %p1094 = pneg %p295
        %p1095 = pneg %p319
        %p1096 = pneg %p316
        %p1097 = pneg %p340
        %p1098 = pneg %p337
        %p1099 = pneg %p361
        %p1100 = pneg %p358
        %p1101 = pneg %p382
        %p1102 = pneg %p379
        %p1103 = pneg %p403
        %p1104 = pneg %p400
        %p1105 = pneg %p424
        %p1106 = pneg %p421
        %p1107 = pneg %p445
        %p1108 = pneg %p442
        %p1109 = pneg %p466
        %p1110 = pneg %p463
        %p1111 = pneg %p487
        %p1112 = pneg %p484
        %p1113 = pneg %p508
        %p1114 = pneg %p505
        %p1115 = pneg %p529
        %p1116 = pneg %p526
        %p1117 = pneg %p555
        %p1118 = pneg %p552
        %s1119 = sand.u32 %s542, 1
        %s1120 = scalar_lea.sflag [#allocation4], %s1119
        %s1121 = sand.u32 %s542, 1
        %s1122 = smul.addr %s1121, 128
        %s1123 = scalar_lea.vmem [#allocation31], %s1122
        %p1124 = pneg %p581
        %p1125 = pneg %p578
        %s1126 = sand.u32 %s568, 1
        %s1127 = scalar_lea.sflag [#allocation33], %s1126
        %s1128 = sand.u32 %s568, 1
        %s1129 = smul.addr %s1128, 128
        %s1130 = scalar_lea.vmem [#allocation32], %s1129
        %s1131 = smul.u32 16, %s58
        %s1132 = smul.u32 16, %s58
        %s1133 = smul.u32 16, %s58
        %s1134 = smul.u32 16, %s58
        %s1135 = smul.u32 16, %s58
        %s1136 = smul.u32 16, %s58
        %s1137 = smul.u32 16, %s58
        %p1138 = scmp.lt.s32.totalorder %s1137, 31
        %s1139 = scalar_select %p1138, %s1137, 31
        %s1140 = smul.addr %s1139, 8
        %s1141 = scalar_lea.vmem %s6, %s1140
        %s1142 = smul.u32 16, %s58
        %s1143 = smul.u32 16, %s58
        %s1144 = smul.u32 16, %s58
        %v1145 = vld [vmem:[%s924] sm:$0xf]
        %v1146 = vld [vmem:[%s924 + $0x4] sm:$0xf]
        %v1147 = vld [vmem:[%s924 + $0x8] sm:$0xf]
        %v1148 = vld [vmem:[%s924 + $0xc] sm:$0xf]
        %v1149 = vld [vmem:[%s924 + $0x10] sm:$0xf]
        %v1150 = vld [vmem:[%s924 + $0x14] sm:$0xf]
        %v1151 = vld [vmem:[%s924 + $0x18] sm:$0xf]
        %v1152 = vld [vmem:[%s924 + $0x1c] sm:$0xf]
        %v1153 = vld [vmem:[%s924 + $0x20] sm:$0xf]
        %v1154 = vld [vmem:[%s924 + $0x24] sm:$0xf]
        %v1155 = vld [vmem:[%s924 + $0x28] sm:$0xf]
        %v1156 = vld [vmem:[%s924 + $0x2c] sm:$0xf]
        %v1157 = vld [vmem:[%s924 + $0x30] sm:$0xf]
        %v1158 = vld [vmem:[%s924 + $0x34] sm:$0xf]
        %v1159 = vld [vmem:[%s924 + $0x38] sm:$0xf]
        %v1160 = vld [vmem:[%s924 + $0x3c] sm:$0xf]
        %v1161 = vld [vmem:[#allocation13] sm:$0xff]
        %v1162 = vld [vmem:[#allocation13 + $0x8] sm:$0xf]
        %v1163 = vld [vmem:[#allocation13 + $0xc] sm:$0xff]
        %v1164 = vld [vmem:[#allocation13 + $0x14] sm:$0xf]
        %v1165 = vld [vmem:[#allocation13 + $0x18] sm:$0xff]
        %v1166 = vld [vmem:[#allocation13 + $0x20] sm:$0xf]
        %v1167 = vld [vmem:[#allocation13 + $0x24] sm:$0xff]
        %v1168 = vld [vmem:[#allocation13 + $0x2c] sm:$0xf]
        %v1169 = vld [vmem:[#allocation13 + $0x30] sm:$0xff]
        %v1170 = vld [vmem:[#allocation13 + $0x38] sm:$0xf]
        %v1171 = vld [vmem:[#allocation13 + $0x3c] sm:$0xff]
        %v1172 = vld [vmem:[#allocation13 + $0x44] sm:$0xf]
        %v1173 = vld [vmem:[#allocation13 + $0x48] sm:$0xff]
        %v1174 = vld [vmem:[#allocation13 + $0x50] sm:$0xf]
        %v1175 = vld [vmem:[#allocation13 + $0x54] sm:$0xff]
        %v1176 = vld [vmem:[#allocation13 + $0x5c] sm:$0xf]
        %v1177 = vld [vmem:[#allocation13 + $0x60] sm:$0xff]
        %v1178 = vld [vmem:[#allocation13 + $0x68] sm:$0xf]
        %v1179 = vld [vmem:[#allocation13 + $0x6c] sm:$0xff]
        %v1180 = vld [vmem:[#allocation13 + $0x74] sm:$0xf]
        %v1181 = vld [vmem:[#allocation13 + $0x78] sm:$0xff]
        %v1182 = vld [vmem:[#allocation13 + $0x80] sm:$0xf]
        %v1183 = vld [vmem:[#allocation13 + $0x84] sm:$0xff]
        %v1184 = vld [vmem:[#allocation13 + $0x8c] sm:$0xf]
        %v1185 = vld [vmem:[#allocation13 + $0x90] sm:$0xff]
        %v1186 = vld [vmem:[#allocation13 + $0x98] sm:$0xf]
        %v1187 = vld [vmem:[#allocation13 + $0x9c] sm:$0xff]
        %v1188 = vld [vmem:[#allocation13 + $0xa4] sm:$0xf]
        %v1189 = vld [vmem:[#allocation13 + $0xa8] sm:$0xff]
        %v1190 = vld [vmem:[#allocation13 + $0xb0] sm:$0xf]
        %v1191 = vld [vmem:[#allocation13 + $0xb4] sm:$0xff]
        %v1192 = vld [vmem:[#allocation13 + $0xbc] sm:$0xf]
        %v1193 = vld [vmem:[%s934] sm:$0xf]
        %v1194 = vld [vmem:[%s934 + $0x4] sm:$0xf]
        %v1195 = vld [vmem:[%s934 + $0x8] sm:$0xf]
        %v1196 = vld [vmem:[%s934 + $0xc] sm:$0xf]
        %v1197 = vld [vmem:[%s934 + $0x10] sm:$0xf]
        %v1198 = vld [vmem:[%s934 + $0x14] sm:$0xf]
        %v1199 = vld [vmem:[%s934 + $0x18] sm:$0xf]
        %v1200 = vld [vmem:[%s934 + $0x1c] sm:$0xf]
        %v1201 = vld [vmem:[%s934 + $0x20] sm:$0xf]
        %v1202 = vld [vmem:[%s934 + $0x24] sm:$0xf]
        %v1203 = vld [vmem:[%s934 + $0x28] sm:$0xf]
        %v1204 = vld [vmem:[%s934 + $0x2c] sm:$0xf]
        %v1205 = vld [vmem:[%s934 + $0x30] sm:$0xf]
        %v1206 = vld [vmem:[%s934 + $0x34] sm:$0xf]
        %v1207 = vld [vmem:[%s934 + $0x38] sm:$0xf]
        %v1208 = vld [vmem:[%s934 + $0x3c] sm:$0xf]
        %v1209 = vld [vmem:[#allocation14] sm:$0xff]
        %v1210 = vld [vmem:[#allocation14 + $0x8] sm:$0xf]
        %v1211 = vld [vmem:[#allocation14 + $0xc] sm:$0xff]
        %v1212 = vld [vmem:[#allocation14 + $0x14] sm:$0xf]
        %v1213 = vld [vmem:[#allocation14 + $0x18] sm:$0xff]
        %v1214 = vld [vmem:[#allocation14 + $0x20] sm:$0xf]
        %v1215 = vld [vmem:[#allocation14 + $0x24] sm:$0xff]
        %v1216 = vld [vmem:[#allocation14 + $0x2c] sm:$0xf]
        %v1217 = vld [vmem:[#allocation14 + $0x30] sm:$0xff]
        %v1218 = vld [vmem:[#allocation14 + $0x38] sm:$0xf]
        %v1219 = vld [vmem:[#allocation14 + $0x3c] sm:$0xff]
        %v1220 = vld [vmem:[#allocation14 + $0x44] sm:$0xf]
        %v1221 = vld [vmem:[#allocation14 + $0x48] sm:$0xff]
        %v1222 = vld [vmem:[#allocation14 + $0x50] sm:$0xf]
        %v1223 = vld [vmem:[#allocation14 + $0x54] sm:$0xff]
        %v1224 = vld [vmem:[#allocation14 + $0x5c] sm:$0xf]
        %v1225 = vld [vmem:[#allocation14 + $0x60] sm:$0xff]
        %v1226 = vld [vmem:[#allocation14 + $0x68] sm:$0xf]
        %v1227 = vld [vmem:[#allocation14 + $0x6c] sm:$0xff]
        %v1228 = vld [vmem:[#allocation14 + $0x74] sm:$0xf]
        %v1229 = vld [vmem:[#allocation14 + $0x78] sm:$0xff]
        %v1230 = vld [vmem:[#allocation14 + $0x80] sm:$0xf]
        %v1231 = vld [vmem:[#allocation14 + $0x84] sm:$0xff]
        %v1232 = vld [vmem:[#allocation14 + $0x8c] sm:$0xf]
        %v1233 = vld [vmem:[#allocation14 + $0x90] sm:$0xff]
        %v1234 = vld [vmem:[#allocation14 + $0x98] sm:$0xf]
        %v1235 = vld [vmem:[#allocation14 + $0x9c] sm:$0xff]
        %v1236 = vld [vmem:[#allocation14 + $0xa4] sm:$0xf]
        %v1237 = vld [vmem:[#allocation14 + $0xa8] sm:$0xff]
        %v1238 = vld [vmem:[#allocation14 + $0xb0] sm:$0xf]
        %v1239 = vld [vmem:[#allocation14 + $0xb4] sm:$0xff]
        %v1240 = vld [vmem:[#allocation14 + $0xbc] sm:$0xf]
        %v1257 = vunpack.c.l.b16 %v1193
        %v1258 = vunpack.c.l.b16 %v1194
        %v1259 = vunpack.c.l.b16 %v1195
        %v1260 = vunpack.c.l.b16 %v1196
        %v1261 = vunpack.c.l.b16 %v1197
        %v1262 = vunpack.c.l.b16 %v1198
        %v1263 = vunpack.c.l.b16 %v1199
        %v1264 = vunpack.c.l.b16 %v1200
        %v1265 = vunpack.c.l.b16 %v1201
        %v1266 = vunpack.c.l.b16 %v1202
        %v1267 = vunpack.c.l.b16 %v1203
        %v1268 = vunpack.c.l.b16 %v1204
        %v1269 = vunpack.c.l.b16 %v1205
        %v1270 = vunpack.c.l.b16 %v1206
        %v1271 = vunpack.c.l.b16 %v1207
        %v1272 = vunpack.c.l.b16 %v1208
        %v1273 = vpack.c.b16 %v1258, %v1257
        %v1274 = vpack.c.b16 %v1260, %v1259
        %v1275 = vpack.c.b16 %v1262, %v1261
        %v1276 = vpack.c.b16 %v1264, %v1263
        %v1277 = vpack.c.b16 %v1266, %v1265
        %v1278 = vpack.c.b16 %v1268, %v1267
        %v1279 = vpack.c.b16 %v1270, %v1269
        %v1280 = vpack.c.b16 %v1272, %v1271
        %v1321 = vunpack.c.l.b16 %v1209
        %v1322 = vunpack.c.h.b16 %v1209
        %v1323 = vunpack.c.l.b16 %v1210
        %v1324 = vunpack.c.l.b16 %v1211
        %v1325 = vunpack.c.h.b16 %v1211
        %v1326 = vunpack.c.l.b16 %v1212
        %v1327 = vunpack.c.l.b16 %v1213
        %v1328 = vunpack.c.h.b16 %v1213
        %v1329 = vunpack.c.l.b16 %v1214
        %v1330 = vunpack.c.l.b16 %v1215
        %v1331 = vunpack.c.h.b16 %v1215
        %v1332 = vunpack.c.l.b16 %v1216
        %v1333 = vunpack.c.l.b16 %v1217
        %v1334 = vunpack.c.h.b16 %v1217
        %v1335 = vunpack.c.l.b16 %v1218
        %v1336 = vunpack.c.l.b16 %v1219
        %v1337 = vunpack.c.h.b16 %v1219
        %v1338 = vunpack.c.l.b16 %v1220
        %v1339 = vunpack.c.l.b16 %v1221
        %v1340 = vunpack.c.h.b16 %v1221
        %v1341 = vunpack.c.l.b16 %v1222
        %v1342 = vunpack.c.l.b16 %v1223
        %v1343 = vunpack.c.h.b16 %v1223
        %v1344 = vunpack.c.l.b16 %v1224
        %v1345 = vunpack.c.l.b16 %v1225
        %v1346 = vunpack.c.h.b16 %v1225
        %v1347 = vunpack.c.l.b16 %v1226
        %v1348 = vunpack.c.l.b16 %v1227
        %v1349 = vunpack.c.h.b16 %v1227
        %v1350 = vunpack.c.l.b16 %v1228
        %v1351 = vunpack.c.l.b16 %v1229
        %v1352 = vunpack.c.h.b16 %v1229
        %v1353 = vunpack.c.l.b16 %v1230
        %v1354 = vunpack.c.l.b16 %v1231
        %v1355 = vunpack.c.h.b16 %v1231
        %v1356 = vunpack.c.l.b16 %v1232
        %v1357 = vunpack.c.l.b16 %v1233
        %v1358 = vunpack.c.h.b16 %v1233
        %v1359 = vunpack.c.l.b16 %v1234
        %v1360 = vunpack.c.l.b16 %v1235
        %v1361 = vunpack.c.h.b16 %v1235
        %v1362 = vunpack.c.l.b16 %v1236
        %v1363 = vunpack.c.l.b16 %v1237
        %v1364 = vunpack.c.h.b16 %v1237
        %v1365 = vunpack.c.l.b16 %v1238
        %v1366 = vunpack.c.l.b16 %v1239
        %v1367 = vunpack.c.h.b16 %v1239
        %v1368 = vunpack.c.l.b16 %v1240
        %v1369 = vpack.c.b16 %v1324, %v1321
        %v1370 = vpack.c.b16 %v1325, %v1322
        %v1371 = vpack.c.b16 %v1326, %v1323
        %v1372 = vpack.c.b16 %v1330, %v1327
        %v1373 = vpack.c.b16 %v1331, %v1328
        %v1374 = vpack.c.b16 %v1332, %v1329
        %v1375 = vpack.c.b16 %v1336, %v1333
        %v1376 = vpack.c.b16 %v1337, %v1334
        %v1377 = vpack.c.b16 %v1338, %v1335
        %v1378 = vpack.c.b16 %v1342, %v1339
        %v1379 = vpack.c.b16 %v1343, %v1340
        %v1380 = vpack.c.b16 %v1344, %v1341
        %v1381 = vpack.c.b16 %v1348, %v1345
        %v1382 = vpack.c.b16 %v1349, %v1346
        %v1383 = vpack.c.b16 %v1350, %v1347
        %v1384 = vpack.c.b16 %v1354, %v1351
        %v1385 = vpack.c.b16 %v1355, %v1352
        %v1386 = vpack.c.b16 %v1356, %v1353
        %v1387 = vpack.c.b16 %v1360, %v1357
        %v1388 = vpack.c.b16 %v1361, %v1358
        %v1389 = vpack.c.b16 %v1362, %v1359
        %v1390 = vpack.c.b16 %v1366, %v1363
        %v1391 = vpack.c.b16 %v1367, %v1364
        %v1392 = vpack.c.b16 %v1368, %v1365
        %1417 = vmatpush.bf16.msra.mxu0 %v1390
        %1418 = vmatpush.bf16.msra.mxu0 %v1387
        %1419 = vmatpush.bf16.msra.mxu0 %v1384
        %1420 = vmatpush.bf16.msra.mxu0 %v1381
        %1421 = vmatpush.bf16.msra.mxu0 %v1378
        %1422 = vmatpush.bf16.msra.mxu0 %v1375
        %1423 = vmatpush.bf16.msra.mxu0 %v1372
        %1424 = vmatpush.bf16.msra.mxu0 %v1369
        %1425 = vmatmul.bf16.gmra.mxu0 %v1273
        %v1426 = vpop.f32.mrf.mxu0
        %v1427 = vadd.f32 0.0, %v1426
        %v1428 = vpop.f32.mrf.mxu0
        %v1429 = vadd.f32 0.0, %v1428
        %1430 = vmatmul.bf16.gmra.mxu0 %v1274
        %v1431 = vpop.f32.mrf.mxu0
        %v1432 = vadd.f32 0.0, %v1431
        %v1433 = vpop.f32.mrf.mxu0
        %v1434 = vadd.f32 0.0, %v1433
        %1435 = vmatmul.bf16.gmra.mxu0 %v1275
        %v1436 = vpop.f32.mrf.mxu0
        %v1437 = vadd.f32 0.0, %v1436
        %v1438 = vpop.f32.mrf.mxu0
        %v1439 = vadd.f32 0.0, %v1438
        %1440 = vmatmul.bf16.gmra.mxu0 %v1276
        %v1441 = vpop.f32.mrf.mxu0
        %v1442 = vadd.f32 0.0, %v1441
        %v1443 = vpop.f32.mrf.mxu0
        %v1444 = vadd.f32 0.0, %v1443
        %1445 = vmatmul.bf16.gmra.mxu0 %v1277
        %v1446 = vpop.f32.mrf.mxu0
        %v1447 = vadd.f32 0.0, %v1446
        %v1448 = vpop.f32.mrf.mxu0
        %v1449 = vadd.f32 0.0, %v1448
        %1450 = vmatmul.bf16.gmra.mxu0 %v1278
        %v1451 = vpop.f32.mrf.mxu0
        %v1452 = vadd.f32 0.0, %v1451
        %v1453 = vpop.f32.mrf.mxu0
        %v1454 = vadd.f32 0.0, %v1453
        %1455 = vmatmul.bf16.gmra.mxu0 %v1279
        %v1456 = vpop.f32.mrf.mxu0
        %v1457 = vadd.f32 0.0, %v1456
        %v1458 = vpop.f32.mrf.mxu0
        %v1459 = vadd.f32 0.0, %v1458
        %1460 = vmatmul.bf16.gmra.mxu0 %v1280
        %v1461 = vpop.f32.mrf.mxu0
        %v1462 = vadd.f32 0.0, %v1461
        %v1463 = vpop.f32.mrf.mxu0
        %v1464 = vadd.f32 0.0, %v1463
        %1465 = vdwg.mxu0
        %1466 = vmatpush.bf16.msra.mxu0 %v1391
        %1467 = vmatpush.bf16.msra.mxu0 %v1388
        %1468 = vmatpush.bf16.msra.mxu0 %v1385
        %1469 = vmatpush.bf16.msra.mxu0 %v1382
        %1470 = vmatpush.bf16.msra.mxu0 %v1379
        %1471 = vmatpush.bf16.msra.mxu0 %v1376
        %1472 = vmatpush.bf16.msra.mxu0 %v1373
        %1473 = vmatpush.bf16.msra.mxu0 %v1370
        %1474 = vmatmul.bf16.gmra.mxu0 %v1273
        %v1475 = vpop.f32.mrf.mxu0
        %v1476 = vadd.f32 0.0, %v1475
        %v1477 = vpop.f32.mrf.mxu0
        %v1478 = vadd.f32 0.0, %v1477
        %1479 = vmatmul.bf16.gmra.mxu0 %v1274
        %v1480 = vpop.f32.mrf.mxu0
        %v1481 = vadd.f32 0.0, %v1480
        %v1482 = vpop.f32.mrf.mxu0
        %v1483 = vadd.f32 0.0, %v1482
        %1484 = vmatmul.bf16.gmra.mxu0 %v1275
        %v1485 = vpop.f32.mrf.mxu0
        %v1486 = vadd.f32 0.0, %v1485
        %v1487 = vpop.f32.mrf.mxu0
        %v1488 = vadd.f32 0.0, %v1487
        %1489 = vmatmul.bf16.gmra.mxu0 %v1276
        %v1490 = vpop.f32.mrf.mxu0
        %v1491 = vadd.f32 0.0, %v1490
        %v1492 = vpop.f32.mrf.mxu0
        %v1493 = vadd.f32 0.0, %v1492
        %1494 = vmatmul.bf16.gmra.mxu0 %v1277
        %v1495 = vpop.f32.mrf.mxu0
        %v1496 = vadd.f32 0.0, %v1495
        %v1497 = vpop.f32.mrf.mxu0
        %v1498 = vadd.f32 0.0, %v1497
        %1499 = vmatmul.bf16.gmra.mxu0 %v1278
        %v1500 = vpop.f32.mrf.mxu0
        %v1501 = vadd.f32 0.0, %v1500
        %v1502 = vpop.f32.mrf.mxu0
        %v1503 = vadd.f32 0.0, %v1502
        %1504 = vmatmul.bf16.gmra.mxu0 %v1279
        %v1505 = vpop.f32.mrf.mxu0
        %v1506 = vadd.f32 0.0, %v1505
        %v1507 = vpop.f32.mrf.mxu0
        %v1508 = vadd.f32 0.0, %v1507
        %1509 = vmatmul.bf16.gmra.mxu0 %v1280
        %v1510 = vpop.f32.mrf.mxu0
        %v1511 = vadd.f32 0.0, %v1510
        %v1512 = vpop.f32.mrf.mxu0
        %v1513 = vadd.f32 0.0, %v1512
        %1514 = vdwg.mxu0
        %1515 = vmatpush.bf16.msra.mxu0 %v1392
        %1516 = vmatpush.bf16.msra.mxu0 %v1389
        %1517 = vmatpush.bf16.msra.mxu0 %v1386
        %1518 = vmatpush.bf16.msra.mxu0 %v1383
        %1519 = vmatpush.bf16.msra.mxu0 %v1380
        %1520 = vmatpush.bf16.msra.mxu0 %v1377
        %1521 = vmatpush.bf16.msra.mxu0 %v1374
        %1522 = vmatpush.bf16.msra.mxu0 %v1371
        %1523 = vmatmul.bf16.gmra.mxu0 %v1273
        %v1524 = vpop.f32.mrf.mxu0
        %v1525 = vadd.f32 0.0, %v1524
        %v1526 = vpop.f32.mrf.mxu0
        %v1527 = vadd.f32 0.0, %v1526
        %1528 = vmatmul.bf16.gmra.mxu0 %v1274
        %v1529 = vpop.f32.mrf.mxu0
        %v1530 = vadd.f32 0.0, %v1529
        %v1531 = vpop.f32.mrf.mxu0
        %v1532 = vadd.f32 0.0, %v1531
        %1533 = vmatmul.bf16.gmra.mxu0 %v1275
        %v1534 = vpop.f32.mrf.mxu0
        %v1535 = vadd.f32 0.0, %v1534
        %v1536 = vpop.f32.mrf.mxu0
        %v1537 = vadd.f32 0.0, %v1536
        %1538 = vmatmul.bf16.gmra.mxu0 %v1276
        %v1539 = vpop.f32.mrf.mxu0
        %v1540 = vadd.f32 0.0, %v1539
        %v1541 = vpop.f32.mrf.mxu0
        %v1542 = vadd.f32 0.0, %v1541
        %1543 = vmatmul.bf16.gmra.mxu0 %v1277
        %v1544 = vpop.f32.mrf.mxu0
        %v1545 = vadd.f32 0.0, %v1544
        %v1546 = vpop.f32.mrf.mxu0
        %v1547 = vadd.f32 0.0, %v1546
        %1548 = vmatmul.bf16.gmra.mxu0 %v1278
        %v1549 = vpop.f32.mrf.mxu0
        %v1550 = vadd.f32 0.0, %v1549
        %v1551 = vpop.f32.mrf.mxu0
        %v1552 = vadd.f32 0.0, %v1551
        %1553 = vmatmul.bf16.gmra.mxu0 %v1279
        %v1554 = vpop.f32.mrf.mxu0
        %v1555 = vadd.f32 0.0, %v1554
        %v1556 = vpop.f32.mrf.mxu0
        %v1557 = vadd.f32 0.0, %v1556
        %1558 = vmatmul.bf16.gmra.mxu0 %v1280
        %v1559 = vpop.f32.mrf.mxu0
        %v1560 = vadd.f32 0.0, %v1559
        %v1561 = vpop.f32.mrf.mxu0
        %v1562 = vadd.f32 0.0, %v1561
        %1563 = vdwg.mxu0
        %v1580 = vunpack.c.l.b16 %v1145
        %v1581 = vunpack.c.l.b16 %v1146
        %v1582 = vunpack.c.l.b16 %v1147
        %v1583 = vunpack.c.l.b16 %v1148
        %v1584 = vunpack.c.l.b16 %v1149
        %v1585 = vunpack.c.l.b16 %v1150
        %v1586 = vunpack.c.l.b16 %v1151
        %v1587 = vunpack.c.l.b16 %v1152
        %v1588 = vunpack.c.l.b16 %v1153
        %v1589 = vunpack.c.l.b16 %v1154
        %v1590 = vunpack.c.l.b16 %v1155
        %v1591 = vunpack.c.l.b16 %v1156
        %v1592 = vunpack.c.l.b16 %v1157
        %v1593 = vunpack.c.l.b16 %v1158
        %v1594 = vunpack.c.l.b16 %v1159
        %v1595 = vunpack.c.l.b16 %v1160
        %v1596 = vpack.c.b16 %v1581, %v1580
        %v1597 = vpack.c.b16 %v1583, %v1582
        %v1598 = vpack.c.b16 %v1585, %v1584
        %v1599 = vpack.c.b16 %v1587, %v1586
        %v1600 = vpack.c.b16 %v1589, %v1588
        %v1601 = vpack.c.b16 %v1591, %v1590
        %v1602 = vpack.c.b16 %v1593, %v1592
        %v1603 = vpack.c.b16 %v1595, %v1594
        %v1644 = vunpack.c.l.b16 %v1161
        %v1645 = vunpack.c.h.b16 %v1161
        %v1646 = vunpack.c.l.b16 %v1162
        %v1647 = vunpack.c.l.b16 %v1163
        %v1648 = vunpack.c.h.b16 %v1163
        %v1649 = vunpack.c.l.b16 %v1164
        %v1650 = vunpack.c.l.b16 %v1165
        %v1651 = vunpack.c.h.b16 %v1165
        %v1652 = vunpack.c.l.b16 %v1166
        %v1653 = vunpack.c.l.b16 %v1167
        %v1654 = vunpack.c.h.b16 %v1167
        %v1655 = vunpack.c.l.b16 %v1168
        %v1656 = vunpack.c.l.b16 %v1169
        %v1657 = vunpack.c.h.b16 %v1169
        %v1658 = vunpack.c.l.b16 %v1170
        %v1659 = vunpack.c.l.b16 %v1171
        %v1660 = vunpack.c.h.b16 %v1171
        %v1661 = vunpack.c.l.b16 %v1172
        %v1662 = vunpack.c.l.b16 %v1173
        %v1663 = vunpack.c.h.b16 %v1173
        %v1664 = vunpack.c.l.b16 %v1174
        %v1665 = vunpack.c.l.b16 %v1175
        %v1666 = vunpack.c.h.b16 %v1175
        %v1667 = vunpack.c.l.b16 %v1176
        %v1668 = vunpack.c.l.b16 %v1177
        %v1669 = vunpack.c.h.b16 %v1177
        %v1670 = vunpack.c.l.b16 %v1178
        %v1671 = vunpack.c.l.b16 %v1179
        %v1672 = vunpack.c.h.b16 %v1179
        %v1673 = vunpack.c.l.b16 %v1180
        %v1674 = vunpack.c.l.b16 %v1181
        %v1675 = vunpack.c.h.b16 %v1181
        %v1676 = vunpack.c.l.b16 %v1182
        %v1677 = vunpack.c.l.b16 %v1183
        %v1678 = vunpack.c.h.b16 %v1183
        %v1679 = vunpack.c.l.b16 %v1184
        %v1680 = vunpack.c.l.b16 %v1185
        %v1681 = vunpack.c.h.b16 %v1185
        %v1682 = vunpack.c.l.b16 %v1186
        %v1683 = vunpack.c.l.b16 %v1187
        %v1684 = vunpack.c.h.b16 %v1187
        %v1685 = vunpack.c.l.b16 %v1188
        %v1686 = vunpack.c.l.b16 %v1189
        %v1687 = vunpack.c.h.b16 %v1189
        %v1688 = vunpack.c.l.b16 %v1190
        %v1689 = vunpack.c.l.b16 %v1191
        %v1690 = vunpack.c.h.b16 %v1191
        %v1691 = vunpack.c.l.b16 %v1192
        %v1692 = vpack.c.b16 %v1647, %v1644
        %v1693 = vpack.c.b16 %v1648, %v1645
        %v1694 = vpack.c.b16 %v1649, %v1646
        %v1695 = vpack.c.b16 %v1653, %v1650
        %v1696 = vpack.c.b16 %v1654, %v1651
        %v1697 = vpack.c.b16 %v1655, %v1652
        %v1698 = vpack.c.b16 %v1659, %v1656
        %v1699 = vpack.c.b16 %v1660, %v1657
        %v1700 = vpack.c.b16 %v1661, %v1658
        %v1701 = vpack.c.b16 %v1665, %v1662
        %v1702 = vpack.c.b16 %v1666, %v1663
        %v1703 = vpack.c.b16 %v1667, %v1664
        %v1704 = vpack.c.b16 %v1671, %v1668
        %v1705 = vpack.c.b16 %v1672, %v1669
        %v1706 = vpack.c.b16 %v1673, %v1670
        %v1707 = vpack.c.b16 %v1677, %v1674
        %v1708 = vpack.c.b16 %v1678, %v1675
        %v1709 = vpack.c.b16 %v1679, %v1676
        %v1710 = vpack.c.b16 %v1683, %v1680
        %v1711 = vpack.c.b16 %v1684, %v1681
        %v1712 = vpack.c.b16 %v1685, %v1682
        %v1713 = vpack.c.b16 %v1689, %v1686
        %v1714 = vpack.c.b16 %v1690, %v1687
        %v1715 = vpack.c.b16 %v1691, %v1688
        %1740 = vmatpush.bf16.msra.mxu0 %v1713
        %1741 = vmatpush.bf16.msra.mxu0 %v1710
        %1742 = vmatpush.bf16.msra.mxu0 %v1707
        %1743 = vmatpush.bf16.msra.mxu0 %v1704
        %1744 = vmatpush.bf16.msra.mxu0 %v1701
        %1745 = vmatpush.bf16.msra.mxu0 %v1698
        %1746 = vmatpush.bf16.msra.mxu0 %v1695
        %1747 = vmatpush.bf16.msra.mxu0 %v1692
        %1748 = vmatmul.bf16.gmra.mxu0 %v1596
        %v1749 = vpop.f32.mrf.mxu0
        %v1750 = vadd.f32 %v1427, %v1749
        %v1751 = vpop.f32.mrf.mxu0
        %v1752 = vadd.f32 %v1429, %v1751
        %1753 = vmatmul.bf16.gmra.mxu0 %v1597
        %v1754 = vpop.f32.mrf.mxu0
        %v1755 = vadd.f32 %v1432, %v1754
        %v1756 = vpop.f32.mrf.mxu0
        %v1757 = vadd.f32 %v1434, %v1756
        %1758 = vmatmul.bf16.gmra.mxu0 %v1598
        %v1759 = vpop.f32.mrf.mxu0
        %v1760 = vadd.f32 %v1437, %v1759
        %v1761 = vpop.f32.mrf.mxu0
        %v1762 = vadd.f32 %v1439, %v1761
        %1763 = vmatmul.bf16.gmra.mxu0 %v1599
        %v1764 = vpop.f32.mrf.mxu0
        %v1765 = vadd.f32 %v1442, %v1764
        %v1766 = vpop.f32.mrf.mxu0
        %v1767 = vadd.f32 %v1444, %v1766
        %1768 = vmatmul.bf16.gmra.mxu0 %v1600
        %v1769 = vpop.f32.mrf.mxu0
        %v1770 = vadd.f32 %v1447, %v1769
        %v1771 = vpop.f32.mrf.mxu0
        %v1772 = vadd.f32 %v1449, %v1771
        %1773 = vmatmul.bf16.gmra.mxu0 %v1601
        %v1774 = vpop.f32.mrf.mxu0
        %v1775 = vadd.f32 %v1452, %v1774
        %v1776 = vpop.f32.mrf.mxu0
        %v1777 = vadd.f32 %v1454, %v1776
        %1778 = vmatmul.bf16.gmra.mxu0 %v1602
        %v1779 = vpop.f32.mrf.mxu0
        %v1780 = vadd.f32 %v1457, %v1779
        %v1781 = vpop.f32.mrf.mxu0
        %v1782 = vadd.f32 %v1459, %v1781
        %1783 = vmatmul.bf16.gmra.mxu0 %v1603
        %v1784 = vpop.f32.mrf.mxu0
        %v1785 = vadd.f32 %v1462, %v1784
        %v1786 = vpop.f32.mrf.mxu0
        %v1787 = vadd.f32 %v1464, %v1786
        %1788 = vdwg.mxu0
        %1789 = vmatpush.bf16.msra.mxu0 %v1714
        %1790 = vmatpush.bf16.msra.mxu0 %v1711
        %1791 = vmatpush.bf16.msra.mxu0 %v1708
        %1792 = vmatpush.bf16.msra.mxu0 %v1705
        %1793 = vmatpush.bf16.msra.mxu0 %v1702
        %1794 = vmatpush.bf16.msra.mxu0 %v1699
        %1795 = vmatpush.bf16.msra.mxu0 %v1696
        %1796 = vmatpush.bf16.msra.mxu0 %v1693
        %1797 = vmatmul.bf16.gmra.mxu0 %v1596
        %v1798 = vpop.f32.mrf.mxu0
        %v1799 = vadd.f32 %v1476, %v1798
        %v1800 = vpop.f32.mrf.mxu0
        %v1801 = vadd.f32 %v1478, %v1800
        %1802 = vmatmul.bf16.gmra.mxu0 %v1597
        %v1803 = vpop.f32.mrf.mxu0
        %v1804 = vadd.f32 %v1481, %v1803
        %v1805 = vpop.f32.mrf.mxu0
        %v1806 = vadd.f32 %v1483, %v1805
        %1807 = vmatmul.bf16.gmra.mxu0 %v1598
        %v1808 = vpop.f32.mrf.mxu0
        %v1809 = vadd.f32 %v1486, %v1808
        %v1810 = vpop.f32.mrf.mxu0
        %v1811 = vadd.f32 %v1488, %v1810
        %1812 = vmatmul.bf16.gmra.mxu0 %v1599
        %v1813 = vpop.f32.mrf.mxu0
        %v1814 = vadd.f32 %v1491, %v1813
        %v1815 = vpop.f32.mrf.mxu0
        %v1816 = vadd.f32 %v1493, %v1815
        %1817 = vmatmul.bf16.gmra.mxu0 %v1600
        %v1818 = vpop.f32.mrf.mxu0
        %v1819 = vadd.f32 %v1496, %v1818
        %v1820 = vpop.f32.mrf.mxu0
        %v1821 = vadd.f32 %v1498, %v1820
        %1822 = vmatmul.bf16.gmra.mxu0 %v1601
        %v1823 = vpop.f32.mrf.mxu0
        %v1824 = vadd.f32 %v1501, %v1823
        %v1825 = vpop.f32.mrf.mxu0
        %v1826 = vadd.f32 %v1503, %v1825
        %1827 = vmatmul.bf16.gmra.mxu0 %v1602
        %v1828 = vpop.f32.mrf.mxu0
        %v1829 = vadd.f32 %v1506, %v1828
        %v1830 = vpop.f32.mrf.mxu0
        %v1831 = vadd.f32 %v1508, %v1830
        %1832 = vmatmul.bf16.gmra.mxu0 %v1603
        %v1833 = vpop.f32.mrf.mxu0
        %v1834 = vadd.f32 %v1511, %v1833
        %v1835 = vpop.f32.mrf.mxu0
        %v1836 = vadd.f32 %v1513, %v1835
        %1837 = vdwg.mxu0
        %1838 = vmatpush.bf16.msra.mxu0 %v1715
        %1839 = vmatpush.bf16.msra.mxu0 %v1712
        %1840 = vmatpush.bf16.msra.mxu0 %v1709
        %1841 = vmatpush.bf16.msra.mxu0 %v1706
        %1842 = vmatpush.bf16.msra.mxu0 %v1703
        %1843 = vmatpush.bf16.msra.mxu0 %v1700
        %1844 = vmatpush.bf16.msra.mxu0 %v1697
        %1845 = vmatpush.bf16.msra.mxu0 %v1694
        %1846 = vmatmul.bf16.gmra.mxu0 %v1596
        %v1847 = vpop.f32.mrf.mxu0
        %v1848 = vadd.f32 %v1525, %v1847
        %v1849 = vpop.f32.mrf.mxu0
        %v1850 = vadd.f32 %v1527, %v1849
        %1851 = vmatmul.bf16.gmra.mxu0 %v1597
        %v1852 = vpop.f32.mrf.mxu0
        %v1853 = vadd.f32 %v1530, %v1852
        %v1854 = vpop.f32.mrf.mxu0
        %v1855 = vadd.f32 %v1532, %v1854
        %1856 = vmatmul.bf16.gmra.mxu0 %v1598
        %v1857 = vpop.f32.mrf.mxu0
        %v1858 = vadd.f32 %v1535, %v1857
        %v1859 = vpop.f32.mrf.mxu0
        %v1860 = vadd.f32 %v1537, %v1859
        %1861 = vmatmul.bf16.gmra.mxu0 %v1599
        %v1862 = vpop.f32.mrf.mxu0
        %v1863 = vadd.f32 %v1540, %v1862
        %v1864 = vpop.f32.mrf.mxu0
        %v1865 = vadd.f32 %v1542, %v1864
        %1866 = vmatmul.bf16.gmra.mxu0 %v1600
        %v1867 = vpop.f32.mrf.mxu0
        %v1868 = vadd.f32 %v1545, %v1867
        %v1869 = vpop.f32.mrf.mxu0
        %v1870 = vadd.f32 %v1547, %v1869
        %1871 = vmatmul.bf16.gmra.mxu0 %v1601
        %v1872 = vpop.f32.mrf.mxu0
        %v1873 = vadd.f32 %v1550, %v1872
        %v1874 = vpop.f32.mrf.mxu0
        %v1875 = vadd.f32 %v1552, %v1874
        %1876 = vmatmul.bf16.gmra.mxu0 %v1602
        %v1877 = vpop.f32.mrf.mxu0
        %v1878 = vadd.f32 %v1555, %v1877
        %v1879 = vpop.f32.mrf.mxu0
        %v1880 = vadd.f32 %v1557, %v1879
        %1881 = vmatmul.bf16.gmra.mxu0 %v1603
        %v1882 = vpop.f32.mrf.mxu0
        %v1883 = vadd.f32 %v1560, %v1882
        %v1884 = vpop.f32.mrf.mxu0
        %v1885 = vadd.f32 %v1562, %v1884
        %1886 = vdwg.mxu0
        %v1887 = vld [vmem:[%s944] sm:$0xf]
        %v1888 = vld [vmem:[%s944 + $0x4] sm:$0xf]
        %v1889 = vld [vmem:[%s944 + $0x8] sm:$0xf]
        %v1890 = vld [vmem:[%s944 + $0xc] sm:$0xf]
        %v1891 = vld [vmem:[%s944 + $0x10] sm:$0xf]
        %v1892 = vld [vmem:[%s944 + $0x14] sm:$0xf]
        %v1893 = vld [vmem:[%s944 + $0x18] sm:$0xf]
        %v1894 = vld [vmem:[%s944 + $0x1c] sm:$0xf]
        %v1895 = vld [vmem:[%s944 + $0x20] sm:$0xf]
        %v1896 = vld [vmem:[%s944 + $0x24] sm:$0xf]
        %v1897 = vld [vmem:[%s944 + $0x28] sm:$0xf]
        %v1898 = vld [vmem:[%s944 + $0x2c] sm:$0xf]
        %v1899 = vld [vmem:[%s944 + $0x30] sm:$0xf]
        %v1900 = vld [vmem:[%s944 + $0x34] sm:$0xf]
        %v1901 = vld [vmem:[%s944 + $0x38] sm:$0xf]
        %v1902 = vld [vmem:[%s944 + $0x3c] sm:$0xf]
        %v1903 = vld [vmem:[#allocation16] sm:$0xff]
        %v1904 = vld [vmem:[#allocation16 + $0x8] sm:$0xf]
        %v1905 = vld [vmem:[#allocation16 + $0xc] sm:$0xff]
        %v1906 = vld [vmem:[#allocation16 + $0x14] sm:$0xf]
        %v1907 = vld [vmem:[#allocation16 + $0x18] sm:$0xff]
        %v1908 = vld [vmem:[#allocation16 + $0x20] sm:$0xf]
        %v1909 = vld [vmem:[#allocation16 + $0x24] sm:$0xff]
        %v1910 = vld [vmem:[#allocation16 + $0x2c] sm:$0xf]
        %v1911 = vld [vmem:[#allocation16 + $0x30] sm:$0xff]
        %v1912 = vld [vmem:[#allocation16 + $0x38] sm:$0xf]
        %v1913 = vld [vmem:[#allocation16 + $0x3c] sm:$0xff]
        %v1914 = vld [vmem:[#allocation16 + $0x44] sm:$0xf]
        %v1915 = vld [vmem:[#allocation16 + $0x48] sm:$0xff]
        %v1916 = vld [vmem:[#allocation16 + $0x50] sm:$0xf]
        %v1917 = vld [vmem:[#allocation16 + $0x54] sm:$0xff]
        %v1918 = vld [vmem:[#allocation16 + $0x5c] sm:$0xf]
        %v1919 = vld [vmem:[#allocation16 + $0x60] sm:$0xff]
        %v1920 = vld [vmem:[#allocation16 + $0x68] sm:$0xf]
        %v1921 = vld [vmem:[#allocation16 + $0x6c] sm:$0xff]
        %v1922 = vld [vmem:[#allocation16 + $0x74] sm:$0xf]
        %v1923 = vld [vmem:[#allocation16 + $0x78] sm:$0xff]
        %v1924 = vld [vmem:[#allocation16 + $0x80] sm:$0xf]
        %v1925 = vld [vmem:[#allocation16 + $0x84] sm:$0xff]
        %v1926 = vld [vmem:[#allocation16 + $0x8c] sm:$0xf]
        %v1927 = vld [vmem:[#allocation16 + $0x90] sm:$0xff]
        %v1928 = vld [vmem:[#allocation16 + $0x98] sm:$0xf]
        %v1929 = vld [vmem:[#allocation16 + $0x9c] sm:$0xff]
        %v1930 = vld [vmem:[#allocation16 + $0xa4] sm:$0xf]
        %v1931 = vld [vmem:[#allocation16 + $0xa8] sm:$0xff]
        %v1932 = vld [vmem:[#allocation16 + $0xb0] sm:$0xf]
        %v1933 = vld [vmem:[#allocation16 + $0xb4] sm:$0xff]
        %v1934 = vld [vmem:[#allocation16 + $0xbc] sm:$0xf]
        %v1951 = vunpack.c.l.b16 %v1887
        %v1952 = vunpack.c.l.b16 %v1888
        %v1953 = vunpack.c.l.b16 %v1889
        %v1954 = vunpack.c.l.b16 %v1890
        %v1955 = vunpack.c.l.b16 %v1891
        %v1956 = vunpack.c.l.b16 %v1892
        %v1957 = vunpack.c.l.b16 %v1893
        %v1958 = vunpack.c.l.b16 %v1894
        %v1959 = vunpack.c.l.b16 %v1895
        %v1960 = vunpack.c.l.b16 %v1896
        %v1961 = vunpack.c.l.b16 %v1897
        %v1962 = vunpack.c.l.b16 %v1898
        %v1963 = vunpack.c.l.b16 %v1899
        %v1964 = vunpack.c.l.b16 %v1900
        %v1965 = vunpack.c.l.b16 %v1901
        %v1966 = vunpack.c.l.b16 %v1902
        %v1967 = vpack.c.b16 %v1952, %v1951
        %v1968 = vpack.c.b16 %v1954, %v1953
        %v1969 = vpack.c.b16 %v1956, %v1955
        %v1970 = vpack.c.b16 %v1958, %v1957
        %v1971 = vpack.c.b16 %v1960, %v1959
        %v1972 = vpack.c.b16 %v1962, %v1961
        %v1973 = vpack.c.b16 %v1964, %v1963
        %v1974 = vpack.c.b16 %v1966, %v1965
        %v2015 = vunpack.c.l.b16 %v1903
        %v2016 = vunpack.c.h.b16 %v1903
        %v2017 = vunpack.c.l.b16 %v1904
        %v2018 = vunpack.c.l.b16 %v1905
        %v2019 = vunpack.c.h.b16 %v1905
        %v2020 = vunpack.c.l.b16 %v1906
        %v2021 = vunpack.c.l.b16 %v1907
        %v2022 = vunpack.c.h.b16 %v1907
        %v2023 = vunpack.c.l.b16 %v1908
        %v2024 = vunpack.c.l.b16 %v1909
        %v2025 = vunpack.c.h.b16 %v1909
        %v2026 = vunpack.c.l.b16 %v1910
        %v2027 = vunpack.c.l.b16 %v1911
        %v2028 = vunpack.c.h.b16 %v1911
        %v2029 = vunpack.c.l.b16 %v1912
        %v2030 = vunpack.c.l.b16 %v1913
        %v2031 = vunpack.c.h.b16 %v1913
        %v2032 = vunpack.c.l.b16 %v1914
        %v2033 = vunpack.c.l.b16 %v1915
        %v2034 = vunpack.c.h.b16 %v1915
        %v2035 = vunpack.c.l.b16 %v1916
        %v2036 = vunpack.c.l.b16 %v1917
        %v2037 = vunpack.c.h.b16 %v1917
        %v2038 = vunpack.c.l.b16 %v1918
        %v2039 = vunpack.c.l.b16 %v1919
        %v2040 = vunpack.c.h.b16 %v1919
        %v2041 = vunpack.c.l.b16 %v1920
        %v2042 = vunpack.c.l.b16 %v1921
        %v2043 = vunpack.c.h.b16 %v1921
        %v2044 = vunpack.c.l.b16 %v1922
        %v2045 = vunpack.c.l.b16 %v1923
        %v2046 = vunpack.c.h.b16 %v1923
        %v2047 = vunpack.c.l.b16 %v1924
        %v2048 = vunpack.c.l.b16 %v1925
        %v2049 = vunpack.c.h.b16 %v1925
        %v2050 = vunpack.c.l.b16 %v1926
        %v2051 = vunpack.c.l.b16 %v1927
        %v2052 = vunpack.c.h.b16 %v1927
        %v2053 = vunpack.c.l.b16 %v1928
        %v2054 = vunpack.c.l.b16 %v1929
        %v2055 = vunpack.c.h.b16 %v1929
        %v2056 = vunpack.c.l.b16 %v1930
        %v2057 = vunpack.c.l.b16 %v1931
        %v2058 = vunpack.c.h.b16 %v1931
        %v2059 = vunpack.c.l.b16 %v1932
        %v2060 = vunpack.c.l.b16 %v1933
        %v2061 = vunpack.c.h.b16 %v1933
        %v2062 = vunpack.c.l.b16 %v1934
        %v2063 = vpack.c.b16 %v2018, %v2015
        %v2064 = vpack.c.b16 %v2019, %v2016
        %v2065 = vpack.c.b16 %v2020, %v2017
        %v2066 = vpack.c.b16 %v2024, %v2021
        %v2067 = vpack.c.b16 %v2025, %v2022
        %v2068 = vpack.c.b16 %v2026, %v2023
        %v2069 = vpack.c.b16 %v2030, %v2027
        %v2070 = vpack.c.b16 %v2031, %v2028
        %v2071 = vpack.c.b16 %v2032, %v2029
        %v2072 = vpack.c.b16 %v2036, %v2033
        %v2073 = vpack.c.b16 %v2037, %v2034
        %v2074 = vpack.c.b16 %v2038, %v2035
        %v2075 = vpack.c.b16 %v2042, %v2039
        %v2076 = vpack.c.b16 %v2043, %v2040
        %v2077 = vpack.c.b16 %v2044, %v2041
        %v2078 = vpack.c.b16 %v2048, %v2045
        %v2079 = vpack.c.b16 %v2049, %v2046
        %v2080 = vpack.c.b16 %v2050, %v2047
        %v2081 = vpack.c.b16 %v2054, %v2051
        %v2082 = vpack.c.b16 %v2055, %v2052
        %v2083 = vpack.c.b16 %v2056, %v2053
        %v2084 = vpack.c.b16 %v2060, %v2057
        %v2085 = vpack.c.b16 %v2061, %v2058
        %v2086 = vpack.c.b16 %v2062, %v2059
        %2111 = vmatpush.bf16.msra.mxu0 %v2084
        %2112 = vmatpush.bf16.msra.mxu0 %v2081
        %2113 = vmatpush.bf16.msra.mxu0 %v2078
        %2114 = vmatpush.bf16.msra.mxu0 %v2075
        %2115 = vmatpush.bf16.msra.mxu0 %v2072
        %2116 = vmatpush.bf16.msra.mxu0 %v2069
        %2117 = vmatpush.bf16.msra.mxu0 %v2066
        %2118 = vmatpush.bf16.msra.mxu0 %v2063
        %2119 = vmatmul.bf16.gmra.mxu0 %v1967
        %v2120 = vpop.f32.mrf.mxu0
        %v2121 = vadd.f32 0.0, %v2120
        %v2122 = vpop.f32.mrf.mxu0
        %v2123 = vadd.f32 0.0, %v2122
        %2124 = vmatmul.bf16.gmra.mxu0 %v1968
        %v2125 = vpop.f32.mrf.mxu0
        %v2126 = vadd.f32 0.0, %v2125
        %v2127 = vpop.f32.mrf.mxu0
        %v2128 = vadd.f32 0.0, %v2127
        %2129 = vmatmul.bf16.gmra.mxu0 %v1969
        %v2130 = vpop.f32.mrf.mxu0
        %v2131 = vadd.f32 0.0, %v2130
        %v2132 = vpop.f32.mrf.mxu0
        %v2133 = vadd.f32 0.0, %v2132
        %2134 = vmatmul.bf16.gmra.mxu0 %v1970
        %v2135 = vpop.f32.mrf.mxu0
        %v2136 = vadd.f32 0.0, %v2135
        %v2137 = vpop.f32.mrf.mxu0
        %v2138 = vadd.f32 0.0, %v2137
        %2139 = vmatmul.bf16.gmra.mxu0 %v1971
        %v2140 = vpop.f32.mrf.mxu0
        %v2141 = vadd.f32 0.0, %v2140
        %v2142 = vpop.f32.mrf.mxu0
        %v2143 = vadd.f32 0.0, %v2142
        %2144 = vmatmul.bf16.gmra.mxu0 %v1972
        %v2145 = vpop.f32.mrf.mxu0
        %v2146 = vadd.f32 0.0, %v2145
        %v2147 = vpop.f32.mrf.mxu0
        %v2148 = vadd.f32 0.0, %v2147
        %2149 = vmatmul.bf16.gmra.mxu0 %v1973
        %v2150 = vpop.f32.mrf.mxu0
        %v2151 = vadd.f32 0.0, %v2150
        %v2152 = vpop.f32.mrf.mxu0
        %v2153 = vadd.f32 0.0, %v2152
        %2154 = vmatmul.bf16.gmra.mxu0 %v1974
        %v2155 = vpop.f32.mrf.mxu0
        %v2156 = vadd.f32 0.0, %v2155
        %v2157 = vpop.f32.mrf.mxu0
        %v2158 = vadd.f32 0.0, %v2157
        %2159 = vdwg.mxu0
        %2160 = vmatpush.bf16.msra.mxu0 %v2085
        %2161 = vmatpush.bf16.msra.mxu0 %v2082
        %2162 = vmatpush.bf16.msra.mxu0 %v2079
        %2163 = vmatpush.bf16.msra.mxu0 %v2076
        %2164 = vmatpush.bf16.msra.mxu0 %v2073
        %2165 = vmatpush.bf16.msra.mxu0 %v2070
        %2166 = vmatpush.bf16.msra.mxu0 %v2067
        %2167 = vmatpush.bf16.msra.mxu0 %v2064
        %2168 = vmatmul.bf16.gmra.mxu0 %v1967
        %v2169 = vpop.f32.mrf.mxu0
        %v2170 = vadd.f32 0.0, %v2169
        %v2171 = vpop.f32.mrf.mxu0
        %v2172 = vadd.f32 0.0, %v2171
        %2173 = vmatmul.bf16.gmra.mxu0 %v1968
        %v2174 = vpop.f32.mrf.mxu0
        %v2175 = vadd.f32 0.0, %v2174
        %v2176 = vpop.f32.mrf.mxu0
        %v2177 = vadd.f32 0.0, %v2176
        %2178 = vmatmul.bf16.gmra.mxu0 %v1969
        %v2179 = vpop.f32.mrf.mxu0
        %v2180 = vadd.f32 0.0, %v2179
        %v2181 = vpop.f32.mrf.mxu0
        %v2182 = vadd.f32 0.0, %v2181
        %2183 = vmatmul.bf16.gmra.mxu0 %v1970
        %v2184 = vpop.f32.mrf.mxu0
        %v2185 = vadd.f32 0.0, %v2184
        %v2186 = vpop.f32.mrf.mxu0
        %v2187 = vadd.f32 0.0, %v2186
        %2188 = vmatmul.bf16.gmra.mxu0 %v1971
        %v2189 = vpop.f32.mrf.mxu0
        %v2190 = vadd.f32 0.0, %v2189
        %v2191 = vpop.f32.mrf.mxu0
        %v2192 = vadd.f32 0.0, %v2191
        %2193 = vmatmul.bf16.gmra.mxu0 %v1972
        %v2194 = vpop.f32.mrf.mxu0
        %v2195 = vadd.f32 0.0, %v2194
        %v2196 = vpop.f32.mrf.mxu0
        %v2197 = vadd.f32 0.0, %v2196
        %2198 = vmatmul.bf16.gmra.mxu0 %v1973
        %v2199 = vpop.f32.mrf.mxu0
        %v2200 = vadd.f32 0.0, %v2199
        %v2201 = vpop.f32.mrf.mxu0
        %v2202 = vadd.f32 0.0, %v2201
        %2203 = vmatmul.bf16.gmra.mxu0 %v1974
        %v2204 = vpop.f32.mrf.mxu0
        %v2205 = vadd.f32 0.0, %v2204
        %v2206 = vpop.f32.mrf.mxu0
        %v2207 = vadd.f32 0.0, %v2206
        %2208 = vdwg.mxu0
        %2209 = vmatpush.bf16.msra.mxu0 %v2086
        %2210 = vmatpush.bf16.msra.mxu0 %v2083
        %2211 = vmatpush.bf16.msra.mxu0 %v2080
        %2212 = vmatpush.bf16.msra.mxu0 %v2077
        %2213 = vmatpush.bf16.msra.mxu0 %v2074
        %2214 = vmatpush.bf16.msra.mxu0 %v2071
        %2215 = vmatpush.bf16.msra.mxu0 %v2068
        %2216 = vmatpush.bf16.msra.mxu0 %v2065
        %2217 = vmatmul.bf16.gmra.mxu0 %v1967
        %v2218 = vpop.f32.mrf.mxu0
        %v2219 = vadd.f32 0.0, %v2218
        %v2220 = vpop.f32.mrf.mxu0
        %v2221 = vadd.f32 0.0, %v2220
        %2222 = vmatmul.bf16.gmra.mxu0 %v1968
        %v2223 = vpop.f32.mrf.mxu0
        %v2224 = vadd.f32 0.0, %v2223
        %v2225 = vpop.f32.mrf.mxu0
        %v2226 = vadd.f32 0.0, %v2225
        %2227 = vmatmul.bf16.gmra.mxu0 %v1969
        %v2228 = vpop.f32.mrf.mxu0
        %v2229 = vadd.f32 0.0, %v2228
        %v2230 = vpop.f32.mrf.mxu0
        %v2231 = vadd.f32 0.0, %v2230
        %2232 = vmatmul.bf16.gmra.mxu0 %v1970
        %v2233 = vpop.f32.mrf.mxu0
        %v2234 = vadd.f32 0.0, %v2233
        %v2235 = vpop.f32.mrf.mxu0
        %v2236 = vadd.f32 0.0, %v2235
        %2237 = vmatmul.bf16.gmra.mxu0 %v1971
        %v2238 = vpop.f32.mrf.mxu0
        %v2239 = vadd.f32 0.0, %v2238
        %v2240 = vpop.f32.mrf.mxu0
        %v2241 = vadd.f32 0.0, %v2240
        %2242 = vmatmul.bf16.gmra.mxu0 %v1972
        %v2243 = vpop.f32.mrf.mxu0
        %v2244 = vadd.f32 0.0, %v2243
        %v2245 = vpop.f32.mrf.mxu0
        %v2246 = vadd.f32 0.0, %v2245
        %2247 = vmatmul.bf16.gmra.mxu0 %v1973
        %v2248 = vpop.f32.mrf.mxu0
        %v2249 = vadd.f32 0.0, %v2248
        %v2250 = vpop.f32.mrf.mxu0
        %v2251 = vadd.f32 0.0, %v2250
        %2252 = vmatmul.bf16.gmra.mxu0 %v1974
        %v2253 = vpop.f32.mrf.mxu0
        %v2254 = vadd.f32 0.0, %v2253
        %v2255 = vpop.f32.mrf.mxu0
        %v2256 = vadd.f32 0.0, %v2255
        %2257 = vdwg.mxu0
        %v2258 = vadd.f32 %v1750, %v2121
        %v2259 = vadd.f32 %v1799, %v2170
        %v2260 = vadd.f32 %v1848, %v2219
        %v2261 = vadd.f32 %v1752, %v2123
        %v2262 = vadd.f32 %v1801, %v2172
        %v2263 = vadd.f32 %v1850, %v2221
        %v2264 = vadd.f32 %v1755, %v2126
        %v2265 = vadd.f32 %v1804, %v2175
        %v2266 = vadd.f32 %v1853, %v2224
        %v2267 = vadd.f32 %v1757, %v2128
        %v2268 = vadd.f32 %v1806, %v2177
        %v2269 = vadd.f32 %v1855, %v2226
        %v2270 = vadd.f32 %v1760, %v2131
        %v2271 = vadd.f32 %v1809, %v2180
        %v2272 = vadd.f32 %v1858, %v2229
        %v2273 = vadd.f32 %v1762, %v2133
        %v2274 = vadd.f32 %v1811, %v2182
        %v2275 = vadd.f32 %v1860, %v2231
        %v2276 = vadd.f32 %v1765, %v2136
        %v2277 = vadd.f32 %v1814, %v2185
        %v2278 = vadd.f32 %v1863, %v2234
        %v2279 = vadd.f32 %v1767, %v2138
        %v2280 = vadd.f32 %v1816, %v2187
        %v2281 = vadd.f32 %v1865, %v2236
        %v2282 = vadd.f32 %v1770, %v2141
        %v2283 = vadd.f32 %v1819, %v2190
        %v2284 = vadd.f32 %v1868, %v2239
        %v2285 = vadd.f32 %v1772, %v2143
        %v2286 = vadd.f32 %v1821, %v2192
        %v2287 = vadd.f32 %v1870, %v2241
        %v2288 = vadd.f32 %v1775, %v2146
        %v2289 = vadd.f32 %v1824, %v2195
        %v2290 = vadd.f32 %v1873, %v2244
        %v2291 = vadd.f32 %v1777, %v2148
        %v2292 = vadd.f32 %v1826, %v2197
        %v2293 = vadd.f32 %v1875, %v2246
        %v2294 = vadd.f32 %v1780, %v2151
        %v2295 = vadd.f32 %v1829, %v2200
        %v2296 = vadd.f32 %v1878, %v2249
        %v2297 = vadd.f32 %v1782, %v2153
        %v2298 = vadd.f32 %v1831, %v2202
        %v2299 = vadd.f32 %v1880, %v2251
        %v2300 = vadd.f32 %v1785, %v2156
        %v2301 = vadd.f32 %v1834, %v2205
        %v2302 = vadd.f32 %v1883, %v2254
        %v2303 = vadd.f32 %v1787, %v2158
        %v2304 = vadd.f32 %v1836, %v2207
        %v2305 = vadd.f32 %v1885, %v2256
        %v2306 = vld [vmem:[%s20] sm:$0x7]
        %v2308 = vperm.slane %v2306, 0
        %v2309 = vperm.slane %v2306, 1
        %v2310 = vperm.slane %v2306, 2
        %v2314 = vadd.f32 %v2258, %v2308
        %v2315 = vadd.f32 %v2259, %v2309
        %v2316 = vadd.f32 %v2260, %v2310
        %v2317 = vadd.f32 %v2261, %v2308
        %v2318 = vadd.f32 %v2262, %v2309
        %v2319 = vadd.f32 %v2263, %v2310
        %v2320 = vadd.f32 %v2264, %v2308
        %v2321 = vadd.f32 %v2265, %v2309
        %v2322 = vadd.f32 %v2266, %v2310
        %v2323 = vadd.f32 %v2267, %v2308
        %v2324 = vadd.f32 %v2268, %v2309
        %v2325 = vadd.f32 %v2269, %v2310
        %v2326 = vadd.f32 %v2270, %v2308
        %v2327 = vadd.f32 %v2271, %v2309
        %v2328 = vadd.f32 %v2272, %v2310
        %v2329 = vadd.f32 %v2273, %v2308
        %v2330 = vadd.f32 %v2274, %v2309
        %v2331 = vadd.f32 %v2275, %v2310
        %v2332 = vadd.f32 %v2276, %v2308
        %v2333 = vadd.f32 %v2277, %v2309
        %v2334 = vadd.f32 %v2278, %v2310
        %v2335 = vadd.f32 %v2279, %v2308
        %v2336 = vadd.f32 %v2280, %v2309
        %v2337 = vadd.f32 %v2281, %v2310
        %v2338 = vadd.f32 %v2282, %v2308
        %v2339 = vadd.f32 %v2283, %v2309
        %v2340 = vadd.f32 %v2284, %v2310
        %v2341 = vadd.f32 %v2285, %v2308
        %v2342 = vadd.f32 %v2286, %v2309
        %v2343 = vadd.f32 %v2287, %v2310
        %v2344 = vadd.f32 %v2288, %v2308
        %v2345 = vadd.f32 %v2289, %v2309
        %v2346 = vadd.f32 %v2290, %v2310
        %v2347 = vadd.f32 %v2291, %v2308
        %v2348 = vadd.f32 %v2292, %v2309
        %v2349 = vadd.f32 %v2293, %v2310
        %v2350 = vadd.f32 %v2294, %v2308
        %v2351 = vadd.f32 %v2295, %v2309
        %v2352 = vadd.f32 %v2296, %v2310
        %v2353 = vadd.f32 %v2297, %v2308
        %v2354 = vadd.f32 %v2298, %v2309
        %v2355 = vadd.f32 %v2299, %v2310
        %v2356 = vadd.f32 %v2300, %v2308
        %v2357 = vadd.f32 %v2301, %v2309
        %v2358 = vadd.f32 %v2302, %v2310
        %v2359 = vadd.f32 %v2303, %v2308
        %v2360 = vadd.f32 %v2304, %v2309
        %v2361 = vadd.f32 %v2305, %v2310
        %v2362 = vmax.f32 %v2314, 0.0
        %v2363 = vmax.f32 %v2315, 0.0
        %v2364 = vmax.f32 %v2316, 0.0
        %v2365 = vmax.f32 %v2317, 0.0
        %v2366 = vmax.f32 %v2318, 0.0
        %v2367 = vmax.f32 %v2319, 0.0
        %v2368 = vmax.f32 %v2320, 0.0
        %v2369 = vmax.f32 %v2321, 0.0
        %v2370 = vmax.f32 %v2322, 0.0
        %v2371 = vmax.f32 %v2323, 0.0
        %v2372 = vmax.f32 %v2324, 0.0
        %v2373 = vmax.f32 %v2325, 0.0
        %v2374 = vmax.f32 %v2326, 0.0
        %v2375 = vmax.f32 %v2327, 0.0
        %v2376 = vmax.f32 %v2328, 0.0
        %v2377 = vmax.f32 %v2329, 0.0
        %v2378 = vmax.f32 %v2330, 0.0
        %v2379 = vmax.f32 %v2331, 0.0
        %v2380 = vmax.f32 %v2332, 0.0
        %v2381 = vmax.f32 %v2333, 0.0
        %v2382 = vmax.f32 %v2334, 0.0
        %v2383 = vmax.f32 %v2335, 0.0
        %v2384 = vmax.f32 %v2336, 0.0
        %v2385 = vmax.f32 %v2337, 0.0
        %v2386 = vmax.f32 %v2338, 0.0
        %v2387 = vmax.f32 %v2339, 0.0
        %v2388 = vmax.f32 %v2340, 0.0
        %v2389 = vmax.f32 %v2341, 0.0
        %v2390 = vmax.f32 %v2342, 0.0
        %v2391 = vmax.f32 %v2343, 0.0
        %v2392 = vmax.f32 %v2344, 0.0
        %v2393 = vmax.f32 %v2345, 0.0
        %v2394 = vmax.f32 %v2346, 0.0
        %v2395 = vmax.f32 %v2347, 0.0
        %v2396 = vmax.f32 %v2348, 0.0
        %v2397 = vmax.f32 %v2349, 0.0
        %v2398 = vmax.f32 %v2350, 0.0
        %v2399 = vmax.f32 %v2351, 0.0
        %v2400 = vmax.f32 %v2352, 0.0
        %v2401 = vmax.f32 %v2353, 0.0
        %v2402 = vmax.f32 %v2354, 0.0
        %v2403 = vmax.f32 %v2355, 0.0
        %v2404 = vmax.f32 %v2356, 0.0
        %v2405 = vmax.f32 %v2357, 0.0
        %v2406 = vmax.f32 %v2358, 0.0
        %v2407 = vmax.f32 %v2359, 0.0
        %v2408 = vmax.f32 %v2360, 0.0
        %v2409 = vmax.f32 %v2361, 0.0
        %v2410 = vld [vmem:[#allocation17] sm:$0xff]
        %v2411 = vld [vmem:[#allocation17 + $0x8] sm:$0xff]
        %v2412 = vld [vmem:[#allocation17 + $0x10] sm:$0xff]
        %v2413 = vld [vmem:[#allocation17 + $0x18] sm:$0xff]
        %v2414 = vld [vmem:[#allocation17 + $0x20] sm:$0xff]
        %v2415 = vld [vmem:[#allocation17 + $0x28] sm:$0xff]
        %v2416 = vld [vmem:[#allocation17 + $0x30] sm:$0xff]
        %v2417 = vld [vmem:[#allocation17 + $0x38] sm:$0xff]
        %v2418 = vld [vmem:[#allocation17 + $0x40] sm:$0xff]
        %v2419 = vld [vmem:[#allocation17 + $0x48] sm:$0xff]
        %v2420 = vld [vmem:[#allocation17 + $0x50] sm:$0xff]
        %v2421 = vld [vmem:[#allocation17 + $0x58] sm:$0xff]
        %v2422 = vld [vmem:[#allocation17 + $0x60] sm:$0xff]
        %v2423 = vld [vmem:[#allocation17 + $0x68] sm:$0xff]
        %v2424 = vld [vmem:[#allocation17 + $0x70] sm:$0xff]
        %v2425 = vld [vmem:[#allocation17 + $0x78] sm:$0xff]
        %v2426 = vld [vmem:[#allocation17 + $0x80] sm:$0xff]
        %v2427 = vld [vmem:[#allocation17 + $0x88] sm:$0xff]
        %v2428 = vld [vmem:[#allocation17 + $0x90] sm:$0xff]
        %v2429 = vld [vmem:[#allocation17 + $0x98] sm:$0xff]
        %v2430 = vld [vmem:[#allocation17 + $0xa0] sm:$0xff]
        %v2431 = vld [vmem:[#allocation17 + $0xa8] sm:$0xff]
        %v2432 = vld [vmem:[#allocation17 + $0xb0] sm:$0xff]
        %v2433 = vld [vmem:[#allocation17 + $0xb8] sm:$0xff]
        %v2434 = vld [vmem:[#allocation17 + $0xc0] sm:$0xff]
        %v2435 = vld [vmem:[#allocation17 + $0xc8] sm:$0xff]
        %v2436 = vld [vmem:[#allocation17 + $0xd0] sm:$0xff]
        %v2437 = vld [vmem:[#allocation17 + $0xd8] sm:$0xff]
        %v2438 = vld [vmem:[#allocation17 + $0xe0] sm:$0xff]
        %v2439 = vld [vmem:[#allocation17 + $0xe8] sm:$0xff]
        %v2440 = vld [vmem:[#allocation17 + $0xf0] sm:$0xff]
        %v2441 = vld [vmem:[#allocation17 + $0xf8] sm:$0xff]
        %v2442 = vld [vmem:[#allocation17 + $0x100] sm:$0xff]
        %v2443 = vld [vmem:[#allocation17 + $0x108] sm:$0xff]
        %v2444 = vld [vmem:[#allocation17 + $0x110] sm:$0xff]
        %v2445 = vld [vmem:[#allocation17 + $0x118] sm:$0xff]
        %v2446 = vld [vmem:[#allocation17 + $0x120] sm:$0xff]
        %v2447 = vld [vmem:[#allocation17 + $0x128] sm:$0xff]
        %v2448 = vld [vmem:[#allocation17 + $0x130] sm:$0xff]
        %v2449 = vld [vmem:[#allocation17 + $0x138] sm:$0xff]
        %v2450 = vld [vmem:[#allocation17 + $0x140] sm:$0xff]
        %v2451 = vld [vmem:[#allocation17 + $0x148] sm:$0xff]
        %v2452 = vld [vmem:[#allocation17 + $0x150] sm:$0xff]
        %v2453 = vld [vmem:[#allocation17 + $0x158] sm:$0xff]
        %v2454 = vld [vmem:[#allocation17 + $0x160] sm:$0xff]
        %v2455 = vld [vmem:[#allocation17 + $0x168] sm:$0xff]
        %v2456 = vld [vmem:[#allocation17 + $0x170] sm:$0xff]
        %v2457 = vld [vmem:[#allocation17 + $0x178] sm:$0xff]
        %v2458 = vpack.c.bf16 %v2365, %v2362
        %v2459 = vpack.c.bf16 %v2366, %v2363
        %v2460 = vpack.c.bf16 %v2367, %v2364
        %v2461 = vpack.c.bf16 %v2371, %v2368
        %v2462 = vpack.c.bf16 %v2372, %v2369
        %v2463 = vpack.c.bf16 %v2373, %v2370
        %v2464 = vpack.c.bf16 %v2377, %v2374
        %v2465 = vpack.c.bf16 %v2378, %v2375
        %v2466 = vpack.c.bf16 %v2379, %v2376
        %v2467 = vpack.c.bf16 %v2383, %v2380
        %v2468 = vpack.c.bf16 %v2384, %v2381
        %v2469 = vpack.c.bf16 %v2385, %v2382
        %v2470 = vpack.c.bf16 %v2389, %v2386
        %v2471 = vpack.c.bf16 %v2390, %v2387
        %v2472 = vpack.c.bf16 %v2391, %v2388
        %v2473 = vpack.c.bf16 %v2395, %v2392
        %v2474 = vpack.c.bf16 %v2396, %v2393
        %v2475 = vpack.c.bf16 %v2397, %v2394
        %v2476 = vpack.c.bf16 %v2401, %v2398
        %v2477 = vpack.c.bf16 %v2402, %v2399
        %v2478 = vpack.c.bf16 %v2403, %v2400
        %v2479 = vpack.c.bf16 %v2407, %v2404
        %v2480 = vpack.c.bf16 %v2408, %v2405
        %v2481 = vpack.c.bf16 %v2409, %v2406
        %v2482 = vld [vmem:[%s20 + $0x3] sm:$0x3]
        %v2484 = vperm.slane %v2482, 0
        %v2485 = vperm.slane %v2482, 1
        %v2536 = vunpack.c.l.b16 %v2410
        %v2537 = vunpack.c.h.b16 %v2410
        %v2538 = vunpack.c.l.b16 %v2411
        %v2539 = vunpack.c.h.b16 %v2411
        %v2540 = vunpack.c.l.b16 %v2412
        %v2541 = vunpack.c.h.b16 %v2412
        %v2542 = vunpack.c.l.b16 %v2413
        %v2543 = vunpack.c.h.b16 %v2413
        %v2544 = vunpack.c.l.b16 %v2414
        %v2545 = vunpack.c.h.b16 %v2414
        %v2546 = vunpack.c.l.b16 %v2415
        %v2547 = vunpack.c.h.b16 %v2415
        %v2548 = vunpack.c.l.b16 %v2416
        %v2549 = vunpack.c.h.b16 %v2416
        %v2550 = vunpack.c.l.b16 %v2417
        %v2551 = vunpack.c.h.b16 %v2417
        %v2552 = vunpack.c.l.b16 %v2418
        %v2553 = vunpack.c.h.b16 %v2418
        %v2554 = vunpack.c.l.b16 %v2419
        %v2555 = vunpack.c.h.b16 %v2419
        %v2556 = vunpack.c.l.b16 %v2420
        %v2557 = vunpack.c.h.b16 %v2420
        %v2558 = vunpack.c.l.b16 %v2421
        %v2559 = vunpack.c.h.b16 %v2421
        %v2560 = vunpack.c.l.b16 %v2422
        %v2561 = vunpack.c.h.b16 %v2422
        %v2562 = vunpack.c.l.b16 %v2423
        %v2563 = vunpack.c.h.b16 %v2423
        %v2564 = vunpack.c.l.b16 %v2424
        %v2565 = vunpack.c.h.b16 %v2424
        %v2566 = vunpack.c.l.b16 %v2425
        %v2567 = vunpack.c.h.b16 %v2425
        %v2568 = vunpack.c.l.b16 %v2426
        %v2569 = vunpack.c.h.b16 %v2426
        %v2570 = vunpack.c.l.b16 %v2427
        %v2571 = vunpack.c.h.b16 %v2427
        %v2572 = vunpack.c.l.b16 %v2428
        %v2573 = vunpack.c.h.b16 %v2428
        %v2574 = vunpack.c.l.b16 %v2429
        %v2575 = vunpack.c.h.b16 %v2429
        %v2576 = vunpack.c.l.b16 %v2430
        %v2577 = vunpack.c.h.b16 %v2430
        %v2578 = vunpack.c.l.b16 %v2431
        %v2579 = vunpack.c.h.b16 %v2431
        %v2580 = vunpack.c.l.b16 %v2432
        %v2581 = vunpack.c.h.b16 %v2432
        %v2582 = vunpack.c.l.b16 %v2433
        %v2583 = vunpack.c.h.b16 %v2433
        %v2584 = vunpack.c.l.b16 %v2434
        %v2585 = vunpack.c.h.b16 %v2434
        %v2586 = vunpack.c.l.b16 %v2435
        %v2587 = vunpack.c.h.b16 %v2435
        %v2588 = vunpack.c.l.b16 %v2436
        %v2589 = vunpack.c.h.b16 %v2436
        %v2590 = vunpack.c.l.b16 %v2437
        %v2591 = vunpack.c.h.b16 %v2437
        %v2592 = vunpack.c.l.b16 %v2438
        %v2593 = vunpack.c.h.b16 %v2438
        %v2594 = vunpack.c.l.b16 %v2439
        %v2595 = vunpack.c.h.b16 %v2439
        %v2596 = vunpack.c.l.b16 %v2440
        %v2597 = vunpack.c.h.b16 %v2440
        %v2598 = vunpack.c.l.b16 %v2441
        %v2599 = vunpack.c.h.b16 %v2441
        %v2600 = vunpack.c.l.b16 %v2442
        %v2601 = vunpack.c.h.b16 %v2442
        %v2602 = vunpack.c.l.b16 %v2443
        %v2603 = vunpack.c.h.b16 %v2443
        %v2604 = vunpack.c.l.b16 %v2444
        %v2605 = vunpack.c.h.b16 %v2444
        %v2606 = vunpack.c.l.b16 %v2445
        %v2607 = vunpack.c.h.b16 %v2445
        %v2608 = vunpack.c.l.b16 %v2446
        %v2609 = vunpack.c.h.b16 %v2446
        %v2610 = vunpack.c.l.b16 %v2447
        %v2611 = vunpack.c.h.b16 %v2447
        %v2612 = vunpack.c.l.b16 %v2448
        %v2613 = vunpack.c.h.b16 %v2448
        %v2614 = vunpack.c.l.b16 %v2449
        %v2615 = vunpack.c.h.b16 %v2449
        %v2616 = vunpack.c.l.b16 %v2450
        %v2617 = vunpack.c.h.b16 %v2450
        %v2618 = vunpack.c.l.b16 %v2451
        %v2619 = vunpack.c.h.b16 %v2451
        %v2620 = vunpack.c.l.b16 %v2452
        %v2621 = vunpack.c.h.b16 %v2452
        %v2622 = vunpack.c.l.b16 %v2453
        %v2623 = vunpack.c.h.b16 %v2453
        %v2624 = vunpack.c.l.b16 %v2454
        %v2625 = vunpack.c.h.b16 %v2454
        %v2626 = vunpack.c.l.b16 %v2455
        %v2627 = vunpack.c.h.b16 %v2455
        %v2628 = vunpack.c.l.b16 %v2456
        %v2629 = vunpack.c.h.b16 %v2456
        %v2630 = vunpack.c.l.b16 %v2457
        %v2631 = vunpack.c.h.b16 %v2457
        %v2632 = vpack.c.b16 %v2538, %v2536
        %v2633 = vpack.c.b16 %v2539, %v2537
        %v2634 = vpack.c.b16 %v2542, %v2540
        %v2635 = vpack.c.b16 %v2543, %v2541
        %v2636 = vpack.c.b16 %v2546, %v2544
        %v2637 = vpack.c.b16 %v2547, %v2545
        %v2638 = vpack.c.b16 %v2550, %v2548
        %v2639 = vpack.c.b16 %v2551, %v2549
        %v2640 = vpack.c.b16 %v2554, %v2552
        %v2641 = vpack.c.b16 %v2555, %v2553
        %v2642 = vpack.c.b16 %v2558, %v2556
        %v2643 = vpack.c.b16 %v2559, %v2557
        %v2644 = vpack.c.b16 %v2562, %v2560
        %v2645 = vpack.c.b16 %v2563, %v2561
        %v2646 = vpack.c.b16 %v2566, %v2564
        %v2647 = vpack.c.b16 %v2567, %v2565
        %v2648 = vpack.c.b16 %v2570, %v2568
        %v2649 = vpack.c.b16 %v2571, %v2569
        %v2650 = vpack.c.b16 %v2574, %v2572
        %v2651 = vpack.c.b16 %v2575, %v2573
        %v2652 = vpack.c.b16 %v2578, %v2576
        %v2653 = vpack.c.b16 %v2579, %v2577
        %v2654 = vpack.c.b16 %v2582, %v2580
        %v2655 = vpack.c.b16 %v2583, %v2581
        %v2656 = vpack.c.b16 %v2586, %v2584
        %v2657 = vpack.c.b16 %v2587, %v2585
        %v2658 = vpack.c.b16 %v2590, %v2588
        %v2659 = vpack.c.b16 %v2591, %v2589
        %v2660 = vpack.c.b16 %v2594, %v2592
        %v2661 = vpack.c.b16 %v2595, %v2593
        %v2662 = vpack.c.b16 %v2598, %v2596
        %v2663 = vpack.c.b16 %v2599, %v2597
        %v2664 = vpack.c.b16 %v2602, %v2600
        %v2665 = vpack.c.b16 %v2603, %v2601
        %v2666 = vpack.c.b16 %v2606, %v2604
        %v2667 = vpack.c.b16 %v2607, %v2605
        %v2668 = vpack.c.b16 %v2610, %v2608
        %v2669 = vpack.c.b16 %v2611, %v2609
        %v2670 = vpack.c.b16 %v2614, %v2612
        %v2671 = vpack.c.b16 %v2615, %v2613
        %v2672 = vpack.c.b16 %v2618, %v2616
        %v2673 = vpack.c.b16 %v2619, %v2617
        %v2674 = vpack.c.b16 %v2622, %v2620
        %v2675 = vpack.c.b16 %v2623, %v2621
        %v2676 = vpack.c.b16 %v2626, %v2624
        %v2677 = vpack.c.b16 %v2627, %v2625
        %v2678 = vpack.c.b16 %v2630, %v2628
        %v2679 = vpack.c.b16 %v2631, %v2629
        %2728 = vmatpush.bf16.msra.mxu0 %v2646
        %2729 = vmatpush.bf16.msra.mxu0 %v2644
        %2730 = vmatpush.bf16.msra.mxu0 %v2642
        %2731 = vmatpush.bf16.msra.mxu0 %v2640
        %2732 = vmatpush.bf16.msra.mxu0 %v2638
        %2733 = vmatpush.bf16.msra.mxu0 %v2636
        %2734 = vmatpush.bf16.msra.mxu0 %v2634
        %2735 = vmatpush.bf16.msra.mxu0 %v2632
        %2736 = vmatmul.bf16.gmra.mxu0 %v2458
        %v2737 = vpop.f32.mrf.mxu0
        %v2738 = vadd.f32 %v2484, %v2737
        %v2739 = vpop.f32.mrf.mxu0
        %v2740 = vadd.f32 %v2484, %v2739
        %2741 = vmatmul.bf16.gmra.mxu0 %v2461
        %v2742 = vpop.f32.mrf.mxu0
        %v2743 = vadd.f32 %v2484, %v2742
        %v2744 = vpop.f32.mrf.mxu0
        %v2745 = vadd.f32 %v2484, %v2744
        %2746 = vmatmul.bf16.gmra.mxu0 %v2464
        %v2747 = vpop.f32.mrf.mxu0
        %v2748 = vadd.f32 %v2484, %v2747
        %v2749 = vpop.f32.mrf.mxu0
        %v2750 = vadd.f32 %v2484, %v2749
        %2751 = vmatmul.bf16.gmra.mxu0 %v2467
        %v2752 = vpop.f32.mrf.mxu0
        %v2753 = vadd.f32 %v2484, %v2752
        %v2754 = vpop.f32.mrf.mxu0
        %v2755 = vadd.f32 %v2484, %v2754
        %2756 = vmatmul.bf16.gmra.mxu0 %v2470
        %v2757 = vpop.f32.mrf.mxu0
        %v2758 = vadd.f32 %v2484, %v2757
        %v2759 = vpop.f32.mrf.mxu0
        %v2760 = vadd.f32 %v2484, %v2759
        %2761 = vmatmul.bf16.gmra.mxu0 %v2473
        %v2762 = vpop.f32.mrf.mxu0
        %v2763 = vadd.f32 %v2484, %v2762
        %v2764 = vpop.f32.mrf.mxu0
        %v2765 = vadd.f32 %v2484, %v2764
        %2766 = vmatmul.bf16.gmra.mxu0 %v2476
        %v2767 = vpop.f32.mrf.mxu0
        %v2768 = vadd.f32 %v2484, %v2767
        %v2769 = vpop.f32.mrf.mxu0
        %v2770 = vadd.f32 %v2484, %v2769
        %2771 = vmatmul.bf16.gmra.mxu0 %v2479
        %v2772 = vpop.f32.mrf.mxu0
        %v2773 = vadd.f32 %v2484, %v2772
        %v2774 = vpop.f32.mrf.mxu0
        %v2775 = vadd.f32 %v2484, %v2774
        %2776 = vdwg.mxu0
        %2777 = vmatpush.bf16.msra.mxu0 %v2662
        %2778 = vmatpush.bf16.msra.mxu0 %v2660
        %2779 = vmatpush.bf16.msra.mxu0 %v2658
        %2780 = vmatpush.bf16.msra.mxu0 %v2656
        %2781 = vmatpush.bf16.msra.mxu0 %v2654
        %2782 = vmatpush.bf16.msra.mxu0 %v2652
        %2783 = vmatpush.bf16.msra.mxu0 %v2650
        %2784 = vmatpush.bf16.msra.mxu0 %v2648
        %2785 = vmatmul.bf16.gmra.mxu0 %v2459
        %v2786 = vpop.f32.mrf.mxu0
        %v2787 = vadd.f32 %v2738, %v2786
        %v2788 = vpop.f32.mrf.mxu0
        %v2789 = vadd.f32 %v2740, %v2788
        %2790 = vmatmul.bf16.gmra.mxu0 %v2462
        %v2791 = vpop.f32.mrf.mxu0
        %v2792 = vadd.f32 %v2743, %v2791
        %v2793 = vpop.f32.mrf.mxu0
        %v2794 = vadd.f32 %v2745, %v2793
        %2795 = vmatmul.bf16.gmra.mxu0 %v2465
        %v2796 = vpop.f32.mrf.mxu0
        %v2797 = vadd.f32 %v2748, %v2796
        %v2798 = vpop.f32.mrf.mxu0
        %v2799 = vadd.f32 %v2750, %v2798
        %2800 = vmatmul.bf16.gmra.mxu0 %v2468
        %v2801 = vpop.f32.mrf.mxu0
        %v2802 = vadd.f32 %v2753, %v2801
        %v2803 = vpop.f32.mrf.mxu0
        %v2804 = vadd.f32 %v2755, %v2803
        %2805 = vmatmul.bf16.gmra.mxu0 %v2471
        %v2806 = vpop.f32.mrf.mxu0
        %v2807 = vadd.f32 %v2758, %v2806
        %v2808 = vpop.f32.mrf.mxu0
        %v2809 = vadd.f32 %v2760, %v2808
        %2810 = vmatmul.bf16.gmra.mxu0 %v2474
        %v2811 = vpop.f32.mrf.mxu0
        %v2812 = vadd.f32 %v2763, %v2811
        %v2813 = vpop.f32.mrf.mxu0
        %v2814 = vadd.f32 %v2765, %v2813
        %2815 = vmatmul.bf16.gmra.mxu0 %v2477
        %v2816 = vpop.f32.mrf.mxu0
        %v2817 = vadd.f32 %v2768, %v2816
        %v2818 = vpop.f32.mrf.mxu0
        %v2819 = vadd.f32 %v2770, %v2818
        %2820 = vmatmul.bf16.gmra.mxu0 %v2480
        %v2821 = vpop.f32.mrf.mxu0
        %v2822 = vadd.f32 %v2773, %v2821
        %v2823 = vpop.f32.mrf.mxu0
        %v2824 = vadd.f32 %v2775, %v2823
        %2825 = vdwg.mxu0
        %2826 = vmatpush.bf16.msra.mxu0 %v2678
        %2827 = vmatpush.bf16.msra.mxu0 %v2676
        %2828 = vmatpush.bf16.msra.mxu0 %v2674
        %2829 = vmatpush.bf16.msra.mxu0 %v2672
        %2830 = vmatpush.bf16.msra.mxu0 %v2670
        %2831 = vmatpush.bf16.msra.mxu0 %v2668
        %2832 = vmatpush.bf16.msra.mxu0 %v2666
        %2833 = vmatpush.bf16.msra.mxu0 %v2664
        %2834 = vmatmul.bf16.gmra.mxu0 %v2460
        %v2835 = vpop.f32.mrf.mxu0
        %v2836 = vadd.f32 %v2787, %v2835
        %v2837 = vpop.f32.mrf.mxu0
        %v2838 = vadd.f32 %v2789, %v2837
        %2839 = vmatmul.bf16.gmra.mxu0 %v2463
        %v2840 = vpop.f32.mrf.mxu0
        %v2841 = vadd.f32 %v2792, %v2840
        %v2842 = vpop.f32.mrf.mxu0
        %v2843 = vadd.f32 %v2794, %v2842
        %2844 = vmatmul.bf16.gmra.mxu0 %v2466
        %v2845 = vpop.f32.mrf.mxu0
        %v2846 = vadd.f32 %v2797, %v2845
        %v2847 = vpop.f32.mrf.mxu0
        %v2848 = vadd.f32 %v2799, %v2847
        %2849 = vmatmul.bf16.gmra.mxu0 %v2469
        %v2850 = vpop.f32.mrf.mxu0
        %v2851 = vadd.f32 %v2802, %v2850
        %v2852 = vpop.f32.mrf.mxu0
        %v2853 = vadd.f32 %v2804, %v2852
        %2854 = vmatmul.bf16.gmra.mxu0 %v2472
        %v2855 = vpop.f32.mrf.mxu0
        %v2856 = vadd.f32 %v2807, %v2855
        %v2857 = vpop.f32.mrf.mxu0
        %v2858 = vadd.f32 %v2809, %v2857
        %2859 = vmatmul.bf16.gmra.mxu0 %v2475
        %v2860 = vpop.f32.mrf.mxu0
        %v2861 = vadd.f32 %v2812, %v2860
        %v2862 = vpop.f32.mrf.mxu0
        %v2863 = vadd.f32 %v2814, %v2862
        %2864 = vmatmul.bf16.gmra.mxu0 %v2478
        %v2865 = vpop.f32.mrf.mxu0
        %v2866 = vadd.f32 %v2817, %v2865
        %v2867 = vpop.f32.mrf.mxu0
        %v2868 = vadd.f32 %v2819, %v2867
        %2869 = vmatmul.bf16.gmra.mxu0 %v2481
        %v2870 = vpop.f32.mrf.mxu0
        %v2871 = vadd.f32 %v2822, %v2870
        %v2872 = vpop.f32.mrf.mxu0
        %v2873 = vadd.f32 %v2824, %v2872
        %2874 = vdwg.mxu0
        %2875 = vmatpush.bf16.msra.mxu0 %v2647
        %2876 = vmatpush.bf16.msra.mxu0 %v2645
        %2877 = vmatpush.bf16.msra.mxu0 %v2643
        %2878 = vmatpush.bf16.msra.mxu0 %v2641
        %2879 = vmatpush.bf16.msra.mxu0 %v2639
        %2880 = vmatpush.bf16.msra.mxu0 %v2637
        %2881 = vmatpush.bf16.msra.mxu0 %v2635
        %2882 = vmatpush.bf16.msra.mxu0 %v2633
        %2883 = vmatmul.bf16.gmra.mxu0 %v2458
        %v2884 = vpop.f32.mrf.mxu0
        %v2885 = vadd.f32 %v2485, %v2884
        %v2886 = vpop.f32.mrf.mxu0
        %v2887 = vadd.f32 %v2485, %v2886
        %2888 = vmatmul.bf16.gmra.mxu0 %v2461
        %v2889 = vpop.f32.mrf.mxu0
        %v2890 = vadd.f32 %v2485, %v2889
        %v2891 = vpop.f32.mrf.mxu0
        %v2892 = vadd.f32 %v2485, %v2891
        %2893 = vmatmul.bf16.gmra.mxu0 %v2464
        %v2894 = vpop.f32.mrf.mxu0
        %v2895 = vadd.f32 %v2485, %v2894
        %v2896 = vpop.f32.mrf.mxu0
        %v2897 = vadd.f32 %v2485, %v2896
        %2898 = vmatmul.bf16.gmra.mxu0 %v2467
        %v2899 = vpop.f32.mrf.mxu0
        %v2900 = vadd.f32 %v2485, %v2899
        %v2901 = vpop.f32.mrf.mxu0
        %v2902 = vadd.f32 %v2485, %v2901
        %2903 = vmatmul.bf16.gmra.mxu0 %v2470
        %v2904 = vpop.f32.mrf.mxu0
        %v2905 = vadd.f32 %v2485, %v2904
        %v2906 = vpop.f32.mrf.mxu0
        %v2907 = vadd.f32 %v2485, %v2906
        %2908 = vmatmul.bf16.gmra.mxu0 %v2473
        %v2909 = vpop.f32.mrf.mxu0
        %v2910 = vadd.f32 %v2485, %v2909
        %v2911 = vpop.f32.mrf.mxu0
        %v2912 = vadd.f32 %v2485, %v2911
        %2913 = vmatmul.bf16.gmra.mxu0 %v2476
        %v2914 = vpop.f32.mrf.mxu0
        %v2915 = vadd.f32 %v2485, %v2914
        %v2916 = vpop.f32.mrf.mxu0
        %v2917 = vadd.f32 %v2485, %v2916
        %2918 = vmatmul.bf16.gmra.mxu0 %v2479
        %v2919 = vpop.f32.mrf.mxu0
        %v2920 = vadd.f32 %v2485, %v2919
        %v2921 = vpop.f32.mrf.mxu0
        %v2922 = vadd.f32 %v2485, %v2921
        %2923 = vdwg.mxu0
        %2924 = vmatpush.bf16.msra.mxu0 %v2663
        %2925 = vmatpush.bf16.msra.mxu0 %v2661
        %2926 = vmatpush.bf16.msra.mxu0 %v2659
        %2927 = vmatpush.bf16.msra.mxu0 %v2657
        %2928 = vmatpush.bf16.msra.mxu0 %v2655
        %2929 = vmatpush.bf16.msra.mxu0 %v2653
        %2930 = vmatpush.bf16.msra.mxu0 %v2651
        %2931 = vmatpush.bf16.msra.mxu0 %v2649
        %2932 = vmatmul.bf16.gmra.mxu0 %v2459
        %v2933 = vpop.f32.mrf.mxu0
        %v2934 = vadd.f32 %v2885, %v2933
        %v2935 = vpop.f32.mrf.mxu0
        %v2936 = vadd.f32 %v2887, %v2935
        %2937 = vmatmul.bf16.gmra.mxu0 %v2462
        %v2938 = vpop.f32.mrf.mxu0
        %v2939 = vadd.f32 %v2890, %v2938
        %v2940 = vpop.f32.mrf.mxu0
        %v2941 = vadd.f32 %v2892, %v2940
        %2942 = vmatmul.bf16.gmra.mxu0 %v2465
        %v2943 = vpop.f32.mrf.mxu0
        %v2944 = vadd.f32 %v2895, %v2943
        %v2945 = vpop.f32.mrf.mxu0
        %v2946 = vadd.f32 %v2897, %v2945
        %2947 = vmatmul.bf16.gmra.mxu0 %v2468
        %v2948 = vpop.f32.mrf.mxu0
        %v2949 = vadd.f32 %v2900, %v2948
        %v2950 = vpop.f32.mrf.mxu0
        %v2951 = vadd.f32 %v2902, %v2950
        %2952 = vmatmul.bf16.gmra.mxu0 %v2471
        %v2953 = vpop.f32.mrf.mxu0
        %v2954 = vadd.f32 %v2905, %v2953
        %v2955 = vpop.f32.mrf.mxu0
        %v2956 = vadd.f32 %v2907, %v2955
        %2957 = vmatmul.bf16.gmra.mxu0 %v2474
        %v2958 = vpop.f32.mrf.mxu0
        %v2959 = vadd.f32 %v2910, %v2958
        %v2960 = vpop.f32.mrf.mxu0
        %v2961 = vadd.f32 %v2912, %v2960
        %2962 = vmatmul.bf16.gmra.mxu0 %v2477
        %v2963 = vpop.f32.mrf.mxu0
        %v2964 = vadd.f32 %v2915, %v2963
        %v2965 = vpop.f32.mrf.mxu0
        %v2966 = vadd.f32 %v2917, %v2965
        %2967 = vmatmul.bf16.gmra.mxu0 %v2480
        %v2968 = vpop.f32.mrf.mxu0
        %v2969 = vadd.f32 %v2920, %v2968
        %v2970 = vpop.f32.mrf.mxu0
        %v2971 = vadd.f32 %v2922, %v2970
        %2972 = vdwg.mxu0
        %2973 = vmatpush.bf16.msra.mxu0 %v2679
        %2974 = vmatpush.bf16.msra.mxu0 %v2677
        %2975 = vmatpush.bf16.msra.mxu0 %v2675
        %2976 = vmatpush.bf16.msra.mxu0 %v2673
        %2977 = vmatpush.bf16.msra.mxu0 %v2671
        %2978 = vmatpush.bf16.msra.mxu0 %v2669
        %2979 = vmatpush.bf16.msra.mxu0 %v2667
        %2980 = vmatpush.bf16.msra.mxu0 %v2665
        %2981 = vmatmul.bf16.gmra.mxu0 %v2460
        %v2982 = vpop.f32.mrf.mxu0
        %v2983 = vadd.f32 %v2934, %v2982
        %v2984 = vpop.f32.mrf.mxu0
        %v2985 = vadd.f32 %v2936, %v2984
        %2986 = vmatmul.bf16.gmra.mxu0 %v2463
        %v2987 = vpop.f32.mrf.mxu0
        %v2988 = vadd.f32 %v2939, %v2987
        %v2989 = vpop.f32.mrf.mxu0
        %v2990 = vadd.f32 %v2941, %v2989
        %2991 = vmatmul.bf16.gmra.mxu0 %v2466
        %v2992 = vpop.f32.mrf.mxu0
        %v2993 = vadd.f32 %v2944, %v2992
        %v2994 = vpop.f32.mrf.mxu0
        %v2995 = vadd.f32 %v2946, %v2994
        %2996 = vmatmul.bf16.gmra.mxu0 %v2469
        %v2997 = vpop.f32.mrf.mxu0
        %v2998 = vadd.f32 %v2949, %v2997
        %v2999 = vpop.f32.mrf.mxu0
        %v3000 = vadd.f32 %v2951, %v2999
        %3001 = vmatmul.bf16.gmra.mxu0 %v2472
        %v3002 = vpop.f32.mrf.mxu0
        %v3003 = vadd.f32 %v2954, %v3002
        %v3004 = vpop.f32.mrf.mxu0
        %v3005 = vadd.f32 %v2956, %v3004
        %3006 = vmatmul.bf16.gmra.mxu0 %v2475
        %v3007 = vpop.f32.mrf.mxu0
        %v3008 = vadd.f32 %v2959, %v3007
        %v3009 = vpop.f32.mrf.mxu0
        %v3010 = vadd.f32 %v2961, %v3009
        %3011 = vmatmul.bf16.gmra.mxu0 %v2478
        %v3012 = vpop.f32.mrf.mxu0
        %v3013 = vadd.f32 %v2964, %v3012
        %v3014 = vpop.f32.mrf.mxu0
        %v3015 = vadd.f32 %v2966, %v3014
        %3016 = vmatmul.bf16.gmra.mxu0 %v2481
        %v3017 = vpop.f32.mrf.mxu0
        %v3018 = vadd.f32 %v2969, %v3017
        %v3019 = vpop.f32.mrf.mxu0
        %v3020 = vadd.f32 %v2971, %v3019
        %3021 = vdwg.mxu0
        %v3022 = vmax.f32 %v2836, 0.0
        %v3023 = vmax.f32 %v2983, 0.0
        %v3024 = vmax.f32 %v2838, 0.0
        %v3025 = vmax.f32 %v2985, 0.0
        %v3026 = vmax.f32 %v2841, 0.0
        %v3027 = vmax.f32 %v2988, 0.0
        %v3028 = vmax.f32 %v2843, 0.0
        %v3029 = vmax.f32 %v2990, 0.0
        %v3030 = vmax.f32 %v2846, 0.0
        %v3031 = vmax.f32 %v2993, 0.0
        %v3032 = vmax.f32 %v2848, 0.0
        %v3033 = vmax.f32 %v2995, 0.0
        %v3034 = vmax.f32 %v2851, 0.0
        %v3035 = vmax.f32 %v2998, 0.0
        %v3036 = vmax.f32 %v2853, 0.0
        %v3037 = vmax.f32 %v3000, 0.0
        %v3038 = vmax.f32 %v2856, 0.0
        %v3039 = vmax.f32 %v3003, 0.0
        %v3040 = vmax.f32 %v2858, 0.0
        %v3041 = vmax.f32 %v3005, 0.0
        %v3042 = vmax.f32 %v2861, 0.0
        %v3043 = vmax.f32 %v3008, 0.0
        %v3044 = vmax.f32 %v2863, 0.0
        %v3045 = vmax.f32 %v3010, 0.0
        %v3046 = vmax.f32 %v2866, 0.0
        %v3047 = vmax.f32 %v3013, 0.0
        %v3048 = vmax.f32 %v2868, 0.0
        %v3049 = vmax.f32 %v3015, 0.0
        %v3050 = vmax.f32 %v2871, 0.0
        %v3051 = vmax.f32 %v3018, 0.0
        %v3052 = vmax.f32 %v2873, 0.0
        %v3053 = vmax.f32 %v3020, 0.0
        %v3054 = vld [vmem:[#allocation19] sm:$0xf]
        %v3055 = vld [vmem:[#allocation19 + $0x4] sm:$0xf]
        %v3056 = vld [vmem:[#allocation19 + $0x8] sm:$0xf]
        %v3057 = vld [vmem:[#allocation19 + $0xc] sm:$0xf]
        %v3058 = vld [vmem:[#allocation19 + $0x10] sm:$0xf]
        %v3059 = vld [vmem:[#allocation19 + $0x14] sm:$0xf]
        %v3060 = vld [vmem:[#allocation19 + $0x18] sm:$0xf]
        %v3061 = vld [vmem:[#allocation19 + $0x1c] sm:$0xf]
        %v3062 = vld [vmem:[#allocation19 + $0x20] sm:$0xf]
        %v3063 = vld [vmem:[#allocation19 + $0x24] sm:$0xf]
        %v3064 = vld [vmem:[#allocation19 + $0x28] sm:$0xf]
        %v3065 = vld [vmem:[#allocation19 + $0x2c] sm:$0xf]
        %v3066 = vld [vmem:[#allocation19 + $0x30] sm:$0xf]
        %v3067 = vld [vmem:[#allocation19 + $0x34] sm:$0xf]
        %v3068 = vld [vmem:[#allocation19 + $0x38] sm:$0xf]
        %v3069 = vld [vmem:[#allocation19 + $0x3c] sm:$0xf]
        %v3070 = vld [vmem:[#allocation19 + $0x40] sm:$0xf]
        %v3071 = vld [vmem:[#allocation19 + $0x44] sm:$0xf]
        %v3072 = vld [vmem:[#allocation19 + $0x48] sm:$0xf]
        %v3073 = vld [vmem:[#allocation19 + $0x4c] sm:$0xf]
        %v3074 = vld [vmem:[#allocation19 + $0x50] sm:$0xf]
        %v3075 = vld [vmem:[#allocation19 + $0x54] sm:$0xf]
        %v3076 = vld [vmem:[#allocation19 + $0x58] sm:$0xf]
        %v3077 = vld [vmem:[#allocation19 + $0x5c] sm:$0xf]
        %v3078 = vld [vmem:[#allocation19 + $0x60] sm:$0xf]
        %v3079 = vld [vmem:[#allocation19 + $0x64] sm:$0xf]
        %v3080 = vld [vmem:[#allocation19 + $0x68] sm:$0xf]
        %v3081 = vld [vmem:[#allocation19 + $0x6c] sm:$0xf]
        %v3082 = vld [vmem:[#allocation19 + $0x70] sm:$0xf]
        %v3083 = vld [vmem:[#allocation19 + $0x74] sm:$0xf]
        %v3084 = vld [vmem:[#allocation19 + $0x78] sm:$0xf]
        %v3085 = vld [vmem:[#allocation19 + $0x7c] sm:$0xf]
        %v3086 = vpack.c.bf16 %v3024, %v3022
        %v3087 = vpack.c.bf16 %v3025, %v3023
        %v3088 = vpack.c.bf16 %v3028, %v3026
        %v3089 = vpack.c.bf16 %v3029, %v3027
        %v3090 = vpack.c.bf16 %v3032, %v3030
        %v3091 = vpack.c.bf16 %v3033, %v3031
        %v3092 = vpack.c.bf16 %v3036, %v3034
        %v3093 = vpack.c.bf16 %v3037, %v3035
        %v3094 = vpack.c.bf16 %v3040, %v3038
        %v3095 = vpack.c.bf16 %v3041, %v3039
        %v3096 = vpack.c.bf16 %v3044, %v3042
        %v3097 = vpack.c.bf16 %v3045, %v3043
        %v3098 = vpack.c.bf16 %v3048, %v3046
        %v3099 = vpack.c.bf16 %v3049, %v3047
        %v3100 = vpack.c.bf16 %v3052, %v3050
        %v3101 = vpack.c.bf16 %v3053, %v3051
        %v3102 = vld [vmem:[%s20 + $0x5] sm:$0x1]
        %v3104 = vperm.slane %v3102, 0
        %v3138 = vunpack.c.l.b16 %v3054
        %v3139 = vunpack.c.l.b16 %v3055
        %v3140 = vunpack.c.l.b16 %v3056
        %v3141 = vunpack.c.l.b16 %v3057
        %v3142 = vunpack.c.l.b16 %v3058
        %v3143 = vunpack.c.l.b16 %v3059
        %v3144 = vunpack.c.l.b16 %v3060
        %v3145 = vunpack.c.l.b16 %v3061
        %v3146 = vunpack.c.l.b16 %v3062
        %v3147 = vunpack.c.l.b16 %v3063
        %v3148 = vunpack.c.l.b16 %v3064
        %v3149 = vunpack.c.l.b16 %v3065
        %v3150 = vunpack.c.l.b16 %v3066
        %v3151 = vunpack.c.l.b16 %v3067
        %v3152 = vunpack.c.l.b16 %v3068
        %v3153 = vunpack.c.l.b16 %v3069
        %v3154 = vunpack.c.l.b16 %v3070
        %v3155 = vunpack.c.l.b16 %v3071
        %v3156 = vunpack.c.l.b16 %v3072
        %v3157 = vunpack.c.l.b16 %v3073
        %v3158 = vunpack.c.l.b16 %v3074
        %v3159 = vunpack.c.l.b16 %v3075
        %v3160 = vunpack.c.l.b16 %v3076
        %v3161 = vunpack.c.l.b16 %v3077
        %v3162 = vunpack.c.l.b16 %v3078
        %v3163 = vunpack.c.l.b16 %v3079
        %v3164 = vunpack.c.l.b16 %v3080
        %v3165 = vunpack.c.l.b16 %v3081
        %v3166 = vunpack.c.l.b16 %v3082
        %v3167 = vunpack.c.l.b16 %v3083
        %v3168 = vunpack.c.l.b16 %v3084
        %v3169 = vunpack.c.l.b16 %v3085
        %v3170 = vpack.c.b16 %v3139, %v3138
        %v3171 = vpack.c.b16 %v3141, %v3140
        %v3172 = vpack.c.b16 %v3143, %v3142
        %v3173 = vpack.c.b16 %v3145, %v3144
        %v3174 = vpack.c.b16 %v3147, %v3146
        %v3175 = vpack.c.b16 %v3149, %v3148
        %v3176 = vpack.c.b16 %v3151, %v3150
        %v3177 = vpack.c.b16 %v3153, %v3152
        %v3178 = vpack.c.b16 %v3155, %v3154
        %v3179 = vpack.c.b16 %v3157, %v3156
        %v3180 = vpack.c.b16 %v3159, %v3158
        %v3181 = vpack.c.b16 %v3161, %v3160
        %v3182 = vpack.c.b16 %v3163, %v3162
        %v3183 = vpack.c.b16 %v3165, %v3164
        %v3184 = vpack.c.b16 %v3167, %v3166
        %v3185 = vpack.c.b16 %v3169, %v3168
        %3202 = vmatpush.bf16.msra.mxu0 %v3177
        %3203 = vmatpush.bf16.msra.mxu0 %v3176
        %3204 = vmatpush.bf16.msra.mxu0 %v3175
        %3205 = vmatpush.bf16.msra.mxu0 %v3174
        %3206 = vmatpush.bf16.msra.mxu0 %v3173
        %3207 = vmatpush.bf16.msra.mxu0 %v3172
        %3208 = vmatpush.bf16.msra.mxu0 %v3171
        %3209 = vmatpush.bf16.msra.mxu0 %v3170
        %3210 = vmatmul.bf16.gmra.mxu0 %v3086
        %v3211 = vpop.f32.mrf.mxu0
        %v3212 = vadd.f32 %v3104, %v3211
        %v3213 = vpop.f32.mrf.mxu0
        %v3214 = vadd.f32 %v3104, %v3213
        %3215 = vmatmul.bf16.gmra.mxu0 %v3088
        %v3216 = vpop.f32.mrf.mxu0
        %v3217 = vadd.f32 %v3104, %v3216
        %v3218 = vpop.f32.mrf.mxu0
        %v3219 = vadd.f32 %v3104, %v3218
        %3220 = vmatmul.bf16.gmra.mxu0 %v3090
        %v3221 = vpop.f32.mrf.mxu0
        %v3222 = vadd.f32 %v3104, %v3221
        %v3223 = vpop.f32.mrf.mxu0
        %v3224 = vadd.f32 %v3104, %v3223
        %3225 = vmatmul.bf16.gmra.mxu0 %v3092
        %v3226 = vpop.f32.mrf.mxu0
        %v3227 = vadd.f32 %v3104, %v3226
        %v3228 = vpop.f32.mrf.mxu0
        %v3229 = vadd.f32 %v3104, %v3228
        %3230 = vmatmul.bf16.gmra.mxu0 %v3094
        %v3231 = vpop.f32.mrf.mxu0
        %v3232 = vadd.f32 %v3104, %v3231
        %v3233 = vpop.f32.mrf.mxu0
        %v3234 = vadd.f32 %v3104, %v3233
        %3235 = vmatmul.bf16.gmra.mxu0 %v3096
        %v3236 = vpop.f32.mrf.mxu0
        %v3237 = vadd.f32 %v3104, %v3236
        %v3238 = vpop.f32.mrf.mxu0
        %v3239 = vadd.f32 %v3104, %v3238
        %3240 = vmatmul.bf16.gmra.mxu0 %v3098
        %v3241 = vpop.f32.mrf.mxu0
        %v3242 = vadd.f32 %v3104, %v3241
        %v3243 = vpop.f32.mrf.mxu0
        %v3244 = vadd.f32 %v3104, %v3243
        %3245 = vmatmul.bf16.gmra.mxu0 %v3100
        %v3246 = vpop.f32.mrf.mxu0
        %v3247 = vadd.f32 %v3104, %v3246
        %v3248 = vpop.f32.mrf.mxu0
        %v3249 = vadd.f32 %v3104, %v3248
        %3250 = vdwg.mxu0
        %3251 = vmatpush.bf16.msra.mxu0 %v3185
        %3252 = vmatpush.bf16.msra.mxu0 %v3184
        %3253 = vmatpush.bf16.msra.mxu0 %v3183
        %3254 = vmatpush.bf16.msra.mxu0 %v3182
        %3255 = vmatpush.bf16.msra.mxu0 %v3181
        %3256 = vmatpush.bf16.msra.mxu0 %v3180
        %3257 = vmatpush.bf16.msra.mxu0 %v3179
        %3258 = vmatpush.bf16.msra.mxu0 %v3178
        %3259 = vmatmul.bf16.gmra.mxu0 %v3087
        %v3260 = vpop.f32.mrf.mxu0
        %v3261 = vadd.f32 %v3212, %v3260
        %v3262 = vpop.f32.mrf.mxu0
        %v3263 = vadd.f32 %v3214, %v3262
        %3264 = vmatmul.bf16.gmra.mxu0 %v3089
        %v3265 = vpop.f32.mrf.mxu0
        %v3266 = vadd.f32 %v3217, %v3265
        %v3267 = vpop.f32.mrf.mxu0
        %v3268 = vadd.f32 %v3219, %v3267
        %3269 = vmatmul.bf16.gmra.mxu0 %v3091
        %v3270 = vpop.f32.mrf.mxu0
        %v3271 = vadd.f32 %v3222, %v3270
        %v3272 = vpop.f32.mrf.mxu0
        %v3273 = vadd.f32 %v3224, %v3272
        %3274 = vmatmul.bf16.gmra.mxu0 %v3093
        %v3275 = vpop.f32.mrf.mxu0
        %v3276 = vadd.f32 %v3227, %v3275
        %v3277 = vpop.f32.mrf.mxu0
        %v3278 = vadd.f32 %v3229, %v3277
        %3279 = vmatmul.bf16.gmra.mxu0 %v3095
        %v3280 = vpop.f32.mrf.mxu0
        %v3281 = vadd.f32 %v3232, %v3280
        %v3282 = vpop.f32.mrf.mxu0
        %v3283 = vadd.f32 %v3234, %v3282
        %3284 = vmatmul.bf16.gmra.mxu0 %v3097
        %v3285 = vpop.f32.mrf.mxu0
        %v3286 = vadd.f32 %v3237, %v3285
        %v3287 = vpop.f32.mrf.mxu0
        %v3288 = vadd.f32 %v3239, %v3287
        %3289 = vmatmul.bf16.gmra.mxu0 %v3099
        %v3290 = vpop.f32.mrf.mxu0
        %v3291 = vadd.f32 %v3242, %v3290
        %v3292 = vpop.f32.mrf.mxu0
        %v3293 = vadd.f32 %v3244, %v3292
        %3294 = vmatmul.bf16.gmra.mxu0 %v3101
        %v3295 = vpop.f32.mrf.mxu0
        %v3296 = vadd.f32 %v3247, %v3295
        %v3297 = vpop.f32.mrf.mxu0
        %v3298 = vadd.f32 %v3249, %v3297
        %3299 = vdwg.mxu0
        %v3300 = vmax.f32 %v3261, 0.0
        %v3301 = vmax.f32 %v3263, 0.0
        %v3302 = vmax.f32 %v3266, 0.0
        %v3303 = vmax.f32 %v3268, 0.0
        %v3304 = vmax.f32 %v3271, 0.0
        %v3305 = vmax.f32 %v3273, 0.0
        %v3306 = vmax.f32 %v3276, 0.0
        %v3307 = vmax.f32 %v3278, 0.0
        %v3308 = vmax.f32 %v3281, 0.0
        %v3309 = vmax.f32 %v3283, 0.0
        %v3310 = vmax.f32 %v3286, 0.0
        %v3311 = vmax.f32 %v3288, 0.0
        %v3312 = vmax.f32 %v3291, 0.0
        %v3313 = vmax.f32 %v3293, 0.0
        %v3314 = vmax.f32 %v3296, 0.0
        %v3315 = vmax.f32 %v3298, 0.0
        %v3316 = vld [vmem:[%s12] sm:$0xff]
        %v3317 = vld [vmem:[%s12 + $0x8] sm:$0xff]
        %v3318 = vld [vmem:[%s12 + $0x10] sm:$0xff]
        %v3319 = vld [vmem:[%s12 + $0x18] sm:$0xff]
        %v3320 = vld [vmem:[%s12 + $0x20] sm:$0xff]
        %v3321 = vld [vmem:[%s12 + $0x28] sm:$0xff]
        %v3322 = vld [vmem:[%s12 + $0x30] sm:$0xff]
        %v3323 = vld [vmem:[%s12 + $0x38] sm:$0xff]
        %v3324 = vld [vmem:[%s12 + $0x40] sm:$0xff]
        %v3325 = vld [vmem:[%s12 + $0x48] sm:$0xff]
        %v3326 = vld [vmem:[%s12 + $0x50] sm:$0xff]
        %v3327 = vld [vmem:[%s12 + $0x58] sm:$0xff]
        %v3328 = vld [vmem:[%s12 + $0x60] sm:$0xff]
        %v3329 = vld [vmem:[%s12 + $0x68] sm:$0xff]
        %v3330 = vld [vmem:[%s12 + $0x70] sm:$0xff]
        %v3331 = vld [vmem:[%s12 + $0x78] sm:$0xff]
        %v3332 = vld [vmem:[%s12 + $0x80] sm:$0xff]
        %v3333 = vld [vmem:[%s12 + $0x88] sm:$0xff]
        %v3334 = vld [vmem:[%s12 + $0x90] sm:$0xff]
        %v3335 = vld [vmem:[%s12 + $0x98] sm:$0xff]
        %v3336 = vld [vmem:[%s12 + $0xa0] sm:$0xff]
        %v3337 = vld [vmem:[%s12 + $0xa8] sm:$0xff]
        %v3338 = vld [vmem:[%s12 + $0xb0] sm:$0xff]
        %v3339 = vld [vmem:[%s12 + $0xb8] sm:$0xff]
        %v3340 = vld [vmem:[%s12 + $0xc0] sm:$0xff]
        %v3341 = vld [vmem:[%s12 + $0xc8] sm:$0xff]
        %v3342 = vld [vmem:[%s12 + $0xd0] sm:$0xff]
        %v3343 = vld [vmem:[%s12 + $0xd8] sm:$0xff]
        %v3344 = vld [vmem:[%s12 + $0xe0] sm:$0xff]
        %v3345 = vld [vmem:[%s12 + $0xe8] sm:$0xff]
        %v3346 = vld [vmem:[%s12 + $0xf0] sm:$0xff]
        %v3347 = vld [vmem:[%s12 + $0xf8] sm:$0xff]
        %v3348 = vpack.c.bf16 %v3301, %v3300
        %v3349 = vpack.c.bf16 %v3303, %v3302
        %v3350 = vpack.c.bf16 %v3305, %v3304
        %v3351 = vpack.c.bf16 %v3307, %v3306
        %v3352 = vpack.c.bf16 %v3309, %v3308
        %v3353 = vpack.c.bf16 %v3311, %v3310
        %v3354 = vpack.c.bf16 %v3313, %v3312
        %v3355 = vpack.c.bf16 %v3315, %v3314
        %v3388 = vunpack.c.l.b16 %v3316
        %v3389 = vunpack.c.h.b16 %v3316
        %v3390 = vunpack.c.l.b16 %v3317
        %v3391 = vunpack.c.h.b16 %v3317
        %v3392 = vunpack.c.l.b16 %v3318
        %v3393 = vunpack.c.h.b16 %v3318
        %v3394 = vunpack.c.l.b16 %v3319
        %v3395 = vunpack.c.h.b16 %v3319
        %v3396 = vunpack.c.l.b16 %v3320
        %v3397 = vunpack.c.h.b16 %v3320
        %v3398 = vunpack.c.l.b16 %v3321
        %v3399 = vunpack.c.h.b16 %v3321
        %v3400 = vunpack.c.l.b16 %v3322
        %v3401 = vunpack.c.h.b16 %v3322
        %v3402 = vunpack.c.l.b16 %v3323
        %v3403 = vunpack.c.h.b16 %v3323
        %v3404 = vunpack.c.l.b16 %v3324
        %v3405 = vunpack.c.h.b16 %v3324
        %v3406 = vunpack.c.l.b16 %v3325
        %v3407 = vunpack.c.h.b16 %v3325
        %v3408 = vunpack.c.l.b16 %v3326
        %v3409 = vunpack.c.h.b16 %v3326
        %v3410 = vunpack.c.l.b16 %v3327
        %v3411 = vunpack.c.h.b16 %v3327
        %v3412 = vunpack.c.l.b16 %v3328
        %v3413 = vunpack.c.h.b16 %v3328
        %v3414 = vunpack.c.l.b16 %v3329
        %v3415 = vunpack.c.h.b16 %v3329
        %v3416 = vunpack.c.l.b16 %v3330
        %v3417 = vunpack.c.h.b16 %v3330
        %v3418 = vunpack.c.l.b16 %v3331
        %v3419 = vunpack.c.h.b16 %v3331
        %v3420 = vunpack.c.l.b16 %v3332
        %v3421 = vunpack.c.h.b16 %v3332
        %v3422 = vunpack.c.l.b16 %v3333
        %v3423 = vunpack.c.h.b16 %v3333
        %v3424 = vunpack.c.l.b16 %v3334
        %v3425 = vunpack.c.h.b16 %v3334
        %v3426 = vunpack.c.l.b16 %v3335
        %v3427 = vunpack.c.h.b16 %v3335
        %v3428 = vunpack.c.l.b16 %v3336
        %v3429 = vunpack.c.h.b16 %v3336
        %v3430 = vunpack.c.l.b16 %v3337
        %v3431 = vunpack.c.h.b16 %v3337
        %v3432 = vunpack.c.l.b16 %v3338
        %v3433 = vunpack.c.h.b16 %v3338
        %v3434 = vunpack.c.l.b16 %v3339
        %v3435 = vunpack.c.h.b16 %v3339
        %v3436 = vunpack.c.l.b16 %v3340
        %v3437 = vunpack.c.h.b16 %v3340
        %v3438 = vunpack.c.l.b16 %v3341
        %v3439 = vunpack.c.h.b16 %v3341
        %v3440 = vunpack.c.l.b16 %v3342
        %v3441 = vunpack.c.h.b16 %v3342
        %v3442 = vunpack.c.l.b16 %v3343
        %v3443 = vunpack.c.h.b16 %v3343
        %v3444 = vunpack.c.l.b16 %v3344
        %v3445 = vunpack.c.h.b16 %v3344
        %v3446 = vunpack.c.l.b16 %v3345
        %v3447 = vunpack.c.h.b16 %v3345
        %v3448 = vunpack.c.l.b16 %v3346
        %v3449 = vunpack.c.h.b16 %v3346
        %v3450 = vunpack.c.l.b16 %v3347
        %v3451 = vunpack.c.h.b16 %v3347
        %v3452 = vpack.c.b16 %v3392, %v3388
        %v3453 = vpack.c.b16 %v3393, %v3389
        %v3454 = vpack.c.b16 %v3394, %v3390
        %v3455 = vpack.c.b16 %v3395, %v3391
        %v3456 = vpack.c.b16 %v3400, %v3396
        %v3457 = vpack.c.b16 %v3401, %v3397
        %v3458 = vpack.c.b16 %v3402, %v3398
        %v3459 = vpack.c.b16 %v3403, %v3399
        %v3460 = vpack.c.b16 %v3408, %v3404
        %v3461 = vpack.c.b16 %v3409, %v3405
        %v3462 = vpack.c.b16 %v3410, %v3406
        %v3463 = vpack.c.b16 %v3411, %v3407
        %v3464 = vpack.c.b16 %v3416, %v3412
        %v3465 = vpack.c.b16 %v3417, %v3413
        %v3466 = vpack.c.b16 %v3418, %v3414
        %v3467 = vpack.c.b16 %v3419, %v3415
        %v3468 = vpack.c.b16 %v3424, %v3420
        %v3469 = vpack.c.b16 %v3425, %v3421
        %v3470 = vpack.c.b16 %v3426, %v3422
        %v3471 = vpack.c.b16 %v3427, %v3423
        %v3472 = vpack.c.b16 %v3432, %v3428
        %v3473 = vpack.c.b16 %v3433, %v3429
        %v3474 = vpack.c.b16 %v3434, %v3430
        %v3475 = vpack.c.b16 %v3435, %v3431
        %v3476 = vpack.c.b16 %v3440, %v3436
        %v3477 = vpack.c.b16 %v3441, %v3437
        %v3478 = vpack.c.b16 %v3442, %v3438
        %v3479 = vpack.c.b16 %v3443, %v3439
        %v3480 = vpack.c.b16 %v3448, %v3444
        %v3481 = vpack.c.b16 %v3449, %v3445
        %v3482 = vpack.c.b16 %v3450, %v3446
        %v3483 = vpack.c.b16 %v3451, %v3447
        %3516 = vmatpush.bf16.msra.mxu0 %v3480
        %3517 = vmatpush.bf16.msra.mxu0 %v3476
        %3518 = vmatpush.bf16.msra.mxu0 %v3472
        %3519 = vmatpush.bf16.msra.mxu0 %v3468
        %3520 = vmatpush.bf16.msra.mxu0 %v3464
        %3521 = vmatpush.bf16.msra.mxu0 %v3460
        %3522 = vmatpush.bf16.msra.mxu0 %v3456
        %3523 = vmatpush.bf16.msra.mxu0 %v3452
        %3524 = vmatmul.bf16.gmra.mxu0 %v3348
        %v3525 = vpop.f32.mrf.mxu0
        %v3526 = vadd.f32 0.0, %v3525
        %v3527 = vpop.f32.mrf.mxu0
        %v3528 = vadd.f32 0.0, %v3527
        %3529 = vmatmul.bf16.gmra.mxu0 %v3349
        %v3530 = vpop.f32.mrf.mxu0
        %v3531 = vadd.f32 0.0, %v3530
        %v3532 = vpop.f32.mrf.mxu0
        %v3533 = vadd.f32 0.0, %v3532
        %3534 = vmatmul.bf16.gmra.mxu0 %v3350
        %v3535 = vpop.f32.mrf.mxu0
        %v3536 = vadd.f32 0.0, %v3535
        %v3537 = vpop.f32.mrf.mxu0
        %v3538 = vadd.f32 0.0, %v3537
        %3539 = vmatmul.bf16.gmra.mxu0 %v3351
        %v3540 = vpop.f32.mrf.mxu0
        %v3541 = vadd.f32 0.0, %v3540
        %v3542 = vpop.f32.mrf.mxu0
        %v3543 = vadd.f32 0.0, %v3542
        %3544 = vmatmul.bf16.gmra.mxu0 %v3352
        %v3545 = vpop.f32.mrf.mxu0
        %v3546 = vadd.f32 0.0, %v3545
        %v3547 = vpop.f32.mrf.mxu0
        %v3548 = vadd.f32 0.0, %v3547
        %3549 = vmatmul.bf16.gmra.mxu0 %v3353
        %v3550 = vpop.f32.mrf.mxu0
        %v3551 = vadd.f32 0.0, %v3550
        %v3552 = vpop.f32.mrf.mxu0
        %v3553 = vadd.f32 0.0, %v3552
        %3554 = vmatmul.bf16.gmra.mxu0 %v3354
        %v3555 = vpop.f32.mrf.mxu0
        %v3556 = vadd.f32 0.0, %v3555
        %v3557 = vpop.f32.mrf.mxu0
        %v3558 = vadd.f32 0.0, %v3557
        %3559 = vmatmul.bf16.gmra.mxu0 %v3355
        %v3560 = vpop.f32.mrf.mxu0
        %v3561 = vadd.f32 0.0, %v3560
        %v3562 = vpop.f32.mrf.mxu0
        %v3563 = vadd.f32 0.0, %v3562
        %3564 = vdwg.mxu0
        %3565 = vmatpush.bf16.msra.mxu0 %v3481
        %3566 = vmatpush.bf16.msra.mxu0 %v3477
        %3567 = vmatpush.bf16.msra.mxu0 %v3473
        %3568 = vmatpush.bf16.msra.mxu0 %v3469
        %3569 = vmatpush.bf16.msra.mxu0 %v3465
        %3570 = vmatpush.bf16.msra.mxu0 %v3461
        %3571 = vmatpush.bf16.msra.mxu0 %v3457
        %3572 = vmatpush.bf16.msra.mxu0 %v3453
        %3573 = vmatmul.bf16.gmra.mxu0 %v3348
        %v3574 = vpop.f32.mrf.mxu0
        %v3575 = vadd.f32 0.0, %v3574
        %v3576 = vpop.f32.mrf.mxu0
        %v3577 = vadd.f32 0.0, %v3576
        %3578 = vmatmul.bf16.gmra.mxu0 %v3349
        %v3579 = vpop.f32.mrf.mxu0
        %v3580 = vadd.f32 0.0, %v3579
        %v3581 = vpop.f32.mrf.mxu0
        %v3582 = vadd.f32 0.0, %v3581
        %3583 = vmatmul.bf16.gmra.mxu0 %v3350
        %v3584 = vpop.f32.mrf.mxu0
        %v3585 = vadd.f32 0.0, %v3584
        %v3586 = vpop.f32.mrf.mxu0
        %v3587 = vadd.f32 0.0, %v3586
        %3588 = vmatmul.bf16.gmra.mxu0 %v3351
        %v3589 = vpop.f32.mrf.mxu0
        %v3590 = vadd.f32 0.0, %v3589
        %v3591 = vpop.f32.mrf.mxu0
        %v3592 = vadd.f32 0.0, %v3591
        %3593 = vmatmul.bf16.gmra.mxu0 %v3352
        %v3594 = vpop.f32.mrf.mxu0
        %v3595 = vadd.f32 0.0, %v3594
        %v3596 = vpop.f32.mrf.mxu0
        %v3597 = vadd.f32 0.0, %v3596
        %3598 = vmatmul.bf16.gmra.mxu0 %v3353
        %v3599 = vpop.f32.mrf.mxu0
        %v3600 = vadd.f32 0.0, %v3599
        %v3601 = vpop.f32.mrf.mxu0
        %v3602 = vadd.f32 0.0, %v3601
        %3603 = vmatmul.bf16.gmra.mxu0 %v3354
        %v3604 = vpop.f32.mrf.mxu0
        %v3605 = vadd.f32 0.0, %v3604
        %v3606 = vpop.f32.mrf.mxu0
        %v3607 = vadd.f32 0.0, %v3606
        %3608 = vmatmul.bf16.gmra.mxu0 %v3355
        %v3609 = vpop.f32.mrf.mxu0
        %v3610 = vadd.f32 0.0, %v3609
        %v3611 = vpop.f32.mrf.mxu0
        %v3612 = vadd.f32 0.0, %v3611
        %3613 = vdwg.mxu0
        %3614 = vmatpush.bf16.msra.mxu0 %v3482
        %3615 = vmatpush.bf16.msra.mxu0 %v3478
        %3616 = vmatpush.bf16.msra.mxu0 %v3474
        %3617 = vmatpush.bf16.msra.mxu0 %v3470
        %3618 = vmatpush.bf16.msra.mxu0 %v3466
        %3619 = vmatpush.bf16.msra.mxu0 %v3462
        %3620 = vmatpush.bf16.msra.mxu0 %v3458
        %3621 = vmatpush.bf16.msra.mxu0 %v3454
        %3622 = vmatmul.bf16.gmra.mxu0 %v3348
        %v3623 = vpop.f32.mrf.mxu0
        %v3624 = vadd.f32 0.0, %v3623
        %v3625 = vpop.f32.mrf.mxu0
        %v3626 = vadd.f32 0.0, %v3625
        %3627 = vmatmul.bf16.gmra.mxu0 %v3349
        %v3628 = vpop.f32.mrf.mxu0
        %v3629 = vadd.f32 0.0, %v3628
        %v3630 = vpop.f32.mrf.mxu0
        %v3631 = vadd.f32 0.0, %v3630
        %3632 = vmatmul.bf16.gmra.mxu0 %v3350
        %v3633 = vpop.f32.mrf.mxu0
        %v3634 = vadd.f32 0.0, %v3633
        %v3635 = vpop.f32.mrf.mxu0
        %v3636 = vadd.f32 0.0, %v3635
        %3637 = vmatmul.bf16.gmra.mxu0 %v3351
        %v3638 = vpop.f32.mrf.mxu0
        %v3639 = vadd.f32 0.0, %v3638
        %v3640 = vpop.f32.mrf.mxu0
        %v3641 = vadd.f32 0.0, %v3640
        %3642 = vmatmul.bf16.gmra.mxu0 %v3352
        %v3643 = vpop.f32.mrf.mxu0
        %v3644 = vadd.f32 0.0, %v3643
        %v3645 = vpop.f32.mrf.mxu0
        %v3646 = vadd.f32 0.0, %v3645
        %3647 = vmatmul.bf16.gmra.mxu0 %v3353
        %v3648 = vpop.f32.mrf.mxu0
        %v3649 = vadd.f32 0.0, %v3648
        %v3650 = vpop.f32.mrf.mxu0
        %v3651 = vadd.f32 0.0, %v3650
        %3652 = vmatmul.bf16.gmra.mxu0 %v3354
        %v3653 = vpop.f32.mrf.mxu0
        %v3654 = vadd.f32 0.0, %v3653
        %v3655 = vpop.f32.mrf.mxu0
        %v3656 = vadd.f32 0.0, %v3655
        %3657 = vmatmul.bf16.gmra.mxu0 %v3355
        %v3658 = vpop.f32.mrf.mxu0
        %v3659 = vadd.f32 0.0, %v3658
        %v3660 = vpop.f32.mrf.mxu0
        %v3661 = vadd.f32 0.0, %v3660
        %3662 = vdwg.mxu0
        %3663 = vmatpush.bf16.msra.mxu0 %v3483
        %3664 = vmatpush.bf16.msra.mxu0 %v3479
        %3665 = vmatpush.bf16.msra.mxu0 %v3475
        %3666 = vmatpush.bf16.msra.mxu0 %v3471
        %3667 = vmatpush.bf16.msra.mxu0 %v3467
        %3668 = vmatpush.bf16.msra.mxu0 %v3463
        %3669 = vmatpush.bf16.msra.mxu0 %v3459
        %3670 = vmatpush.bf16.msra.mxu0 %v3455
        %3671 = vmatmul.bf16.gmra.mxu0 %v3348
        %v3672 = vpop.f32.mrf.mxu0
        %v3673 = vadd.f32 0.0, %v3672
        %v3674 = vpop.f32.mrf.mxu0
        %v3675 = vadd.f32 0.0, %v3674
        %3676 = vmatmul.bf16.gmra.mxu0 %v3349
        %v3677 = vpop.f32.mrf.mxu0
        %v3678 = vadd.f32 0.0, %v3677
        %v3679 = vpop.f32.mrf.mxu0
        %v3680 = vadd.f32 0.0, %v3679
        %3681 = vmatmul.bf16.gmra.mxu0 %v3350
        %v3682 = vpop.f32.mrf.mxu0
        %v3683 = vadd.f32 0.0, %v3682
        %v3684 = vpop.f32.mrf.mxu0
        %v3685 = vadd.f32 0.0, %v3684
        %3686 = vmatmul.bf16.gmra.mxu0 %v3351
        %v3687 = vpop.f32.mrf.mxu0
        %v3688 = vadd.f32 0.0, %v3687
        %v3689 = vpop.f32.mrf.mxu0
        %v3690 = vadd.f32 0.0, %v3689
        %3691 = vmatmul.bf16.gmra.mxu0 %v3352
        %v3692 = vpop.f32.mrf.mxu0
        %v3693 = vadd.f32 0.0, %v3692
        %v3694 = vpop.f32.mrf.mxu0
        %v3695 = vadd.f32 0.0, %v3694
        %3696 = vmatmul.bf16.gmra.mxu0 %v3353
        %v3697 = vpop.f32.mrf.mxu0
        %v3698 = vadd.f32 0.0, %v3697
        %v3699 = vpop.f32.mrf.mxu0
        %v3700 = vadd.f32 0.0, %v3699
        %3701 = vmatmul.bf16.gmra.mxu0 %v3354
        %v3702 = vpop.f32.mrf.mxu0
        %v3703 = vadd.f32 0.0, %v3702
        %v3704 = vpop.f32.mrf.mxu0
        %v3705 = vadd.f32 0.0, %v3704
        %3706 = vmatmul.bf16.gmra.mxu0 %v3355
        %v3707 = vpop.f32.mrf.mxu0
        %v3708 = vadd.f32 0.0, %v3707
        %v3709 = vpop.f32.mrf.mxu0
        %v3710 = vadd.f32 0.0, %v3709
        %3711 = vdwg.mxu0
        %v3712 = vld [vmem:[%s954] sm:$0xf]
        %v3713 = vld [vmem:[%s954 + $0x4] sm:$0xf]
        %v3714 = vld [vmem:[%s954 + $0x8] sm:$0xf]
        %v3715 = vld [vmem:[%s954 + $0xc] sm:$0xf]
        %v3716 = vld [vmem:[%s954 + $0x10] sm:$0xf]
        %v3717 = vld [vmem:[%s954 + $0x14] sm:$0xf]
        %v3718 = vld [vmem:[%s954 + $0x18] sm:$0xf]
        %v3719 = vld [vmem:[%s954 + $0x1c] sm:$0xf]
        %v3720 = vld [vmem:[%s954 + $0x20] sm:$0xf]
        %v3721 = vld [vmem:[%s954 + $0x24] sm:$0xf]
        %v3722 = vld [vmem:[%s954 + $0x28] sm:$0xf]
        %v3723 = vld [vmem:[%s954 + $0x2c] sm:$0xf]
        %v3724 = vld [vmem:[%s954 + $0x30] sm:$0xf]
        %v3725 = vld [vmem:[%s954 + $0x34] sm:$0xf]
        %v3726 = vld [vmem:[%s954 + $0x38] sm:$0xf]
        %v3727 = vld [vmem:[%s954 + $0x3c] sm:$0xf]
        %v3728 = vld [vmem:[#allocation20] sm:$0xff]
        %v3729 = vld [vmem:[#allocation20 + $0x8] sm:$0xf]
        %v3730 = vld [vmem:[#allocation20 + $0xc] sm:$0xff]
        %v3731 = vld [vmem:[#allocation20 + $0x14] sm:$0xf]
        %v3732 = vld [vmem:[#allocation20 + $0x18] sm:$0xff]
        %v3733 = vld [vmem:[#allocation20 + $0x20] sm:$0xf]
        %v3734 = vld [vmem:[#allocation20 + $0x24] sm:$0xff]
        %v3735 = vld [vmem:[#allocation20 + $0x2c] sm:$0xf]
        %v3736 = vld [vmem:[#allocation20 + $0x30] sm:$0xff]
        %v3737 = vld [vmem:[#allocation20 + $0x38] sm:$0xf]
        %v3738 = vld [vmem:[#allocation20 + $0x3c] sm:$0xff]
        %v3739 = vld [vmem:[#allocation20 + $0x44] sm:$0xf]
        %v3740 = vld [vmem:[#allocation20 + $0x48] sm:$0xff]
        %v3741 = vld [vmem:[#allocation20 + $0x50] sm:$0xf]
        %v3742 = vld [vmem:[#allocation20 + $0x54] sm:$0xff]
        %v3743 = vld [vmem:[#allocation20 + $0x5c] sm:$0xf]
        %v3744 = vld [vmem:[#allocation20 + $0x60] sm:$0xff]
        %v3745 = vld [vmem:[#allocation20 + $0x68] sm:$0xf]
        %v3746 = vld [vmem:[#allocation20 + $0x6c] sm:$0xff]
        %v3747 = vld [vmem:[#allocation20 + $0x74] sm:$0xf]
        %v3748 = vld [vmem:[#allocation20 + $0x78] sm:$0xff]
        %v3749 = vld [vmem:[#allocation20 + $0x80] sm:$0xf]
        %v3750 = vld [vmem:[#allocation20 + $0x84] sm:$0xff]
        %v3751 = vld [vmem:[#allocation20 + $0x8c] sm:$0xf]
        %v3752 = vld [vmem:[#allocation20 + $0x90] sm:$0xff]
        %v3753 = vld [vmem:[#allocation20 + $0x98] sm:$0xf]
        %v3754 = vld [vmem:[#allocation20 + $0x9c] sm:$0xff]
        %v3755 = vld [vmem:[#allocation20 + $0xa4] sm:$0xf]
        %v3756 = vld [vmem:[#allocation20 + $0xa8] sm:$0xff]
        %v3757 = vld [vmem:[#allocation20 + $0xb0] sm:$0xf]
        %v3758 = vld [vmem:[#allocation20 + $0xb4] sm:$0xff]
        %v3759 = vld [vmem:[#allocation20 + $0xbc] sm:$0xf]
        %v3760 = vld [vmem:[%s964] sm:$0xf]
        %v3761 = vld [vmem:[%s964 + $0x4] sm:$0xf]
        %v3762 = vld [vmem:[%s964 + $0x8] sm:$0xf]
        %v3763 = vld [vmem:[%s964 + $0xc] sm:$0xf]
        %v3764 = vld [vmem:[%s964 + $0x10] sm:$0xf]
        %v3765 = vld [vmem:[%s964 + $0x14] sm:$0xf]
        %v3766 = vld [vmem:[%s964 + $0x18] sm:$0xf]
        %v3767 = vld [vmem:[%s964 + $0x1c] sm:$0xf]
        %v3768 = vld [vmem:[%s964 + $0x20] sm:$0xf]
        %v3769 = vld [vmem:[%s964 + $0x24] sm:$0xf]
        %v3770 = vld [vmem:[%s964 + $0x28] sm:$0xf]
        %v3771 = vld [vmem:[%s964 + $0x2c] sm:$0xf]
        %v3772 = vld [vmem:[%s964 + $0x30] sm:$0xf]
        %v3773 = vld [vmem:[%s964 + $0x34] sm:$0xf]
        %v3774 = vld [vmem:[%s964 + $0x38] sm:$0xf]
        %v3775 = vld [vmem:[%s964 + $0x3c] sm:$0xf]
        %v3776 = vld [vmem:[#allocation22] sm:$0xff]
        %v3777 = vld [vmem:[#allocation22 + $0x8] sm:$0xf]
        %v3778 = vld [vmem:[#allocation22 + $0xc] sm:$0xff]
        %v3779 = vld [vmem:[#allocation22 + $0x14] sm:$0xf]
        %v3780 = vld [vmem:[#allocation22 + $0x18] sm:$0xff]
        %v3781 = vld [vmem:[#allocation22 + $0x20] sm:$0xf]
        %v3782 = vld [vmem:[#allocation22 + $0x24] sm:$0xff]
        %v3783 = vld [vmem:[#allocation22 + $0x2c] sm:$0xf]
        %v3784 = vld [vmem:[#allocation22 + $0x30] sm:$0xff]
        %v3785 = vld [vmem:[#allocation22 + $0x38] sm:$0xf]
        %v3786 = vld [vmem:[#allocation22 + $0x3c] sm:$0xff]
        %v3787 = vld [vmem:[#allocation22 + $0x44] sm:$0xf]
        %v3788 = vld [vmem:[#allocation22 + $0x48] sm:$0xff]
        %v3789 = vld [vmem:[#allocation22 + $0x50] sm:$0xf]
        %v3790 = vld [vmem:[#allocation22 + $0x54] sm:$0xff]
        %v3791 = vld [vmem:[#allocation22 + $0x5c] sm:$0xf]
        %v3792 = vld [vmem:[#allocation22 + $0x60] sm:$0xff]
        %v3793 = vld [vmem:[#allocation22 + $0x68] sm:$0xf]
        %v3794 = vld [vmem:[#allocation22 + $0x6c] sm:$0xff]
        %v3795 = vld [vmem:[#allocation22 + $0x74] sm:$0xf]
        %v3796 = vld [vmem:[#allocation22 + $0x78] sm:$0xff]
        %v3797 = vld [vmem:[#allocation22 + $0x80] sm:$0xf]
        %v3798 = vld [vmem:[#allocation22 + $0x84] sm:$0xff]
        %v3799 = vld [vmem:[#allocation22 + $0x8c] sm:$0xf]
        %v3800 = vld [vmem:[#allocation22 + $0x90] sm:$0xff]
        %v3801 = vld [vmem:[#allocation22 + $0x98] sm:$0xf]
        %v3802 = vld [vmem:[#allocation22 + $0x9c] sm:$0xff]
        %v3803 = vld [vmem:[#allocation22 + $0xa4] sm:$0xf]
        %v3804 = vld [vmem:[#allocation22 + $0xa8] sm:$0xff]
        %v3805 = vld [vmem:[#allocation22 + $0xb0] sm:$0xf]
        %v3806 = vld [vmem:[#allocation22 + $0xb4] sm:$0xff]
        %v3807 = vld [vmem:[#allocation22 + $0xbc] sm:$0xf]
        %v3824 = vunpack.c.l.b16 %v3760
        %v3825 = vunpack.c.l.b16 %v3761
        %v3826 = vunpack.c.l.b16 %v3762
        %v3827 = vunpack.c.l.b16 %v3763
        %v3828 = vunpack.c.l.b16 %v3764
        %v3829 = vunpack.c.l.b16 %v3765
        %v3830 = vunpack.c.l.b16 %v3766
        %v3831 = vunpack.c.l.b16 %v3767
        %v3832 = vunpack.c.l.b16 %v3768
        %v3833 = vunpack.c.l.b16 %v3769
        %v3834 = vunpack.c.l.b16 %v3770
        %v3835 = vunpack.c.l.b16 %v3771
        %v3836 = vunpack.c.l.b16 %v3772
        %v3837 = vunpack.c.l.b16 %v3773
        %v3838 = vunpack.c.l.b16 %v3774
        %v3839 = vunpack.c.l.b16 %v3775
        %v3840 = vpack.c.b16 %v3825, %v3824
        %v3841 = vpack.c.b16 %v3827, %v3826
        %v3842 = vpack.c.b16 %v3829, %v3828
        %v3843 = vpack.c.b16 %v3831, %v3830
        %v3844 = vpack.c.b16 %v3833, %v3832
        %v3845 = vpack.c.b16 %v3835, %v3834
        %v3846 = vpack.c.b16 %v3837, %v3836
        %v3847 = vpack.c.b16 %v3839, %v3838
        %v3888 = vunpack.c.l.b16 %v3776
        %v3889 = vunpack.c.h.b16 %v3776
        %v3890 = vunpack.c.l.b16 %v3777
        %v3891 = vunpack.c.l.b16 %v3778
        %v3892 = vunpack.c.h.b16 %v3778
        %v3893 = vunpack.c.l.b16 %v3779
        %v3894 = vunpack.c.l.b16 %v3780
        %v3895 = vunpack.c.h.b16 %v3780
        %v3896 = vunpack.c.l.b16 %v3781
        %v3897 = vunpack.c.l.b16 %v3782
        %v3898 = vunpack.c.h.b16 %v3782
        %v3899 = vunpack.c.l.b16 %v3783
        %v3900 = vunpack.c.l.b16 %v3784
        %v3901 = vunpack.c.h.b16 %v3784
        %v3902 = vunpack.c.l.b16 %v3785
        %v3903 = vunpack.c.l.b16 %v3786
        %v3904 = vunpack.c.h.b16 %v3786
        %v3905 = vunpack.c.l.b16 %v3787
        %v3906 = vunpack.c.l.b16 %v3788
        %v3907 = vunpack.c.h.b16 %v3788
        %v3908 = vunpack.c.l.b16 %v3789
        %v3909 = vunpack.c.l.b16 %v3790
        %v3910 = vunpack.c.h.b16 %v3790
        %v3911 = vunpack.c.l.b16 %v3791
        %v3912 = vunpack.c.l.b16 %v3792
        %v3913 = vunpack.c.h.b16 %v3792
        %v3914 = vunpack.c.l.b16 %v3793
        %v3915 = vunpack.c.l.b16 %v3794
        %v3916 = vunpack.c.h.b16 %v3794
        %v3917 = vunpack.c.l.b16 %v3795
        %v3918 = vunpack.c.l.b16 %v3796
        %v3919 = vunpack.c.h.b16 %v3796
        %v3920 = vunpack.c.l.b16 %v3797
        %v3921 = vunpack.c.l.b16 %v3798
        %v3922 = vunpack.c.h.b16 %v3798
        %v3923 = vunpack.c.l.b16 %v3799
        %v3924 = vunpack.c.l.b16 %v3800
        %v3925 = vunpack.c.h.b16 %v3800
        %v3926 = vunpack.c.l.b16 %v3801
        %v3927 = vunpack.c.l.b16 %v3802
        %v3928 = vunpack.c.h.b16 %v3802
        %v3929 = vunpack.c.l.b16 %v3803
        %v3930 = vunpack.c.l.b16 %v3804
        %v3931 = vunpack.c.h.b16 %v3804
        %v3932 = vunpack.c.l.b16 %v3805
        %v3933 = vunpack.c.l.b16 %v3806
        %v3934 = vunpack.c.h.b16 %v3806
        %v3935 = vunpack.c.l.b16 %v3807
        %v3936 = vpack.c.b16 %v3891, %v3888
        %v3937 = vpack.c.b16 %v3892, %v3889
        %v3938 = vpack.c.b16 %v3893, %v3890
        %v3939 = vpack.c.b16 %v3897, %v3894
        %v3940 = vpack.c.b16 %v3898, %v3895
        %v3941 = vpack.c.b16 %v3899, %v3896
        %v3942 = vpack.c.b16 %v3903, %v3900
        %v3943 = vpack.c.b16 %v3904, %v3901
        %v3944 = vpack.c.b16 %v3905, %v3902
        %v3945 = vpack.c.b16 %v3909, %v3906
        %v3946 = vpack.c.b16 %v3910, %v3907
        %v3947 = vpack.c.b16 %v3911, %v3908
        %v3948 = vpack.c.b16 %v3915, %v3912
        %v3949 = vpack.c.b16 %v3916, %v3913
        %v3950 = vpack.c.b16 %v3917, %v3914
        %v3951 = vpack.c.b16 %v3921, %v3918
        %v3952 = vpack.c.b16 %v3922, %v3919
        %v3953 = vpack.c.b16 %v3923, %v3920
        %v3954 = vpack.c.b16 %v3927, %v3924
        %v3955 = vpack.c.b16 %v3928, %v3925
        %v3956 = vpack.c.b16 %v3929, %v3926
        %v3957 = vpack.c.b16 %v3933, %v3930
        %v3958 = vpack.c.b16 %v3934, %v3931
        %v3959 = vpack.c.b16 %v3935, %v3932
        %3984 = vmatpush.bf16.msra.mxu0 %v3957
        %3985 = vmatpush.bf16.msra.mxu0 %v3954
        %3986 = vmatpush.bf16.msra.mxu0 %v3951
        %3987 = vmatpush.bf16.msra.mxu0 %v3948
        %3988 = vmatpush.bf16.msra.mxu0 %v3945
        %3989 = vmatpush.bf16.msra.mxu0 %v3942
        %3990 = vmatpush.bf16.msra.mxu0 %v3939
        %3991 = vmatpush.bf16.msra.mxu0 %v3936
        %3992 = vmatmul.bf16.gmra.mxu0 %v3840
        %v3993 = vpop.f32.mrf.mxu0
        %v3994 = vadd.f32 0.0, %v3993
        %v3995 = vpop.f32.mrf.mxu0
        %v3996 = vadd.f32 0.0, %v3995
        %3997 = vmatmul.bf16.gmra.mxu0 %v3841
        %v3998 = vpop.f32.mrf.mxu0
        %v3999 = vadd.f32 0.0, %v3998
        %v4000 = vpop.f32.mrf.mxu0
        %v4001 = vadd.f32 0.0, %v4000
        %4002 = vmatmul.bf16.gmra.mxu0 %v3842
        %v4003 = vpop.f32.mrf.mxu0
        %v4004 = vadd.f32 0.0, %v4003
        %v4005 = vpop.f32.mrf.mxu0
        %v4006 = vadd.f32 0.0, %v4005
        %4007 = vmatmul.bf16.gmra.mxu0 %v3843
        %v4008 = vpop.f32.mrf.mxu0
        %v4009 = vadd.f32 0.0, %v4008
        %v4010 = vpop.f32.mrf.mxu0
        %v4011 = vadd.f32 0.0, %v4010
        %4012 = vmatmul.bf16.gmra.mxu0 %v3844
        %v4013 = vpop.f32.mrf.mxu0
        %v4014 = vadd.f32 0.0, %v4013
        %v4015 = vpop.f32.mrf.mxu0
        %v4016 = vadd.f32 0.0, %v4015
        %4017 = vmatmul.bf16.gmra.mxu0 %v3845
        %v4018 = vpop.f32.mrf.mxu0
        %v4019 = vadd.f32 0.0, %v4018
        %v4020 = vpop.f32.mrf.mxu0
        %v4021 = vadd.f32 0.0, %v4020
        %4022 = vmatmul.bf16.gmra.mxu0 %v3846
        %v4023 = vpop.f32.mrf.mxu0
        %v4024 = vadd.f32 0.0, %v4023
        %v4025 = vpop.f32.mrf.mxu0
        %v4026 = vadd.f32 0.0, %v4025
        %4027 = vmatmul.bf16.gmra.mxu0 %v3847
        %v4028 = vpop.f32.mrf.mxu0
        %v4029 = vadd.f32 0.0, %v4028
        %v4030 = vpop.f32.mrf.mxu0
        %v4031 = vadd.f32 0.0, %v4030
        %4032 = vdwg.mxu0
        %4033 = vmatpush.bf16.msra.mxu0 %v3958
        %4034 = vmatpush.bf16.msra.mxu0 %v3955
        %4035 = vmatpush.bf16.msra.mxu0 %v3952
        %4036 = vmatpush.bf16.msra.mxu0 %v3949
        %4037 = vmatpush.bf16.msra.mxu0 %v3946
        %4038 = vmatpush.bf16.msra.mxu0 %v3943
        %4039 = vmatpush.bf16.msra.mxu0 %v3940
        %4040 = vmatpush.bf16.msra.mxu0 %v3937
        %4041 = vmatmul.bf16.gmra.mxu0 %v3840
        %v4042 = vpop.f32.mrf.mxu0
        %v4043 = vadd.f32 0.0, %v4042
        %v4044 = vpop.f32.mrf.mxu0
        %v4045 = vadd.f32 0.0, %v4044
        %4046 = vmatmul.bf16.gmra.mxu0 %v3841
        %v4047 = vpop.f32.mrf.mxu0
        %v4048 = vadd.f32 0.0, %v4047
        %v4049 = vpop.f32.mrf.mxu0
        %v4050 = vadd.f32 0.0, %v4049
        %4051 = vmatmul.bf16.gmra.mxu0 %v3842
        %v4052 = vpop.f32.mrf.mxu0
        %v4053 = vadd.f32 0.0, %v4052
        %v4054 = vpop.f32.mrf.mxu0
        %v4055 = vadd.f32 0.0, %v4054
        %4056 = vmatmul.bf16.gmra.mxu0 %v3843
        %v4057 = vpop.f32.mrf.mxu0
        %v4058 = vadd.f32 0.0, %v4057
        %v4059 = vpop.f32.mrf.mxu0
        %v4060 = vadd.f32 0.0, %v4059
        %4061 = vmatmul.bf16.gmra.mxu0 %v3844
        %v4062 = vpop.f32.mrf.mxu0
        %v4063 = vadd.f32 0.0, %v4062
        %v4064 = vpop.f32.mrf.mxu0
        %v4065 = vadd.f32 0.0, %v4064
        %4066 = vmatmul.bf16.gmra.mxu0 %v3845
        %v4067 = vpop.f32.mrf.mxu0
        %v4068 = vadd.f32 0.0, %v4067
        %v4069 = vpop.f32.mrf.mxu0
        %v4070 = vadd.f32 0.0, %v4069
        %4071 = vmatmul.bf16.gmra.mxu0 %v3846
        %v4072 = vpop.f32.mrf.mxu0
        %v4073 = vadd.f32 0.0, %v4072
        %v4074 = vpop.f32.mrf.mxu0
        %v4075 = vadd.f32 0.0, %v4074
        %4076 = vmatmul.bf16.gmra.mxu0 %v3847
        %v4077 = vpop.f32.mrf.mxu0
        %v4078 = vadd.f32 0.0, %v4077
        %v4079 = vpop.f32.mrf.mxu0
        %v4080 = vadd.f32 0.0, %v4079
        %4081 = vdwg.mxu0
        %4082 = vmatpush.bf16.msra.mxu0 %v3959
        %4083 = vmatpush.bf16.msra.mxu0 %v3956
        %4084 = vmatpush.bf16.msra.mxu0 %v3953
        %4085 = vmatpush.bf16.msra.mxu0 %v3950
        %4086 = vmatpush.bf16.msra.mxu0 %v3947
        %4087 = vmatpush.bf16.msra.mxu0 %v3944
        %4088 = vmatpush.bf16.msra.mxu0 %v3941
        %4089 = vmatpush.bf16.msra.mxu0 %v3938
        %4090 = vmatmul.bf16.gmra.mxu0 %v3840
        %v4091 = vpop.f32.mrf.mxu0
        %v4092 = vadd.f32 0.0, %v4091
        %v4093 = vpop.f32.mrf.mxu0
        %v4094 = vadd.f32 0.0, %v4093
        %4095 = vmatmul.bf16.gmra.mxu0 %v3841
        %v4096 = vpop.f32.mrf.mxu0
        %v4097 = vadd.f32 0.0, %v4096
        %v4098 = vpop.f32.mrf.mxu0
        %v4099 = vadd.f32 0.0, %v4098
        %4100 = vmatmul.bf16.gmra.mxu0 %v3842
        %v4101 = vpop.f32.mrf.mxu0
        %v4102 = vadd.f32 0.0, %v4101
        %v4103 = vpop.f32.mrf.mxu0
        %v4104 = vadd.f32 0.0, %v4103
        %4105 = vmatmul.bf16.gmra.mxu0 %v3843
        %v4106 = vpop.f32.mrf.mxu0
        %v4107 = vadd.f32 0.0, %v4106
        %v4108 = vpop.f32.mrf.mxu0
        %v4109 = vadd.f32 0.0, %v4108
        %4110 = vmatmul.bf16.gmra.mxu0 %v3844
        %v4111 = vpop.f32.mrf.mxu0
        %v4112 = vadd.f32 0.0, %v4111
        %v4113 = vpop.f32.mrf.mxu0
        %v4114 = vadd.f32 0.0, %v4113
        %4115 = vmatmul.bf16.gmra.mxu0 %v3845
        %v4116 = vpop.f32.mrf.mxu0
        %v4117 = vadd.f32 0.0, %v4116
        %v4118 = vpop.f32.mrf.mxu0
        %v4119 = vadd.f32 0.0, %v4118
        %4120 = vmatmul.bf16.gmra.mxu0 %v3846
        %v4121 = vpop.f32.mrf.mxu0
        %v4122 = vadd.f32 0.0, %v4121
        %v4123 = vpop.f32.mrf.mxu0
        %v4124 = vadd.f32 0.0, %v4123
        %4125 = vmatmul.bf16.gmra.mxu0 %v3847
        %v4126 = vpop.f32.mrf.mxu0
        %v4127 = vadd.f32 0.0, %v4126
        %v4128 = vpop.f32.mrf.mxu0
        %v4129 = vadd.f32 0.0, %v4128
        %4130 = vdwg.mxu0
        %v4147 = vunpack.c.l.b16 %v3712
        %v4148 = vunpack.c.l.b16 %v3713
        %v4149 = vunpack.c.l.b16 %v3714
        %v4150 = vunpack.c.l.b16 %v3715
        %v4151 = vunpack.c.l.b16 %v3716
        %v4152 = vunpack.c.l.b16 %v3717
        %v4153 = vunpack.c.l.b16 %v3718
        %v4154 = vunpack.c.l.b16 %v3719
        %v4155 = vunpack.c.l.b16 %v3720
        %v4156 = vunpack.c.l.b16 %v3721
        %v4157 = vunpack.c.l.b16 %v3722
        %v4158 = vunpack.c.l.b16 %v3723
        %v4159 = vunpack.c.l.b16 %v3724
        %v4160 = vunpack.c.l.b16 %v3725
        %v4161 = vunpack.c.l.b16 %v3726
        %v4162 = vunpack.c.l.b16 %v3727
        %v4163 = vpack.c.b16 %v4148, %v4147
        %v4164 = vpack.c.b16 %v4150, %v4149
        %v4165 = vpack.c.b16 %v4152, %v4151
        %v4166 = vpack.c.b16 %v4154, %v4153
        %v4167 = vpack.c.b16 %v4156, %v4155
        %v4168 = vpack.c.b16 %v4158, %v4157
        %v4169 = vpack.c.b16 %v4160, %v4159
        %v4170 = vpack.c.b16 %v4162, %v4161
        %v4211 = vunpack.c.l.b16 %v3728
        %v4212 = vunpack.c.h.b16 %v3728
        %v4213 = vunpack.c.l.b16 %v3729
        %v4214 = vunpack.c.l.b16 %v3730
        %v4215 = vunpack.c.h.b16 %v3730
        %v4216 = vunpack.c.l.b16 %v3731
        %v4217 = vunpack.c.l.b16 %v3732
        %v4218 = vunpack.c.h.b16 %v3732
        %v4219 = vunpack.c.l.b16 %v3733
        %v4220 = vunpack.c.l.b16 %v3734
        %v4221 = vunpack.c.h.b16 %v3734
        %v4222 = vunpack.c.l.b16 %v3735
        %v4223 = vunpack.c.l.b16 %v3736
        %v4224 = vunpack.c.h.b16 %v3736
        %v4225 = vunpack.c.l.b16 %v3737
        %v4226 = vunpack.c.l.b16 %v3738
        %v4227 = vunpack.c.h.b16 %v3738
        %v4228 = vunpack.c.l.b16 %v3739
        %v4229 = vunpack.c.l.b16 %v3740
        %v4230 = vunpack.c.h.b16 %v3740
        %v4231 = vunpack.c.l.b16 %v3741
        %v4232 = vunpack.c.l.b16 %v3742
        %v4233 = vunpack.c.h.b16 %v3742
        %v4234 = vunpack.c.l.b16 %v3743
        %v4235 = vunpack.c.l.b16 %v3744
        %v4236 = vunpack.c.h.b16 %v3744
        %v4237 = vunpack.c.l.b16 %v3745
        %v4238 = vunpack.c.l.b16 %v3746
        %v4239 = vunpack.c.h.b16 %v3746
        %v4240 = vunpack.c.l.b16 %v3747
        %v4241 = vunpack.c.l.b16 %v3748
        %v4242 = vunpack.c.h.b16 %v3748
        %v4243 = vunpack.c.l.b16 %v3749
        %v4244 = vunpack.c.l.b16 %v3750
        %v4245 = vunpack.c.h.b16 %v3750
        %v4246 = vunpack.c.l.b16 %v3751
        %v4247 = vunpack.c.l.b16 %v3752
        %v4248 = vunpack.c.h.b16 %v3752
        %v4249 = vunpack.c.l.b16 %v3753
        %v4250 = vunpack.c.l.b16 %v3754
        %v4251 = vunpack.c.h.b16 %v3754
        %v4252 = vunpack.c.l.b16 %v3755
        %v4253 = vunpack.c.l.b16 %v3756
        %v4254 = vunpack.c.h.b16 %v3756
        %v4255 = vunpack.c.l.b16 %v3757
        %v4256 = vunpack.c.l.b16 %v3758
        %v4257 = vunpack.c.h.b16 %v3758
        %v4258 = vunpack.c.l.b16 %v3759
        %v4259 = vpack.c.b16 %v4214, %v4211
        %v4260 = vpack.c.b16 %v4215, %v4212
        %v4261 = vpack.c.b16 %v4216, %v4213
        %v4262 = vpack.c.b16 %v4220, %v4217
        %v4263 = vpack.c.b16 %v4221, %v4218
        %v4264 = vpack.c.b16 %v4222, %v4219
        %v4265 = vpack.c.b16 %v4226, %v4223
        %v4266 = vpack.c.b16 %v4227, %v4224
        %v4267 = vpack.c.b16 %v4228, %v4225
        %v4268 = vpack.c.b16 %v4232, %v4229
        %v4269 = vpack.c.b16 %v4233, %v4230
        %v4270 = vpack.c.b16 %v4234, %v4231
        %v4271 = vpack.c.b16 %v4238, %v4235
        %v4272 = vpack.c.b16 %v4239, %v4236
        %v4273 = vpack.c.b16 %v4240, %v4237
        %v4274 = vpack.c.b16 %v4244, %v4241
        %v4275 = vpack.c.b16 %v4245, %v4242
        %v4276 = vpack.c.b16 %v4246, %v4243
        %v4277 = vpack.c.b16 %v4250, %v4247
        %v4278 = vpack.c.b16 %v4251, %v4248
        %v4279 = vpack.c.b16 %v4252, %v4249
        %v4280 = vpack.c.b16 %v4256, %v4253
        %v4281 = vpack.c.b16 %v4257, %v4254
        %v4282 = vpack.c.b16 %v4258, %v4255
        %4307 = vmatpush.bf16.msra.mxu0 %v4280
        %4308 = vmatpush.bf16.msra.mxu0 %v4277
        %4309 = vmatpush.bf16.msra.mxu0 %v4274
        %4310 = vmatpush.bf16.msra.mxu0 %v4271
        %4311 = vmatpush.bf16.msra.mxu0 %v4268
        %4312 = vmatpush.bf16.msra.mxu0 %v4265
        %4313 = vmatpush.bf16.msra.mxu0 %v4262
        %4314 = vmatpush.bf16.msra.mxu0 %v4259
        %4315 = vmatmul.bf16.gmra.mxu0 %v4163
        %v4316 = vpop.f32.mrf.mxu0
        %v4317 = vadd.f32 %v3994, %v4316
        %v4318 = vpop.f32.mrf.mxu0
        %v4319 = vadd.f32 %v3996, %v4318
        %4320 = vmatmul.bf16.gmra.mxu0 %v4164
        %v4321 = vpop.f32.mrf.mxu0
        %v4322 = vadd.f32 %v3999, %v4321
        %v4323 = vpop.f32.mrf.mxu0
        %v4324 = vadd.f32 %v4001, %v4323
        %4325 = vmatmul.bf16.gmra.mxu0 %v4165
        %v4326 = vpop.f32.mrf.mxu0
        %v4327 = vadd.f32 %v4004, %v4326
        %v4328 = vpop.f32.mrf.mxu0
        %v4329 = vadd.f32 %v4006, %v4328
        %4330 = vmatmul.bf16.gmra.mxu0 %v4166
        %v4331 = vpop.f32.mrf.mxu0
        %v4332 = vadd.f32 %v4009, %v4331
        %v4333 = vpop.f32.mrf.mxu0
        %v4334 = vadd.f32 %v4011, %v4333
        %4335 = vmatmul.bf16.gmra.mxu0 %v4167
        %v4336 = vpop.f32.mrf.mxu0
        %v4337 = vadd.f32 %v4014, %v4336
        %v4338 = vpop.f32.mrf.mxu0
        %v4339 = vadd.f32 %v4016, %v4338
        %4340 = vmatmul.bf16.gmra.mxu0 %v4168
        %v4341 = vpop.f32.mrf.mxu0
        %v4342 = vadd.f32 %v4019, %v4341
        %v4343 = vpop.f32.mrf.mxu0
        %v4344 = vadd.f32 %v4021, %v4343
        %4345 = vmatmul.bf16.gmra.mxu0 %v4169
        %v4346 = vpop.f32.mrf.mxu0
        %v4347 = vadd.f32 %v4024, %v4346
        %v4348 = vpop.f32.mrf.mxu0
        %v4349 = vadd.f32 %v4026, %v4348
        %4350 = vmatmul.bf16.gmra.mxu0 %v4170
        %v4351 = vpop.f32.mrf.mxu0
        %v4352 = vadd.f32 %v4029, %v4351
        %v4353 = vpop.f32.mrf.mxu0
        %v4354 = vadd.f32 %v4031, %v4353
        %4355 = vdwg.mxu0
        %4356 = vmatpush.bf16.msra.mxu0 %v4281
        %4357 = vmatpush.bf16.msra.mxu0 %v4278
        %4358 = vmatpush.bf16.msra.mxu0 %v4275
        %4359 = vmatpush.bf16.msra.mxu0 %v4272
        %4360 = vmatpush.bf16.msra.mxu0 %v4269
        %4361 = vmatpush.bf16.msra.mxu0 %v4266
        %4362 = vmatpush.bf16.msra.mxu0 %v4263
        %4363 = vmatpush.bf16.msra.mxu0 %v4260
        %4364 = vmatmul.bf16.gmra.mxu0 %v4163
        %v4365 = vpop.f32.mrf.mxu0
        %v4366 = vadd.f32 %v4043, %v4365
        %v4367 = vpop.f32.mrf.mxu0
        %v4368 = vadd.f32 %v4045, %v4367
        %4369 = vmatmul.bf16.gmra.mxu0 %v4164
        %v4370 = vpop.f32.mrf.mxu0
        %v4371 = vadd.f32 %v4048, %v4370
        %v4372 = vpop.f32.mrf.mxu0
        %v4373 = vadd.f32 %v4050, %v4372
        %4374 = vmatmul.bf16.gmra.mxu0 %v4165
        %v4375 = vpop.f32.mrf.mxu0
        %v4376 = vadd.f32 %v4053, %v4375
        %v4377 = vpop.f32.mrf.mxu0
        %v4378 = vadd.f32 %v4055, %v4377
        %4379 = vmatmul.bf16.gmra.mxu0 %v4166
        %v4380 = vpop.f32.mrf.mxu0
        %v4381 = vadd.f32 %v4058, %v4380
        %v4382 = vpop.f32.mrf.mxu0
        %v4383 = vadd.f32 %v4060, %v4382
        %4384 = vmatmul.bf16.gmra.mxu0 %v4167
        %v4385 = vpop.f32.mrf.mxu0
        %v4386 = vadd.f32 %v4063, %v4385
        %v4387 = vpop.f32.mrf.mxu0
        %v4388 = vadd.f32 %v4065, %v4387
        %4389 = vmatmul.bf16.gmra.mxu0 %v4168
        %v4390 = vpop.f32.mrf.mxu0
        %v4391 = vadd.f32 %v4068, %v4390
        %v4392 = vpop.f32.mrf.mxu0
        %v4393 = vadd.f32 %v4070, %v4392
        %4394 = vmatmul.bf16.gmra.mxu0 %v4169
        %v4395 = vpop.f32.mrf.mxu0
        %v4396 = vadd.f32 %v4073, %v4395
        %v4397 = vpop.f32.mrf.mxu0
        %v4398 = vadd.f32 %v4075, %v4397
        %4399 = vmatmul.bf16.gmra.mxu0 %v4170
        %v4400 = vpop.f32.mrf.mxu0
        %v4401 = vadd.f32 %v4078, %v4400
        %v4402 = vpop.f32.mrf.mxu0
        %v4403 = vadd.f32 %v4080, %v4402
        %4404 = vdwg.mxu0
        %4405 = vmatpush.bf16.msra.mxu0 %v4282
        %4406 = vmatpush.bf16.msra.mxu0 %v4279
        %4407 = vmatpush.bf16.msra.mxu0 %v4276
        %4408 = vmatpush.bf16.msra.mxu0 %v4273
        %4409 = vmatpush.bf16.msra.mxu0 %v4270
        %4410 = vmatpush.bf16.msra.mxu0 %v4267
        %4411 = vmatpush.bf16.msra.mxu0 %v4264
        %4412 = vmatpush.bf16.msra.mxu0 %v4261
        %4413 = vmatmul.bf16.gmra.mxu0 %v4163
        %v4414 = vpop.f32.mrf.mxu0
        %v4415 = vadd.f32 %v4092, %v4414
        %v4416 = vpop.f32.mrf.mxu0
        %v4417 = vadd.f32 %v4094, %v4416
        %4418 = vmatmul.bf16.gmra.mxu0 %v4164
        %v4419 = vpop.f32.mrf.mxu0
        %v4420 = vadd.f32 %v4097, %v4419
        %v4421 = vpop.f32.mrf.mxu0
        %v4422 = vadd.f32 %v4099, %v4421
        %4423 = vmatmul.bf16.gmra.mxu0 %v4165
        %v4424 = vpop.f32.mrf.mxu0
        %v4425 = vadd.f32 %v4102, %v4424
        %v4426 = vpop.f32.mrf.mxu0
        %v4427 = vadd.f32 %v4104, %v4426
        %4428 = vmatmul.bf16.gmra.mxu0 %v4166
        %v4429 = vpop.f32.mrf.mxu0
        %v4430 = vadd.f32 %v4107, %v4429
        %v4431 = vpop.f32.mrf.mxu0
        %v4432 = vadd.f32 %v4109, %v4431
        %4433 = vmatmul.bf16.gmra.mxu0 %v4167
        %v4434 = vpop.f32.mrf.mxu0
        %v4435 = vadd.f32 %v4112, %v4434
        %v4436 = vpop.f32.mrf.mxu0
        %v4437 = vadd.f32 %v4114, %v4436
        %4438 = vmatmul.bf16.gmra.mxu0 %v4168
        %v4439 = vpop.f32.mrf.mxu0
        %v4440 = vadd.f32 %v4117, %v4439
        %v4441 = vpop.f32.mrf.mxu0
        %v4442 = vadd.f32 %v4119, %v4441
        %4443 = vmatmul.bf16.gmra.mxu0 %v4169
        %v4444 = vpop.f32.mrf.mxu0
        %v4445 = vadd.f32 %v4122, %v4444
        %v4446 = vpop.f32.mrf.mxu0
        %v4447 = vadd.f32 %v4124, %v4446
        %4448 = vmatmul.bf16.gmra.mxu0 %v4170
        %v4449 = vpop.f32.mrf.mxu0
        %v4450 = vadd.f32 %v4127, %v4449
        %v4451 = vpop.f32.mrf.mxu0
        %v4452 = vadd.f32 %v4129, %v4451
        %4453 = vdwg.mxu0
        %v4454 = vld [vmem:[%s974] sm:$0xf]
        %v4455 = vld [vmem:[%s974 + $0x4] sm:$0xf]
        %v4456 = vld [vmem:[%s974 + $0x8] sm:$0xf]
        %v4457 = vld [vmem:[%s974 + $0xc] sm:$0xf]
        %v4458 = vld [vmem:[%s974 + $0x10] sm:$0xf]
        %v4459 = vld [vmem:[%s974 + $0x14] sm:$0xf]
        %v4460 = vld [vmem:[%s974 + $0x18] sm:$0xf]
        %v4461 = vld [vmem:[%s974 + $0x1c] sm:$0xf]
        %v4462 = vld [vmem:[%s974 + $0x20] sm:$0xf]
        %v4463 = vld [vmem:[%s974 + $0x24] sm:$0xf]
        %v4464 = vld [vmem:[%s974 + $0x28] sm:$0xf]
        %v4465 = vld [vmem:[%s974 + $0x2c] sm:$0xf]
        %v4466 = vld [vmem:[%s974 + $0x30] sm:$0xf]
        %v4467 = vld [vmem:[%s974 + $0x34] sm:$0xf]
        %v4468 = vld [vmem:[%s974 + $0x38] sm:$0xf]
        %v4469 = vld [vmem:[%s974 + $0x3c] sm:$0xf]
        %v4470 = vld [vmem:[#allocation23] sm:$0xff]
        %v4471 = vld [vmem:[#allocation23 + $0x8] sm:$0xf]
        %v4472 = vld [vmem:[#allocation23 + $0xc] sm:$0xff]
        %v4473 = vld [vmem:[#allocation23 + $0x14] sm:$0xf]
        %v4474 = vld [vmem:[#allocation23 + $0x18] sm:$0xff]
        %v4475 = vld [vmem:[#allocation23 + $0x20] sm:$0xf]
        %v4476 = vld [vmem:[#allocation23 + $0x24] sm:$0xff]
        %v4477 = vld [vmem:[#allocation23 + $0x2c] sm:$0xf]
        %v4478 = vld [vmem:[#allocation23 + $0x30] sm:$0xff]
        %v4479 = vld [vmem:[#allocation23 + $0x38] sm:$0xf]
        %v4480 = vld [vmem:[#allocation23 + $0x3c] sm:$0xff]
        %v4481 = vld [vmem:[#allocation23 + $0x44] sm:$0xf]
        %v4482 = vld [vmem:[#allocation23 + $0x48] sm:$0xff]
        %v4483 = vld [vmem:[#allocation23 + $0x50] sm:$0xf]
        %v4484 = vld [vmem:[#allocation23 + $0x54] sm:$0xff]
        %v4485 = vld [vmem:[#allocation23 + $0x5c] sm:$0xf]
        %v4486 = vld [vmem:[#allocation23 + $0x60] sm:$0xff]
        %v4487 = vld [vmem:[#allocation23 + $0x68] sm:$0xf]
        %v4488 = vld [vmem:[#allocation23 + $0x6c] sm:$0xff]
        %v4489 = vld [vmem:[#allocation23 + $0x74] sm:$0xf]
        %v4490 = vld [vmem:[#allocation23 + $0x78] sm:$0xff]
        %v4491 = vld [vmem:[#allocation23 + $0x80] sm:$0xf]
        %v4492 = vld [vmem:[#allocation23 + $0x84] sm:$0xff]
        %v4493 = vld [vmem:[#allocation23 + $0x8c] sm:$0xf]
        %v4494 = vld [vmem:[#allocation23 + $0x90] sm:$0xff]
        %v4495 = vld [vmem:[#allocation23 + $0x98] sm:$0xf]
        %v4496 = vld [vmem:[#allocation23 + $0x9c] sm:$0xff]
        %v4497 = vld [vmem:[#allocation23 + $0xa4] sm:$0xf]
        %v4498 = vld [vmem:[#allocation23 + $0xa8] sm:$0xff]
        %v4499 = vld [vmem:[#allocation23 + $0xb0] sm:$0xf]
        %v4500 = vld [vmem:[#allocation23 + $0xb4] sm:$0xff]
        %v4501 = vld [vmem:[#allocation23 + $0xbc] sm:$0xf]
        %v4518 = vunpack.c.l.b16 %v4454
        %v4519 = vunpack.c.l.b16 %v4455
        %v4520 = vunpack.c.l.b16 %v4456
        %v4521 = vunpack.c.l.b16 %v4457
        %v4522 = vunpack.c.l.b16 %v4458
        %v4523 = vunpack.c.l.b16 %v4459
        %v4524 = vunpack.c.l.b16 %v4460
        %v4525 = vunpack.c.l.b16 %v4461
        %v4526 = vunpack.c.l.b16 %v4462
        %v4527 = vunpack.c.l.b16 %v4463
        %v4528 = vunpack.c.l.b16 %v4464
        %v4529 = vunpack.c.l.b16 %v4465
        %v4530 = vunpack.c.l.b16 %v4466
        %v4531 = vunpack.c.l.b16 %v4467
        %v4532 = vunpack.c.l.b16 %v4468
        %v4533 = vunpack.c.l.b16 %v4469
        %v4534 = vpack.c.b16 %v4519, %v4518
        %v4535 = vpack.c.b16 %v4521, %v4520
        %v4536 = vpack.c.b16 %v4523, %v4522
        %v4537 = vpack.c.b16 %v4525, %v4524
        %v4538 = vpack.c.b16 %v4527, %v4526
        %v4539 = vpack.c.b16 %v4529, %v4528
        %v4540 = vpack.c.b16 %v4531, %v4530
        %v4541 = vpack.c.b16 %v4533, %v4532
        %v4582 = vunpack.c.l.b16 %v4470
        %v4583 = vunpack.c.h.b16 %v4470
        %v4584 = vunpack.c.l.b16 %v4471
        %v4585 = vunpack.c.l.b16 %v4472
        %v4586 = vunpack.c.h.b16 %v4472
        %v4587 = vunpack.c.l.b16 %v4473
        %v4588 = vunpack.c.l.b16 %v4474
        %v4589 = vunpack.c.h.b16 %v4474
        %v4590 = vunpack.c.l.b16 %v4475
        %v4591 = vunpack.c.l.b16 %v4476
        %v4592 = vunpack.c.h.b16 %v4476
        %v4593 = vunpack.c.l.b16 %v4477
        %v4594 = vunpack.c.l.b16 %v4478
        %v4595 = vunpack.c.h.b16 %v4478
        %v4596 = vunpack.c.l.b16 %v4479
        %v4597 = vunpack.c.l.b16 %v4480
        %v4598 = vunpack.c.h.b16 %v4480
        %v4599 = vunpack.c.l.b16 %v4481
        %v4600 = vunpack.c.l.b16 %v4482
        %v4601 = vunpack.c.h.b16 %v4482
        %v4602 = vunpack.c.l.b16 %v4483
        %v4603 = vunpack.c.l.b16 %v4484
        %v4604 = vunpack.c.h.b16 %v4484
        %v4605 = vunpack.c.l.b16 %v4485
        %v4606 = vunpack.c.l.b16 %v4486
        %v4607 = vunpack.c.h.b16 %v4486
        %v4608 = vunpack.c.l.b16 %v4487
        %v4609 = vunpack.c.l.b16 %v4488
        %v4610 = vunpack.c.h.b16 %v4488
        %v4611 = vunpack.c.l.b16 %v4489
        %v4612 = vunpack.c.l.b16 %v4490
        %v4613 = vunpack.c.h.b16 %v4490
        %v4614 = vunpack.c.l.b16 %v4491
        %v4615 = vunpack.c.l.b16 %v4492
        %v4616 = vunpack.c.h.b16 %v4492
        %v4617 = vunpack.c.l.b16 %v4493
        %v4618 = vunpack.c.l.b16 %v4494
        %v4619 = vunpack.c.h.b16 %v4494
        %v4620 = vunpack.c.l.b16 %v4495
        %v4621 = vunpack.c.l.b16 %v4496
        %v4622 = vunpack.c.h.b16 %v4496
        %v4623 = vunpack.c.l.b16 %v4497
        %v4624 = vunpack.c.l.b16 %v4498
        %v4625 = vunpack.c.h.b16 %v4498
        %v4626 = vunpack.c.l.b16 %v4499
        %v4627 = vunpack.c.l.b16 %v4500
        %v4628 = vunpack.c.h.b16 %v4500
        %v4629 = vunpack.c.l.b16 %v4501
        %v4630 = vpack.c.b16 %v4585, %v4582
        %v4631 = vpack.c.b16 %v4586, %v4583
        %v4632 = vpack.c.b16 %v4587, %v4584
        %v4633 = vpack.c.b16 %v4591, %v4588
        %v4634 = vpack.c.b16 %v4592, %v4589
        %v4635 = vpack.c.b16 %v4593, %v4590
        %v4636 = vpack.c.b16 %v4597, %v4594
        %v4637 = vpack.c.b16 %v4598, %v4595
        %v4638 = vpack.c.b16 %v4599, %v4596
        %v4639 = vpack.c.b16 %v4603, %v4600
        %v4640 = vpack.c.b16 %v4604, %v4601
        %v4641 = vpack.c.b16 %v4605, %v4602
        %v4642 = vpack.c.b16 %v4609, %v4606
        %v4643 = vpack.c.b16 %v4610, %v4607
        %v4644 = vpack.c.b16 %v4611, %v4608
        %v4645 = vpack.c.b16 %v4615, %v4612
        %v4646 = vpack.c.b16 %v4616, %v4613
        %v4647 = vpack.c.b16 %v4617, %v4614
        %v4648 = vpack.c.b16 %v4621, %v4618
        %v4649 = vpack.c.b16 %v4622, %v4619
        %v4650 = vpack.c.b16 %v4623, %v4620
        %v4651 = vpack.c.b16 %v4627, %v4624
        %v4652 = vpack.c.b16 %v4628, %v4625
        %v4653 = vpack.c.b16 %v4629, %v4626
        %4678 = vmatpush.bf16.msra.mxu0 %v4651
        %4679 = vmatpush.bf16.msra.mxu0 %v4648
        %4680 = vmatpush.bf16.msra.mxu0 %v4645
        %4681 = vmatpush.bf16.msra.mxu0 %v4642
        %4682 = vmatpush.bf16.msra.mxu0 %v4639
        %4683 = vmatpush.bf16.msra.mxu0 %v4636
        %4684 = vmatpush.bf16.msra.mxu0 %v4633
        %4685 = vmatpush.bf16.msra.mxu0 %v4630
        %4686 = vmatmul.bf16.gmra.mxu0 %v4534
        %v4687 = vpop.f32.mrf.mxu0
        %v4688 = vadd.f32 0.0, %v4687
        %v4689 = vpop.f32.mrf.mxu0
        %v4690 = vadd.f32 0.0, %v4689
        %4691 = vmatmul.bf16.gmra.mxu0 %v4535
        %v4692 = vpop.f32.mrf.mxu0
        %v4693 = vadd.f32 0.0, %v4692
        %v4694 = vpop.f32.mrf.mxu0
        %v4695 = vadd.f32 0.0, %v4694
        %4696 = vmatmul.bf16.gmra.mxu0 %v4536
        %v4697 = vpop.f32.mrf.mxu0
        %v4698 = vadd.f32 0.0, %v4697
        %v4699 = vpop.f32.mrf.mxu0
        %v4700 = vadd.f32 0.0, %v4699
        %4701 = vmatmul.bf16.gmra.mxu0 %v4537
        %v4702 = vpop.f32.mrf.mxu0
        %v4703 = vadd.f32 0.0, %v4702
        %v4704 = vpop.f32.mrf.mxu0
        %v4705 = vadd.f32 0.0, %v4704
        %4706 = vmatmul.bf16.gmra.mxu0 %v4538
        %v4707 = vpop.f32.mrf.mxu0
        %v4708 = vadd.f32 0.0, %v4707
        %v4709 = vpop.f32.mrf.mxu0
        %v4710 = vadd.f32 0.0, %v4709
        %4711 = vmatmul.bf16.gmra.mxu0 %v4539
        %v4712 = vpop.f32.mrf.mxu0
        %v4713 = vadd.f32 0.0, %v4712
        %v4714 = vpop.f32.mrf.mxu0
        %v4715 = vadd.f32 0.0, %v4714
        %4716 = vmatmul.bf16.gmra.mxu0 %v4540
        %v4717 = vpop.f32.mrf.mxu0
        %v4718 = vadd.f32 0.0, %v4717
        %v4719 = vpop.f32.mrf.mxu0
        %v4720 = vadd.f32 0.0, %v4719
        %4721 = vmatmul.bf16.gmra.mxu0 %v4541
        %v4722 = vpop.f32.mrf.mxu0
        %v4723 = vadd.f32 0.0, %v4722
        %v4724 = vpop.f32.mrf.mxu0
        %v4725 = vadd.f32 0.0, %v4724
        %4726 = vdwg.mxu0
        %4727 = vmatpush.bf16.msra.mxu0 %v4652
        %4728 = vmatpush.bf16.msra.mxu0 %v4649
        %4729 = vmatpush.bf16.msra.mxu0 %v4646
        %4730 = vmatpush.bf16.msra.mxu0 %v4643
        %4731 = vmatpush.bf16.msra.mxu0 %v4640
        %4732 = vmatpush.bf16.msra.mxu0 %v4637
        %4733 = vmatpush.bf16.msra.mxu0 %v4634
        %4734 = vmatpush.bf16.msra.mxu0 %v4631
        %4735 = vmatmul.bf16.gmra.mxu0 %v4534
        %v4736 = vpop.f32.mrf.mxu0
        %v4737 = vadd.f32 0.0, %v4736
        %v4738 = vpop.f32.mrf.mxu0
        %v4739 = vadd.f32 0.0, %v4738
        %4740 = vmatmul.bf16.gmra.mxu0 %v4535
        %v4741 = vpop.f32.mrf.mxu0
        %v4742 = vadd.f32 0.0, %v4741
        %v4743 = vpop.f32.mrf.mxu0
        %v4744 = vadd.f32 0.0, %v4743
        %4745 = vmatmul.bf16.gmra.mxu0 %v4536
        %v4746 = vpop.f32.mrf.mxu0
        %v4747 = vadd.f32 0.0, %v4746
        %v4748 = vpop.f32.mrf.mxu0
        %v4749 = vadd.f32 0.0, %v4748
        %4750 = vmatmul.bf16.gmra.mxu0 %v4537
        %v4751 = vpop.f32.mrf.mxu0
        %v4752 = vadd.f32 0.0, %v4751
        %v4753 = vpop.f32.mrf.mxu0
        %v4754 = vadd.f32 0.0, %v4753
        %4755 = vmatmul.bf16.gmra.mxu0 %v4538
        %v4756 = vpop.f32.mrf.mxu0
        %v4757 = vadd.f32 0.0, %v4756
        %v4758 = vpop.f32.mrf.mxu0
        %v4759 = vadd.f32 0.0, %v4758
        %4760 = vmatmul.bf16.gmra.mxu0 %v4539
        %v4761 = vpop.f32.mrf.mxu0
        %v4762 = vadd.f32 0.0, %v4761
        %v4763 = vpop.f32.mrf.mxu0
        %v4764 = vadd.f32 0.0, %v4763
        %4765 = vmatmul.bf16.gmra.mxu0 %v4540
        %v4766 = vpop.f32.mrf.mxu0
        %v4767 = vadd.f32 0.0, %v4766
        %v4768 = vpop.f32.mrf.mxu0
        %v4769 = vadd.f32 0.0, %v4768
        %4770 = vmatmul.bf16.gmra.mxu0 %v4541
        %v4771 = vpop.f32.mrf.mxu0
        %v4772 = vadd.f32 0.0, %v4771
        %v4773 = vpop.f32.mrf.mxu0
        %v4774 = vadd.f32 0.0, %v4773
        %4775 = vdwg.mxu0
        %4776 = vmatpush.bf16.msra.mxu0 %v4653
        %4777 = vmatpush.bf16.msra.mxu0 %v4650
        %4778 = vmatpush.bf16.msra.mxu0 %v4647
        %4779 = vmatpush.bf16.msra.mxu0 %v4644
        %4780 = vmatpush.bf16.msra.mxu0 %v4641
        %4781 = vmatpush.bf16.msra.mxu0 %v4638
        %4782 = vmatpush.bf16.msra.mxu0 %v4635
        %4783 = vmatpush.bf16.msra.mxu0 %v4632
        %4784 = vmatmul.bf16.gmra.mxu0 %v4534
        %v4785 = vpop.f32.mrf.mxu0
        %v4786 = vadd.f32 0.0, %v4785
        %v4787 = vpop.f32.mrf.mxu0
        %v4788 = vadd.f32 0.0, %v4787
        %4789 = vmatmul.bf16.gmra.mxu0 %v4535
        %v4790 = vpop.f32.mrf.mxu0
        %v4791 = vadd.f32 0.0, %v4790
        %v4792 = vpop.f32.mrf.mxu0
        %v4793 = vadd.f32 0.0, %v4792
        %4794 = vmatmul.bf16.gmra.mxu0 %v4536
        %v4795 = vpop.f32.mrf.mxu0
        %v4796 = vadd.f32 0.0, %v4795
        %v4797 = vpop.f32.mrf.mxu0
        %v4798 = vadd.f32 0.0, %v4797
        %4799 = vmatmul.bf16.gmra.mxu0 %v4537
        %v4800 = vpop.f32.mrf.mxu0
        %v4801 = vadd.f32 0.0, %v4800
        %v4802 = vpop.f32.mrf.mxu0
        %v4803 = vadd.f32 0.0, %v4802
        %4804 = vmatmul.bf16.gmra.mxu0 %v4538
        %v4805 = vpop.f32.mrf.mxu0
        %v4806 = vadd.f32 0.0, %v4805
        %v4807 = vpop.f32.mrf.mxu0
        %v4808 = vadd.f32 0.0, %v4807
        %4809 = vmatmul.bf16.gmra.mxu0 %v4539
        %v4810 = vpop.f32.mrf.mxu0
        %v4811 = vadd.f32 0.0, %v4810
        %v4812 = vpop.f32.mrf.mxu0
        %v4813 = vadd.f32 0.0, %v4812
        %4814 = vmatmul.bf16.gmra.mxu0 %v4540
        %v4815 = vpop.f32.mrf.mxu0
        %v4816 = vadd.f32 0.0, %v4815
        %v4817 = vpop.f32.mrf.mxu0
        %v4818 = vadd.f32 0.0, %v4817
        %4819 = vmatmul.bf16.gmra.mxu0 %v4541
        %v4820 = vpop.f32.mrf.mxu0
        %v4821 = vadd.f32 0.0, %v4820
        %v4822 = vpop.f32.mrf.mxu0
        %v4823 = vadd.f32 0.0, %v4822
        %4824 = vdwg.mxu0
        %v4825 = vadd.f32 %v4317, %v4688
        %v4826 = vadd.f32 %v4366, %v4737
        %v4827 = vadd.f32 %v4415, %v4786
        %v4828 = vadd.f32 %v4319, %v4690
        %v4829 = vadd.f32 %v4368, %v4739
        %v4830 = vadd.f32 %v4417, %v4788
        %v4831 = vadd.f32 %v4322, %v4693
        %v4832 = vadd.f32 %v4371, %v4742
        %v4833 = vadd.f32 %v4420, %v4791
        %v4834 = vadd.f32 %v4324, %v4695
        %v4835 = vadd.f32 %v4373, %v4744
        %v4836 = vadd.f32 %v4422, %v4793
        %v4837 = vadd.f32 %v4327, %v4698
        %v4838 = vadd.f32 %v4376, %v4747
        %v4839 = vadd.f32 %v4425, %v4796
        %v4840 = vadd.f32 %v4329, %v4700
        %v4841 = vadd.f32 %v4378, %v4749
        %v4842 = vadd.f32 %v4427, %v4798
        %v4843 = vadd.f32 %v4332, %v4703
        %v4844 = vadd.f32 %v4381, %v4752
        %v4845 = vadd.f32 %v4430, %v4801
        %v4846 = vadd.f32 %v4334, %v4705
        %v4847 = vadd.f32 %v4383, %v4754
        %v4848 = vadd.f32 %v4432, %v4803
        %v4849 = vadd.f32 %v4337, %v4708
        %v4850 = vadd.f32 %v4386, %v4757
        %v4851 = vadd.f32 %v4435, %v4806
        %v4852 = vadd.f32 %v4339, %v4710
        %v4853 = vadd.f32 %v4388, %v4759
        %v4854 = vadd.f32 %v4437, %v4808
        %v4855 = vadd.f32 %v4342, %v4713
        %v4856 = vadd.f32 %v4391, %v4762
        %v4857 = vadd.f32 %v4440, %v4811
        %v4858 = vadd.f32 %v4344, %v4715
        %v4859 = vadd.f32 %v4393, %v4764
        %v4860 = vadd.f32 %v4442, %v4813
        %v4861 = vadd.f32 %v4347, %v4718
        %v4862 = vadd.f32 %v4396, %v4767
        %v4863 = vadd.f32 %v4445, %v4816
        %v4864 = vadd.f32 %v4349, %v4720
        %v4865 = vadd.f32 %v4398, %v4769
        %v4866 = vadd.f32 %v4447, %v4818
        %v4867 = vadd.f32 %v4352, %v4723
        %v4868 = vadd.f32 %v4401, %v4772
        %v4869 = vadd.f32 %v4450, %v4821
        %v4870 = vadd.f32 %v4354, %v4725
        %v4871 = vadd.f32 %v4403, %v4774
        %v4872 = vadd.f32 %v4452, %v4823
        %v4873 = vld [vmem:[%s20 + $0x6] sm:$0x7]
        %v4875 = vperm.slane %v4873, 0
        %v4876 = vperm.slane %v4873, 1
        %v4877 = vperm.slane %v4873, 2
        %v4881 = vadd.f32 %v4825, %v4875
        %v4882 = vadd.f32 %v4826, %v4876
        %v4883 = vadd.f32 %v4827, %v4877
        %v4884 = vadd.f32 %v4828, %v4875
        %v4885 = vadd.f32 %v4829, %v4876
        %v4886 = vadd.f32 %v4830, %v4877
        %v4887 = vadd.f32 %v4831, %v4875
        %v4888 = vadd.f32 %v4832, %v4876
        %v4889 = vadd.f32 %v4833, %v4877
        %v4890 = vadd.f32 %v4834, %v4875
        %v4891 = vadd.f32 %v4835, %v4876
        %v4892 = vadd.f32 %v4836, %v4877
        %v4893 = vadd.f32 %v4837, %v4875
        %v4894 = vadd.f32 %v4838, %v4876
        %v4895 = vadd.f32 %v4839, %v4877
        %v4896 = vadd.f32 %v4840, %v4875
        %v4897 = vadd.f32 %v4841, %v4876
        %v4898 = vadd.f32 %v4842, %v4877
        %v4899 = vadd.f32 %v4843, %v4875
        %v4900 = vadd.f32 %v4844, %v4876
        %v4901 = vadd.f32 %v4845, %v4877
        %v4902 = vadd.f32 %v4846, %v4875
        %v4903 = vadd.f32 %v4847, %v4876
        %v4904 = vadd.f32 %v4848, %v4877
        %v4905 = vadd.f32 %v4849, %v4875
        %v4906 = vadd.f32 %v4850, %v4876
        %v4907 = vadd.f32 %v4851, %v4877
        %v4908 = vadd.f32 %v4852, %v4875
        %v4909 = vadd.f32 %v4853, %v4876
        %v4910 = vadd.f32 %v4854, %v4877
        %v4911 = vadd.f32 %v4855, %v4875
        %v4912 = vadd.f32 %v4856, %v4876
        %v4913 = vadd.f32 %v4857, %v4877
        %v4914 = vadd.f32 %v4858, %v4875
        %v4915 = vadd.f32 %v4859, %v4876
        %v4916 = vadd.f32 %v4860, %v4877
        %v4917 = vadd.f32 %v4861, %v4875
        %v4918 = vadd.f32 %v4862, %v4876
        %v4919 = vadd.f32 %v4863, %v4877
        %v4920 = vadd.f32 %v4864, %v4875
        %v4921 = vadd.f32 %v4865, %v4876
        %v4922 = vadd.f32 %v4866, %v4877
        %v4923 = vadd.f32 %v4867, %v4875
        %v4924 = vadd.f32 %v4868, %v4876
        %v4925 = vadd.f32 %v4869, %v4877
        %v4926 = vadd.f32 %v4870, %v4875
        %v4927 = vadd.f32 %v4871, %v4876
        %v4928 = vadd.f32 %v4872, %v4877
        %v4929 = vmax.f32 %v4881, 0.0
        %v4930 = vmax.f32 %v4882, 0.0
        %v4931 = vmax.f32 %v4883, 0.0
        %v4932 = vmax.f32 %v4884, 0.0
        %v4933 = vmax.f32 %v4885, 0.0
        %v4934 = vmax.f32 %v4886, 0.0
        %v4935 = vmax.f32 %v4887, 0.0
        %v4936 = vmax.f32 %v4888, 0.0
        %v4937 = vmax.f32 %v4889, 0.0
        %v4938 = vmax.f32 %v4890, 0.0
        %v4939 = vmax.f32 %v4891, 0.0
        %v4940 = vmax.f32 %v4892, 0.0
        %v4941 = vmax.f32 %v4893, 0.0
        %v4942 = vmax.f32 %v4894, 0.0
        %v4943 = vmax.f32 %v4895, 0.0
        %v4944 = vmax.f32 %v4896, 0.0
        %v4945 = vmax.f32 %v4897, 0.0
        %v4946 = vmax.f32 %v4898, 0.0
        %v4947 = vmax.f32 %v4899, 0.0
        %v4948 = vmax.f32 %v4900, 0.0
        %v4949 = vmax.f32 %v4901, 0.0
        %v4950 = vmax.f32 %v4902, 0.0
        %v4951 = vmax.f32 %v4903, 0.0
        %v4952 = vmax.f32 %v4904, 0.0
        %v4953 = vmax.f32 %v4905, 0.0
        %v4954 = vmax.f32 %v4906, 0.0
        %v4955 = vmax.f32 %v4907, 0.0
        %v4956 = vmax.f32 %v4908, 0.0
        %v4957 = vmax.f32 %v4909, 0.0
        %v4958 = vmax.f32 %v4910, 0.0
        %v4959 = vmax.f32 %v4911, 0.0
        %v4960 = vmax.f32 %v4912, 0.0
        %v4961 = vmax.f32 %v4913, 0.0
        %v4962 = vmax.f32 %v4914, 0.0
        %v4963 = vmax.f32 %v4915, 0.0
        %v4964 = vmax.f32 %v4916, 0.0
        %v4965 = vmax.f32 %v4917, 0.0
        %v4966 = vmax.f32 %v4918, 0.0
        %v4967 = vmax.f32 %v4919, 0.0
        %v4968 = vmax.f32 %v4920, 0.0
        %v4969 = vmax.f32 %v4921, 0.0
        %v4970 = vmax.f32 %v4922, 0.0
        %v4971 = vmax.f32 %v4923, 0.0
        %v4972 = vmax.f32 %v4924, 0.0
        %v4973 = vmax.f32 %v4925, 0.0
        %v4974 = vmax.f32 %v4926, 0.0
        %v4975 = vmax.f32 %v4927, 0.0
        %v4976 = vmax.f32 %v4928, 0.0
        %v4977 = vld [vmem:[#allocation25] sm:$0xff]
        %v4978 = vld [vmem:[#allocation25 + $0x8] sm:$0xff]
        %v4979 = vld [vmem:[#allocation25 + $0x10] sm:$0xff]
        %v4980 = vld [vmem:[#allocation25 + $0x18] sm:$0xff]
        %v4981 = vld [vmem:[#allocation25 + $0x20] sm:$0xff]
        %v4982 = vld [vmem:[#allocation25 + $0x28] sm:$0xff]
        %v4983 = vld [vmem:[#allocation25 + $0x30] sm:$0xff]
        %v4984 = vld [vmem:[#allocation25 + $0x38] sm:$0xff]
        %v4985 = vld [vmem:[#allocation25 + $0x40] sm:$0xff]
        %v4986 = vld [vmem:[#allocation25 + $0x48] sm:$0xff]
        %v4987 = vld [vmem:[#allocation25 + $0x50] sm:$0xff]
        %v4988 = vld [vmem:[#allocation25 + $0x58] sm:$0xff]
        %v4989 = vld [vmem:[#allocation25 + $0x60] sm:$0xff]
        %v4990 = vld [vmem:[#allocation25 + $0x68] sm:$0xff]
        %v4991 = vld [vmem:[#allocation25 + $0x70] sm:$0xff]
        %v4992 = vld [vmem:[#allocation25 + $0x78] sm:$0xff]
        %v4993 = vld [vmem:[#allocation25 + $0x80] sm:$0xff]
        %v4994 = vld [vmem:[#allocation25 + $0x88] sm:$0xff]
        %v4995 = vld [vmem:[#allocation25 + $0x90] sm:$0xff]
        %v4996 = vld [vmem:[#allocation25 + $0x98] sm:$0xff]
        %v4997 = vld [vmem:[#allocation25 + $0xa0] sm:$0xff]
        %v4998 = vld [vmem:[#allocation25 + $0xa8] sm:$0xff]
        %v4999 = vld [vmem:[#allocation25 + $0xb0] sm:$0xff]
        %v5000 = vld [vmem:[#allocation25 + $0xb8] sm:$0xff]
        %v5001 = vld [vmem:[#allocation25 + $0xc0] sm:$0xff]
        %v5002 = vld [vmem:[#allocation25 + $0xc8] sm:$0xff]
        %v5003 = vld [vmem:[#allocation25 + $0xd0] sm:$0xff]
        %v5004 = vld [vmem:[#allocation25 + $0xd8] sm:$0xff]
        %v5005 = vld [vmem:[#allocation25 + $0xe0] sm:$0xff]
        %v5006 = vld [vmem:[#allocation25 + $0xe8] sm:$0xff]
        %v5007 = vld [vmem:[#allocation25 + $0xf0] sm:$0xff]
        %v5008 = vld [vmem:[#allocation25 + $0xf8] sm:$0xff]
        %v5009 = vld [vmem:[#allocation25 + $0x100] sm:$0xff]
        %v5010 = vld [vmem:[#allocation25 + $0x108] sm:$0xff]
        %v5011 = vld [vmem:[#allocation25 + $0x110] sm:$0xff]
        %v5012 = vld [vmem:[#allocation25 + $0x118] sm:$0xff]
        %v5013 = vld [vmem:[#allocation25 + $0x120] sm:$0xff]
        %v5014 = vld [vmem:[#allocation25 + $0x128] sm:$0xff]
        %v5015 = vld [vmem:[#allocation25 + $0x130] sm:$0xff]
        %v5016 = vld [vmem:[#allocation25 + $0x138] sm:$0xff]
        %v5017 = vld [vmem:[#allocation25 + $0x140] sm:$0xff]
        %v5018 = vld [vmem:[#allocation25 + $0x148] sm:$0xff]
        %v5019 = vld [vmem:[#allocation25 + $0x150] sm:$0xff]
        %v5020 = vld [vmem:[#allocation25 + $0x158] sm:$0xff]
        %v5021 = vld [vmem:[#allocation25 + $0x160] sm:$0xff]
        %v5022 = vld [vmem:[#allocation25 + $0x168] sm:$0xff]
        %v5023 = vld [vmem:[#allocation25 + $0x170] sm:$0xff]
        %v5024 = vld [vmem:[#allocation25 + $0x178] sm:$0xff]
        %v5025 = vpack.c.bf16 %v4932, %v4929
        %v5026 = vpack.c.bf16 %v4933, %v4930
        %v5027 = vpack.c.bf16 %v4934, %v4931
        %v5028 = vpack.c.bf16 %v4938, %v4935
        %v5029 = vpack.c.bf16 %v4939, %v4936
        %v5030 = vpack.c.bf16 %v4940, %v4937
        %v5031 = vpack.c.bf16 %v4944, %v4941
        %v5032 = vpack.c.bf16 %v4945, %v4942
        %v5033 = vpack.c.bf16 %v4946, %v4943
        %v5034 = vpack.c.bf16 %v4950, %v4947
        %v5035 = vpack.c.bf16 %v4951, %v4948
        %v5036 = vpack.c.bf16 %v4952, %v4949
        %v5037 = vpack.c.bf16 %v4956, %v4953
        %v5038 = vpack.c.bf16 %v4957, %v4954
        %v5039 = vpack.c.bf16 %v4958, %v4955
        %v5040 = vpack.c.bf16 %v4962, %v4959
        %v5041 = vpack.c.bf16 %v4963, %v4960
        %v5042 = vpack.c.bf16 %v4964, %v4961
        %v5043 = vpack.c.bf16 %v4968, %v4965
        %v5044 = vpack.c.bf16 %v4969, %v4966
        %v5045 = vpack.c.bf16 %v4970, %v4967
        %v5046 = vpack.c.bf16 %v4974, %v4971
        %v5047 = vpack.c.bf16 %v4975, %v4972
        %v5048 = vpack.c.bf16 %v4976, %v4973
        %v5049 = vld [vmem:[%s20 + $0x9] sm:$0x3]
        %v5051 = vperm.slane %v5049, 0
        %v5052 = vperm.slane %v5049, 1
        %v5103 = vunpack.c.l.b16 %v4977
        %v5104 = vunpack.c.h.b16 %v4977
        %v5105 = vunpack.c.l.b16 %v4978
        %v5106 = vunpack.c.h.b16 %v4978
        %v5107 = vunpack.c.l.b16 %v4979
        %v5108 = vunpack.c.h.b16 %v4979
        %v5109 = vunpack.c.l.b16 %v4980
        %v5110 = vunpack.c.h.b16 %v4980
        %v5111 = vunpack.c.l.b16 %v4981
        %v5112 = vunpack.c.h.b16 %v4981
        %v5113 = vunpack.c.l.b16 %v4982
        %v5114 = vunpack.c.h.b16 %v4982
        %v5115 = vunpack.c.l.b16 %v4983
        %v5116 = vunpack.c.h.b16 %v4983
        %v5117 = vunpack.c.l.b16 %v4984
        %v5118 = vunpack.c.h.b16 %v4984
        %v5119 = vunpack.c.l.b16 %v4985
        %v5120 = vunpack.c.h.b16 %v4985
        %v5121 = vunpack.c.l.b16 %v4986
        %v5122 = vunpack.c.h.b16 %v4986
        %v5123 = vunpack.c.l.b16 %v4987
        %v5124 = vunpack.c.h.b16 %v4987
        %v5125 = vunpack.c.l.b16 %v4988
        %v5126 = vunpack.c.h.b16 %v4988
        %v5127 = vunpack.c.l.b16 %v4989
        %v5128 = vunpack.c.h.b16 %v4989
        %v5129 = vunpack.c.l.b16 %v4990
        %v5130 = vunpack.c.h.b16 %v4990
        %v5131 = vunpack.c.l.b16 %v4991
        %v5132 = vunpack.c.h.b16 %v4991
        %v5133 = vunpack.c.l.b16 %v4992
        %v5134 = vunpack.c.h.b16 %v4992
        %v5135 = vunpack.c.l.b16 %v4993
        %v5136 = vunpack.c.h.b16 %v4993
        %v5137 = vunpack.c.l.b16 %v4994
        %v5138 = vunpack.c.h.b16 %v4994
        %v5139 = vunpack.c.l.b16 %v4995
        %v5140 = vunpack.c.h.b16 %v4995
        %v5141 = vunpack.c.l.b16 %v4996
        %v5142 = vunpack.c.h.b16 %v4996
        %v5143 = vunpack.c.l.b16 %v4997
        %v5144 = vunpack.c.h.b16 %v4997
        %v5145 = vunpack.c.l.b16 %v4998
        %v5146 = vunpack.c.h.b16 %v4998
        %v5147 = vunpack.c.l.b16 %v4999
        %v5148 = vunpack.c.h.b16 %v4999
        %v5149 = vunpack.c.l.b16 %v5000
        %v5150 = vunpack.c.h.b16 %v5000
        %v5151 = vunpack.c.l.b16 %v5001
        %v5152 = vunpack.c.h.b16 %v5001
        %v5153 = vunpack.c.l.b16 %v5002
        %v5154 = vunpack.c.h.b16 %v5002
        %v5155 = vunpack.c.l.b16 %v5003
        %v5156 = vunpack.c.h.b16 %v5003
        %v5157 = vunpack.c.l.b16 %v5004
        %v5158 = vunpack.c.h.b16 %v5004
        %v5159 = vunpack.c.l.b16 %v5005
        %v5160 = vunpack.c.h.b16 %v5005
        %v5161 = vunpack.c.l.b16 %v5006
        %v5162 = vunpack.c.h.b16 %v5006
        %v5163 = vunpack.c.l.b16 %v5007
        %v5164 = vunpack.c.h.b16 %v5007
        %v5165 = vunpack.c.l.b16 %v5008
        %v5166 = vunpack.c.h.b16 %v5008
        %v5167 = vunpack.c.l.b16 %v5009
        %v5168 = vunpack.c.h.b16 %v5009
        %v5169 = vunpack.c.l.b16 %v5010
        %v5170 = vunpack.c.h.b16 %v5010
        %v5171 = vunpack.c.l.b16 %v5011
        %v5172 = vunpack.c.h.b16 %v5011
        %v5173 = vunpack.c.l.b16 %v5012
        %v5174 = vunpack.c.h.b16 %v5012
        %v5175 = vunpack.c.l.b16 %v5013
        %v5176 = vunpack.c.h.b16 %v5013
        %v5177 = vunpack.c.l.b16 %v5014
        %v5178 = vunpack.c.h.b16 %v5014
        %v5179 = vunpack.c.l.b16 %v5015
        %v5180 = vunpack.c.h.b16 %v5015
        %v5181 = vunpack.c.l.b16 %v5016
        %v5182 = vunpack.c.h.b16 %v5016
        %v5183 = vunpack.c.l.b16 %v5017
        %v5184 = vunpack.c.h.b16 %v5017
        %v5185 = vunpack.c.l.b16 %v5018
        %v5186 = vunpack.c.h.b16 %v5018
        %v5187 = vunpack.c.l.b16 %v5019
        %v5188 = vunpack.c.h.b16 %v5019
        %v5189 = vunpack.c.l.b16 %v5020
        %v5190 = vunpack.c.h.b16 %v5020
        %v5191 = vunpack.c.l.b16 %v5021
        %v5192 = vunpack.c.h.b16 %v5021
        %v5193 = vunpack.c.l.b16 %v5022
        %v5194 = vunpack.c.h.b16 %v5022
        %v5195 = vunpack.c.l.b16 %v5023
        %v5196 = vunpack.c.h.b16 %v5023
        %v5197 = vunpack.c.l.b16 %v5024
        %v5198 = vunpack.c.h.b16 %v5024
        %v5199 = vpack.c.b16 %v5105, %v5103
        %v5200 = vpack.c.b16 %v5106, %v5104
        %v5201 = vpack.c.b16 %v5109, %v5107
        %v5202 = vpack.c.b16 %v5110, %v5108
        %v5203 = vpack.c.b16 %v5113, %v5111
        %v5204 = vpack.c.b16 %v5114, %v5112
        %v5205 = vpack.c.b16 %v5117, %v5115
        %v5206 = vpack.c.b16 %v5118, %v5116
        %v5207 = vpack.c.b16 %v5121, %v5119
        %v5208 = vpack.c.b16 %v5122, %v5120
        %v5209 = vpack.c.b16 %v5125, %v5123
        %v5210 = vpack.c.b16 %v5126, %v5124
        %v5211 = vpack.c.b16 %v5129, %v5127
        %v5212 = vpack.c.b16 %v5130, %v5128
        %v5213 = vpack.c.b16 %v5133, %v5131
        %v5214 = vpack.c.b16 %v5134, %v5132
        %v5215 = vpack.c.b16 %v5137, %v5135
        %v5216 = vpack.c.b16 %v5138, %v5136
        %v5217 = vpack.c.b16 %v5141, %v5139
        %v5218 = vpack.c.b16 %v5142, %v5140
        %v5219 = vpack.c.b16 %v5145, %v5143
        %v5220 = vpack.c.b16 %v5146, %v5144
        %v5221 = vpack.c.b16 %v5149, %v5147
        %v5222 = vpack.c.b16 %v5150, %v5148
        %v5223 = vpack.c.b16 %v5153, %v5151
        %v5224 = vpack.c.b16 %v5154, %v5152
        %v5225 = vpack.c.b16 %v5157, %v5155
        %v5226 = vpack.c.b16 %v5158, %v5156
        %v5227 = vpack.c.b16 %v5161, %v5159
        %v5228 = vpack.c.b16 %v5162, %v5160
        %v5229 = vpack.c.b16 %v5165, %v5163
        %v5230 = vpack.c.b16 %v5166, %v5164
        %v5231 = vpack.c.b16 %v5169, %v5167
        %v5232 = vpack.c.b16 %v5170, %v5168
        %v5233 = vpack.c.b16 %v5173, %v5171
        %v5234 = vpack.c.b16 %v5174, %v5172
        %v5235 = vpack.c.b16 %v5177, %v5175
        %v5236 = vpack.c.b16 %v5178, %v5176
        %v5237 = vpack.c.b16 %v5181, %v5179
        %v5238 = vpack.c.b16 %v5182, %v5180
        %v5239 = vpack.c.b16 %v5185, %v5183
        %v5240 = vpack.c.b16 %v5186, %v5184
        %v5241 = vpack.c.b16 %v5189, %v5187
        %v5242 = vpack.c.b16 %v5190, %v5188
        %v5243 = vpack.c.b16 %v5193, %v5191
        %v5244 = vpack.c.b16 %v5194, %v5192
        %v5245 = vpack.c.b16 %v5197, %v5195
        %v5246 = vpack.c.b16 %v5198, %v5196
        %5295 = vmatpush.bf16.msra.mxu0 %v5213
        %5296 = vmatpush.bf16.msra.mxu0 %v5211
        %5297 = vmatpush.bf16.msra.mxu0 %v5209
        %5298 = vmatpush.bf16.msra.mxu0 %v5207
        %5299 = vmatpush.bf16.msra.mxu0 %v5205
        %5300 = vmatpush.bf16.msra.mxu0 %v5203
        %5301 = vmatpush.bf16.msra.mxu0 %v5201
        %5302 = vmatpush.bf16.msra.mxu0 %v5199
        %5303 = vmatmul.bf16.gmra.mxu0 %v5025
        %v5304 = vpop.f32.mrf.mxu0
        %v5305 = vadd.f32 %v5051, %v5304
        %v5306 = vpop.f32.mrf.mxu0
        %v5307 = vadd.f32 %v5051, %v5306
        %5308 = vmatmul.bf16.gmra.mxu0 %v5028
        %v5309 = vpop.f32.mrf.mxu0
        %v5310 = vadd.f32 %v5051, %v5309
        %v5311 = vpop.f32.mrf.mxu0
        %v5312 = vadd.f32 %v5051, %v5311
        %5313 = vmatmul.bf16.gmra.mxu0 %v5031
        %v5314 = vpop.f32.mrf.mxu0
        %v5315 = vadd.f32 %v5051, %v5314
        %v5316 = vpop.f32.mrf.mxu0
        %v5317 = vadd.f32 %v5051, %v5316
        %5318 = vmatmul.bf16.gmra.mxu0 %v5034
        %v5319 = vpop.f32.mrf.mxu0
        %v5320 = vadd.f32 %v5051, %v5319
        %v5321 = vpop.f32.mrf.mxu0
        %v5322 = vadd.f32 %v5051, %v5321
        %5323 = vmatmul.bf16.gmra.mxu0 %v5037
        %v5324 = vpop.f32.mrf.mxu0
        %v5325 = vadd.f32 %v5051, %v5324
        %v5326 = vpop.f32.mrf.mxu0
        %v5327 = vadd.f32 %v5051, %v5326
        %5328 = vmatmul.bf16.gmra.mxu0 %v5040
        %v5329 = vpop.f32.mrf.mxu0
        %v5330 = vadd.f32 %v5051, %v5329
        %v5331 = vpop.f32.mrf.mxu0
        %v5332 = vadd.f32 %v5051, %v5331
        %5333 = vmatmul.bf16.gmra.mxu0 %v5043
        %v5334 = vpop.f32.mrf.mxu0
        %v5335 = vadd.f32 %v5051, %v5334
        %v5336 = vpop.f32.mrf.mxu0
        %v5337 = vadd.f32 %v5051, %v5336
        %5338 = vmatmul.bf16.gmra.mxu0 %v5046
        %v5339 = vpop.f32.mrf.mxu0
        %v5340 = vadd.f32 %v5051, %v5339
        %v5341 = vpop.f32.mrf.mxu0
        %v5342 = vadd.f32 %v5051, %v5341
        %5343 = vdwg.mxu0
        %5344 = vmatpush.bf16.msra.mxu0 %v5229
        %5345 = vmatpush.bf16.msra.mxu0 %v5227
        %5346 = vmatpush.bf16.msra.mxu0 %v5225
        %5347 = vmatpush.bf16.msra.mxu0 %v5223
        %5348 = vmatpush.bf16.msra.mxu0 %v5221
        %5349 = vmatpush.bf16.msra.mxu0 %v5219
        %5350 = vmatpush.bf16.msra.mxu0 %v5217
        %5351 = vmatpush.bf16.msra.mxu0 %v5215
        %5352 = vmatmul.bf16.gmra.mxu0 %v5026
        %v5353 = vpop.f32.mrf.mxu0
        %v5354 = vadd.f32 %v5305, %v5353
        %v5355 = vpop.f32.mrf.mxu0
        %v5356 = vadd.f32 %v5307, %v5355
        %5357 = vmatmul.bf16.gmra.mxu0 %v5029
        %v5358 = vpop.f32.mrf.mxu0
        %v5359 = vadd.f32 %v5310, %v5358
        %v5360 = vpop.f32.mrf.mxu0
        %v5361 = vadd.f32 %v5312, %v5360
        %5362 = vmatmul.bf16.gmra.mxu0 %v5032
        %v5363 = vpop.f32.mrf.mxu0
        %v5364 = vadd.f32 %v5315, %v5363
        %v5365 = vpop.f32.mrf.mxu0
        %v5366 = vadd.f32 %v5317, %v5365
        %5367 = vmatmul.bf16.gmra.mxu0 %v5035
        %v5368 = vpop.f32.mrf.mxu0
        %v5369 = vadd.f32 %v5320, %v5368
        %v5370 = vpop.f32.mrf.mxu0
        %v5371 = vadd.f32 %v5322, %v5370
        %5372 = vmatmul.bf16.gmra.mxu0 %v5038
        %v5373 = vpop.f32.mrf.mxu0
        %v5374 = vadd.f32 %v5325, %v5373
        %v5375 = vpop.f32.mrf.mxu0
        %v5376 = vadd.f32 %v5327, %v5375
        %5377 = vmatmul.bf16.gmra.mxu0 %v5041
        %v5378 = vpop.f32.mrf.mxu0
        %v5379 = vadd.f32 %v5330, %v5378
        %v5380 = vpop.f32.mrf.mxu0
        %v5381 = vadd.f32 %v5332, %v5380
        %5382 = vmatmul.bf16.gmra.mxu0 %v5044
        %v5383 = vpop.f32.mrf.mxu0
        %v5384 = vadd.f32 %v5335, %v5383
        %v5385 = vpop.f32.mrf.mxu0
        %v5386 = vadd.f32 %v5337, %v5385
        %5387 = vmatmul.bf16.gmra.mxu0 %v5047
        %v5388 = vpop.f32.mrf.mxu0
        %v5389 = vadd.f32 %v5340, %v5388
        %v5390 = vpop.f32.mrf.mxu0
        %v5391 = vadd.f32 %v5342, %v5390
        %5392 = vdwg.mxu0
        %5393 = vmatpush.bf16.msra.mxu0 %v5245
        %5394 = vmatpush.bf16.msra.mxu0 %v5243
        %5395 = vmatpush.bf16.msra.mxu0 %v5241
        %5396 = vmatpush.bf16.msra.mxu0 %v5239
        %5397 = vmatpush.bf16.msra.mxu0 %v5237
        %5398 = vmatpush.bf16.msra.mxu0 %v5235
        %5399 = vmatpush.bf16.msra.mxu0 %v5233
        %5400 = vmatpush.bf16.msra.mxu0 %v5231
        %5401 = vmatmul.bf16.gmra.mxu0 %v5027
        %v5402 = vpop.f32.mrf.mxu0
        %v5403 = vadd.f32 %v5354, %v5402
        %v5404 = vpop.f32.mrf.mxu0
        %v5405 = vadd.f32 %v5356, %v5404
        %5406 = vmatmul.bf16.gmra.mxu0 %v5030
        %v5407 = vpop.f32.mrf.mxu0
        %v5408 = vadd.f32 %v5359, %v5407
        %v5409 = vpop.f32.mrf.mxu0
        %v5410 = vadd.f32 %v5361, %v5409
        %5411 = vmatmul.bf16.gmra.mxu0 %v5033
        %v5412 = vpop.f32.mrf.mxu0
        %v5413 = vadd.f32 %v5364, %v5412
        %v5414 = vpop.f32.mrf.mxu0
        %v5415 = vadd.f32 %v5366, %v5414
        %5416 = vmatmul.bf16.gmra.mxu0 %v5036
        %v5417 = vpop.f32.mrf.mxu0
        %v5418 = vadd.f32 %v5369, %v5417
        %v5419 = vpop.f32.mrf.mxu0
        %v5420 = vadd.f32 %v5371, %v5419
        %5421 = vmatmul.bf16.gmra.mxu0 %v5039
        %v5422 = vpop.f32.mrf.mxu0
        %v5423 = vadd.f32 %v5374, %v5422
        %v5424 = vpop.f32.mrf.mxu0
        %v5425 = vadd.f32 %v5376, %v5424
        %5426 = vmatmul.bf16.gmra.mxu0 %v5042
        %v5427 = vpop.f32.mrf.mxu0
        %v5428 = vadd.f32 %v5379, %v5427
        %v5429 = vpop.f32.mrf.mxu0
        %v5430 = vadd.f32 %v5381, %v5429
        %5431 = vmatmul.bf16.gmra.mxu0 %v5045
        %v5432 = vpop.f32.mrf.mxu0
        %v5433 = vadd.f32 %v5384, %v5432
        %v5434 = vpop.f32.mrf.mxu0
        %v5435 = vadd.f32 %v5386, %v5434
        %5436 = vmatmul.bf16.gmra.mxu0 %v5048
        %v5437 = vpop.f32.mrf.mxu0
        %v5438 = vadd.f32 %v5389, %v5437
        %v5439 = vpop.f32.mrf.mxu0
        %v5440 = vadd.f32 %v5391, %v5439
        %5441 = vdwg.mxu0
        %5442 = vmatpush.bf16.msra.mxu0 %v5214
        %5443 = vmatpush.bf16.msra.mxu0 %v5212
        %5444 = vmatpush.bf16.msra.mxu0 %v5210
        %5445 = vmatpush.bf16.msra.mxu0 %v5208
        %5446 = vmatpush.bf16.msra.mxu0 %v5206
        %5447 = vmatpush.bf16.msra.mxu0 %v5204
        %5448 = vmatpush.bf16.msra.mxu0 %v5202
        %5449 = vmatpush.bf16.msra.mxu0 %v5200
        %5450 = vmatmul.bf16.gmra.mxu0 %v5025
        %v5451 = vpop.f32.mrf.mxu0
        %v5452 = vadd.f32 %v5052, %v5451
        %v5453 = vpop.f32.mrf.mxu0
        %v5454 = vadd.f32 %v5052, %v5453
        %5455 = vmatmul.bf16.gmra.mxu0 %v5028
        %v5456 = vpop.f32.mrf.mxu0
        %v5457 = vadd.f32 %v5052, %v5456
        %v5458 = vpop.f32.mrf.mxu0
        %v5459 = vadd.f32 %v5052, %v5458
        %5460 = vmatmul.bf16.gmra.mxu0 %v5031
        %v5461 = vpop.f32.mrf.mxu0
        %v5462 = vadd.f32 %v5052, %v5461
        %v5463 = vpop.f32.mrf.mxu0
        %v5464 = vadd.f32 %v5052, %v5463
        %5465 = vmatmul.bf16.gmra.mxu0 %v5034
        %v5466 = vpop.f32.mrf.mxu0
        %v5467 = vadd.f32 %v5052, %v5466
        %v5468 = vpop.f32.mrf.mxu0
        %v5469 = vadd.f32 %v5052, %v5468
        %5470 = vmatmul.bf16.gmra.mxu0 %v5037
        %v5471 = vpop.f32.mrf.mxu0
        %v5472 = vadd.f32 %v5052, %v5471
        %v5473 = vpop.f32.mrf.mxu0
        %v5474 = vadd.f32 %v5052, %v5473
        %5475 = vmatmul.bf16.gmra.mxu0 %v5040
        %v5476 = vpop.f32.mrf.mxu0
        %v5477 = vadd.f32 %v5052, %v5476
        %v5478 = vpop.f32.mrf.mxu0
        %v5479 = vadd.f32 %v5052, %v5478
        %5480 = vmatmul.bf16.gmra.mxu0 %v5043
        %v5481 = vpop.f32.mrf.mxu0
        %v5482 = vadd.f32 %v5052, %v5481
        %v5483 = vpop.f32.mrf.mxu0
        %v5484 = vadd.f32 %v5052, %v5483
        %5485 = vmatmul.bf16.gmra.mxu0 %v5046
        %v5486 = vpop.f32.mrf.mxu0
        %v5487 = vadd.f32 %v5052, %v5486
        %v5488 = vpop.f32.mrf.mxu0
        %v5489 = vadd.f32 %v5052, %v5488
        %5490 = vdwg.mxu0
        %5491 = vmatpush.bf16.msra.mxu0 %v5230
        %5492 = vmatpush.bf16.msra.mxu0 %v5228
        %5493 = vmatpush.bf16.msra.mxu0 %v5226
        %5494 = vmatpush.bf16.msra.mxu0 %v5224
        %5495 = vmatpush.bf16.msra.mxu0 %v5222
        %5496 = vmatpush.bf16.msra.mxu0 %v5220
        %5497 = vmatpush.bf16.msra.mxu0 %v5218
        %5498 = vmatpush.bf16.msra.mxu0 %v5216
        %5499 = vmatmul.bf16.gmra.mxu0 %v5026
        %v5500 = vpop.f32.mrf.mxu0
        %v5501 = vadd.f32 %v5452, %v5500
        %v5502 = vpop.f32.mrf.mxu0
        %v5503 = vadd.f32 %v5454, %v5502
        %5504 = vmatmul.bf16.gmra.mxu0 %v5029
        %v5505 = vpop.f32.mrf.mxu0
        %v5506 = vadd.f32 %v5457, %v5505
        %v5507 = vpop.f32.mrf.mxu0
        %v5508 = vadd.f32 %v5459, %v5507
        %5509 = vmatmul.bf16.gmra.mxu0 %v5032
        %v5510 = vpop.f32.mrf.mxu0
        %v5511 = vadd.f32 %v5462, %v5510
        %v5512 = vpop.f32.mrf.mxu0
        %v5513 = vadd.f32 %v5464, %v5512
        %5514 = vmatmul.bf16.gmra.mxu0 %v5035
        %v5515 = vpop.f32.mrf.mxu0
        %v5516 = vadd.f32 %v5467, %v5515
        %v5517 = vpop.f32.mrf.mxu0
        %v5518 = vadd.f32 %v5469, %v5517
        %5519 = vmatmul.bf16.gmra.mxu0 %v5038
        %v5520 = vpop.f32.mrf.mxu0
        %v5521 = vadd.f32 %v5472, %v5520
        %v5522 = vpop.f32.mrf.mxu0
        %v5523 = vadd.f32 %v5474, %v5522
        %5524 = vmatmul.bf16.gmra.mxu0 %v5041
        %v5525 = vpop.f32.mrf.mxu0
        %v5526 = vadd.f32 %v5477, %v5525
        %v5527 = vpop.f32.mrf.mxu0
        %v5528 = vadd.f32 %v5479, %v5527
        %5529 = vmatmul.bf16.gmra.mxu0 %v5044
        %v5530 = vpop.f32.mrf.mxu0
        %v5531 = vadd.f32 %v5482, %v5530
        %v5532 = vpop.f32.mrf.mxu0
        %v5533 = vadd.f32 %v5484, %v5532
        %5534 = vmatmul.bf16.gmra.mxu0 %v5047
        %v5535 = vpop.f32.mrf.mxu0
        %v5536 = vadd.f32 %v5487, %v5535
        %v5537 = vpop.f32.mrf.mxu0
        %v5538 = vadd.f32 %v5489, %v5537
        %5539 = vdwg.mxu0
        %5540 = vmatpush.bf16.msra.mxu0 %v5246
        %5541 = vmatpush.bf16.msra.mxu0 %v5244
        %5542 = vmatpush.bf16.msra.mxu0 %v5242
        %5543 = vmatpush.bf16.msra.mxu0 %v5240
        %5544 = vmatpush.bf16.msra.mxu0 %v5238
        %5545 = vmatpush.bf16.msra.mxu0 %v5236
        %5546 = vmatpush.bf16.msra.mxu0 %v5234
        %5547 = vmatpush.bf16.msra.mxu0 %v5232
        %5548 = vmatmul.bf16.gmra.mxu0 %v5027
        %v5549 = vpop.f32.mrf.mxu0
        %v5550 = vadd.f32 %v5501, %v5549
        %v5551 = vpop.f32.mrf.mxu0
        %v5552 = vadd.f32 %v5503, %v5551
        %5553 = vmatmul.bf16.gmra.mxu0 %v5030
        %v5554 = vpop.f32.mrf.mxu0
        %v5555 = vadd.f32 %v5506, %v5554
        %v5556 = vpop.f32.mrf.mxu0
        %v5557 = vadd.f32 %v5508, %v5556
        %5558 = vmatmul.bf16.gmra.mxu0 %v5033
        %v5559 = vpop.f32.mrf.mxu0
        %v5560 = vadd.f32 %v5511, %v5559
        %v5561 = vpop.f32.mrf.mxu0
        %v5562 = vadd.f32 %v5513, %v5561
        %5563 = vmatmul.bf16.gmra.mxu0 %v5036
        %v5564 = vpop.f32.mrf.mxu0
        %v5565 = vadd.f32 %v5516, %v5564
        %v5566 = vpop.f32.mrf.mxu0
        %v5567 = vadd.f32 %v5518, %v5566
        %5568 = vmatmul.bf16.gmra.mxu0 %v5039
        %v5569 = vpop.f32.mrf.mxu0
        %v5570 = vadd.f32 %v5521, %v5569
        %v5571 = vpop.f32.mrf.mxu0
        %v5572 = vadd.f32 %v5523, %v5571
        %5573 = vmatmul.bf16.gmra.mxu0 %v5042
        %v5574 = vpop.f32.mrf.mxu0
        %v5575 = vadd.f32 %v5526, %v5574
        %v5576 = vpop.f32.mrf.mxu0
        %v5577 = vadd.f32 %v5528, %v5576
        %5578 = vmatmul.bf16.gmra.mxu0 %v5045
        %v5579 = vpop.f32.mrf.mxu0
        %v5580 = vadd.f32 %v5531, %v5579
        %v5581 = vpop.f32.mrf.mxu0
        %v5582 = vadd.f32 %v5533, %v5581
        %5583 = vmatmul.bf16.gmra.mxu0 %v5048
        %v5584 = vpop.f32.mrf.mxu0
        %v5585 = vadd.f32 %v5536, %v5584
        %v5586 = vpop.f32.mrf.mxu0
        %v5587 = vadd.f32 %v5538, %v5586
        %5588 = vdwg.mxu0
        %v5589 = vmax.f32 %v5403, 0.0
        %v5590 = vmax.f32 %v5550, 0.0
        %v5591 = vmax.f32 %v5405, 0.0
        %v5592 = vmax.f32 %v5552, 0.0
        %v5593 = vmax.f32 %v5408, 0.0
        %v5594 = vmax.f32 %v5555, 0.0
        %v5595 = vmax.f32 %v5410, 0.0
        %v5596 = vmax.f32 %v5557, 0.0
        %v5597 = vmax.f32 %v5413, 0.0
        %v5598 = vmax.f32 %v5560, 0.0
        %v5599 = vmax.f32 %v5415, 0.0
        %v5600 = vmax.f32 %v5562, 0.0
        %v5601 = vmax.f32 %v5418, 0.0
        %v5602 = vmax.f32 %v5565, 0.0
        %v5603 = vmax.f32 %v5420, 0.0
        %v5604 = vmax.f32 %v5567, 0.0
        %v5605 = vmax.f32 %v5423, 0.0
        %v5606 = vmax.f32 %v5570, 0.0
        %v5607 = vmax.f32 %v5425, 0.0
        %v5608 = vmax.f32 %v5572, 0.0
        %v5609 = vmax.f32 %v5428, 0.0
        %v5610 = vmax.f32 %v5575, 0.0
        %v5611 = vmax.f32 %v5430, 0.0
        %v5612 = vmax.f32 %v5577, 0.0
        %v5613 = vmax.f32 %v5433, 0.0
        %v5614 = vmax.f32 %v5580, 0.0
        %v5615 = vmax.f32 %v5435, 0.0
        %v5616 = vmax.f32 %v5582, 0.0
        %v5617 = vmax.f32 %v5438, 0.0
        %v5618 = vmax.f32 %v5585, 0.0
        %v5619 = vmax.f32 %v5440, 0.0
        %v5620 = vmax.f32 %v5587, 0.0
        %v5621 = vld [vmem:[#allocation26] sm:$0xf]
        %v5622 = vld [vmem:[#allocation26 + $0x4] sm:$0xf]
        %v5623 = vld [vmem:[#allocation26 + $0x8] sm:$0xf]
        %v5624 = vld [vmem:[#allocation26 + $0xc] sm:$0xf]
        %v5625 = vld [vmem:[#allocation26 + $0x10] sm:$0xf]
        %v5626 = vld [vmem:[#allocation26 + $0x14] sm:$0xf]
        %v5627 = vld [vmem:[#allocation26 + $0x18] sm:$0xf]
        %v5628 = vld [vmem:[#allocation26 + $0x1c] sm:$0xf]
        %v5629 = vld [vmem:[#allocation26 + $0x20] sm:$0xf]
        %v5630 = vld [vmem:[#allocation26 + $0x24] sm:$0xf]
        %v5631 = vld [vmem:[#allocation26 + $0x28] sm:$0xf]
        %v5632 = vld [vmem:[#allocation26 + $0x2c] sm:$0xf]
        %v5633 = vld [vmem:[#allocation26 + $0x30] sm:$0xf]
        %v5634 = vld [vmem:[#allocation26 + $0x34] sm:$0xf]
        %v5635 = vld [vmem:[#allocation26 + $0x38] sm:$0xf]
        %v5636 = vld [vmem:[#allocation26 + $0x3c] sm:$0xf]
        %v5637 = vld [vmem:[#allocation26 + $0x40] sm:$0xf]
        %v5638 = vld [vmem:[#allocation26 + $0x44] sm:$0xf]
        %v5639 = vld [vmem:[#allocation26 + $0x48] sm:$0xf]
        %v5640 = vld [vmem:[#allocation26 + $0x4c] sm:$0xf]
        %v5641 = vld [vmem:[#allocation26 + $0x50] sm:$0xf]
        %v5642 = vld [vmem:[#allocation26 + $0x54] sm:$0xf]
        %v5643 = vld [vmem:[#allocation26 + $0x58] sm:$0xf]
        %v5644 = vld [vmem:[#allocation26 + $0x5c] sm:$0xf]
        %v5645 = vld [vmem:[#allocation26 + $0x60] sm:$0xf]
        %v5646 = vld [vmem:[#allocation26 + $0x64] sm:$0xf]
        %v5647 = vld [vmem:[#allocation26 + $0x68] sm:$0xf]
        %v5648 = vld [vmem:[#allocation26 + $0x6c] sm:$0xf]
        %v5649 = vld [vmem:[#allocation26 + $0x70] sm:$0xf]
        %v5650 = vld [vmem:[#allocation26 + $0x74] sm:$0xf]
        %v5651 = vld [vmem:[#allocation26 + $0x78] sm:$0xf]
        %v5652 = vld [vmem:[#allocation26 + $0x7c] sm:$0xf]
        %v5653 = vpack.c.bf16 %v5591, %v5589
        %v5654 = vpack.c.bf16 %v5592, %v5590
        %v5655 = vpack.c.bf16 %v5595, %v5593
        %v5656 = vpack.c.bf16 %v5596, %v5594
        %v5657 = vpack.c.bf16 %v5599, %v5597
        %v5658 = vpack.c.bf16 %v5600, %v5598
        %v5659 = vpack.c.bf16 %v5603, %v5601
        %v5660 = vpack.c.bf16 %v5604, %v5602
        %v5661 = vpack.c.bf16 %v5607, %v5605
        %v5662 = vpack.c.bf16 %v5608, %v5606
        %v5663 = vpack.c.bf16 %v5611, %v5609
        %v5664 = vpack.c.bf16 %v5612, %v5610
        %v5665 = vpack.c.bf16 %v5615, %v5613
        %v5666 = vpack.c.bf16 %v5616, %v5614
        %v5667 = vpack.c.bf16 %v5619, %v5617
        %v5668 = vpack.c.bf16 %v5620, %v5618
        %v5669 = vld [vmem:[%s20 + $0xb] sm:$0x1]
        %v5671 = vperm.slane %v5669, 0
        %v5705 = vunpack.c.l.b16 %v5621
        %v5706 = vunpack.c.l.b16 %v5622
        %v5707 = vunpack.c.l.b16 %v5623
        %v5708 = vunpack.c.l.b16 %v5624
        %v5709 = vunpack.c.l.b16 %v5625
        %v5710 = vunpack.c.l.b16 %v5626
        %v5711 = vunpack.c.l.b16 %v5627
        %v5712 = vunpack.c.l.b16 %v5628
        %v5713 = vunpack.c.l.b16 %v5629
        %v5714 = vunpack.c.l.b16 %v5630
        %v5715 = vunpack.c.l.b16 %v5631
        %v5716 = vunpack.c.l.b16 %v5632
        %v5717 = vunpack.c.l.b16 %v5633
        %v5718 = vunpack.c.l.b16 %v5634
        %v5719 = vunpack.c.l.b16 %v5635
        %v5720 = vunpack.c.l.b16 %v5636
        %v5721 = vunpack.c.l.b16 %v5637
        %v5722 = vunpack.c.l.b16 %v5638
        %v5723 = vunpack.c.l.b16 %v5639
        %v5724 = vunpack.c.l.b16 %v5640
        %v5725 = vunpack.c.l.b16 %v5641
        %v5726 = vunpack.c.l.b16 %v5642
        %v5727 = vunpack.c.l.b16 %v5643
        %v5728 = vunpack.c.l.b16 %v5644
        %v5729 = vunpack.c.l.b16 %v5645
        %v5730 = vunpack.c.l.b16 %v5646
        %v5731 = vunpack.c.l.b16 %v5647
        %v5732 = vunpack.c.l.b16 %v5648
        %v5733 = vunpack.c.l.b16 %v5649
        %v5734 = vunpack.c.l.b16 %v5650
        %v5735 = vunpack.c.l.b16 %v5651
        %v5736 = vunpack.c.l.b16 %v5652
        %v5737 = vpack.c.b16 %v5706, %v5705
        %v5738 = vpack.c.b16 %v5708, %v5707
        %v5739 = vpack.c.b16 %v5710, %v5709
        %v5740 = vpack.c.b16 %v5712, %v5711
        %v5741 = vpack.c.b16 %v5714, %v5713
        %v5742 = vpack.c.b16 %v5716, %v5715
        %v5743 = vpack.c.b16 %v5718, %v5717
        %v5744 = vpack.c.b16 %v5720, %v5719
        %v5745 = vpack.c.b16 %v5722, %v5721
        %v5746 = vpack.c.b16 %v5724, %v5723
        %v5747 = vpack.c.b16 %v5726, %v5725
        %v5748 = vpack.c.b16 %v5728, %v5727
        %v5749 = vpack.c.b16 %v5730, %v5729
        %v5750 = vpack.c.b16 %v5732, %v5731
        %v5751 = vpack.c.b16 %v5734, %v5733
        %v5752 = vpack.c.b16 %v5736, %v5735
        %5769 = vmatpush.bf16.msra.mxu0 %v5744
        %5770 = vmatpush.bf16.msra.mxu0 %v5743
        %5771 = vmatpush.bf16.msra.mxu0 %v5742
        %5772 = vmatpush.bf16.msra.mxu0 %v5741
        %5773 = vmatpush.bf16.msra.mxu0 %v5740
        %5774 = vmatpush.bf16.msra.mxu0 %v5739
        %5775 = vmatpush.bf16.msra.mxu0 %v5738
        %5776 = vmatpush.bf16.msra.mxu0 %v5737
        %5777 = vmatmul.bf16.gmra.mxu0 %v5653
        %v5778 = vpop.f32.mrf.mxu0
        %v5779 = vadd.f32 %v5671, %v5778
        %v5780 = vpop.f32.mrf.mxu0
        %v5781 = vadd.f32 %v5671, %v5780
        %5782 = vmatmul.bf16.gmra.mxu0 %v5655
        %v5783 = vpop.f32.mrf.mxu0
        %v5784 = vadd.f32 %v5671, %v5783
        %v5785 = vpop.f32.mrf.mxu0
        %v5786 = vadd.f32 %v5671, %v5785
        %5787 = vmatmul.bf16.gmra.mxu0 %v5657
        %v5788 = vpop.f32.mrf.mxu0
        %v5789 = vadd.f32 %v5671, %v5788
        %v5790 = vpop.f32.mrf.mxu0
        %v5791 = vadd.f32 %v5671, %v5790
        %5792 = vmatmul.bf16.gmra.mxu0 %v5659
        %v5793 = vpop.f32.mrf.mxu0
        %v5794 = vadd.f32 %v5671, %v5793
        %v5795 = vpop.f32.mrf.mxu0
        %v5796 = vadd.f32 %v5671, %v5795
        %5797 = vmatmul.bf16.gmra.mxu0 %v5661
        %v5798 = vpop.f32.mrf.mxu0
        %v5799 = vadd.f32 %v5671, %v5798
        %v5800 = vpop.f32.mrf.mxu0
        %v5801 = vadd.f32 %v5671, %v5800
        %5802 = vmatmul.bf16.gmra.mxu0 %v5663
        %v5803 = vpop.f32.mrf.mxu0
        %v5804 = vadd.f32 %v5671, %v5803
        %v5805 = vpop.f32.mrf.mxu0
        %v5806 = vadd.f32 %v5671, %v5805
        %5807 = vmatmul.bf16.gmra.mxu0 %v5665
        %v5808 = vpop.f32.mrf.mxu0
        %v5809 = vadd.f32 %v5671, %v5808
        %v5810 = vpop.f32.mrf.mxu0
        %v5811 = vadd.f32 %v5671, %v5810
        %5812 = vmatmul.bf16.gmra.mxu0 %v5667
        %v5813 = vpop.f32.mrf.mxu0
        %v5814 = vadd.f32 %v5671, %v5813
        %v5815 = vpop.f32.mrf.mxu0
        %v5816 = vadd.f32 %v5671, %v5815
        %5817 = vdwg.mxu0
        %5818 = vmatpush.bf16.msra.mxu0 %v5752
        %5819 = vmatpush.bf16.msra.mxu0 %v5751
        %5820 = vmatpush.bf16.msra.mxu0 %v5750
        %5821 = vmatpush.bf16.msra.mxu0 %v5749
        %5822 = vmatpush.bf16.msra.mxu0 %v5748
        %5823 = vmatpush.bf16.msra.mxu0 %v5747
        %5824 = vmatpush.bf16.msra.mxu0 %v5746
        %5825 = vmatpush.bf16.msra.mxu0 %v5745
        %5826 = vmatmul.bf16.gmra.mxu0 %v5654
        %v5827 = vpop.f32.mrf.mxu0
        %v5828 = vadd.f32 %v5779, %v5827
        %v5829 = vpop.f32.mrf.mxu0
        %v5830 = vadd.f32 %v5781, %v5829
        %5831 = vmatmul.bf16.gmra.mxu0 %v5656
        %v5832 = vpop.f32.mrf.mxu0
        %v5833 = vadd.f32 %v5784, %v5832
        %v5834 = vpop.f32.mrf.mxu0
        %v5835 = vadd.f32 %v5786, %v5834
        %5836 = vmatmul.bf16.gmra.mxu0 %v5658
        %v5837 = vpop.f32.mrf.mxu0
        %v5838 = vadd.f32 %v5789, %v5837
        %v5839 = vpop.f32.mrf.mxu0
        %v5840 = vadd.f32 %v5791, %v5839
        %5841 = vmatmul.bf16.gmra.mxu0 %v5660
        %v5842 = vpop.f32.mrf.mxu0
        %v5843 = vadd.f32 %v5794, %v5842
        %v5844 = vpop.f32.mrf.mxu0
        %v5845 = vadd.f32 %v5796, %v5844
        %5846 = vmatmul.bf16.gmra.mxu0 %v5662
        %v5847 = vpop.f32.mrf.mxu0
        %v5848 = vadd.f32 %v5799, %v5847
        %v5849 = vpop.f32.mrf.mxu0
        %v5850 = vadd.f32 %v5801, %v5849
        %5851 = vmatmul.bf16.gmra.mxu0 %v5664
        %v5852 = vpop.f32.mrf.mxu0
        %v5853 = vadd.f32 %v5804, %v5852
        %v5854 = vpop.f32.mrf.mxu0
        %v5855 = vadd.f32 %v5806, %v5854
        %5856 = vmatmul.bf16.gmra.mxu0 %v5666
        %v5857 = vpop.f32.mrf.mxu0
        %v5858 = vadd.f32 %v5809, %v5857
        %v5859 = vpop.f32.mrf.mxu0
        %v5860 = vadd.f32 %v5811, %v5859
        %5861 = vmatmul.bf16.gmra.mxu0 %v5668
        %v5862 = vpop.f32.mrf.mxu0
        %v5863 = vadd.f32 %v5814, %v5862
        %v5864 = vpop.f32.mrf.mxu0
        %v5865 = vadd.f32 %v5816, %v5864
        %5866 = vdwg.mxu0
        %v5867 = vmax.f32 %v5828, 0.0
        %v5868 = vmax.f32 %v5830, 0.0
        %v5869 = vmax.f32 %v5833, 0.0
        %v5870 = vmax.f32 %v5835, 0.0
        %v5871 = vmax.f32 %v5838, 0.0
        %v5872 = vmax.f32 %v5840, 0.0
        %v5873 = vmax.f32 %v5843, 0.0
        %v5874 = vmax.f32 %v5845, 0.0
        %v5875 = vmax.f32 %v5848, 0.0
        %v5876 = vmax.f32 %v5850, 0.0
        %v5877 = vmax.f32 %v5853, 0.0
        %v5878 = vmax.f32 %v5855, 0.0
        %v5879 = vmax.f32 %v5858, 0.0
        %v5880 = vmax.f32 %v5860, 0.0
        %v5881 = vmax.f32 %v5863, 0.0
        %v5882 = vmax.f32 %v5865, 0.0
        %v5883 = vld [vmem:[#allocation28] sm:$0xf]
        %v5884 = vld [vmem:[#allocation28 + $0x4] sm:$0xf]
        %v5885 = vld [vmem:[#allocation28 + $0x8] sm:$0xf]
        %v5886 = vld [vmem:[#allocation28 + $0xc] sm:$0xf]
        %v5887 = vld [vmem:[#allocation28 + $0x10] sm:$0xf]
        %v5888 = vld [vmem:[#allocation28 + $0x14] sm:$0xf]
        %v5889 = vld [vmem:[#allocation28 + $0x18] sm:$0xf]
        %v5890 = vld [vmem:[#allocation28 + $0x1c] sm:$0xf]
        %v5891 = vld [vmem:[#allocation28 + $0x20] sm:$0xf]
        %v5892 = vld [vmem:[#allocation28 + $0x24] sm:$0xf]
        %v5893 = vld [vmem:[#allocation28 + $0x28] sm:$0xf]
        %v5894 = vld [vmem:[#allocation28 + $0x2c] sm:$0xf]
        %v5895 = vld [vmem:[#allocation28 + $0x30] sm:$0xf]
        %v5896 = vld [vmem:[#allocation28 + $0x34] sm:$0xf]
        %v5897 = vld [vmem:[#allocation28 + $0x38] sm:$0xf]
        %v5898 = vld [vmem:[#allocation28 + $0x3c] sm:$0xf]
        %v5899 = vpack.c.bf16 %v5868, %v5867
        %v5900 = vpack.c.bf16 %v5870, %v5869
        %v5901 = vpack.c.bf16 %v5872, %v5871
        %v5902 = vpack.c.bf16 %v5874, %v5873
        %v5903 = vpack.c.bf16 %v5876, %v5875
        %v5904 = vpack.c.bf16 %v5878, %v5877
        %v5905 = vpack.c.bf16 %v5880, %v5879
        %v5906 = vpack.c.bf16 %v5882, %v5881
        %v5907 = vld [vmem:[%s20 + $0xc] sm:$0x1]
        %v5909 = vperm.slane %v5907, 0
        %v5927 = vunpack.c.l.b16 %v5883
        %v5928 = vunpack.c.l.b16 %v5884
        %v5929 = vunpack.c.l.b16 %v5885
        %v5930 = vunpack.c.l.b16 %v5886
        %v5931 = vunpack.c.l.b16 %v5887
        %v5932 = vunpack.c.l.b16 %v5888
        %v5933 = vunpack.c.l.b16 %v5889
        %v5934 = vunpack.c.l.b16 %v5890
        %v5935 = vunpack.c.l.b16 %v5891
        %v5936 = vunpack.c.l.b16 %v5892
        %v5937 = vunpack.c.l.b16 %v5893
        %v5938 = vunpack.c.l.b16 %v5894
        %v5939 = vunpack.c.l.b16 %v5895
        %v5940 = vunpack.c.l.b16 %v5896
        %v5941 = vunpack.c.l.b16 %v5897
        %v5942 = vunpack.c.l.b16 %v5898
        %v5943 = vpack.c.b16 %v5928, %v5927
        %v5944 = vpack.c.b16 %v5930, %v5929
        %v5945 = vpack.c.b16 %v5932, %v5931
        %v5946 = vpack.c.b16 %v5934, %v5933
        %v5947 = vpack.c.b16 %v5936, %v5935
        %v5948 = vpack.c.b16 %v5938, %v5937
        %v5949 = vpack.c.b16 %v5940, %v5939
        %v5950 = vpack.c.b16 %v5942, %v5941
        %5959 = vmatpush.bf16.msra.mxu0 %v5950
        %5960 = vmatpush.bf16.msra.mxu0 %v5949
        %5961 = vmatpush.bf16.msra.mxu0 %v5948
        %5962 = vmatpush.bf16.msra.mxu0 %v5947
        %5963 = vmatpush.bf16.msra.mxu0 %v5946
        %5964 = vmatpush.bf16.msra.mxu0 %v5945
        %5965 = vmatpush.bf16.msra.mxu0 %v5944
        %5966 = vmatpush.bf16.msra.mxu0 %v5943
        %5967 = vmatmul.bf16.gmra.mxu0 %v5899
        %v5968 = vpop.f32.mrf.mxu0
        %v5969 = vadd.f32 %v5909, %v5968
        %v5970 = vpop.f32.mrf.mxu0
        %v5971 = vadd.f32 %v5909, %v5970
        %5972 = vmatmul.bf16.gmra.mxu0 %v5900
        %v5973 = vpop.f32.mrf.mxu0
        %v5974 = vadd.f32 %v5909, %v5973
        %v5975 = vpop.f32.mrf.mxu0
        %v5976 = vadd.f32 %v5909, %v5975
        %5977 = vmatmul.bf16.gmra.mxu0 %v5901
        %v5978 = vpop.f32.mrf.mxu0
        %v5979 = vadd.f32 %v5909, %v5978
        %v5980 = vpop.f32.mrf.mxu0
        %v5981 = vadd.f32 %v5909, %v5980
        %5982 = vmatmul.bf16.gmra.mxu0 %v5902
        %v5983 = vpop.f32.mrf.mxu0
        %v5984 = vadd.f32 %v5909, %v5983
        %v5985 = vpop.f32.mrf.mxu0
        %v5986 = vadd.f32 %v5909, %v5985
        %5987 = vmatmul.bf16.gmra.mxu0 %v5903
        %v5988 = vpop.f32.mrf.mxu0
        %v5989 = vadd.f32 %v5909, %v5988
        %v5990 = vpop.f32.mrf.mxu0
        %v5991 = vadd.f32 %v5909, %v5990
        %5992 = vmatmul.bf16.gmra.mxu0 %v5904
        %v5993 = vpop.f32.mrf.mxu0
        %v5994 = vadd.f32 %v5909, %v5993
        %v5995 = vpop.f32.mrf.mxu0
        %v5996 = vadd.f32 %v5909, %v5995
        %5997 = vmatmul.bf16.gmra.mxu0 %v5905
        %v5998 = vpop.f32.mrf.mxu0
        %v5999 = vadd.f32 %v5909, %v5998
        %v6000 = vpop.f32.mrf.mxu0
        %v6001 = vadd.f32 %v5909, %v6000
        %6002 = vmatmul.bf16.gmra.mxu0 %v5906
        %v6003 = vpop.f32.mrf.mxu0
        %v6004 = vadd.f32 %v5909, %v6003
        %v6005 = vpop.f32.mrf.mxu0
        %v6006 = vadd.f32 %v5909, %v6005
        %6007 = vdwg.mxu0
        %v6008 = vld [vmem:[%s1141] sm:$0xff]
        %v6009 = vld [vmem:[%s1141 + $0x8] sm:$0xff]
        %v6010 = vld [vmem:[%s1141 + $0x10] sm:$0xff]
        %v6011 = vld [vmem:[%s1141 + $0x18] sm:$0xff]
        %v6012 = vld [vmem:[%s1141 + $0x20] sm:$0xff]
        %v6013 = vld [vmem:[%s1141 + $0x28] sm:$0xff]
        %v6014 = vld [vmem:[%s1141 + $0x30] sm:$0xff]
        %v6015 = vld [vmem:[%s1141 + $0x38] sm:$0xff]
        %v6016 = vld [vmem:[%s1141 + $0x40] sm:$0xff]
        %v6017 = vld [vmem:[%s1141 + $0x48] sm:$0xff]
        %v6018 = vld [vmem:[%s1141 + $0x50] sm:$0xff]
        %v6019 = vld [vmem:[%s1141 + $0x58] sm:$0xff]
        %v6020 = vld [vmem:[%s1141 + $0x60] sm:$0xff]
        %v6021 = vld [vmem:[%s1141 + $0x68] sm:$0xff]
        %v6022 = vld [vmem:[%s1141 + $0x70] sm:$0xff]
        %v6023 = vld [vmem:[%s1141 + $0x78] sm:$0xff]
        %v6024 = vld [vmem:[#allocation29] sm:$0xf]
        %6026 = vset.pattern.permute.xlu0 0
        %6027 = vperm.xlu0 %6026, %v6008
        %v6028 = vpop.permute.xlu0 %6027
        %6031 = vset.pattern.permute.xlu0 0
        %6032 = vperm.xlu0 %6031, %v6009
        %v6033 = vpop.permute.xlu0 %6032
        %6036 = vset.pattern.permute.xlu0 0
        %6037 = vperm.xlu0 %6036, %v6010
        %v6038 = vpop.permute.xlu0 %6037
        %6041 = vset.pattern.permute.xlu0 0
        %6042 = vperm.xlu0 %6041, %v6011
        %v6043 = vpop.permute.xlu0 %6042
        %6046 = vset.pattern.permute.xlu0 0
        %6047 = vperm.xlu0 %6046, %v6012
        %v6048 = vpop.permute.xlu0 %6047
        %6051 = vset.pattern.permute.xlu0 0
        %6052 = vperm.xlu0 %6051, %v6013
        %v6053 = vpop.permute.xlu0 %6052
        %6056 = vset.pattern.permute.xlu0 0
        %6057 = vperm.xlu0 %6056, %v6014
        %v6058 = vpop.permute.xlu0 %6057
        %6061 = vset.pattern.permute.xlu0 0
        %6062 = vperm.xlu0 %6061, %v6015
        %v6063 = vpop.permute.xlu0 %6062
        %6066 = vset.pattern.permute.xlu0 0
        %6067 = vperm.xlu0 %6066, %v6016
        %v6068 = vpop.permute.xlu0 %6067
        %6071 = vset.pattern.permute.xlu0 0
        %6072 = vperm.xlu0 %6071, %v6017
        %v6073 = vpop.permute.xlu0 %6072
        %6076 = vset.pattern.permute.xlu0 0
        %6077 = vperm.xlu0 %6076, %v6018
        %v6078 = vpop.permute.xlu0 %6077
        %6081 = vset.pattern.permute.xlu0 0
        %6082 = vperm.xlu0 %6081, %v6019
        %v6083 = vpop.permute.xlu0 %6082
        %6086 = vset.pattern.permute.xlu0 0
        %6087 = vperm.xlu0 %6086, %v6020
        %v6088 = vpop.permute.xlu0 %6087
        %6091 = vset.pattern.permute.xlu0 0
        %6092 = vperm.xlu0 %6091, %v6021
        %v6093 = vpop.permute.xlu0 %6092
        %6096 = vset.pattern.permute.xlu0 0
        %6097 = vperm.xlu0 %6096, %v6022
        %v6098 = vpop.permute.xlu0 %6097
        %6101 = vset.pattern.permute.xlu0 0
        %6102 = vperm.xlu0 %6101, %v6023
        %v6103 = vpop.permute.xlu0 %6102
        %v6106 = vperm.slane %v6024, 0
        %v6107 = vperm.slane %v6024, 1
        %v6108 = vperm.slane %v6024, 2
        %v6109 = vperm.slane %v6024, 3
        %v6114 = vmul.f32 %v6028, %v6106
        %v6115 = vmul.f32 %v6028, %v6107
        %v6116 = vmul.f32 %v6028, %v6108
        %v6117 = vmul.f32 %v6028, %v6109
        %v6118 = vmul.f32 %v6033, %v6106
        %v6119 = vmul.f32 %v6033, %v6107
        %v6120 = vmul.f32 %v6033, %v6108
        %v6121 = vmul.f32 %v6033, %v6109
        %v6122 = vmul.f32 %v6038, %v6106
        %v6123 = vmul.f32 %v6038, %v6107
        %v6124 = vmul.f32 %v6038, %v6108
        %v6125 = vmul.f32 %v6038, %v6109
        %v6126 = vmul.f32 %v6043, %v6106
        %v6127 = vmul.f32 %v6043, %v6107
        %v6128 = vmul.f32 %v6043, %v6108
        %v6129 = vmul.f32 %v6043, %v6109
        %v6130 = vmul.f32 %v6048, %v6106
        %v6131 = vmul.f32 %v6048, %v6107
        %v6132 = vmul.f32 %v6048, %v6108
        %v6133 = vmul.f32 %v6048, %v6109
        %v6134 = vmul.f32 %v6053, %v6106
        %v6135 = vmul.f32 %v6053, %v6107
        %v6136 = vmul.f32 %v6053, %v6108
        %v6137 = vmul.f32 %v6053, %v6109
        %v6138 = vmul.f32 %v6058, %v6106
        %v6139 = vmul.f32 %v6058, %v6107
        %v6140 = vmul.f32 %v6058, %v6108
        %v6141 = vmul.f32 %v6058, %v6109
        %v6142 = vmul.f32 %v6063, %v6106
        %v6143 = vmul.f32 %v6063, %v6107
        %v6144 = vmul.f32 %v6063, %v6108
        %v6145 = vmul.f32 %v6063, %v6109
        %v6146 = vmul.f32 %v6068, %v6106
        %v6147 = vmul.f32 %v6068, %v6107
        %v6148 = vmul.f32 %v6068, %v6108
        %v6149 = vmul.f32 %v6068, %v6109
        %v6150 = vmul.f32 %v6073, %v6106
        %v6151 = vmul.f32 %v6073, %v6107
        %v6152 = vmul.f32 %v6073, %v6108
        %v6153 = vmul.f32 %v6073, %v6109
        %v6154 = vmul.f32 %v6078, %v6106
        %v6155 = vmul.f32 %v6078, %v6107
        %v6156 = vmul.f32 %v6078, %v6108
        %v6157 = vmul.f32 %v6078, %v6109
        %v6158 = vmul.f32 %v6083, %v6106
        %v6159 = vmul.f32 %v6083, %v6107
        %v6160 = vmul.f32 %v6083, %v6108
        %v6161 = vmul.f32 %v6083, %v6109
        %v6162 = vmul.f32 %v6088, %v6106
        %v6163 = vmul.f32 %v6088, %v6107
        %v6164 = vmul.f32 %v6088, %v6108
        %v6165 = vmul.f32 %v6088, %v6109
        %v6166 = vmul.f32 %v6093, %v6106
        %v6167 = vmul.f32 %v6093, %v6107
        %v6168 = vmul.f32 %v6093, %v6108
        %v6169 = vmul.f32 %v6093, %v6109
        %v6170 = vmul.f32 %v6098, %v6106
        %v6171 = vmul.f32 %v6098, %v6107
        %v6172 = vmul.f32 %v6098, %v6108
        %v6173 = vmul.f32 %v6098, %v6109
        %v6174 = vmul.f32 %v6103, %v6106
        %v6175 = vmul.f32 %v6103, %v6107
        %v6176 = vmul.f32 %v6103, %v6108
        %v6177 = vmul.f32 %v6103, %v6109
        %v6178 = vadd.f32 %v6114, %v3526
        %v6179 = vadd.f32 %v6115, %v3575
        %v6180 = vadd.f32 %v6116, %v3624
        %v6181 = vadd.f32 %v6117, %v3673
        %v6182 = vadd.f32 %v6118, %v3528
        %v6183 = vadd.f32 %v6119, %v3577
        %v6184 = vadd.f32 %v6120, %v3626
        %v6185 = vadd.f32 %v6121, %v3675
        %v6186 = vadd.f32 %v6122, %v3531
        %v6187 = vadd.f32 %v6123, %v3580
        %v6188 = vadd.f32 %v6124, %v3629
        %v6189 = vadd.f32 %v6125, %v3678
        %v6190 = vadd.f32 %v6126, %v3533
        %v6191 = vadd.f32 %v6127, %v3582
        %v6192 = vadd.f32 %v6128, %v3631
        %v6193 = vadd.f32 %v6129, %v3680
        %v6194 = vadd.f32 %v6130, %v3536
        %v6195 = vadd.f32 %v6131, %v3585
        %v6196 = vadd.f32 %v6132, %v3634
        %v6197 = vadd.f32 %v6133, %v3683
        %v6198 = vadd.f32 %v6134, %v3538
        %v6199 = vadd.f32 %v6135, %v3587
        %v6200 = vadd.f32 %v6136, %v3636
        %v6201 = vadd.f32 %v6137, %v3685
        %v6202 = vadd.f32 %v6138, %v3541
        %v6203 = vadd.f32 %v6139, %v3590
        %v6204 = vadd.f32 %v6140, %v3639
        %v6205 = vadd.f32 %v6141, %v3688
        %v6206 = vadd.f32 %v6142, %v3543
        %v6207 = vadd.f32 %v6143, %v3592
        %v6208 = vadd.f32 %v6144, %v3641
        %v6209 = vadd.f32 %v6145, %v3690
        %v6210 = vadd.f32 %v6146, %v3546
        %v6211 = vadd.f32 %v6147, %v3595
        %v6212 = vadd.f32 %v6148, %v3644
        %v6213 = vadd.f32 %v6149, %v3693
        %v6214 = vadd.f32 %v6150, %v3548
        %v6215 = vadd.f32 %v6151, %v3597
        %v6216 = vadd.f32 %v6152, %v3646
        %v6217 = vadd.f32 %v6153, %v3695
        %v6218 = vadd.f32 %v6154, %v3551
        %v6219 = vadd.f32 %v6155, %v3600
        %v6220 = vadd.f32 %v6156, %v3649
        %v6221 = vadd.f32 %v6157, %v3698
        %v6222 = vadd.f32 %v6158, %v3553
        %v6223 = vadd.f32 %v6159, %v3602
        %v6224 = vadd.f32 %v6160, %v3651
        %v6225 = vadd.f32 %v6161, %v3700
        %v6226 = vadd.f32 %v6162, %v3556
        %v6227 = vadd.f32 %v6163, %v3605
        %v6228 = vadd.f32 %v6164, %v3654
        %v6229 = vadd.f32 %v6165, %v3703
        %v6230 = vadd.f32 %v6166, %v3558
        %v6231 = vadd.f32 %v6167, %v3607
        %v6232 = vadd.f32 %v6168, %v3656
        %v6233 = vadd.f32 %v6169, %v3705
        %v6234 = vadd.f32 %v6170, %v3561
        %v6235 = vadd.f32 %v6171, %v3610
        %v6236 = vadd.f32 %v6172, %v3659
        %v6237 = vadd.f32 %v6173, %v3708
        %v6238 = vadd.f32 %v6174, %v3563
        %v6239 = vadd.f32 %v6175, %v3612
        %v6240 = vadd.f32 %v6176, %v3661
        %v6241 = vadd.f32 %v6177, %v3710
        %v6242 = vld [vmem:[%s20 + $0xd] sm:$0xf]
        %v6244 = vperm.slane %v6242, 0
        %v6245 = vperm.slane %v6242, 1
        %v6246 = vperm.slane %v6242, 2
        %v6247 = vperm.slane %v6242, 3
        %v6252 = vadd.f32 %v6178, %v6244
        %v6253 = vadd.f32 %v6179, %v6245
        %v6254 = vadd.f32 %v6180, %v6246
        %v6255 = vadd.f32 %v6181, %v6247
        %v6256 = vadd.f32 %v6182, %v6244
        %v6257 = vadd.f32 %v6183, %v6245
        %v6258 = vadd.f32 %v6184, %v6246
        %v6259 = vadd.f32 %v6185, %v6247
        %v6260 = vadd.f32 %v6186, %v6244
        %v6261 = vadd.f32 %v6187, %v6245
        %v6262 = vadd.f32 %v6188, %v6246
        %v6263 = vadd.f32 %v6189, %v6247
        %v6264 = vadd.f32 %v6190, %v6244
        %v6265 = vadd.f32 %v6191, %v6245
        %v6266 = vadd.f32 %v6192, %v6246
        %v6267 = vadd.f32 %v6193, %v6247
        %v6268 = vadd.f32 %v6194, %v6244
        %v6269 = vadd.f32 %v6195, %v6245
        %v6270 = vadd.f32 %v6196, %v6246
        %v6271 = vadd.f32 %v6197, %v6247
        %v6272 = vadd.f32 %v6198, %v6244
        %v6273 = vadd.f32 %v6199, %v6245
        %v6274 = vadd.f32 %v6200, %v6246
        %v6275 = vadd.f32 %v6201, %v6247
        %v6276 = vadd.f32 %v6202, %v6244
        %v6277 = vadd.f32 %v6203, %v6245
        %v6278 = vadd.f32 %v6204, %v6246
        %v6279 = vadd.f32 %v6205, %v6247
        %v6280 = vadd.f32 %v6206, %v6244
        %v6281 = vadd.f32 %v6207, %v6245
        %v6282 = vadd.f32 %v6208, %v6246
        %v6283 = vadd.f32 %v6209, %v6247
        %v6284 = vadd.f32 %v6210, %v6244
        %v6285 = vadd.f32 %v6211, %v6245
        %v6286 = vadd.f32 %v6212, %v6246
        %v6287 = vadd.f32 %v6213, %v6247
        %v6288 = vadd.f32 %v6214, %v6244
        %v6289 = vadd.f32 %v6215, %v6245
        %v6290 = vadd.f32 %v6216, %v6246
        %v6291 = vadd.f32 %v6217, %v6247
        %v6292 = vadd.f32 %v6218, %v6244
        %v6293 = vadd.f32 %v6219, %v6245
        %v6294 = vadd.f32 %v6220, %v6246
        %v6295 = vadd.f32 %v6221, %v6247
        %v6296 = vadd.f32 %v6222, %v6244
        %v6297 = vadd.f32 %v6223, %v6245
        %v6298 = vadd.f32 %v6224, %v6246
        %v6299 = vadd.f32 %v6225, %v6247
        %v6300 = vadd.f32 %v6226, %v6244
        %v6301 = vadd.f32 %v6227, %v6245
        %v6302 = vadd.f32 %v6228, %v6246
        %v6303 = vadd.f32 %v6229, %v6247
        %v6304 = vadd.f32 %v6230, %v6244
        %v6305 = vadd.f32 %v6231, %v6245
        %v6306 = vadd.f32 %v6232, %v6246
        %v6307 = vadd.f32 %v6233, %v6247
        %v6308 = vadd.f32 %v6234, %v6244
        %v6309 = vadd.f32 %v6235, %v6245
        %v6310 = vadd.f32 %v6236, %v6246
        %v6311 = vadd.f32 %v6237, %v6247
        %v6312 = vadd.f32 %v6238, %v6244
        %v6313 = vadd.f32 %v6239, %v6245
        %v6314 = vadd.f32 %v6240, %v6246
        %v6315 = vadd.f32 %v6241, %v6247
        %v6316 = vxor.u32 %v6252, 2147483648
        %v6317 = vxor.u32 %v6256, 2147483648
        %v6318 = vxor.u32 %v6260, 2147483648
        %v6319 = vxor.u32 %v6264, 2147483648
        %v6320 = vxor.u32 %v6268, 2147483648
        %v6321 = vxor.u32 %v6272, 2147483648
        %v6322 = vxor.u32 %v6276, 2147483648
        %v6323 = vxor.u32 %v6280, 2147483648
        %v6324 = vxor.u32 %v6284, 2147483648
        %v6325 = vxor.u32 %v6288, 2147483648
        %v6326 = vxor.u32 %v6292, 2147483648
        %v6327 = vxor.u32 %v6296, 2147483648
        %v6328 = vxor.u32 %v6300, 2147483648
        %v6329 = vxor.u32 %v6304, 2147483648
        %v6330 = vxor.u32 %v6308, 2147483648
        %v6331 = vxor.u32 %v6312, 2147483648
        %v6332 = vmul.f32 %v6316, 1.442695
        %v6333 = vpow.pop %v6332
        %v6334 = vmul.f32 %v6317, 1.442695
        %v6335 = vpow.pop %v6334
        %v6336 = vmul.f32 %v6318, 1.442695
        %v6337 = vpow.pop %v6336
        %v6338 = vmul.f32 %v6319, 1.442695
        %v6339 = vpow.pop %v6338
        %v6340 = vmul.f32 %v6320, 1.442695
        %v6341 = vpow.pop %v6340
        %v6342 = vmul.f32 %v6321, 1.442695
        %v6343 = vpow.pop %v6342
        %v6344 = vmul.f32 %v6322, 1.442695
        %v6345 = vpow.pop %v6344
        %v6346 = vmul.f32 %v6323, 1.442695
        %v6347 = vpow.pop %v6346
        %v6348 = vmul.f32 %v6324, 1.442695
        %v6349 = vpow.pop %v6348
        %v6350 = vmul.f32 %v6325, 1.442695
        %v6351 = vpow.pop %v6350
        %v6352 = vmul.f32 %v6326, 1.442695
        %v6353 = vpow.pop %v6352
        %v6354 = vmul.f32 %v6327, 1.442695
        %v6355 = vpow.pop %v6354
        %v6356 = vmul.f32 %v6328, 1.442695
        %v6357 = vpow.pop %v6356
        %v6358 = vmul.f32 %v6329, 1.442695
        %v6359 = vpow.pop %v6358
        %v6360 = vmul.f32 %v6330, 1.442695
        %v6361 = vpow.pop %v6360
        %v6362 = vmul.f32 %v6331, 1.442695
        %v6363 = vpow.pop %v6362
        %v6364 = vadd.f32 %v6333, 1.0
        %v6365 = vadd.f32 %v6335, 1.0
        %v6366 = vadd.f32 %v6337, 1.0
        %v6367 = vadd.f32 %v6339, 1.0
        %v6368 = vadd.f32 %v6341, 1.0
        %v6369 = vadd.f32 %v6343, 1.0
        %v6370 = vadd.f32 %v6345, 1.0
        %v6371 = vadd.f32 %v6347, 1.0
        %v6372 = vadd.f32 %v6349, 1.0
        %v6373 = vadd.f32 %v6351, 1.0
        %v6374 = vadd.f32 %v6353, 1.0
        %v6375 = vadd.f32 %v6355, 1.0
        %v6376 = vadd.f32 %v6357, 1.0
        %v6377 = vadd.f32 %v6359, 1.0
        %v6378 = vadd.f32 %v6361, 1.0
        %v6379 = vadd.f32 %v6363, 1.0
        %v6380 = vrcp.pop %v6364
        %v6381 = vmul.f32 %v6364, %v6380
        %v6382 = vsub.f32 1.0, %v6381
        %v6383 = vmul.f32 %v6380, %v6382
        %v6384 = vadd.f32 %v6380, %v6383
        %vm6385 = vweird.f32 %v6364
        %vm6386 = vweird.f32 %v6380
        %vm6387 = vmor %vm6385, %vm6386
        %v6388 = vsel %vm6387, %v6380, %v6384
        %v6389 = vand.u32 2147483647, %v6364
        %vm6390 = vcmp.eq.f32.partialorder %v6389, 8.507059e+37
        %v6391 = vand.u32 %v6364, 2147483648
        %v6392 = vor.u32 1.1754944e-38, %v6391
        %v6393 = vsel %vm6390, %v6392, %v6388
        %v6394 = vmul.f32 1.0, %v6393
        %v6395 = vrcp.pop %v6365
        %v6396 = vmul.f32 %v6365, %v6395
        %v6397 = vsub.f32 1.0, %v6396
        %v6398 = vmul.f32 %v6395, %v6397
        %v6399 = vadd.f32 %v6395, %v6398
        %vm6400 = vweird.f32 %v6365
        %vm6401 = vweird.f32 %v6395
        %vm6402 = vmor %vm6400, %vm6401
        %v6403 = vsel %vm6402, %v6395, %v6399
        %v6404 = vand.u32 2147483647, %v6365
        %vm6405 = vcmp.eq.f32.partialorder %v6404, 8.507059e+37
        %v6406 = vand.u32 %v6365, 2147483648
        %v6407 = vor.u32 1.1754944e-38, %v6406
        %v6408 = vsel %vm6405, %v6407, %v6403
        %v6409 = vmul.f32 1.0, %v6408
        %v6410 = vrcp.pop %v6366
        %v6411 = vmul.f32 %v6366, %v6410
        %v6412 = vsub.f32 1.0, %v6411
        %v6413 = vmul.f32 %v6410, %v6412
        %v6414 = vadd.f32 %v6410, %v6413
        %vm6415 = vweird.f32 %v6366
        %vm6416 = vweird.f32 %v6410
        %vm6417 = vmor %vm6415, %vm6416
        %v6418 = vsel %vm6417, %v6410, %v6414
        %v6419 = vand.u32 2147483647, %v6366
        %vm6420 = vcmp.eq.f32.partialorder %v6419, 8.507059e+37
        %v6421 = vand.u32 %v6366, 2147483648
        %v6422 = vor.u32 1.1754944e-38, %v6421
        %v6423 = vsel %vm6420, %v6422, %v6418
        %v6424 = vmul.f32 1.0, %v6423
        %v6425 = vrcp.pop %v6367
        %v6426 = vmul.f32 %v6367, %v6425
        %v6427 = vsub.f32 1.0, %v6426
        %v6428 = vmul.f32 %v6425, %v6427
        %v6429 = vadd.f32 %v6425, %v6428
        %vm6430 = vweird.f32 %v6367
        %vm6431 = vweird.f32 %v6425
        %vm6432 = vmor %vm6430, %vm6431
        %v6433 = vsel %vm6432, %v6425, %v6429
        %v6434 = vand.u32 2147483647, %v6367
        %vm6435 = vcmp.eq.f32.partialorder %v6434, 8.507059e+37
        %v6436 = vand.u32 %v6367, 2147483648
        %v6437 = vor.u32 1.1754944e-38, %v6436
        %v6438 = vsel %vm6435, %v6437, %v6433
        %v6439 = vmul.f32 1.0, %v6438
        %v6440 = vrcp.pop %v6368
        %v6441 = vmul.f32 %v6368, %v6440
        %v6442 = vsub.f32 1.0, %v6441
        %v6443 = vmul.f32 %v6440, %v6442
        %v6444 = vadd.f32 %v6440, %v6443
        %vm6445 = vweird.f32 %v6368
        %vm6446 = vweird.f32 %v6440
        %vm6447 = vmor %vm6445, %vm6446
        %v6448 = vsel %vm6447, %v6440, %v6444
        %v6449 = vand.u32 2147483647, %v6368
        %vm6450 = vcmp.eq.f32.partialorder %v6449, 8.507059e+37
        %v6451 = vand.u32 %v6368, 2147483648
        %v6452 = vor.u32 1.1754944e-38, %v6451
        %v6453 = vsel %vm6450, %v6452, %v6448
        %v6454 = vmul.f32 1.0, %v6453
        %v6455 = vrcp.pop %v6369
        %v6456 = vmul.f32 %v6369, %v6455
        %v6457 = vsub.f32 1.0, %v6456
        %v6458 = vmul.f32 %v6455, %v6457
        %v6459 = vadd.f32 %v6455, %v6458
        %vm6460 = vweird.f32 %v6369
        %vm6461 = vweird.f32 %v6455
        %vm6462 = vmor %vm6460, %vm6461
        %v6463 = vsel %vm6462, %v6455, %v6459
        %v6464 = vand.u32 2147483647, %v6369
        %vm6465 = vcmp.eq.f32.partialorder %v6464, 8.507059e+37
        %v6466 = vand.u32 %v6369, 2147483648
        %v6467 = vor.u32 1.1754944e-38, %v6466
        %v6468 = vsel %vm6465, %v6467, %v6463
        %v6469 = vmul.f32 1.0, %v6468
        %v6470 = vrcp.pop %v6370
        %v6471 = vmul.f32 %v6370, %v6470
        %v6472 = vsub.f32 1.0, %v6471
        %v6473 = vmul.f32 %v6470, %v6472
        %v6474 = vadd.f32 %v6470, %v6473
        %vm6475 = vweird.f32 %v6370
        %vm6476 = vweird.f32 %v6470
        %vm6477 = vmor %vm6475, %vm6476
        %v6478 = vsel %vm6477, %v6470, %v6474
        %v6479 = vand.u32 2147483647, %v6370
        %vm6480 = vcmp.eq.f32.partialorder %v6479, 8.507059e+37
        %v6481 = vand.u32 %v6370, 2147483648
        %v6482 = vor.u32 1.1754944e-38, %v6481
        %v6483 = vsel %vm6480, %v6482, %v6478
        %v6484 = vmul.f32 1.0, %v6483
        %v6485 = vrcp.pop %v6371
        %v6486 = vmul.f32 %v6371, %v6485
        %v6487 = vsub.f32 1.0, %v6486
        %v6488 = vmul.f32 %v6485, %v6487
        %v6489 = vadd.f32 %v6485, %v6488
        %vm6490 = vweird.f32 %v6371
        %vm6491 = vweird.f32 %v6485
        %vm6492 = vmor %vm6490, %vm6491
        %v6493 = vsel %vm6492, %v6485, %v6489
        %v6494 = vand.u32 2147483647, %v6371
        %vm6495 = vcmp.eq.f32.partialorder %v6494, 8.507059e+37
        %v6496 = vand.u32 %v6371, 2147483648
        %v6497 = vor.u32 1.1754944e-38, %v6496
        %v6498 = vsel %vm6495, %v6497, %v6493
        %v6499 = vmul.f32 1.0, %v6498
        %v6500 = vrcp.pop %v6372
        %v6501 = vmul.f32 %v6372, %v6500
        %v6502 = vsub.f32 1.0, %v6501
        %v6503 = vmul.f32 %v6500, %v6502
        %v6504 = vadd.f32 %v6500, %v6503
        %vm6505 = vweird.f32 %v6372
        %vm6506 = vweird.f32 %v6500
        %vm6507 = vmor %vm6505, %vm6506
        %v6508 = vsel %vm6507, %v6500, %v6504
        %v6509 = vand.u32 2147483647, %v6372
        %vm6510 = vcmp.eq.f32.partialorder %v6509, 8.507059e+37
        %v6511 = vand.u32 %v6372, 2147483648
        %v6512 = vor.u32 1.1754944e-38, %v6511
        %v6513 = vsel %vm6510, %v6512, %v6508
        %v6514 = vmul.f32 1.0, %v6513
        %v6515 = vrcp.pop %v6373
        %v6516 = vmul.f32 %v6373, %v6515
        %v6517 = vsub.f32 1.0, %v6516
        %v6518 = vmul.f32 %v6515, %v6517
        %v6519 = vadd.f32 %v6515, %v6518
        %vm6520 = vweird.f32 %v6373
        %vm6521 = vweird.f32 %v6515
        %vm6522 = vmor %vm6520, %vm6521
        %v6523 = vsel %vm6522, %v6515, %v6519
        %v6524 = vand.u32 2147483647, %v6373
        %vm6525 = vcmp.eq.f32.partialorder %v6524, 8.507059e+37
        %v6526 = vand.u32 %v6373, 2147483648
        %v6527 = vor.u32 1.1754944e-38, %v6526
        %v6528 = vsel %vm6525, %v6527, %v6523
        %v6529 = vmul.f32 1.0, %v6528
        %v6530 = vrcp.pop %v6374
        %v6531 = vmul.f32 %v6374, %v6530
        %v6532 = vsub.f32 1.0, %v6531
        %v6533 = vmul.f32 %v6530, %v6532
        %v6534 = vadd.f32 %v6530, %v6533
        %vm6535 = vweird.f32 %v6374
        %vm6536 = vweird.f32 %v6530
        %vm6537 = vmor %vm6535, %vm6536
        %v6538 = vsel %vm6537, %v6530, %v6534
        %v6539 = vand.u32 2147483647, %v6374
        %vm6540 = vcmp.eq.f32.partialorder %v6539, 8.507059e+37
        %v6541 = vand.u32 %v6374, 2147483648
        %v6542 = vor.u32 1.1754944e-38, %v6541
        %v6543 = vsel %vm6540, %v6542, %v6538
        %v6544 = vmul.f32 1.0, %v6543
        %v6545 = vrcp.pop %v6375
        %v6546 = vmul.f32 %v6375, %v6545
        %v6547 = vsub.f32 1.0, %v6546
        %v6548 = vmul.f32 %v6545, %v6547
        %v6549 = vadd.f32 %v6545, %v6548
        %vm6550 = vweird.f32 %v6375
        %vm6551 = vweird.f32 %v6545
        %vm6552 = vmor %vm6550, %vm6551
        %v6553 = vsel %vm6552, %v6545, %v6549
        %v6554 = vand.u32 2147483647, %v6375
        %vm6555 = vcmp.eq.f32.partialorder %v6554, 8.507059e+37
        %v6556 = vand.u32 %v6375, 2147483648
        %v6557 = vor.u32 1.1754944e-38, %v6556
        %v6558 = vsel %vm6555, %v6557, %v6553
        %v6559 = vmul.f32 1.0, %v6558
        %v6560 = vrcp.pop %v6376
        %v6561 = vmul.f32 %v6376, %v6560
        %v6562 = vsub.f32 1.0, %v6561
        %v6563 = vmul.f32 %v6560, %v6562
        %v6564 = vadd.f32 %v6560, %v6563
        %vm6565 = vweird.f32 %v6376
        %vm6566 = vweird.f32 %v6560
        %vm6567 = vmor %vm6565, %vm6566
        %v6568 = vsel %vm6567, %v6560, %v6564
        %v6569 = vand.u32 2147483647, %v6376
        %vm6570 = vcmp.eq.f32.partialorder %v6569, 8.507059e+37
        %v6571 = vand.u32 %v6376, 2147483648
        %v6572 = vor.u32 1.1754944e-38, %v6571
        %v6573 = vsel %vm6570, %v6572, %v6568
        %v6574 = vmul.f32 1.0, %v6573
        %v6575 = vrcp.pop %v6377
        %v6576 = vmul.f32 %v6377, %v6575
        %v6577 = vsub.f32 1.0, %v6576
        %v6578 = vmul.f32 %v6575, %v6577
        %v6579 = vadd.f32 %v6575, %v6578
        %vm6580 = vweird.f32 %v6377
        %vm6581 = vweird.f32 %v6575
        %vm6582 = vmor %vm6580, %vm6581
        %v6583 = vsel %vm6582, %v6575, %v6579
        %v6584 = vand.u32 2147483647, %v6377
        %vm6585 = vcmp.eq.f32.partialorder %v6584, 8.507059e+37
        %v6586 = vand.u32 %v6377, 2147483648
        %v6587 = vor.u32 1.1754944e-38, %v6586
        %v6588 = vsel %vm6585, %v6587, %v6583
        %v6589 = vmul.f32 1.0, %v6588
        %v6590 = vrcp.pop %v6378
        %v6591 = vmul.f32 %v6378, %v6590
        %v6592 = vsub.f32 1.0, %v6591
        %v6593 = vmul.f32 %v6590, %v6592
        %v6594 = vadd.f32 %v6590, %v6593
        %vm6595 = vweird.f32 %v6378
        %vm6596 = vweird.f32 %v6590
        %vm6597 = vmor %vm6595, %vm6596
        %v6598 = vsel %vm6597, %v6590, %v6594
        %v6599 = vand.u32 2147483647, %v6378
        %vm6600 = vcmp.eq.f32.partialorder %v6599, 8.507059e+37
        %v6601 = vand.u32 %v6378, 2147483648
        %v6602 = vor.u32 1.1754944e-38, %v6601
        %v6603 = vsel %vm6600, %v6602, %v6598
        %v6604 = vmul.f32 1.0, %v6603
        %v6605 = vrcp.pop %v6379
        %v6606 = vmul.f32 %v6379, %v6605
        %v6607 = vsub.f32 1.0, %v6606
        %v6608 = vmul.f32 %v6605, %v6607
        %v6609 = vadd.f32 %v6605, %v6608
        %vm6610 = vweird.f32 %v6379
        %vm6611 = vweird.f32 %v6605
        %vm6612 = vmor %vm6610, %vm6611
        %v6613 = vsel %vm6612, %v6605, %v6609
        %v6614 = vand.u32 2147483647, %v6379
        %vm6615 = vcmp.eq.f32.partialorder %v6614, 8.507059e+37
        %v6616 = vand.u32 %v6379, 2147483648
        %v6617 = vor.u32 1.1754944e-38, %v6616
        %v6618 = vsel %vm6615, %v6617, %v6613
        %v6619 = vmul.f32 1.0, %v6618
        %v6620 = vxor.u32 %v6253, 2147483648
        %v6621 = vxor.u32 %v6257, 2147483648
        %v6622 = vxor.u32 %v6261, 2147483648
        %v6623 = vxor.u32 %v6265, 2147483648
        %v6624 = vxor.u32 %v6269, 2147483648
        %v6625 = vxor.u32 %v6273, 2147483648
        %v6626 = vxor.u32 %v6277, 2147483648
        %v6627 = vxor.u32 %v6281, 2147483648
        %v6628 = vxor.u32 %v6285, 2147483648
        %v6629 = vxor.u32 %v6289, 2147483648
        %v6630 = vxor.u32 %v6293, 2147483648
        %v6631 = vxor.u32 %v6297, 2147483648
        %v6632 = vxor.u32 %v6301, 2147483648
        %v6633 = vxor.u32 %v6305, 2147483648
        %v6634 = vxor.u32 %v6309, 2147483648
        %v6635 = vxor.u32 %v6313, 2147483648
        %v6636 = vmul.f32 %v6620, 1.442695
        %v6637 = vpow.pop %v6636
        %v6638 = vmul.f32 %v6621, 1.442695
        %v6639 = vpow.pop %v6638
        %v6640 = vmul.f32 %v6622, 1.442695
        %v6641 = vpow.pop %v6640
        %v6642 = vmul.f32 %v6623, 1.442695
        %v6643 = vpow.pop %v6642
        %v6644 = vmul.f32 %v6624, 1.442695
        %v6645 = vpow.pop %v6644
        %v6646 = vmul.f32 %v6625, 1.442695
        %v6647 = vpow.pop %v6646
        %v6648 = vmul.f32 %v6626, 1.442695
        %v6649 = vpow.pop %v6648
        %v6650 = vmul.f32 %v6627, 1.442695
        %v6651 = vpow.pop %v6650
        %v6652 = vmul.f32 %v6628, 1.442695
        %v6653 = vpow.pop %v6652
        %v6654 = vmul.f32 %v6629, 1.442695
        %v6655 = vpow.pop %v6654
        %v6656 = vmul.f32 %v6630, 1.442695
        %v6657 = vpow.pop %v6656
        %v6658 = vmul.f32 %v6631, 1.442695
        %v6659 = vpow.pop %v6658
        %v6660 = vmul.f32 %v6632, 1.442695
        %v6661 = vpow.pop %v6660
        %v6662 = vmul.f32 %v6633, 1.442695
        %v6663 = vpow.pop %v6662
        %v6664 = vmul.f32 %v6634, 1.442695
        %v6665 = vpow.pop %v6664
        %v6666 = vmul.f32 %v6635, 1.442695
        %v6667 = vpow.pop %v6666
        %v6668 = vadd.f32 %v6637, 1.0
        %v6669 = vadd.f32 %v6639, 1.0
        %v6670 = vadd.f32 %v6641, 1.0
        %v6671 = vadd.f32 %v6643, 1.0
        %v6672 = vadd.f32 %v6645, 1.0
        %v6673 = vadd.f32 %v6647, 1.0
        %v6674 = vadd.f32 %v6649, 1.0
        %v6675 = vadd.f32 %v6651, 1.0
        %v6676 = vadd.f32 %v6653, 1.0
        %v6677 = vadd.f32 %v6655, 1.0
        %v6678 = vadd.f32 %v6657, 1.0
        %v6679 = vadd.f32 %v6659, 1.0
        %v6680 = vadd.f32 %v6661, 1.0
        %v6681 = vadd.f32 %v6663, 1.0
        %v6682 = vadd.f32 %v6665, 1.0
        %v6683 = vadd.f32 %v6667, 1.0
        %v6684 = vrcp.pop %v6668
        %v6685 = vmul.f32 %v6668, %v6684
        %v6686 = vsub.f32 1.0, %v6685
        %v6687 = vmul.f32 %v6684, %v6686
        %v6688 = vadd.f32 %v6684, %v6687
        %vm6689 = vweird.f32 %v6668
        %vm6690 = vweird.f32 %v6684
        %vm6691 = vmor %vm6689, %vm6690
        %v6692 = vsel %vm6691, %v6684, %v6688
        %v6693 = vand.u32 2147483647, %v6668
        %vm6694 = vcmp.eq.f32.partialorder %v6693, 8.507059e+37
        %v6695 = vand.u32 %v6668, 2147483648
        %v6696 = vor.u32 1.1754944e-38, %v6695
        %v6697 = vsel %vm6694, %v6696, %v6692
        %v6698 = vmul.f32 1.0, %v6697
        %v6699 = vrcp.pop %v6669
        %v6700 = vmul.f32 %v6669, %v6699
        %v6701 = vsub.f32 1.0, %v6700
        %v6702 = vmul.f32 %v6699, %v6701
        %v6703 = vadd.f32 %v6699, %v6702
        %vm6704 = vweird.f32 %v6669
        %vm6705 = vweird.f32 %v6699
        %vm6706 = vmor %vm6704, %vm6705
        %v6707 = vsel %vm6706, %v6699, %v6703
        %v6708 = vand.u32 2147483647, %v6669
        %vm6709 = vcmp.eq.f32.partialorder %v6708, 8.507059e+37
        %v6710 = vand.u32 %v6669, 2147483648
        %v6711 = vor.u32 1.1754944e-38, %v6710
        %v6712 = vsel %vm6709, %v6711, %v6707
        %v6713 = vmul.f32 1.0, %v6712
        %v6714 = vrcp.pop %v6670
        %v6715 = vmul.f32 %v6670, %v6714
        %v6716 = vsub.f32 1.0, %v6715
        %v6717 = vmul.f32 %v6714, %v6716
        %v6718 = vadd.f32 %v6714, %v6717
        %vm6719 = vweird.f32 %v6670
        %vm6720 = vweird.f32 %v6714
        %vm6721 = vmor %vm6719, %vm6720
        %v6722 = vsel %vm6721, %v6714, %v6718
        %v6723 = vand.u32 2147483647, %v6670
        %vm6724 = vcmp.eq.f32.partialorder %v6723, 8.507059e+37
        %v6725 = vand.u32 %v6670, 2147483648
        %v6726 = vor.u32 1.1754944e-38, %v6725
        %v6727 = vsel %vm6724, %v6726, %v6722
        %v6728 = vmul.f32 1.0, %v6727
        %v6729 = vrcp.pop %v6671
        %v6730 = vmul.f32 %v6671, %v6729
        %v6731 = vsub.f32 1.0, %v6730
        %v6732 = vmul.f32 %v6729, %v6731
        %v6733 = vadd.f32 %v6729, %v6732
        %vm6734 = vweird.f32 %v6671
        %vm6735 = vweird.f32 %v6729
        %vm6736 = vmor %vm6734, %vm6735
        %v6737 = vsel %vm6736, %v6729, %v6733
        %v6738 = vand.u32 2147483647, %v6671
        %vm6739 = vcmp.eq.f32.partialorder %v6738, 8.507059e+37
        %v6740 = vand.u32 %v6671, 2147483648
        %v6741 = vor.u32 1.1754944e-38, %v6740
        %v6742 = vsel %vm6739, %v6741, %v6737
        %v6743 = vmul.f32 1.0, %v6742
        %v6744 = vrcp.pop %v6672
        %v6745 = vmul.f32 %v6672, %v6744
        %v6746 = vsub.f32 1.0, %v6745
        %v6747 = vmul.f32 %v6744, %v6746
        %v6748 = vadd.f32 %v6744, %v6747
        %vm6749 = vweird.f32 %v6672
        %vm6750 = vweird.f32 %v6744
        %vm6751 = vmor %vm6749, %vm6750
        %v6752 = vsel %vm6751, %v6744, %v6748
        %v6753 = vand.u32 2147483647, %v6672
        %vm6754 = vcmp.eq.f32.partialorder %v6753, 8.507059e+37
        %v6755 = vand.u32 %v6672, 2147483648
        %v6756 = vor.u32 1.1754944e-38, %v6755
        %v6757 = vsel %vm6754, %v6756, %v6752
        %v6758 = vmul.f32 1.0, %v6757
        %v6759 = vrcp.pop %v6673
        %v6760 = vmul.f32 %v6673, %v6759
        %v6761 = vsub.f32 1.0, %v6760
        %v6762 = vmul.f32 %v6759, %v6761
        %v6763 = vadd.f32 %v6759, %v6762
        %vm6764 = vweird.f32 %v6673
        %vm6765 = vweird.f32 %v6759
        %vm6766 = vmor %vm6764, %vm6765
        %v6767 = vsel %vm6766, %v6759, %v6763
        %v6768 = vand.u32 2147483647, %v6673
        %vm6769 = vcmp.eq.f32.partialorder %v6768, 8.507059e+37
        %v6770 = vand.u32 %v6673, 2147483648
        %v6771 = vor.u32 1.1754944e-38, %v6770
        %v6772 = vsel %vm6769, %v6771, %v6767
        %v6773 = vmul.f32 1.0, %v6772
        %v6774 = vrcp.pop %v6674
        %v6775 = vmul.f32 %v6674, %v6774
        %v6776 = vsub.f32 1.0, %v6775
        %v6777 = vmul.f32 %v6774, %v6776
        %v6778 = vadd.f32 %v6774, %v6777
        %vm6779 = vweird.f32 %v6674
        %vm6780 = vweird.f32 %v6774
        %vm6781 = vmor %vm6779, %vm6780
        %v6782 = vsel %vm6781, %v6774, %v6778
        %v6783 = vand.u32 2147483647, %v6674
        %vm6784 = vcmp.eq.f32.partialorder %v6783, 8.507059e+37
        %v6785 = vand.u32 %v6674, 2147483648
        %v6786 = vor.u32 1.1754944e-38, %v6785
        %v6787 = vsel %vm6784, %v6786, %v6782
        %v6788 = vmul.f32 1.0, %v6787
        %v6789 = vrcp.pop %v6675
        %v6790 = vmul.f32 %v6675, %v6789
        %v6791 = vsub.f32 1.0, %v6790
        %v6792 = vmul.f32 %v6789, %v6791
        %v6793 = vadd.f32 %v6789, %v6792
        %vm6794 = vweird.f32 %v6675
        %vm6795 = vweird.f32 %v6789
        %vm6796 = vmor %vm6794, %vm6795
        %v6797 = vsel %vm6796, %v6789, %v6793
        %v6798 = vand.u32 2147483647, %v6675
        %vm6799 = vcmp.eq.f32.partialorder %v6798, 8.507059e+37
        %v6800 = vand.u32 %v6675, 2147483648
        %v6801 = vor.u32 1.1754944e-38, %v6800
        %v6802 = vsel %vm6799, %v6801, %v6797
        %v6803 = vmul.f32 1.0, %v6802
        %v6804 = vrcp.pop %v6676
        %v6805 = vmul.f32 %v6676, %v6804
        %v6806 = vsub.f32 1.0, %v6805
        %v6807 = vmul.f32 %v6804, %v6806
        %v6808 = vadd.f32 %v6804, %v6807
        %vm6809 = vweird.f32 %v6676
        %vm6810 = vweird.f32 %v6804
        %vm6811 = vmor %vm6809, %vm6810
        %v6812 = vsel %vm6811, %v6804, %v6808
        %v6813 = vand.u32 2147483647, %v6676
        %vm6814 = vcmp.eq.f32.partialorder %v6813, 8.507059e+37
        %v6815 = vand.u32 %v6676, 2147483648
        %v6816 = vor.u32 1.1754944e-38, %v6815
        %v6817 = vsel %vm6814, %v6816, %v6812
        %v6818 = vmul.f32 1.0, %v6817
        %v6819 = vrcp.pop %v6677
        %v6820 = vmul.f32 %v6677, %v6819
        %v6821 = vsub.f32 1.0, %v6820
        %v6822 = vmul.f32 %v6819, %v6821
        %v6823 = vadd.f32 %v6819, %v6822
        %vm6824 = vweird.f32 %v6677
        %vm6825 = vweird.f32 %v6819
        %vm6826 = vmor %vm6824, %vm6825
        %v6827 = vsel %vm6826, %v6819, %v6823
        %v6828 = vand.u32 2147483647, %v6677
        %vm6829 = vcmp.eq.f32.partialorder %v6828, 8.507059e+37
        %v6830 = vand.u32 %v6677, 2147483648
        %v6831 = vor.u32 1.1754944e-38, %v6830
        %v6832 = vsel %vm6829, %v6831, %v6827
        %v6833 = vmul.f32 1.0, %v6832
        %v6834 = vrcp.pop %v6678
        %v6835 = vmul.f32 %v6678, %v6834
        %v6836 = vsub.f32 1.0, %v6835
        %v6837 = vmul.f32 %v6834, %v6836
        %v6838 = vadd.f32 %v6834, %v6837
        %vm6839 = vweird.f32 %v6678
        %vm6840 = vweird.f32 %v6834
        %vm6841 = vmor %vm6839, %vm6840
        %v6842 = vsel %vm6841, %v6834, %v6838
        %v6843 = vand.u32 2147483647, %v6678
        %vm6844 = vcmp.eq.f32.partialorder %v6843, 8.507059e+37
        %v6845 = vand.u32 %v6678, 2147483648
        %v6846 = vor.u32 1.1754944e-38, %v6845
        %v6847 = vsel %vm6844, %v6846, %v6842
        %v6848 = vmul.f32 1.0, %v6847
        %v6849 = vrcp.pop %v6679
        %v6850 = vmul.f32 %v6679, %v6849
        %v6851 = vsub.f32 1.0, %v6850
        %v6852 = vmul.f32 %v6849, %v6851
        %v6853 = vadd.f32 %v6849, %v6852
        %vm6854 = vweird.f32 %v6679
        %vm6855 = vweird.f32 %v6849
        %vm6856 = vmor %vm6854, %vm6855
        %v6857 = vsel %vm6856, %v6849, %v6853
        %v6858 = vand.u32 2147483647, %v6679
        %vm6859 = vcmp.eq.f32.partialorder %v6858, 8.507059e+37
        %v6860 = vand.u32 %v6679, 2147483648
        %v6861 = vor.u32 1.1754944e-38, %v6860
        %v6862 = vsel %vm6859, %v6861, %v6857
        %v6863 = vmul.f32 1.0, %v6862
        %v6864 = vrcp.pop %v6680
        %v6865 = vmul.f32 %v6680, %v6864
        %v6866 = vsub.f32 1.0, %v6865
        %v6867 = vmul.f32 %v6864, %v6866
        %v6868 = vadd.f32 %v6864, %v6867
        %vm6869 = vweird.f32 %v6680
        %vm6870 = vweird.f32 %v6864
        %vm6871 = vmor %vm6869, %vm6870
        %v6872 = vsel %vm6871, %v6864, %v6868
        %v6873 = vand.u32 2147483647, %v6680
        %vm6874 = vcmp.eq.f32.partialorder %v6873, 8.507059e+37
        %v6875 = vand.u32 %v6680, 2147483648
        %v6876 = vor.u32 1.1754944e-38, %v6875
        %v6877 = vsel %vm6874, %v6876, %v6872
        %v6878 = vmul.f32 1.0, %v6877
        %v6879 = vrcp.pop %v6681
        %v6880 = vmul.f32 %v6681, %v6879
        %v6881 = vsub.f32 1.0, %v6880
        %v6882 = vmul.f32 %v6879, %v6881
        %v6883 = vadd.f32 %v6879, %v6882
        %vm6884 = vweird.f32 %v6681
        %vm6885 = vweird.f32 %v6879
        %vm6886 = vmor %vm6884, %vm6885
        %v6887 = vsel %vm6886, %v6879, %v6883
        %v6888 = vand.u32 2147483647, %v6681
        %vm6889 = vcmp.eq.f32.partialorder %v6888, 8.507059e+37
        %v6890 = vand.u32 %v6681, 2147483648
        %v6891 = vor.u32 1.1754944e-38, %v6890
        %v6892 = vsel %vm6889, %v6891, %v6887
        %v6893 = vmul.f32 1.0, %v6892
        %v6894 = vrcp.pop %v6682
        %v6895 = vmul.f32 %v6682, %v6894
        %v6896 = vsub.f32 1.0, %v6895
        %v6897 = vmul.f32 %v6894, %v6896
        %v6898 = vadd.f32 %v6894, %v6897
        %vm6899 = vweird.f32 %v6682
        %vm6900 = vweird.f32 %v6894
        %vm6901 = vmor %vm6899, %vm6900
        %v6902 = vsel %vm6901, %v6894, %v6898
        %v6903 = vand.u32 2147483647, %v6682
        %vm6904 = vcmp.eq.f32.partialorder %v6903, 8.507059e+37
        %v6905 = vand.u32 %v6682, 2147483648
        %v6906 = vor.u32 1.1754944e-38, %v6905
        %v6907 = vsel %vm6904, %v6906, %v6902
        %v6908 = vmul.f32 1.0, %v6907
        %v6909 = vrcp.pop %v6683
        %v6910 = vmul.f32 %v6683, %v6909
        %v6911 = vsub.f32 1.0, %v6910
        %v6912 = vmul.f32 %v6909, %v6911
        %v6913 = vadd.f32 %v6909, %v6912
        %vm6914 = vweird.f32 %v6683
        %vm6915 = vweird.f32 %v6909
        %vm6916 = vmor %vm6914, %vm6915
        %v6917 = vsel %vm6916, %v6909, %v6913
        %v6918 = vand.u32 2147483647, %v6683
        %vm6919 = vcmp.eq.f32.partialorder %v6918, 8.507059e+37
        %v6920 = vand.u32 %v6683, 2147483648
        %v6921 = vor.u32 1.1754944e-38, %v6920
        %v6922 = vsel %vm6919, %v6921, %v6917
        %v6923 = vmul.f32 1.0, %v6922
        %v6924 = vtanh.pop %v6254
        %v6925 = vtanh.pop %v6258
        %v6926 = vtanh.pop %v6262
        %v6927 = vtanh.pop %v6266
        %v6928 = vtanh.pop %v6270
        %v6929 = vtanh.pop %v6274
        %v6930 = vtanh.pop %v6278
        %v6931 = vtanh.pop %v6282
        %v6932 = vtanh.pop %v6286
        %v6933 = vtanh.pop %v6290
        %v6934 = vtanh.pop %v6294
        %v6935 = vtanh.pop %v6298
        %v6936 = vtanh.pop %v6302
        %v6937 = vtanh.pop %v6306
        %v6938 = vtanh.pop %v6310
        %v6939 = vtanh.pop %v6314
        %v6940 = vxor.u32 %v6255, 2147483648
        %v6941 = vxor.u32 %v6259, 2147483648
        %v6942 = vxor.u32 %v6263, 2147483648
        %v6943 = vxor.u32 %v6267, 2147483648
        %v6944 = vxor.u32 %v6271, 2147483648
        %v6945 = vxor.u32 %v6275, 2147483648
        %v6946 = vxor.u32 %v6279, 2147483648
        %v6947 = vxor.u32 %v6283, 2147483648
        %v6948 = vxor.u32 %v6287, 2147483648
        %v6949 = vxor.u32 %v6291, 2147483648
        %v6950 = vxor.u32 %v6295, 2147483648
        %v6951 = vxor.u32 %v6299, 2147483648
        %v6952 = vxor.u32 %v6303, 2147483648
        %v6953 = vxor.u32 %v6307, 2147483648
        %v6954 = vxor.u32 %v6311, 2147483648
        %v6955 = vxor.u32 %v6315, 2147483648
        %v6956 = vmul.f32 %v6940, 1.442695
        %v6957 = vpow.pop %v6956
        %v6958 = vmul.f32 %v6941, 1.442695
        %v6959 = vpow.pop %v6958
        %v6960 = vmul.f32 %v6942, 1.442695
        %v6961 = vpow.pop %v6960
        %v6962 = vmul.f32 %v6943, 1.442695
        %v6963 = vpow.pop %v6962
        %v6964 = vmul.f32 %v6944, 1.442695
        %v6965 = vpow.pop %v6964
        %v6966 = vmul.f32 %v6945, 1.442695
        %v6967 = vpow.pop %v6966
        %v6968 = vmul.f32 %v6946, 1.442695
        %v6969 = vpow.pop %v6968
        %v6970 = vmul.f32 %v6947, 1.442695
        %v6971 = vpow.pop %v6970
        %v6972 = vmul.f32 %v6948, 1.442695
        %v6973 = vpow.pop %v6972
        %v6974 = vmul.f32 %v6949, 1.442695
        %v6975 = vpow.pop %v6974
        %v6976 = vmul.f32 %v6950, 1.442695
        %v6977 = vpow.pop %v6976
        %v6978 = vmul.f32 %v6951, 1.442695
        %v6979 = vpow.pop %v6978
        %v6980 = vmul.f32 %v6952, 1.442695
        %v6981 = vpow.pop %v6980
        %v6982 = vmul.f32 %v6953, 1.442695
        %v6983 = vpow.pop %v6982
        %v6984 = vmul.f32 %v6954, 1.442695
        %v6985 = vpow.pop %v6984
        %v6986 = vmul.f32 %v6955, 1.442695
        %v6987 = vpow.pop %v6986
        %v6988 = vadd.f32 %v6957, 1.0
        %v6989 = vadd.f32 %v6959, 1.0
        %v6990 = vadd.f32 %v6961, 1.0
        %v6991 = vadd.f32 %v6963, 1.0
        %v6992 = vadd.f32 %v6965, 1.0
        %v6993 = vadd.f32 %v6967, 1.0
        %v6994 = vadd.f32 %v6969, 1.0
        %v6995 = vadd.f32 %v6971, 1.0
        %v6996 = vadd.f32 %v6973, 1.0
        %v6997 = vadd.f32 %v6975, 1.0
        %v6998 = vadd.f32 %v6977, 1.0
        %v6999 = vadd.f32 %v6979, 1.0
        %v7000 = vadd.f32 %v6981, 1.0
        %v7001 = vadd.f32 %v6983, 1.0
        %v7002 = vadd.f32 %v6985, 1.0
        %v7003 = vadd.f32 %v6987, 1.0
        %v7004 = vrcp.pop %v6988
        %v7005 = vmul.f32 %v6988, %v7004
        %v7006 = vsub.f32 1.0, %v7005
        %v7007 = vmul.f32 %v7004, %v7006
        %v7008 = vadd.f32 %v7004, %v7007
        %vm7009 = vweird.f32 %v6988
        %vm7010 = vweird.f32 %v7004
        %vm7011 = vmor %vm7009, %vm7010
        %v7012 = vsel %vm7011, %v7004, %v7008
        %v7013 = vand.u32 2147483647, %v6988
        %vm7014 = vcmp.eq.f32.partialorder %v7013, 8.507059e+37
        %v7015 = vand.u32 %v6988, 2147483648
        %v7016 = vor.u32 1.1754944e-38, %v7015
        %v7017 = vsel %vm7014, %v7016, %v7012
        %v7018 = vmul.f32 1.0, %v7017
        %v7019 = vrcp.pop %v6989
        %v7020 = vmul.f32 %v6989, %v7019
        %v7021 = vsub.f32 1.0, %v7020
        %v7022 = vmul.f32 %v7019, %v7021
        %v7023 = vadd.f32 %v7019, %v7022
        %vm7024 = vweird.f32 %v6989
        %vm7025 = vweird.f32 %v7019
        %vm7026 = vmor %vm7024, %vm7025
        %v7027 = vsel %vm7026, %v7019, %v7023
        %v7028 = vand.u32 2147483647, %v6989
        %vm7029 = vcmp.eq.f32.partialorder %v7028, 8.507059e+37
        %v7030 = vand.u32 %v6989, 2147483648
        %v7031 = vor.u32 1.1754944e-38, %v7030
        %v7032 = vsel %vm7029, %v7031, %v7027
        %v7033 = vmul.f32 1.0, %v7032
        %v7034 = vrcp.pop %v6990
        %v7035 = vmul.f32 %v6990, %v7034
        %v7036 = vsub.f32 1.0, %v7035
        %v7037 = vmul.f32 %v7034, %v7036
        %v7038 = vadd.f32 %v7034, %v7037
        %vm7039 = vweird.f32 %v6990
        %vm7040 = vweird.f32 %v7034
        %vm7041 = vmor %vm7039, %vm7040
        %v7042 = vsel %vm7041, %v7034, %v7038
        %v7043 = vand.u32 2147483647, %v6990
        %vm7044 = vcmp.eq.f32.partialorder %v7043, 8.507059e+37
        %v7045 = vand.u32 %v6990, 2147483648
        %v7046 = vor.u32 1.1754944e-38, %v7045
        %v7047 = vsel %vm7044, %v7046, %v7042
        %v7048 = vmul.f32 1.0, %v7047
        %v7049 = vrcp.pop %v6991
        %v7050 = vmul.f32 %v6991, %v7049
        %v7051 = vsub.f32 1.0, %v7050
        %v7052 = vmul.f32 %v7049, %v7051
        %v7053 = vadd.f32 %v7049, %v7052
        %vm7054 = vweird.f32 %v6991
        %vm7055 = vweird.f32 %v7049
        %vm7056 = vmor %vm7054, %vm7055
        %v7057 = vsel %vm7056, %v7049, %v7053
        %v7058 = vand.u32 2147483647, %v6991
        %vm7059 = vcmp.eq.f32.partialorder %v7058, 8.507059e+37
        %v7060 = vand.u32 %v6991, 2147483648
        %v7061 = vor.u32 1.1754944e-38, %v7060
        %v7062 = vsel %vm7059, %v7061, %v7057
        %v7063 = vmul.f32 1.0, %v7062
        %v7064 = vrcp.pop %v6992
        %v7065 = vmul.f32 %v6992, %v7064
        %v7066 = vsub.f32 1.0, %v7065
        %v7067 = vmul.f32 %v7064, %v7066
        %v7068 = vadd.f32 %v7064, %v7067
        %vm7069 = vweird.f32 %v6992
        %vm7070 = vweird.f32 %v7064
        %vm7071 = vmor %vm7069, %vm7070
        %v7072 = vsel %vm7071, %v7064, %v7068
        %v7073 = vand.u32 2147483647, %v6992
        %vm7074 = vcmp.eq.f32.partialorder %v7073, 8.507059e+37
        %v7075 = vand.u32 %v6992, 2147483648
        %v7076 = vor.u32 1.1754944e-38, %v7075
        %v7077 = vsel %vm7074, %v7076, %v7072
        %v7078 = vmul.f32 1.0, %v7077
        %v7079 = vrcp.pop %v6993
        %v7080 = vmul.f32 %v6993, %v7079
        %v7081 = vsub.f32 1.0, %v7080
        %v7082 = vmul.f32 %v7079, %v7081
        %v7083 = vadd.f32 %v7079, %v7082
        %vm7084 = vweird.f32 %v6993
        %vm7085 = vweird.f32 %v7079
        %vm7086 = vmor %vm7084, %vm7085
        %v7087 = vsel %vm7086, %v7079, %v7083
        %v7088 = vand.u32 2147483647, %v6993
        %vm7089 = vcmp.eq.f32.partialorder %v7088, 8.507059e+37
        %v7090 = vand.u32 %v6993, 2147483648
        %v7091 = vor.u32 1.1754944e-38, %v7090
        %v7092 = vsel %vm7089, %v7091, %v7087
        %v7093 = vmul.f32 1.0, %v7092
        %v7094 = vrcp.pop %v6994
        %v7095 = vmul.f32 %v6994, %v7094
        %v7096 = vsub.f32 1.0, %v7095
        %v7097 = vmul.f32 %v7094, %v7096
        %v7098 = vadd.f32 %v7094, %v7097
        %vm7099 = vweird.f32 %v6994
        %vm7100 = vweird.f32 %v7094
        %vm7101 = vmor %vm7099, %vm7100
        %v7102 = vsel %vm7101, %v7094, %v7098
        %v7103 = vand.u32 2147483647, %v6994
        %vm7104 = vcmp.eq.f32.partialorder %v7103, 8.507059e+37
        %v7105 = vand.u32 %v6994, 2147483648
        %v7106 = vor.u32 1.1754944e-38, %v7105
        %v7107 = vsel %vm7104, %v7106, %v7102
        %v7108 = vmul.f32 1.0, %v7107
        %v7109 = vrcp.pop %v6995
        %v7110 = vmul.f32 %v6995, %v7109
        %v7111 = vsub.f32 1.0, %v7110
        %v7112 = vmul.f32 %v7109, %v7111
        %v7113 = vadd.f32 %v7109, %v7112
        %vm7114 = vweird.f32 %v6995
        %vm7115 = vweird.f32 %v7109
        %vm7116 = vmor %vm7114, %vm7115
        %v7117 = vsel %vm7116, %v7109, %v7113
        %v7118 = vand.u32 2147483647, %v6995
        %vm7119 = vcmp.eq.f32.partialorder %v7118, 8.507059e+37
        %v7120 = vand.u32 %v6995, 2147483648
        %v7121 = vor.u32 1.1754944e-38, %v7120
        %v7122 = vsel %vm7119, %v7121, %v7117
        %v7123 = vmul.f32 1.0, %v7122
        %v7124 = vrcp.pop %v6996
        %v7125 = vmul.f32 %v6996, %v7124
        %v7126 = vsub.f32 1.0, %v7125
        %v7127 = vmul.f32 %v7124, %v7126
        %v7128 = vadd.f32 %v7124, %v7127
        %vm7129 = vweird.f32 %v6996
        %vm7130 = vweird.f32 %v7124
        %vm7131 = vmor %vm7129, %vm7130
        %v7132 = vsel %vm7131, %v7124, %v7128
        %v7133 = vand.u32 2147483647, %v6996
        %vm7134 = vcmp.eq.f32.partialorder %v7133, 8.507059e+37
        %v7135 = vand.u32 %v6996, 2147483648
        %v7136 = vor.u32 1.1754944e-38, %v7135
        %v7137 = vsel %vm7134, %v7136, %v7132
        %v7138 = vmul.f32 1.0, %v7137
        %v7139 = vrcp.pop %v6997
        %v7140 = vmul.f32 %v6997, %v7139
        %v7141 = vsub.f32 1.0, %v7140
        %v7142 = vmul.f32 %v7139, %v7141
        %v7143 = vadd.f32 %v7139, %v7142
        %vm7144 = vweird.f32 %v6997
        %vm7145 = vweird.f32 %v7139
        %vm7146 = vmor %vm7144, %vm7145
        %v7147 = vsel %vm7146, %v7139, %v7143
        %v7148 = vand.u32 2147483647, %v6997
        %vm7149 = vcmp.eq.f32.partialorder %v7148, 8.507059e+37
        %v7150 = vand.u32 %v6997, 2147483648
        %v7151 = vor.u32 1.1754944e-38, %v7150
        %v7152 = vsel %vm7149, %v7151, %v7147
        %v7153 = vmul.f32 1.0, %v7152
        %v7154 = vrcp.pop %v6998
        %v7155 = vmul.f32 %v6998, %v7154
        %v7156 = vsub.f32 1.0, %v7155
        %v7157 = vmul.f32 %v7154, %v7156
        %v7158 = vadd.f32 %v7154, %v7157
        %vm7159 = vweird.f32 %v6998
        %vm7160 = vweird.f32 %v7154
        %vm7161 = vmor %vm7159, %vm7160
        %v7162 = vsel %vm7161, %v7154, %v7158
        %v7163 = vand.u32 2147483647, %v6998
        %vm7164 = vcmp.eq.f32.partialorder %v7163, 8.507059e+37
        %v7165 = vand.u32 %v6998, 2147483648
        %v7166 = vor.u32 1.1754944e-38, %v7165
        %v7167 = vsel %vm7164, %v7166, %v7162
        %v7168 = vmul.f32 1.0, %v7167
        %v7169 = vrcp.pop %v6999
        %v7170 = vmul.f32 %v6999, %v7169
        %v7171 = vsub.f32 1.0, %v7170
        %v7172 = vmul.f32 %v7169, %v7171
        %v7173 = vadd.f32 %v7169, %v7172
        %vm7174 = vweird.f32 %v6999
        %vm7175 = vweird.f32 %v7169
        %vm7176 = vmor %vm7174, %vm7175
        %v7177 = vsel %vm7176, %v7169, %v7173
        %v7178 = vand.u32 2147483647, %v6999
        %vm7179 = vcmp.eq.f32.partialorder %v7178, 8.507059e+37
        %v7180 = vand.u32 %v6999, 2147483648
        %v7181 = vor.u32 1.1754944e-38, %v7180
        %v7182 = vsel %vm7179, %v7181, %v7177
        %v7183 = vmul.f32 1.0, %v7182
        %v7184 = vrcp.pop %v7000
        %v7185 = vmul.f32 %v7000, %v7184
        %v7186 = vsub.f32 1.0, %v7185
        %v7187 = vmul.f32 %v7184, %v7186
        %v7188 = vadd.f32 %v7184, %v7187
        %vm7189 = vweird.f32 %v7000
        %vm7190 = vweird.f32 %v7184
        %vm7191 = vmor %vm7189, %vm7190
        %v7192 = vsel %vm7191, %v7184, %v7188
        %v7193 = vand.u32 2147483647, %v7000
        %vm7194 = vcmp.eq.f32.partialorder %v7193, 8.507059e+37
        %v7195 = vand.u32 %v7000, 2147483648
        %v7196 = vor.u32 1.1754944e-38, %v7195
        %v7197 = vsel %vm7194, %v7196, %v7192
        %v7198 = vmul.f32 1.0, %v7197
        %v7199 = vrcp.pop %v7001
        %v7200 = vmul.f32 %v7001, %v7199
        %v7201 = vsub.f32 1.0, %v7200
        %v7202 = vmul.f32 %v7199, %v7201
        %v7203 = vadd.f32 %v7199, %v7202
        %vm7204 = vweird.f32 %v7001
        %vm7205 = vweird.f32 %v7199
        %vm7206 = vmor %vm7204, %vm7205
        %v7207 = vsel %vm7206, %v7199, %v7203
        %v7208 = vand.u32 2147483647, %v7001
        %vm7209 = vcmp.eq.f32.partialorder %v7208, 8.507059e+37
        %v7210 = vand.u32 %v7001, 2147483648
        %v7211 = vor.u32 1.1754944e-38, %v7210
        %v7212 = vsel %vm7209, %v7211, %v7207
        %v7213 = vmul.f32 1.0, %v7212
        %v7214 = vrcp.pop %v7002
        %v7215 = vmul.f32 %v7002, %v7214
        %v7216 = vsub.f32 1.0, %v7215
        %v7217 = vmul.f32 %v7214, %v7216
        %v7218 = vadd.f32 %v7214, %v7217
        %vm7219 = vweird.f32 %v7002
        %vm7220 = vweird.f32 %v7214
        %vm7221 = vmor %vm7219, %vm7220
        %v7222 = vsel %vm7221, %v7214, %v7218
        %v7223 = vand.u32 2147483647, %v7002
        %vm7224 = vcmp.eq.f32.partialorder %v7223, 8.507059e+37
        %v7225 = vand.u32 %v7002, 2147483648
        %v7226 = vor.u32 1.1754944e-38, %v7225
        %v7227 = vsel %vm7224, %v7226, %v7222
        %v7228 = vmul.f32 1.0, %v7227
        %v7229 = vrcp.pop %v7003
        %v7230 = vmul.f32 %v7003, %v7229
        %v7231 = vsub.f32 1.0, %v7230
        %v7232 = vmul.f32 %v7229, %v7231
        %v7233 = vadd.f32 %v7229, %v7232
        %vm7234 = vweird.f32 %v7003
        %vm7235 = vweird.f32 %v7229
        %vm7236 = vmor %vm7234, %vm7235
        %v7237 = vsel %vm7236, %v7229, %v7233
        %v7238 = vand.u32 2147483647, %v7003
        %vm7239 = vcmp.eq.f32.partialorder %v7238, 8.507059e+37
        %v7240 = vand.u32 %v7003, 2147483648
        %v7241 = vor.u32 1.1754944e-38, %v7240
        %v7242 = vsel %vm7239, %v7241, %v7237
        %v7243 = vmul.f32 1.0, %v7242
        %v7244 = vmul.f32 %v6698, %v5969
        %v7245 = vmul.f32 %v6713, %v5971
        %v7246 = vmul.f32 %v6728, %v5974
        %v7247 = vmul.f32 %v6743, %v5976
        %v7248 = vmul.f32 %v6758, %v5979
        %v7249 = vmul.f32 %v6773, %v5981
        %v7250 = vmul.f32 %v6788, %v5984
        %v7251 = vmul.f32 %v6803, %v5986
        %v7252 = vmul.f32 %v6818, %v5989
        %v7253 = vmul.f32 %v6833, %v5991
        %v7254 = vmul.f32 %v6848, %v5994
        %v7255 = vmul.f32 %v6863, %v5996
        %v7256 = vmul.f32 %v6878, %v5999
        %v7257 = vmul.f32 %v6893, %v6001
        %v7258 = vmul.f32 %v6908, %v6004
        %v7259 = vmul.f32 %v6923, %v6006
        %v7260 = vmul.f32 %v6394, %v6924
        %v7261 = vmul.f32 %v6409, %v6925
        %v7262 = vmul.f32 %v6424, %v6926
        %v7263 = vmul.f32 %v6439, %v6927
        %v7264 = vmul.f32 %v6454, %v6928
        %v7265 = vmul.f32 %v6469, %v6929
        %v7266 = vmul.f32 %v6484, %v6930
        %v7267 = vmul.f32 %v6499, %v6931
        %v7268 = vmul.f32 %v6514, %v6932
        %v7269 = vmul.f32 %v6529, %v6933
        %v7270 = vmul.f32 %v6544, %v6934
        %v7271 = vmul.f32 %v6559, %v6935
        %v7272 = vmul.f32 %v6574, %v6936
        %v7273 = vmul.f32 %v6589, %v6937
        %v7274 = vmul.f32 %v6604, %v6938
        %v7275 = vmul.f32 %v6619, %v6939
        %v7276 = vadd.f32 %v7244, %v7260
        %v7277 = vadd.f32 %v7245, %v7261
        %v7278 = vadd.f32 %v7246, %v7262
        %v7279 = vadd.f32 %v7247, %v7263
        %v7280 = vadd.f32 %v7248, %v7264
        %v7281 = vadd.f32 %v7249, %v7265
        %v7282 = vadd.f32 %v7250, %v7266
        %v7283 = vadd.f32 %v7251, %v7267
        %v7284 = vadd.f32 %v7252, %v7268
        %v7285 = vadd.f32 %v7253, %v7269
        %v7286 = vadd.f32 %v7254, %v7270
        %v7287 = vadd.f32 %v7255, %v7271
        %v7288 = vadd.f32 %v7256, %v7272
        %v7289 = vadd.f32 %v7257, %v7273
        %v7290 = vadd.f32 %v7258, %v7274
        %v7291 = vadd.f32 %v7259, %v7275
        %v7292 = vtanh.pop %v7276
        %v7293 = vtanh.pop %v7277
        %v7294 = vtanh.pop %v7278
        %v7295 = vtanh.pop %v7279
        %v7296 = vtanh.pop %v7280
        %v7297 = vtanh.pop %v7281
        %v7298 = vtanh.pop %v7282
        %v7299 = vtanh.pop %v7283
        %v7300 = vtanh.pop %v7284
        %v7301 = vtanh.pop %v7285
        %v7302 = vtanh.pop %v7286
        %v7303 = vtanh.pop %v7287
        %v7304 = vtanh.pop %v7288
        %v7305 = vtanh.pop %v7289
        %v7306 = vtanh.pop %v7290
        %v7307 = vtanh.pop %v7291
        %v7308 = vmul.f32 %v7018, %v7292
        %v7309 = vmul.f32 %v7033, %v7293
        %v7310 = vmul.f32 %v7048, %v7294
        %v7311 = vmul.f32 %v7063, %v7295
        %v7312 = vmul.f32 %v7078, %v7296
        %v7313 = vmul.f32 %v7093, %v7297
        %v7314 = vmul.f32 %v7108, %v7298
        %v7315 = vmul.f32 %v7123, %v7299
        %v7316 = vmul.f32 %v7138, %v7300
        %v7317 = vmul.f32 %v7153, %v7301
        %v7318 = vmul.f32 %v7168, %v7302
        %v7319 = vmul.f32 %v7183, %v7303
        %v7320 = vmul.f32 %v7198, %v7304
        %v7321 = vmul.f32 %v7213, %v7305
        %v7322 = vmul.f32 %v7228, %v7306
        %v7323 = vmul.f32 %v7243, %v7307
        %7324 = vst [vmem:[%s1123] sm:$0xff] %v7308
        %7325 = vst [vmem:[%s1123 + $0x8] sm:$0xff] %v7309
        %7326 = vst [vmem:[%s1123 + $0x10] sm:$0xff] %v7310
        %7327 = vst [vmem:[%s1123 + $0x18] sm:$0xff] %v7311
        %7328 = vst [vmem:[%s1123 + $0x20] sm:$0xff] %v7312
        %7329 = vst [vmem:[%s1123 + $0x28] sm:$0xff] %v7313
        %7330 = vst [vmem:[%s1123 + $0x30] sm:$0xff] %v7314
        %7331 = vst [vmem:[%s1123 + $0x38] sm:$0xff] %v7315
        %7332 = vst [vmem:[%s1123 + $0x40] sm:$0xff] %v7316
        %7333 = vst [vmem:[%s1123 + $0x48] sm:$0xff] %v7317
        %7334 = vst [vmem:[%s1123 + $0x50] sm:$0xff] %v7318
        %7335 = vst [vmem:[%s1123 + $0x58] sm:$0xff] %v7319
        %7336 = vst [vmem:[%s1123 + $0x60] sm:$0xff] %v7320
        %7337 = vst [vmem:[%s1123 + $0x68] sm:$0xff] %v7321
        %7338 = vst [vmem:[%s1123 + $0x70] sm:$0xff] %v7322
        %7339 = vst [vmem:[%s1123 + $0x78] sm:$0xff] %v7323
        %7340 = vst [vmem:[%s1130] sm:$0xff] %v7276
        %7341 = vst [vmem:[%s1130 + $0x8] sm:$0xff] %v7277
        %7342 = vst [vmem:[%s1130 + $0x10] sm:$0xff] %v7278
        %7343 = vst [vmem:[%s1130 + $0x18] sm:$0xff] %v7279
        %7344 = vst [vmem:[%s1130 + $0x20] sm:$0xff] %v7280
        %7345 = vst [vmem:[%s1130 + $0x28] sm:$0xff] %v7281
        %7346 = vst [vmem:[%s1130 + $0x30] sm:$0xff] %v7282
        %7347 = vst [vmem:[%s1130 + $0x38] sm:$0xff] %v7283
        %7348 = vst [vmem:[%s1130 + $0x40] sm:$0xff] %v7284
        %7349 = vst [vmem:[%s1130 + $0x48] sm:$0xff] %v7285
        %7350 = vst [vmem:[%s1130 + $0x50] sm:$0xff] %v7286
        %7351 = vst [vmem:[%s1130 + $0x58] sm:$0xff] %v7287
        %7352 = vst [vmem:[%s1130 + $0x60] sm:$0xff] %v7288
        %7353 = vst [vmem:[%s1130 + $0x68] sm:$0xff] %v7289
        %7354 = vst [vmem:[%s1130 + $0x70] sm:$0xff] %v7290
        %7355 = vst [vmem:[%s1130 + $0x78] sm:$0xff] %v7291
        %s7356 = sand.u32 %s542, 1
        %s7357 = scalar_lea.sflag [#allocation4], %s7356
        %s7358 = sand.u32 %s542, 1
        %s7359 = smul.addr %s7358, 128
        %s7360 = scalar_lea.vmem [#allocation31], %s7359
        %s7361 = sand.u32 %s568, 1
        %s7362 = scalar_lea.sflag [#allocation33], %s7361
        %s7363 = sand.u32 %s568, 1
        %s7364 = smul.addr %s7363, 128
        %s7365 = scalar_lea.vmem [#allocation32], %s7364
        // Predicated region
        $region177: #{tpu_custom_call.1} parent=103 // pred_check
          %p7366 = pneg %p552
        $region178: #{tpu_custom_call.1} parent=103 // pred_check_branch
          %7368 = sbr.rel (%p7366) target = $region180
        $region179: #{tpu_custom_call.1} parent=103 // pred_region
          %s7369 = smul.u32 16, %s58
          %7371 = vsyncadd %s7357, 0
          %s7372 = smul.addr %s7369, 8
          %s7373 = scalar_lea.hbm %s21, %s7372
          %s7374 = sshll.u32 %s7360, 4
          %s7375 = int_to_ptr.vmem [resolvable:$true] %s7374
          %s7376 = sshll.u32 %s7373, 4
          %s7377 = int_to_ptr.hbm [resolvable:$true] %s7376
          %7382 = dma.vmem_to_hbm [thread:$0]  %s7375, 2048, %s7377, %s7357, 128, 128, 8
        $region180: #{tpu_custom_call.1} parent=103 // pred_fallthru
          _
        // Predicated region
        $region181: #{tpu_custom_call.1} parent=103 // pred_check
          %p7383 = pneg %p578
        $region182: #{tpu_custom_call.1} parent=103 // pred_check_branch
          %7385 = sbr.rel (%p7383) target = $region184
        $region183: #{tpu_custom_call.1} parent=103 // pred_region
          %s7386 = smul.u32 16, %s58
          %7388 = vsyncadd %s7362, 0
          %s7389 = smul.addr %s7386, 8
          %s7390 = scalar_lea.hbm %s22, %s7389
          %s7391 = sshll.u32 %s7365, 4
          %s7392 = int_to_ptr.vmem [resolvable:$true] %s7391
          %s7393 = sshll.u32 %s7390, 4
          %s7394 = int_to_ptr.hbm [resolvable:$true] %s7393
          %7399 = dma.vmem_to_hbm [thread:$0]  %s7392, 2048, %s7394, %s7362, 128, 128, 8
        $region184: #{tpu_custom_call.1} parent=103 // pred_fallthru
          _
      $region104: #{tpu_custom_call.1} parent=5 // pred_fallthru
        _
      %p7400 = scmp.le.s32.totalorder 2, %s53
      // Predicated region
      $region185: #{tpu_custom_call.1} parent=5 // pred_check
        %p7401 = pneg %p7400
      $region186: #{tpu_custom_call.1} parent=5 // pred_check_branch
        %7403 = sbr.rel (%p7401) target = $region188
      $region187: #{tpu_custom_call.1} parent=5 // pred_region
        %s7404 = ssub.s32 %s53, 2
        // Predicated region
        $region189: #{tpu_custom_call.1} parent=187 // pred_check
          %p7405 = pneg %p558
        $region190: #{tpu_custom_call.1} parent=187 // pred_check_branch
          %7407 = sbr.rel (%p7405) target = $region192
        $region191: #{tpu_custom_call.1} parent=187 // pred_region
          %s7408 = sand.u32 %s543, 1
          %s7409 = scalar_lea.sflag [#allocation4], %s7408
          %s7410 = sand.u32 %s543, 1
          %s7411 = smul.addr %s7410, 128
          %s7412 = scalar_lea.vmem [#allocation31], %s7411
          %7414 = dma.done %s7409, 2048
        $region192: #{tpu_custom_call.1} parent=187 // pred_fallthru
          _
        // Predicated region
        $region193: #{tpu_custom_call.1} parent=187 // pred_check
          %p7415 = pneg %p584
        $region194: #{tpu_custom_call.1} parent=187 // pred_check_branch
          %7417 = sbr.rel (%p7415) target = $region196
        $region195: #{tpu_custom_call.1} parent=187 // pred_region
          %s7418 = sand.u32 %s569, 1
          %s7419 = scalar_lea.sflag [#allocation33], %s7418
          %s7420 = sand.u32 %s569, 1
          %s7421 = smul.addr %s7420, 128
          %s7422 = scalar_lea.vmem [#allocation32], %s7421
          %7424 = dma.done %s7419, 2048
        $region196: #{tpu_custom_call.1} parent=187 // pred_fallthru
          _
      $region188: #{tpu_custom_call.1} parent=5 // pred_fallthru
        _
    $region6: #{tpu_custom_call.1} parent=1 // loop_footer
      %s57 = sadd.s32 1, %s53
    $region7: #{tpu_custom_call.1} parent=1 // loop_footer_branch
      %52 = sbr.rel target = $region3
    $region8: #{tpu_custom_call.1} parent=1 // loop_exit
      _
    %7425 = vsyncpa [#allocation3], 1
    %s7426 = scalar_lea.sflag [#allocation3], 1
    %7427 = vsyncpa %s7426, 1
    %7428 = vsyncpa [#allocation6], 1
    %s7429 = scalar_lea.sflag [#allocation6], 1
    %7430 = vsyncpa %s7429, 1
    %7431 = vsyncpa [#allocation9], 1
    %s7432 = scalar_lea.sflag [#allocation9], 1
    %7433 = vsyncpa %s7432, 1
    %7434 = vsyncpa [#allocation12], 1
    %s7435 = scalar_lea.sflag [#allocation12], 1
    %7436 = vsyncpa %s7435, 1
    %7437 = vsyncpa [#allocation15], 1
    %7438 = vsyncpa [#allocation18], 1
    %7439 = vsyncpa [#allocation21], 1
    %7440 = vsyncpa [#allocation24], 1
    %7441 = vsyncpa [#allocation27], 1
    %7442 = vsyncpa [#allocation30], 1
    %7443 = vsyncpa [#allocation4], 1
    %s7444 = scalar_lea.sflag [#allocation4], 1
    %7445 = vsyncpa %s7444, 1
    %7446 = vsyncpa [#allocation33], 1
    %s7447 = scalar_lea.sflag [#allocation33], 1
    %7448 = vsyncpa %s7447, 1

</llo_original>
